<compile_context>
chip_gen: v7x
topology: tpu7x:2x2x1
jax: 0.10.0
libtpu: 0.0.40
codegen_flags: <defaults>
</compile_context>

<pallas_src>
import functools

import jax
import jax.numpy as jnp
from jax import lax
from jax.experimental import pallas as pl
from jax.experimental.pallas import tpu as pltpu

LEAK = 0.1
BN_EPS = 1e-5
MXU_DTYPE = jnp.bfloat16       # MXU operand dtype; accumulation stays fp32

C1, C2, C3 = 64, 128, 256      # channel widths of the three conv layers
KH = KW = 4


# ------------------------------ kernel helpers ------------------------------ #

def _lrelu(y):
    return jnp.maximum(y, LEAK * y)


def _bn_lrelu(y, g, b):
    """Training-mode BatchNorm (batch stats, biased variance) + LeakyReLU(0.1).
    Single pass: stats from sum / sum-of-squares, applied as one FMA."""
    inv_m = 1.0 / y.shape[0]
    mean = jnp.sum(y, axis=0, keepdims=True) * inv_m
    mean_sq = jnp.sum(y * y, axis=0, keepdims=True) * inv_m
    var = mean_sq - mean * mean
    scale = g * lax.rsqrt(var + BN_EPS)
    shift = b - mean * scale
    z = y * scale + shift
    return jnp.maximum(z, LEAK * z)


def _stash_padded(dst_ref, y, n, oh, ow, cout):
    """Store a layer's (M, Cout) output into a zero-initialized VMEM scratch
    that holds the zero-padded activation in a parity-split layout:

        dst[b, h//2, h%2, w//2, w%2, c] == padded_act[b, h-1, w-1, c]

    (h, w are the conv's padded coordinates shifted by +1 so that the interior
    block is parity-aligned; the outermost slots are dead / zero padding.)
    Only dense slice writes with static integer indices are used."""
    yr = y.reshape(n, oh, ow, cout)
    for r in range(oh):
        row = yr[:, r, :, :].reshape(n, ow // 2, 2, cout)
        dst_ref[:, (r + 2) // 2, r % 2, 1:1 + ow // 2, :, :] = row


def _conv_taps(src_ref, w_ref, n, oh, ow, cin, cout):
    """4x4 / stride-2 conv as 16 accumulated tap matmuls (in-kernel im2col).
    `src_ref` holds the padded input activation in the parity-split layout of
    `_stash_padded`; every tap read is a dense static slice (no strides)."""
    m = n * oh * ow
    acc = jnp.zeros((m, cout), jnp.float32)
    for kh in range(KH):
        u, pu = (kh + 1) // 2, (kh + 1) % 2
        for kw in range(KW):
            v, pv = (kw + 1) // 2, (kw + 1) % 2
            tap = src_ref[:, u:u + oh, pu, v:v + ow, pv, :]
            tap = tap.reshape(m, cin).astype(MXU_DTYPE)
            t = kh * KW + kw
            wt = w_ref[t * cin:(t + 1) * cin, :]
            acc = acc + jnp.dot(tap, wt, preferred_element_type=jnp.float32)
    return acc


# --------------------------------- kernel ----------------------------------- #

def d_svhn_kernel(p1_ref, w1_ref, w2_ref, w3_ref,
                  g2_ref, b2_ref, g3_ref, b3_ref,
                  out_ref, a1_ref, a2_ref,
                  *, n, oh1, ow1, oh2, ow2, oh3, ow3):
    # zero scratch so the conv zero-padding rows/cols are correct
    a1_ref[...] = jnp.zeros(a1_ref.shape, a1_ref.dtype)
    a2_ref[...] = jnp.zeros(a2_ref.shape, a2_ref.dtype)

    # ---- layer 1: host-built bf16 patches @ W1, LeakyReLU (stays in VMEM) ----
    y1 = jnp.dot(p1_ref[...], w1_ref[...], preferred_element_type=jnp.float32)
    y1 = _lrelu(y1)
    _stash_padded(a1_ref, y1, n, oh1, ow1, C1)

    # ---- layer 2: in-kernel im2col conv + BN + LeakyReLU ----
    y2 = _conv_taps(a1_ref, w2_ref, n, oh2, ow2, C1, C2)
    y2 = _bn_lrelu(y2, g2_ref[...], b2_ref[...])
    _stash_padded(a2_ref, y2, n, oh2, ow2, C2)

    # ---- layer 3: in-kernel im2col conv + BN + LeakyReLU (lane-dense output) ----
    y3 = _conv_taps(a2_ref, w3_ref, n, oh3, ow3, C2, C3)
    out_ref[...] = _bn_lrelu(y3, g3_ref[...], b3_ref[...])


# ----------------------------- host-side wrapper ----------------------------- #

def d_svhn_forward(img_nchw, params):
    """Full D_SVHN forward. Input NCHW (PyTorch convention), output NCHW."""
    x = jnp.transpose(img_nchw, (0, 2, 3, 1)).astype(jnp.float32)   # -> NHWC
    N, H, W, C = x.shape
    oh1, ow1 = H // 2, W // 2
    oh2, ow2 = H // 4, W // 4
    oh3, ow3 = H // 8, W // 8

    # host-side im2col for layer 1 only, feature order (KH, KW, C): channels
    # stay lane-contiguous and the matching weight reshape is layout-free.
    xp = jnp.pad(x, ((0, 0), (1, 1), (1, 1), (0, 0)))
    taps = [xp[:, kh:kh + 2 * oh1:2, kw:kw + 2 * ow1:2, :]
            for kh in range(KH) for kw in range(KW)]
    p1 = jnp.concatenate(taps, axis=-1).reshape(N * oh1 * ow1, KH * KW * C)
    p1 = p1.astype(MXU_DTYPE)

    def prep_w(w):   # OIHW -> (KH*KW*Cin, Cout), tap-major, bf16
        cout, cin = w.shape[0], w.shape[1]
        return (jnp.transpose(w, (2, 3, 1, 0))
                .reshape(KH * KW * cin, cout).astype(MXU_DTYPE))

    w1 = prep_w(params["w1"])
    w2 = prep_w(params["w2"])
    w3 = prep_w(params["w3"])
    g2 = params["g2"].reshape(1, C2).astype(jnp.float32)
    b2 = params["b2"].reshape(1, C2).astype(jnp.float32)
    g3 = params["g3"].reshape(1, C3).astype(jnp.float32)
    b3 = params["b3"].reshape(1, C3).astype(jnp.float32)

    m3 = N * oh3 * ow3

    def full_spec(shape):
        return pl.BlockSpec(shape, lambda i: (0,) * len(shape))

    kernel = functools.partial(d_svhn_kernel, n=N, oh1=oh1, ow1=ow1,
                               oh2=oh2, ow2=ow2, oh3=oh3, ow3=ow3)

    out = pl.pallas_call(
        kernel,
        out_shape=jax.ShapeDtypeStruct((m3, C3), jnp.float32),
        grid=(1,),
        in_specs=[full_spec(p1.shape), full_spec(w1.shape),
                  full_spec(w2.shape), full_spec(w3.shape),
                  full_spec(g2.shape), full_spec(b2.shape),
                  full_spec(g3.shape), full_spec(b3.shape)],
        out_specs=full_spec((m3, C3)),
        scratch_shapes=[
            pltpu.VMEM((N, (oh1 + 4) // 2, 2, (ow1 + 4) // 2, 2, C1), jnp.float32),
            pltpu.VMEM((N, (oh2 + 4) // 2, 2, (ow2 + 4) // 2, 2, C2), jnp.float32),
        ],
        compiler_params=pltpu.CompilerParams(
            dimension_semantics=("arbitrary",),
            vmem_limit_bytes=32 * 1024 * 1024),
    )(p1, w1, w2, w3, g2, b2, g3, b3)

    y = out.reshape(N, oh3, ow3, C3)
    return jnp.transpose(y, (0, 3, 1, 2))                            # -> NCHW


# ----------------------------- pure-JAX reference ---------------------------- #

def _ref_conv(x, w):
    return lax.conv_general_dilated(
        x, w, window_strides=(2, 2), padding=((1, 1), (1, 1)),
        dimension_numbers=("NCHW", "OIHW", "NCHW"))


def _ref_bn(x, g, b):
    mean = jnp.mean(x, axis=(0, 2, 3), keepdims=True)
    var = jnp.mean((x - mean) ** 2, axis=(0, 2, 3), keepdims=True)
    return (x - mean) * lax.rsqrt(var + BN_EPS) * g[None, :, None, None] \
        + b[None, :, None, None]


def _ref_lrelu(x):
    return jnp.where(x > 0, x, LEAK * x)


def d_svhn_reference(img_nchw, params):
    x = img_nchw.astype(jnp.float32)
    x = _ref_lrelu(_ref_conv(x, params["w1"]))
    x = _ref_lrelu(_ref_bn(_ref_conv(x, params["w2"]), params["g2"], params["b2"]))
    x = _ref_lrelu(_ref_bn(_ref_conv(x, params["w3"]), params["g3"], params["b3"]))
    return x


# ----------------------------------- main ------------------------------------ #

def init_params(key, channels):
    ks = jax.random.split(key, 7)

    def conv_w(k, cout, cin):
        bound = 1.0 / jnp.sqrt(cin * 16.0)
        return jax.random.uniform(k, (cout, cin, 4, 4), jnp.float32, -bound, bound)

    return {
        "w1": conv_w(ks[0], C1, channels),
        "w2": conv_w(ks[1], C2, C1),
        "w3": conv_w(ks[2], C3, C2),
        "g2": 1.0 + 0.1 * jax.random.normal(ks[3], (C2,), jnp.float32),
        "b2": 0.1 * jax.random.normal(ks[4], (C2,), jnp.float32),
        "g3": 1.0 + 0.1 * jax.random.normal(ks[5], (C3,), jnp.float32),
        "b3": 0.1 * jax.random.normal(ks[6], (C3,), jnp.float32),
    }


if __name__ == "__main__":
    key = jax.random.PRNGKey(0)
    k_img, k_par = jax.random.split(key)

    N, C, H, W = 2, 4, 16, 16          # small SVHN-like input (NCHW)
    img = jax.random.normal(k_img, (N, C, H, W), jnp.float32)
    params = init_params(k_par, C)

    out = jax.block_until_ready(jax.jit(d_svhn_forward)(img, params))
    assert out.shape == (N, C3, H // 8, W // 8), out.shape

    ref = jax.block_until_ready(d_svhn_reference(img, params))
    # bf16 MXU operands (fp32 accumulation) -> tolerance looser than pure fp32
    max_err = float(jnp.max(jnp.abs(out - ref)))
    assert jnp.allclose(out, ref, atol=5e-2, rtol=5e-2), max_err

    print("KERNEL_OK")
</pallas_src>

<mosaic_0001>
module attributes {stable_mosaic.version = 11 : i64} {
  func.func @d_svhn_kernel(%arg0: i32, %arg1: memref<128x64xbf16, #tpu.memory_space<vmem>>, %arg2: memref<64x64xbf16, #tpu.memory_space<vmem>>, %arg3: memref<1024x128xbf16, #tpu.memory_space<vmem>>, %arg4: memref<2048x256xbf16, #tpu.memory_space<vmem>>, %arg5: memref<1x128xf32, #tpu.memory_space<vmem>>, %arg6: memref<1x128xf32, #tpu.memory_space<vmem>>, %arg7: memref<1x256xf32, #tpu.memory_space<vmem>>, %arg8: memref<1x256xf32, #tpu.memory_space<vmem>>, %arg9: memref<8x256xf32, #tpu.memory_space<vmem>>, %arg10: memref<2x6x2x6x2x64xf32, #tpu.memory_space<vmem>>, %arg11: memref<2x4x2x4x2x128xf32, #tpu.memory_space<vmem>>) attributes {dimension_semantics = [#tpu.dimension_semantics<arbitrary>], iteration_bounds = array<i64: 1>, scalar_prefetch = 0 : i64, scratch_operands = 2 : i64, tpu.core_type = #tpu.core_type<tc>, window_params = [{pipeline_mode = #tpu.pipeline_mode<synchronous>, transform_indices = @transform_0, window_bounds = array<i64: 128, 64>}, {pipeline_mode = #tpu.pipeline_mode<synchronous>, transform_indices = @transform_1, window_bounds = array<i64: 64, 64>}, {pipeline_mode = #tpu.pipeline_mode<synchronous>, transform_indices = @transform_2, window_bounds = array<i64: 1024, 128>}, {pipeline_mode = #tpu.pipeline_mode<synchronous>, transform_indices = @transform_3, window_bounds = array<i64: 2048, 256>}, {pipeline_mode = #tpu.pipeline_mode<synchronous>, transform_indices = @transform_4, window_bounds = array<i64: 1, 128>}, {pipeline_mode = #tpu.pipeline_mode<synchronous>, transform_indices = @transform_5, window_bounds = array<i64: 1, 128>}, {pipeline_mode = #tpu.pipeline_mode<synchronous>, transform_indices = @transform_6, window_bounds = array<i64: 1, 256>}, {pipeline_mode = #tpu.pipeline_mode<synchronous>, transform_indices = @transform_7, window_bounds = array<i64: 1, 256>}, {pipeline_mode = #tpu.pipeline_mode<synchronous>, transform_indices = @transform_8, window_bounds = array<i64: 8, 256>}]} {
    %cst = arith.constant 0.000000e+00 : f32
    %0 = vector.broadcast %cst : f32 to vector<2x6x2x6x2x64xf32>
    %c0 = arith.constant 0 : index
    %c0_0 = arith.constant 0 : index
    %c0_1 = arith.constant 0 : index
    %c0_2 = arith.constant 0 : index
    %c0_3 = arith.constant 0 : index
    %c0_4 = arith.constant 0 : index
    %1 = vector.load %arg10[%c0, %c0_0, %c0_1, %c0_2, %c0_3, %c0_4] : memref<2x6x2x6x2x64xf32, #tpu.memory_space<vmem>>, vector<2x6x2x6x2x64xf32>
    tpu.vector_store %arg10[%c0, %c0_0, %c0_1, %c0_2, %c0_3, %c0_4], %0 {strides = array<i32>} : memref<2x6x2x6x2x64xf32, #tpu.memory_space<vmem>>, vector<2x6x2x6x2x64xf32>,
    %cst_5 = arith.constant 0.000000e+00 : f32
    %2 = vector.broadcast %cst_5 : f32 to vector<2x4x2x4x2x128xf32>
    %c0_6 = arith.constant 0 : index
    %c0_7 = arith.constant 0 : index
    %c0_8 = arith.constant 0 : index
    %c0_9 = arith.constant 0 : index
    %c0_10 = arith.constant 0 : index
    %c0_11 = arith.constant 0 : index
    %3 = vector.load %arg11[%c0_6, %c0_7, %c0_8, %c0_9, %c0_10, %c0_11] : memref<2x4x2x4x2x128xf32, #tpu.memory_space<vmem>>, vector<2x4x2x4x2x128xf32>
    tpu.vector_store %arg11[%c0_6, %c0_7, %c0_8, %c0_9, %c0_10, %c0_11], %2 {strides = array<i32>} : memref<2x4x2x4x2x128xf32, #tpu.memory_space<vmem>>, vector<2x4x2x4x2x128xf32>,
    %c0_12 = arith.constant 0 : index
    %c0_13 = arith.constant 0 : index
    %4 = vector.load %arg1[%c0_12, %c0_13] : memref<128x64xbf16, #tpu.memory_space<vmem>>, vector<128x64xbf16>
    %c0_14 = arith.constant 0 : index
    %c0_15 = arith.constant 0 : index
    %5 = vector.load %arg2[%c0_14, %c0_15] : memref<64x64xbf16, #tpu.memory_space<vmem>>, vector<64x64xbf16>
    %cst_16 = arith.constant dense<0.000000e+00> : vector<128x64xf32>
    %6 = tpu.matmul %4, %5, %cst_16 {dimension_numbers = #tpu.dot_dimension_numbers<[1], [0], [0], [1], [0, 0, 1, 1], [], []>} : vector<128x64xbf16>, vector<64x64xbf16>, vector<128x64xf32> -> vector<128x64xf32>
    %cst_17 = arith.constant 1.000000e-01 : f32
    %7 = vector.broadcast %cst_17 : f32 to vector<128x64xf32>
    %8 = arith.mulf %7, %6 : vector<128x64xf32>
    %9 = arith.maximumf %6, %8 : vector<128x64xf32>
    %10 = vector.shape_cast %9 : vector<128x64xf32> to vector<2x8x8x64xf32>
    %11 = vector.extract_strided_slice %10 {offsets = [0, 0, 0, 0], sizes = [2, 1, 8, 64], strides = [1, 1, 1, 1]} : vector<2x8x8x64xf32> to vector<2x1x8x64xf32>
    %12 = vector.shape_cast %11 : vector<2x1x8x64xf32> to vector<2x8x64xf32>
    %13 = vector.shape_cast %12 : vector<2x8x64xf32> to vector<2x4x2x64xf32>
    %c0_18 = arith.constant 0 : index
    %c1 = arith.constant 1 : index
    %c0_19 = arith.constant 0 : index
    %c1_20 = arith.constant 1 : index
    %c0_21 = arith.constant 0 : index
    %c0_22 = arith.constant 0 : index
    %14 = vector.load %arg10[%c0_18, %c1, %c0_19, %c1_20, %c0_21, %c0_22] : memref<2x6x2x6x2x64xf32, #tpu.memory_space<vmem>>, vector<2x1x1x4x2x64xf32>
    %15 = vector.shape_cast %14 : vector<2x1x1x4x2x64xf32> to vector<2x4x2x64xf32>
    %16 = vector.shape_cast %13 : vector<2x4x2x64xf32> to vector<2x1x1x4x2x64xf32>
    tpu.vector_store %arg10[%c0_18, %c1, %c0_19, %c1_20, %c0_21, %c0_22], %16 {strides = array<i32>} : memref<2x6x2x6x2x64xf32, #tpu.memory_space<vmem>>, vector<2x1x1x4x2x64xf32>,
    %17 = vector.extract_strided_slice %10 {offsets = [0, 1, 0, 0], sizes = [2, 1, 8, 64], strides = [1, 1, 1, 1]} : vector<2x8x8x64xf32> to vector<2x1x8x64xf32>
    %18 = vector.shape_cast %17 : vector<2x1x8x64xf32> to vector<2x8x64xf32>
    %19 = vector.shape_cast %18 : vector<2x8x64xf32> to vector<2x4x2x64xf32>
    %c0_23 = arith.constant 0 : index
    %c1_24 = arith.constant 1 : index
    %c1_25 = arith.constant 1 : index
    %c1_26 = arith.constant 1 : index
    %c0_27 = arith.constant 0 : index
    %c0_28 = arith.constant 0 : index
    %20 = vector.load %arg10[%c0_23, %c1_24, %c1_25, %c1_26, %c0_27, %c0_28] : memref<2x6x2x6x2x64xf32, #tpu.memory_space<vmem>>, vector<2x1x1x4x2x64xf32>
    %21 = vector.shape_cast %20 : vector<2x1x1x4x2x64xf32> to vector<2x4x2x64xf32>
    %22 = vector.shape_cast %19 : vector<2x4x2x64xf32> to vector<2x1x1x4x2x64xf32>
    tpu.vector_store %arg10[%c0_23, %c1_24, %c1_25, %c1_26, %c0_27, %c0_28], %22 {strides = array<i32>} : memref<2x6x2x6x2x64xf32, #tpu.memory_space<vmem>>, vector<2x1x1x4x2x64xf32>,
    %23 = vector.extract_strided_slice %10 {offsets = [0, 2, 0, 0], sizes = [2, 1, 8, 64], strides = [1, 1, 1, 1]} : vector<2x8x8x64xf32> to vector<2x1x8x64xf32>
    %24 = vector.shape_cast %23 : vector<2x1x8x64xf32> to vector<2x8x64xf32>
    %25 = vector.shape_cast %24 : vector<2x8x64xf32> to vector<2x4x2x64xf32>
    %c0_29 = arith.constant 0 : index
    %c2 = arith.constant 2 : index
    %c0_30 = arith.constant 0 : index
    %c1_31 = arith.constant 1 : index
    %c0_32 = arith.constant 0 : index
    %c0_33 = arith.constant 0 : index
    %26 = vector.load %arg10[%c0_29, %c2, %c0_30, %c1_31, %c0_32, %c0_33] : memref<2x6x2x6x2x64xf32, #tpu.memory_space<vmem>>, vector<2x1x1x4x2x64xf32>
    %27 = vector.shape_cast %26 : vector<2x1x1x4x2x64xf32> to vector<2x4x2x64xf32>
    %28 = vector.shape_cast %25 : vector<2x4x2x64xf32> to vector<2x1x1x4x2x64xf32>
    tpu.vector_store %arg10[%c0_29, %c2, %c0_30, %c1_31, %c0_32, %c0_33], %28 {strides = array<i32>} : memref<2x6x2x6x2x64xf32, #tpu.memory_space<vmem>>, vector<2x1x1x4x2x64xf32>,
    %29 = vector.extract_strided_slice %10 {offsets = [0, 3, 0, 0], sizes = [2, 1, 8, 64], strides = [1, 1, 1, 1]} : vector<2x8x8x64xf32> to vector<2x1x8x64xf32>
    %30 = vector.shape_cast %29 : vector<2x1x8x64xf32> to vector<2x8x64xf32>
    %31 = vector.shape_cast %30 : vector<2x8x64xf32> to vector<2x4x2x64xf32>
    %c0_34 = arith.constant 0 : index
    %c2_35 = arith.constant 2 : index
    %c1_36 = arith.constant 1 : index
    %c1_37 = arith.constant 1 : index
    %c0_38 = arith.constant 0 : index
    %c0_39 = arith.constant 0 : index
    %32 = vector.load %arg10[%c0_34, %c2_35, %c1_36, %c1_37, %c0_38, %c0_39] : memref<2x6x2x6x2x64xf32, #tpu.memory_space<vmem>>, vector<2x1x1x4x2x64xf32>
    %33 = vector.shape_cast %32 : vector<2x1x1x4x2x64xf32> to vector<2x4x2x64xf32>
    %34 = vector.shape_cast %31 : vector<2x4x2x64xf32> to vector<2x1x1x4x2x64xf32>
    tpu.vector_store %arg10[%c0_34, %c2_35, %c1_36, %c1_37, %c0_38, %c0_39], %34 {strides = array<i32>} : memref<2x6x2x6x2x64xf32, #tpu.memory_space<vmem>>, vector<2x1x1x4x2x64xf32>,
    %35 = vector.extract_strided_slice %10 {offsets = [0, 4, 0, 0], sizes = [2, 1, 8, 64], strides = [1, 1, 1, 1]} : vector<2x8x8x64xf32> to vector<2x1x8x64xf32>
    %36 = vector.shape_cast %35 : vector<2x1x8x64xf32> to vector<2x8x64xf32>
    %37 = vector.shape_cast %36 : vector<2x8x64xf32> to vector<2x4x2x64xf32>
    %c0_40 = arith.constant 0 : index
    %c3 = arith.constant 3 : index
    %c0_41 = arith.constant 0 : index
    %c1_42 = arith.constant 1 : index
    %c0_43 = arith.constant 0 : index
    %c0_44 = arith.constant 0 : index
    %38 = vector.load %arg10[%c0_40, %c3, %c0_41, %c1_42, %c0_43, %c0_44] : memref<2x6x2x6x2x64xf32, #tpu.memory_space<vmem>>, vector<2x1x1x4x2x64xf32>
    %39 = vector.shape_cast %38 : vector<2x1x1x4x2x64xf32> to vector<2x4x2x64xf32>
    %40 = vector.shape_cast %37 : vector<2x4x2x64xf32> to vector<2x1x1x4x2x64xf32>
    tpu.vector_store %arg10[%c0_40, %c3, %c0_41, %c1_42, %c0_43, %c0_44], %40 {strides = array<i32>} : memref<2x6x2x6x2x64xf32, #tpu.memory_space<vmem>>, vector<2x1x1x4x2x64xf32>,
    %41 = vector.extract_strided_slice %10 {offsets = [0, 5, 0, 0], sizes = [2, 1, 8, 64], strides = [1, 1, 1, 1]} : vector<2x8x8x64xf32> to vector<2x1x8x64xf32>
    %42 = vector.shape_cast %41 : vector<2x1x8x64xf32> to vector<2x8x64xf32>
    %43 = vector.shape_cast %42 : vector<2x8x64xf32> to vector<2x4x2x64xf32>
    %c0_45 = arith.constant 0 : index
    %c3_46 = arith.constant 3 : index
    %c1_47 = arith.constant 1 : index
    %c1_48 = arith.constant 1 : index
    %c0_49 = arith.constant 0 : index
    %c0_50 = arith.constant 0 : index
    %44 = vector.load %arg10[%c0_45, %c3_46, %c1_47, %c1_48, %c0_49, %c0_50] : memref<2x6x2x6x2x64xf32, #tpu.memory_space<vmem>>, vector<2x1x1x4x2x64xf32>
    %45 = vector.shape_cast %44 : vector<2x1x1x4x2x64xf32> to vector<2x4x2x64xf32>
    %46 = vector.shape_cast %43 : vector<2x4x2x64xf32> to vector<2x1x1x4x2x64xf32>
    tpu.vector_store %arg10[%c0_45, %c3_46, %c1_47, %c1_48, %c0_49, %c0_50], %46 {strides = array<i32>} : memref<2x6x2x6x2x64xf32, #tpu.memory_space<vmem>>, vector<2x1x1x4x2x64xf32>,
    %47 = vector.extract_strided_slice %10 {offsets = [0, 6, 0, 0], sizes = [2, 1, 8, 64], strides = [1, 1, 1, 1]} : vector<2x8x8x64xf32> to vector<2x1x8x64xf32>
    %48 = vector.shape_cast %47 : vector<2x1x8x64xf32> to vector<2x8x64xf32>
    %49 = vector.shape_cast %48 : vector<2x8x64xf32> to vector<2x4x2x64xf32>
    %c0_51 = arith.constant 0 : index
    %c4 = arith.constant 4 : index
    %c0_52 = arith.constant 0 : index
    %c1_53 = arith.constant 1 : index
    %c0_54 = arith.constant 0 : index
    %c0_55 = arith.constant 0 : index
    %50 = vector.load %arg10[%c0_51, %c4, %c0_52, %c1_53, %c0_54, %c0_55] : memref<2x6x2x6x2x64xf32, #tpu.memory_space<vmem>>, vector<2x1x1x4x2x64xf32>
    %51 = vector.shape_cast %50 : vector<2x1x1x4x2x64xf32> to vector<2x4x2x64xf32>
    %52 = vector.shape_cast %49 : vector<2x4x2x64xf32> to vector<2x1x1x4x2x64xf32>
    tpu.vector_store %arg10[%c0_51, %c4, %c0_52, %c1_53, %c0_54, %c0_55], %52 {strides = array<i32>} : memref<2x6x2x6x2x64xf32, #tpu.memory_space<vmem>>, vector<2x1x1x4x2x64xf32>,
    %53 = vector.extract_strided_slice %10 {offsets = [0, 7, 0, 0], sizes = [2, 1, 8, 64], strides = [1, 1, 1, 1]} : vector<2x8x8x64xf32> to vector<2x1x8x64xf32>
    %54 = vector.shape_cast %53 : vector<2x1x8x64xf32> to vector<2x8x64xf32>
    %55 = vector.shape_cast %54 : vector<2x8x64xf32> to vector<2x4x2x64xf32>
    %c0_56 = arith.constant 0 : index
    %c4_57 = arith.constant 4 : index
    %c1_58 = arith.constant 1 : index
    %c1_59 = arith.constant 1 : index
    %c0_60 = arith.constant 0 : index
    %c0_61 = arith.constant 0 : index
    %56 = vector.load %arg10[%c0_56, %c4_57, %c1_58, %c1_59, %c0_60, %c0_61] : memref<2x6x2x6x2x64xf32, #tpu.memory_space<vmem>>, vector<2x1x1x4x2x64xf32>
    %57 = vector.shape_cast %56 : vector<2x1x1x4x2x64xf32> to vector<2x4x2x64xf32>
    %58 = vector.shape_cast %55 : vector<2x4x2x64xf32> to vector<2x1x1x4x2x64xf32>
    tpu.vector_store %arg10[%c0_56, %c4_57, %c1_58, %c1_59, %c0_60, %c0_61], %58 {strides = array<i32>} : memref<2x6x2x6x2x64xf32, #tpu.memory_space<vmem>>, vector<2x1x1x4x2x64xf32>,
    %cst_62 = arith.constant 0.000000e+00 : f32
    %59 = vector.broadcast %cst_62 : f32 to vector<32x128xf32>
    %c0_63 = arith.constant 0 : index
    %c0_64 = arith.constant 0 : index
    %c1_65 = arith.constant 1 : index
    %c0_66 = arith.constant 0 : index
    %c1_67 = arith.constant 1 : index
    %c0_68 = arith.constant 0 : index
    %60 = vector.load %arg10[%c0_63, %c0_64, %c1_65, %c0_66, %c1_67, %c0_68] : memref<2x6x2x6x2x64xf32, #tpu.memory_space<vmem>>, vector<2x4x1x4x1x64xf32>
    %61 = vector.shape_cast %60 : vector<2x4x1x4x1x64xf32> to vector<2x4x4x64xf32>
    %62 = vector.shape_cast %61 : vector<2x4x4x64xf32> to vector<32x64xf32>
    %63 = arith.truncf %62 : vector<32x64xf32> to vector<32x64xbf16>
    %c0_69 = arith.constant 0 : index
    %c0_70 = arith.constant 0 : index
    %64 = vector.load %arg3[%c0_69, %c0_70] : memref<1024x128xbf16, #tpu.memory_space<vmem>>, vector<64x128xbf16>
    %cst_71 = arith.constant dense<0.000000e+00> : vector<32x128xf32>
    %65 = tpu.matmul %63, %64, %cst_71 {dimension_numbers = #tpu.dot_dimension_numbers<[1], [0], [0], [1], [0, 0, 1, 1], [], []>} : vector<32x64xbf16>, vector<64x128xbf16>, vector<32x128xf32> -> vector<32x128xf32>
    %66 = arith.addf %59, %65 : vector<32x128xf32>
    %c0_72 = arith.constant 0 : index
    %c0_73 = arith.constant 0 : index
    %c1_74 = arith.constant 1 : index
    %c1_75 = arith.constant 1 : index
    %c0_76 = arith.constant 0 : index
    %c0_77 = arith.constant 0 : index
    %67 = vector.load %arg10[%c0_72, %c0_73, %c1_74, %c1_75, %c0_76, %c0_77] : memref<2x6x2x6x2x64xf32, #tpu.memory_space<vmem>>, vector<2x4x1x4x1x64xf32>
    %68 = vector.shape_cast %67 : vector<2x4x1x4x1x64xf32> to vector<2x4x4x64xf32>
    %69 = vector.shape_cast %68 : vector<2x4x4x64xf32> to vector<32x64xf32>
    %70 = arith.truncf %69 : vector<32x64xf32> to vector<32x64xbf16>
    %c64 = arith.constant 64 : index
    %c0_78 = arith.constant 0 : index
    %71 = vector.load %arg3[%c64, %c0_78] : memref<1024x128xbf16, #tpu.memory_space<vmem>>, vector<64x128xbf16>
    %cst_79 = arith.constant dense<0.000000e+00> : vector<32x128xf32>
    %72 = tpu.matmul %70, %71, %cst_79 {dimension_numbers = #tpu.dot_dimension_numbers<[1], [0], [0], [1], [0, 0, 1, 1], [], []>} : vector<32x64xbf16>, vector<64x128xbf16>, vector<32x128xf32> -> vector<32x128xf32>
    %73 = arith.addf %66, %72 : vector<32x128xf32>
    %c0_80 = arith.constant 0 : index
    %c0_81 = arith.constant 0 : index
    %c1_82 = arith.constant 1 : index
    %c1_83 = arith.constant 1 : index
    %c1_84 = arith.constant 1 : index
    %c0_85 = arith.constant 0 : index
    %74 = vector.load %arg10[%c0_80, %c0_81, %c1_82, %c1_83, %c1_84, %c0_85] : memref<2x6x2x6x2x64xf32, #tpu.memory_space<vmem>>, vector<2x4x1x4x1x64xf32>
    %75 = vector.shape_cast %74 : vector<2x4x1x4x1x64xf32> to vector<2x4x4x64xf32>
    %76 = vector.shape_cast %75 : vector<2x4x4x64xf32> to vector<32x64xf32>
    %77 = arith.truncf %76 : vector<32x64xf32> to vector<32x64xbf16>
    %c128 = arith.constant 128 : index
    %c0_86 = arith.constant 0 : index
    %78 = vector.load %arg3[%c128, %c0_86] : memref<1024x128xbf16, #tpu.memory_space<vmem>>, vector<64x128xbf16>
    %cst_87 = arith.constant dense<0.000000e+00> : vector<32x128xf32>
    %79 = tpu.matmul %77, %78, %cst_87 {dimension_numbers = #tpu.dot_dimension_numbers<[1], [0], [0], [1], [0, 0, 1, 1], [], []>} : vector<32x64xbf16>, vector<64x128xbf16>, vector<32x128xf32> -> vector<32x128xf32>
    %80 = arith.addf %73, %79 : vector<32x128xf32>
    %c0_88 = arith.constant 0 : index
    %c0_89 = arith.constant 0 : index
    %c1_90 = arith.constant 1 : index
    %c2_91 = arith.constant 2 : index
    %c0_92 = arith.constant 0 : index
    %c0_93 = arith.constant 0 : index
    %81 = vector.load %arg10[%c0_88, %c0_89, %c1_90, %c2_91, %c0_92, %c0_93] : memref<2x6x2x6x2x64xf32, #tpu.memory_space<vmem>>, vector<2x4x1x4x1x64xf32>
    %82 = vector.shape_cast %81 : vector<2x4x1x4x1x64xf32> to vector<2x4x4x64xf32>
    %83 = vector.shape_cast %82 : vector<2x4x4x64xf32> to vector<32x64xf32>
    %84 = arith.truncf %83 : vector<32x64xf32> to vector<32x64xbf16>
    %c192 = arith.constant 192 : index
    %c0_94 = arith.constant 0 : index
    %85 = vector.load %arg3[%c192, %c0_94] : memref<1024x128xbf16, #tpu.memory_space<vmem>>, vector<64x128xbf16>
    %cst_95 = arith.constant dense<0.000000e+00> : vector<32x128xf32>
    %86 = tpu.matmul %84, %85, %cst_95 {dimension_numbers = #tpu.dot_dimension_numbers<[1], [0], [0], [1], [0, 0, 1, 1], [], []>} : vector<32x64xbf16>, vector<64x128xbf16>, vector<32x128xf32> -> vector<32x128xf32>
    %87 = arith.addf %80, %86 : vector<32x128xf32>
    %c0_96 = arith.constant 0 : index
    %c1_97 = arith.constant 1 : index
    %c0_98 = arith.constant 0 : index
    %c0_99 = arith.constant 0 : index
    %c1_100 = arith.constant 1 : index
    %c0_101 = arith.constant 0 : index
    %88 = vector.load %arg10[%c0_96, %c1_97, %c0_98, %c0_99, %c1_100, %c0_101] : memref<2x6x2x6x2x64xf32, #tpu.memory_space<vmem>>, vector<2x4x1x4x1x64xf32>
    %89 = vector.shape_cast %88 : vector<2x4x1x4x1x64xf32> to vector<2x4x4x64xf32>
    %90 = vector.shape_cast %89 : vector<2x4x4x64xf32> to vector<32x64xf32>
    %91 = arith.truncf %90 : vector<32x64xf32> to vector<32x64xbf16>
    %c256 = arith.constant 256 : index
    %c0_102 = arith.constant 0 : index
    %92 = vector.load %arg3[%c256, %c0_102] : memref<1024x128xbf16, #tpu.memory_space<vmem>>, vector<64x128xbf16>
    %cst_103 = arith.constant dense<0.000000e+00> : vector<32x128xf32>
    %93 = tpu.matmul %91, %92, %cst_103 {dimension_numbers = #tpu.dot_dimension_numbers<[1], [0], [0], [1], [0, 0, 1, 1], [], []>} : vector<32x64xbf16>, vector<64x128xbf16>, vector<32x128xf32> -> vector<32x128xf32>
    %94 = arith.addf %87, %93 : vector<32x128xf32>
    %c0_104 = arith.constant 0 : index
    %c1_105 = arith.constant 1 : index
    %c0_106 = arith.constant 0 : index
    %c1_107 = arith.constant 1 : index
    %c0_108 = arith.constant 0 : index
    %c0_109 = arith.constant 0 : index
    %95 = vector.load %arg10[%c0_104, %c1_105, %c0_106, %c1_107, %c0_108, %c0_109] : memref<2x6x2x6x2x64xf32, #tpu.memory_space<vmem>>, vector<2x4x1x4x1x64xf32>
    %96 = vector.shape_cast %95 : vector<2x4x1x4x1x64xf32> to vector<2x4x4x64xf32>
    %97 = vector.shape_cast %96 : vector<2x4x4x64xf32> to vector<32x64xf32>
    %98 = arith.truncf %97 : vector<32x64xf32> to vector<32x64xbf16>
    %c320 = arith.constant 320 : index
    %c0_110 = arith.constant 0 : index
    %99 = vector.load %arg3[%c320, %c0_110] : memref<1024x128xbf16, #tpu.memory_space<vmem>>, vector<64x128xbf16>
    %cst_111 = arith.constant dense<0.000000e+00> : vector<32x128xf32>
    %100 = tpu.matmul %98, %99, %cst_111 {dimension_numbers = #tpu.dot_dimension_numbers<[1], [0], [0], [1], [0, 0, 1, 1], [], []>} : vector<32x64xbf16>, vector<64x128xbf16>, vector<32x128xf32> -> vector<32x128xf32>
    %101 = arith.addf %94, %100 : vector<32x128xf32>
    %c0_112 = arith.constant 0 : index
    %c1_113 = arith.constant 1 : index
    %c0_114 = arith.constant 0 : index
    %c1_115 = arith.constant 1 : index
    %c1_116 = arith.constant 1 : index
    %c0_117 = arith.constant 0 : index
    %102 = vector.load %arg10[%c0_112, %c1_113, %c0_114, %c1_115, %c1_116, %c0_117] : memref<2x6x2x6x2x64xf32, #tpu.memory_space<vmem>>, vector<2x4x1x4x1x64xf32>
    %103 = vector.shape_cast %102 : vector<2x4x1x4x1x64xf32> to vector<2x4x4x64xf32>
    %104 = vector.shape_cast %103 : vector<2x4x4x64xf32> to vector<32x64xf32>
    %105 = arith.truncf %104 : vector<32x64xf32> to vector<32x64xbf16>
    %c384 = arith.constant 384 : index
    %c0_118 = arith.constant 0 : index
    %106 = vector.load %arg3[%c384, %c0_118] : memref<1024x128xbf16, #tpu.memory_space<vmem>>, vector<64x128xbf16>
    %cst_119 = arith.constant dense<0.000000e+00> : vector<32x128xf32>
    %107 = tpu.matmul %105, %106, %cst_119 {dimension_numbers = #tpu.dot_dimension_numbers<[1], [0], [0], [1], [0, 0, 1, 1], [], []>} : vector<32x64xbf16>, vector<64x128xbf16>, vector<32x128xf32> -> vector<32x128xf32>
    %108 = arith.addf %101, %107 : vector<32x128xf32>
    %c0_120 = arith.constant 0 : index
    %c1_121 = arith.constant 1 : index
    %c0_122 = arith.constant 0 : index
    %c2_123 = arith.constant 2 : index
    %c0_124 = arith.constant 0 : index
    %c0_125 = arith.constant 0 : index
    %109 = vector.load %arg10[%c0_120, %c1_121, %c0_122, %c2_123, %c0_124, %c0_125] : memref<2x6x2x6x2x64xf32, #tpu.memory_space<vmem>>, vector<2x4x1x4x1x64xf32>
    %110 = vector.shape_cast %109 : vector<2x4x1x4x1x64xf32> to vector<2x4x4x64xf32>
    %111 = vector.shape_cast %110 : vector<2x4x4x64xf32> to vector<32x64xf32>
    %112 = arith.truncf %111 : vector<32x64xf32> to vector<32x64xbf16>
    %c448 = arith.constant 448 : index
    %c0_126 = arith.constant 0 : index
    %113 = vector.load %arg3[%c448, %c0_126] : memref<1024x128xbf16, #tpu.memory_space<vmem>>, vector<64x128xbf16>
    %cst_127 = arith.constant dense<0.000000e+00> : vector<32x128xf32>
    %114 = tpu.matmul %112, %113, %cst_127 {dimension_numbers = #tpu.dot_dimension_numbers<[1], [0], [0], [1], [0, 0, 1, 1], [], []>} : vector<32x64xbf16>, vector<64x128xbf16>, vector<32x128xf32> -> vector<32x128xf32>
    %115 = arith.addf %108, %114 : vector<32x128xf32>
    %c0_128 = arith.constant 0 : index
    %c1_129 = arith.constant 1 : index
    %c1_130 = arith.constant 1 : index
    %c0_131 = arith.constant 0 : index
    %c1_132 = arith.constant 1 : index
    %c0_133 = arith.constant 0 : index
    %116 = vector.load %arg10[%c0_128, %c1_129, %c1_130, %c0_131, %c1_132, %c0_133] : memref<2x6x2x6x2x64xf32, #tpu.memory_space<vmem>>, vector<2x4x1x4x1x64xf32>
    %117 = vector.shape_cast %116 : vector<2x4x1x4x1x64xf32> to vector<2x4x4x64xf32>
    %118 = vector.shape_cast %117 : vector<2x4x4x64xf32> to vector<32x64xf32>
    %119 = arith.truncf %118 : vector<32x64xf32> to vector<32x64xbf16>
    %c512 = arith.constant 512 : index
    %c0_134 = arith.constant 0 : index
    %120 = vector.load %arg3[%c512, %c0_134] : memref<1024x128xbf16, #tpu.memory_space<vmem>>, vector<64x128xbf16>
    %cst_135 = arith.constant dense<0.000000e+00> : vector<32x128xf32>
    %121 = tpu.matmul %119, %120, %cst_135 {dimension_numbers = #tpu.dot_dimension_numbers<[1], [0], [0], [1], [0, 0, 1, 1], [], []>} : vector<32x64xbf16>, vector<64x128xbf16>, vector<32x128xf32> -> vector<32x128xf32>
    %122 = arith.addf %115, %121 : vector<32x128xf32>
    %c0_136 = arith.constant 0 : index
    %c1_137 = arith.constant 1 : index
    %c1_138 = arith.constant 1 : index
    %c1_139 = arith.constant 1 : index
    %c0_140 = arith.constant 0 : index
    %c0_141 = arith.constant 0 : index
    %123 = vector.load %arg10[%c0_136, %c1_137, %c1_138, %c1_139, %c0_140, %c0_141] : memref<2x6x2x6x2x64xf32, #tpu.memory_space<vmem>>, vector<2x4x1x4x1x64xf32>
    %124 = vector.shape_cast %123 : vector<2x4x1x4x1x64xf32> to vector<2x4x4x64xf32>
    %125 = vector.shape_cast %124 : vector<2x4x4x64xf32> to vector<32x64xf32>
    %126 = arith.truncf %125 : vector<32x64xf32> to vector<32x64xbf16>
    %c576 = arith.constant 576 : index
    %c0_142 = arith.constant 0 : index
    %127 = vector.load %arg3[%c576, %c0_142] : memref<1024x128xbf16, #tpu.memory_space<vmem>>, vector<64x128xbf16>
    %cst_143 = arith.constant dense<0.000000e+00> : vector<32x128xf32>
    %128 = tpu.matmul %126, %127, %cst_143 {dimension_numbers = #tpu.dot_dimension_numbers<[1], [0], [0], [1], [0, 0, 1, 1], [], []>} : vector<32x64xbf16>, vector<64x128xbf16>, vector<32x128xf32> -> vector<32x128xf32>
    %129 = arith.addf %122, %128 : vector<32x128xf32>
    %c0_144 = arith.constant 0 : index
    %c1_145 = arith.constant 1 : index
    %c1_146 = arith.constant 1 : index
    %c1_147 = arith.constant 1 : index
    %c1_148 = arith.constant 1 : index
    %c0_149 = arith.constant 0 : index
    %130 = vector.load %arg10[%c0_144, %c1_145, %c1_146, %c1_147, %c1_148, %c0_149] : memref<2x6x2x6x2x64xf32, #tpu.memory_space<vmem>>, vector<2x4x1x4x1x64xf32>
    %131 = vector.shape_cast %130 : vector<2x4x1x4x1x64xf32> to vector<2x4x4x64xf32>
    %132 = vector.shape_cast %131 : vector<2x4x4x64xf32> to vector<32x64xf32>
    %133 = arith.truncf %132 : vector<32x64xf32> to vector<32x64xbf16>
    %c640 = arith.constant 640 : index
    %c0_150 = arith.constant 0 : index
    %134 = vector.load %arg3[%c640, %c0_150] : memref<1024x128xbf16, #tpu.memory_space<vmem>>, vector<64x128xbf16>
    %cst_151 = arith.constant dense<0.000000e+00> : vector<32x128xf32>
    %135 = tpu.matmul %133, %134, %cst_151 {dimension_numbers = #tpu.dot_dimension_numbers<[1], [0], [0], [1], [0, 0, 1, 1], [], []>} : vector<32x64xbf16>, vector<64x128xbf16>, vector<32x128xf32> -> vector<32x128xf32>
    %136 = arith.addf %129, %135 : vector<32x128xf32>
    %c0_152 = arith.constant 0 : index
    %c1_153 = arith.constant 1 : index
    %c1_154 = arith.constant 1 : index
    %c2_155 = arith.constant 2 : index
    %c0_156 = arith.constant 0 : index
    %c0_157 = arith.constant 0 : index
    %137 = vector.load %arg10[%c0_152, %c1_153, %c1_154, %c2_155, %c0_156, %c0_157] : memref<2x6x2x6x2x64xf32, #tpu.memory_space<vmem>>, vector<2x4x1x4x1x64xf32>
    %138 = vector.shape_cast %137 : vector<2x4x1x4x1x64xf32> to vector<2x4x4x64xf32>
    %139 = vector.shape_cast %138 : vector<2x4x4x64xf32> to vector<32x64xf32>
    %140 = arith.truncf %139 : vector<32x64xf32> to vector<32x64xbf16>
    %c704 = arith.constant 704 : index
    %c0_158 = arith.constant 0 : index
    %141 = vector.load %arg3[%c704, %c0_158] : memref<1024x128xbf16, #tpu.memory_space<vmem>>, vector<64x128xbf16>
    %cst_159 = arith.constant dense<0.000000e+00> : vector<32x128xf32>
    %142 = tpu.matmul %140, %141, %cst_159 {dimension_numbers = #tpu.dot_dimension_numbers<[1], [0], [0], [1], [0, 0, 1, 1], [], []>} : vector<32x64xbf16>, vector<64x128xbf16>, vector<32x128xf32> -> vector<32x128xf32>
    %143 = arith.addf %136, %142 : vector<32x128xf32>
    %c0_160 = arith.constant 0 : index
    %c2_161 = arith.constant 2 : index
    %c0_162 = arith.constant 0 : index
    %c0_163 = arith.constant 0 : index
    %c1_164 = arith.constant 1 : index
    %c0_165 = arith.constant 0 : index
    %144 = vector.load %arg10[%c0_160, %c2_161, %c0_162, %c0_163, %c1_164, %c0_165] : memref<2x6x2x6x2x64xf32, #tpu.memory_space<vmem>>, vector<2x4x1x4x1x64xf32>
    %145 = vector.shape_cast %144 : vector<2x4x1x4x1x64xf32> to vector<2x4x4x64xf32>
    %146 = vector.shape_cast %145 : vector<2x4x4x64xf32> to vector<32x64xf32>
    %147 = arith.truncf %146 : vector<32x64xf32> to vector<32x64xbf16>
    %c768 = arith.constant 768 : index
    %c0_166 = arith.constant 0 : index
    %148 = vector.load %arg3[%c768, %c0_166] : memref<1024x128xbf16, #tpu.memory_space<vmem>>, vector<64x128xbf16>
    %cst_167 = arith.constant dense<0.000000e+00> : vector<32x128xf32>
    %149 = tpu.matmul %147, %148, %cst_167 {dimension_numbers = #tpu.dot_dimension_numbers<[1], [0], [0], [1], [0, 0, 1, 1], [], []>} : vector<32x64xbf16>, vector<64x128xbf16>, vector<32x128xf32> -> vector<32x128xf32>
    %150 = arith.addf %143, %149 : vector<32x128xf32>
    %c0_168 = arith.constant 0 : index
    %c2_169 = arith.constant 2 : index
    %c0_170 = arith.constant 0 : index
    %c1_171 = arith.constant 1 : index
    %c0_172 = arith.constant 0 : index
    %c0_173 = arith.constant 0 : index
    %151 = vector.load %arg10[%c0_168, %c2_169, %c0_170, %c1_171, %c0_172, %c0_173] : memref<2x6x2x6x2x64xf32, #tpu.memory_space<vmem>>, vector<2x4x1x4x1x64xf32>
    %152 = vector.shape_cast %151 : vector<2x4x1x4x1x64xf32> to vector<2x4x4x64xf32>
    %153 = vector.shape_cast %152 : vector<2x4x4x64xf32> to vector<32x64xf32>
    %154 = arith.truncf %153 : vector<32x64xf32> to vector<32x64xbf16>
    %c832 = arith.constant 832 : index
    %c0_174 = arith.constant 0 : index
    %155 = vector.load %arg3[%c832, %c0_174] : memref<1024x128xbf16, #tpu.memory_space<vmem>>, vector<64x128xbf16>
    %cst_175 = arith.constant dense<0.000000e+00> : vector<32x128xf32>
    %156 = tpu.matmul %154, %155, %cst_175 {dimension_numbers = #tpu.dot_dimension_numbers<[1], [0], [0], [1], [0, 0, 1, 1], [], []>} : vector<32x64xbf16>, vector<64x128xbf16>, vector<32x128xf32> -> vector<32x128xf32>
    %157 = arith.addf %150, %156 : vector<32x128xf32>
    %c0_176 = arith.constant 0 : index
    %c2_177 = arith.constant 2 : index
    %c0_178 = arith.constant 0 : index
    %c1_179 = arith.constant 1 : index
    %c1_180 = arith.constant 1 : index
    %c0_181 = arith.constant 0 : index
    %158 = vector.load %arg10[%c0_176, %c2_177, %c0_178, %c1_179, %c1_180, %c0_181] : memref<2x6x2x6x2x64xf32, #tpu.memory_space<vmem>>, vector<2x4x1x4x1x64xf32>
    %159 = vector.shape_cast %158 : vector<2x4x1x4x1x64xf32> to vector<2x4x4x64xf32>
    %160 = vector.shape_cast %159 : vector<2x4x4x64xf32> to vector<32x64xf32>
    %161 = arith.truncf %160 : vector<32x64xf32> to vector<32x64xbf16>
    %c896 = arith.constant 896 : index
    %c0_182 = arith.constant 0 : index
    %162 = vector.load %arg3[%c896, %c0_182] : memref<1024x128xbf16, #tpu.memory_space<vmem>>, vector<64x128xbf16>
    %cst_183 = arith.constant dense<0.000000e+00> : vector<32x128xf32>
    %163 = tpu.matmul %161, %162, %cst_183 {dimension_numbers = #tpu.dot_dimension_numbers<[1], [0], [0], [1], [0, 0, 1, 1], [], []>} : vector<32x64xbf16>, vector<64x128xbf16>, vector<32x128xf32> -> vector<32x128xf32>
    %164 = arith.addf %157, %163 : vector<32x128xf32>
    %c0_184 = arith.constant 0 : index
    %c2_185 = arith.constant 2 : index
    %c0_186 = arith.constant 0 : index
    %c2_187 = arith.constant 2 : index
    %c0_188 = arith.constant 0 : index
    %c0_189 = arith.constant 0 : index
    %165 = vector.load %arg10[%c0_184, %c2_185, %c0_186, %c2_187, %c0_188, %c0_189] : memref<2x6x2x6x2x64xf32, #tpu.memory_space<vmem>>, vector<2x4x1x4x1x64xf32>
    %166 = vector.shape_cast %165 : vector<2x4x1x4x1x64xf32> to vector<2x4x4x64xf32>
    %167 = vector.shape_cast %166 : vector<2x4x4x64xf32> to vector<32x64xf32>
    %168 = arith.truncf %167 : vector<32x64xf32> to vector<32x64xbf16>
    %c960 = arith.constant 960 : index
    %c0_190 = arith.constant 0 : index
    %169 = vector.load %arg3[%c960, %c0_190] : memref<1024x128xbf16, #tpu.memory_space<vmem>>, vector<64x128xbf16>
    %cst_191 = arith.constant dense<0.000000e+00> : vector<32x128xf32>
    %170 = tpu.matmul %168, %169, %cst_191 {dimension_numbers = #tpu.dot_dimension_numbers<[1], [0], [0], [1], [0, 0, 1, 1], [], []>} : vector<32x64xbf16>, vector<64x128xbf16>, vector<32x128xf32> -> vector<32x128xf32>
    %171 = arith.addf %164, %170 : vector<32x128xf32>
    %c0_192 = arith.constant 0 : index
    %c0_193 = arith.constant 0 : index
    %172 = vector.load %arg5[%c0_192, %c0_193] : memref<1x128xf32, #tpu.memory_space<vmem>>, vector<1x128xf32>
    %c0_194 = arith.constant 0 : index
    %c0_195 = arith.constant 0 : index
    %173 = vector.load %arg6[%c0_194, %c0_195] : memref<1x128xf32, #tpu.memory_space<vmem>>, vector<1x128xf32>
    %cst_196 = arith.constant dense<0.000000e+00> : vector<128xf32>
    %174 = vector.multi_reduction <add>, %171, %cst_196 [0] : vector<32x128xf32> to vector<128xf32>
    %175 = vector.shape_cast %174 : vector<128xf32> to vector<1x128xf32>
    %cst_197 = arith.constant 3.125000e-02 : f32
    %176 = vector.broadcast %cst_197 : f32 to vector<1x128xf32>
    %177 = arith.mulf %175, %176 : vector<1x128xf32>
    %178 = arith.mulf %171, %171 : vector<32x128xf32>
    %cst_198 = arith.constant dense<0.000000e+00> : vector<128xf32>
    %179 = vector.multi_reduction <add>, %178, %cst_198 [0] : vector<32x128xf32> to vector<128xf32>
    %180 = vector.shape_cast %179 : vector<128xf32> to vector<1x128xf32>
    %cst_199 = arith.constant 3.125000e-02 : f32
    %181 = vector.broadcast %cst_199 : f32 to vector<1x128xf32>
    %182 = arith.mulf %180, %181 : vector<1x128xf32>
    %183 = arith.mulf %177, %177 : vector<1x128xf32>
    %184 = arith.subf %182, %183 : vector<1x128xf32>
    %cst_200 = arith.constant 9.99999974E-6 : f32
    %185 = vector.broadcast %cst_200 : f32 to vector<1x128xf32>
    %186 = arith.addf %184, %185 : vector<1x128xf32>
    %187 = math.rsqrt %186 : vector<1x128xf32>
    %188 = arith.mulf %172, %187 : vector<1x128xf32>
    %189 = arith.mulf %177, %188 : vector<1x128xf32>
    %190 = arith.subf %173, %189 : vector<1x128xf32>
    %191 = vector.broadcast %188 : vector<1x128xf32> to vector<32x128xf32>
    %192 = arith.mulf %171, %191 : vector<32x128xf32>
    %193 = vector.broadcast %190 : vector<1x128xf32> to vector<32x128xf32>
    %194 = arith.addf %192, %193 : vector<32x128xf32>
    %cst_201 = arith.constant 1.000000e-01 : f32
    %195 = vector.broadcast %cst_201 : f32 to vector<32x128xf32>
    %196 = arith.mulf %195, %194 : vector<32x128xf32>
    %197 = arith.maximumf %194, %196 : vector<32x128xf32>
    %198 = vector.shape_cast %197 : vector<32x128xf32> to vector<2x4x4x128xf32>
    %199 = vector.extract_strided_slice %198 {offsets = [0, 0, 0, 0], sizes = [2, 1, 4, 128], strides = [1, 1, 1, 1]} : vector<2x4x4x128xf32> to vector<2x1x4x128xf32>
    %200 = vector.shape_cast %199 : vector<2x1x4x128xf32> to vector<2x4x128xf32>
    %201 = vector.shape_cast %200 : vector<2x4x128xf32> to vector<2x2x2x128xf32>
    %c0_202 = arith.constant 0 : index
    %c1_203 = arith.constant 1 : index
    %c0_204 = arith.constant 0 : index
    %c1_205 = arith.constant 1 : index
    %c0_206 = arith.constant 0 : index
    %c0_207 = arith.constant 0 : index
    %202 = vector.load %arg11[%c0_202, %c1_203, %c0_204, %c1_205, %c0_206, %c0_207] : memref<2x4x2x4x2x128xf32, #tpu.memory_space<vmem>>, vector<2x1x1x2x2x128xf32>
    %203 = vector.shape_cast %202 : vector<2x1x1x2x2x128xf32> to vector<2x2x2x128xf32>
    %204 = vector.shape_cast %201 : vector<2x2x2x128xf32> to vector<2x1x1x2x2x128xf32>
    tpu.vector_store %arg11[%c0_202, %c1_203, %c0_204, %c1_205, %c0_206, %c0_207], %204 {strides = array<i32>} : memref<2x4x2x4x2x128xf32, #tpu.memory_space<vmem>>, vector<2x1x1x2x2x128xf32>,
    %205 = vector.extract_strided_slice %198 {offsets = [0, 1, 0, 0], sizes = [2, 1, 4, 128], strides = [1, 1, 1, 1]} : vector<2x4x4x128xf32> to vector<2x1x4x128xf32>
    %206 = vector.shape_cast %205 : vector<2x1x4x128xf32> to vector<2x4x128xf32>
    %207 = vector.shape_cast %206 : vector<2x4x128xf32> to vector<2x2x2x128xf32>
    %c0_208 = arith.constant 0 : index
    %c1_209 = arith.constant 1 : index
    %c1_210 = arith.constant 1 : index
    %c1_211 = arith.constant 1 : index
    %c0_212 = arith.constant 0 : index
    %c0_213 = arith.constant 0 : index
    %208 = vector.load %arg11[%c0_208, %c1_209, %c1_210, %c1_211, %c0_212, %c0_213] : memref<2x4x2x4x2x128xf32, #tpu.memory_space<vmem>>, vector<2x1x1x2x2x128xf32>
    %209 = vector.shape_cast %208 : vector<2x1x1x2x2x128xf32> to vector<2x2x2x128xf32>
    %210 = vector.shape_cast %207 : vector<2x2x2x128xf32> to vector<2x1x1x2x2x128xf32>
    tpu.vector_store %arg11[%c0_208, %c1_209, %c1_210, %c1_211, %c0_212, %c0_213], %210 {strides = array<i32>} : memref<2x4x2x4x2x128xf32, #tpu.memory_space<vmem>>, vector<2x1x1x2x2x128xf32>,
    %211 = vector.extract_strided_slice %198 {offsets = [0, 2, 0, 0], sizes = [2, 1, 4, 128], strides = [1, 1, 1, 1]} : vector<2x4x4x128xf32> to vector<2x1x4x128xf32>
    %212 = vector.shape_cast %211 : vector<2x1x4x128xf32> to vector<2x4x128xf32>
    %213 = vector.shape_cast %212 : vector<2x4x128xf32> to vector<2x2x2x128xf32>
    %c0_214 = arith.constant 0 : index
    %c2_215 = arith.constant 2 : index
    %c0_216 = arith.constant 0 : index
    %c1_217 = arith.constant 1 : index
    %c0_218 = arith.constant 0 : index
    %c0_219 = arith.constant 0 : index
    %214 = vector.load %arg11[%c0_214, %c2_215, %c0_216, %c1_217, %c0_218, %c0_219] : memref<2x4x2x4x2x128xf32, #tpu.memory_space<vmem>>, vector<2x1x1x2x2x128xf32>
    %215 = vector.shape_cast %214 : vector<2x1x1x2x2x128xf32> to vector<2x2x2x128xf32>
    %216 = vector.shape_cast %213 : vector<2x2x2x128xf32> to vector<2x1x1x2x2x128xf32>
    tpu.vector_store %arg11[%c0_214, %c2_215, %c0_216, %c1_217, %c0_218, %c0_219], %216 {strides = array<i32>} : memref<2x4x2x4x2x128xf32, #tpu.memory_space<vmem>>, vector<2x1x1x2x2x128xf32>,
    %217 = vector.extract_strided_slice %198 {offsets = [0, 3, 0, 0], sizes = [2, 1, 4, 128], strides = [1, 1, 1, 1]} : vector<2x4x4x128xf32> to vector<2x1x4x128xf32>
    %218 = vector.shape_cast %217 : vector<2x1x4x128xf32> to vector<2x4x128xf32>
    %219 = vector.shape_cast %218 : vector<2x4x128xf32> to vector<2x2x2x128xf32>
    %c0_220 = arith.constant 0 : index
    %c2_221 = arith.constant 2 : index
    %c1_222 = arith.constant 1 : index
    %c1_223 = arith.constant 1 : index
    %c0_224 = arith.constant 0 : index
    %c0_225 = arith.constant 0 : index
    %220 = vector.load %arg11[%c0_220, %c2_221, %c1_222, %c1_223, %c0_224, %c0_225] : memref<2x4x2x4x2x128xf32, #tpu.memory_space<vmem>>, vector<2x1x1x2x2x128xf32>
    %221 = vector.shape_cast %220 : vector<2x1x1x2x2x128xf32> to vector<2x2x2x128xf32>
    %222 = vector.shape_cast %219 : vector<2x2x2x128xf32> to vector<2x1x1x2x2x128xf32>
    tpu.vector_store %arg11[%c0_220, %c2_221, %c1_222, %c1_223, %c0_224, %c0_225], %222 {strides = array<i32>} : memref<2x4x2x4x2x128xf32, #tpu.memory_space<vmem>>, vector<2x1x1x2x2x128xf32>,
    %cst_226 = arith.constant 0.000000e+00 : f32
    %223 = vector.broadcast %cst_226 : f32 to vector<8x256xf32>
    %c0_227 = arith.constant 0 : index
    %c0_228 = arith.constant 0 : index
    %c1_229 = arith.constant 1 : index
    %c0_230 = arith.constant 0 : index
    %c1_231 = arith.constant 1 : index
    %c0_232 = arith.constant 0 : index
    %224 = vector.load %arg11[%c0_227, %c0_228, %c1_229, %c0_230, %c1_231, %c0_232] : memref<2x4x2x4x2x128xf32, #tpu.memory_space<vmem>>, vector<2x2x1x2x1x128xf32>
    %225 = vector.shape_cast %224 : vector<2x2x1x2x1x128xf32> to vector<2x2x2x128xf32>
    %226 = vector.shape_cast %225 : vector<2x2x2x128xf32> to vector<8x128xf32>
    %227 = arith.truncf %226 : vector<8x128xf32> to vector<8x128xbf16>
    %c0_233 = arith.constant 0 : index
    %c0_234 = arith.constant 0 : index
    %228 = vector.load %arg4[%c0_233, %c0_234] : memref<2048x256xbf16, #tpu.memory_space<vmem>>, vector<128x256xbf16>
    %cst_235 = arith.constant dense<0.000000e+00> : vector<8x256xf32>
    %229 = tpu.matmul %227, %228, %cst_235 {dimension_numbers = #tpu.dot_dimension_numbers<[1], [0], [0], [1], [0, 0, 1, 1], [], []>} : vector<8x128xbf16>, vector<128x256xbf16>, vector<8x256xf32> -> vector<8x256xf32>
    %230 = arith.addf %223, %229 : vector<8x256xf32>
    %c0_236 = arith.constant 0 : index
    %c0_237 = arith.constant 0 : index
    %c1_238 = arith.constant 1 : index
    %c1_239 = arith.constant 1 : index
    %c0_240 = arith.constant 0 : index
    %c0_241 = arith.constant 0 : index
    %231 = vector.load %arg11[%c0_236, %c0_237, %c1_238, %c1_239, %c0_240, %c0_241] : memref<2x4x2x4x2x128xf32, #tpu.memory_space<vmem>>, vector<2x2x1x2x1x128xf32>
    %232 = vector.shape_cast %231 : vector<2x2x1x2x1x128xf32> to vector<2x2x2x128xf32>
    %233 = vector.shape_cast %232 : vector<2x2x2x128xf32> to vector<8x128xf32>
    %234 = arith.truncf %233 : vector<8x128xf32> to vector<8x128xbf16>
    %c128_242 = arith.constant 128 : index
    %c0_243 = arith.constant 0 : index
    %235 = vector.load %arg4[%c128_242, %c0_243] : memref<2048x256xbf16, #tpu.memory_space<vmem>>, vector<128x256xbf16>
    %cst_244 = arith.constant dense<0.000000e+00> : vector<8x256xf32>
    %236 = tpu.matmul %234, %235, %cst_244 {dimension_numbers = #tpu.dot_dimension_numbers<[1], [0], [0], [1], [0, 0, 1, 1], [], []>} : vector<8x128xbf16>, vector<128x256xbf16>, vector<8x256xf32> -> vector<8x256xf32>
    %237 = arith.addf %230, %236 : vector<8x256xf32>
    %c0_245 = arith.constant 0 : index
    %c0_246 = arith.constant 0 : index
    %c1_247 = arith.constant 1 : index
    %c1_248 = arith.constant 1 : index
    %c1_249 = arith.constant 1 : index
    %c0_250 = arith.constant 0 : index
    %238 = vector.load %arg11[%c0_245, %c0_246, %c1_247, %c1_248, %c1_249, %c0_250] : memref<2x4x2x4x2x128xf32, #tpu.memory_space<vmem>>, vector<2x2x1x2x1x128xf32>
    %239 = vector.shape_cast %238 : vector<2x2x1x2x1x128xf32> to vector<2x2x2x128xf32>
    %240 = vector.shape_cast %239 : vector<2x2x2x128xf32> to vector<8x128xf32>
    %241 = arith.truncf %240 : vector<8x128xf32> to vector<8x128xbf16>
    %c256_251 = arith.constant 256 : index
    %c0_252 = arith.constant 0 : index
    %242 = vector.load %arg4[%c256_251, %c0_252] : memref<2048x256xbf16, #tpu.memory_space<vmem>>, vector<128x256xbf16>
    %cst_253 = arith.constant dense<0.000000e+00> : vector<8x256xf32>
    %243 = tpu.matmul %241, %242, %cst_253 {dimension_numbers = #tpu.dot_dimension_numbers<[1], [0], [0], [1], [0, 0, 1, 1], [], []>} : vector<8x128xbf16>, vector<128x256xbf16>, vector<8x256xf32> -> vector<8x256xf32>
    %244 = arith.addf %237, %243 : vector<8x256xf32>
    %c0_254 = arith.constant 0 : index
    %c0_255 = arith.constant 0 : index
    %c1_256 = arith.constant 1 : index
    %c2_257 = arith.constant 2 : index
    %c0_258 = arith.constant 0 : index
    %c0_259 = arith.constant 0 : index
    %245 = vector.load %arg11[%c0_254, %c0_255, %c1_256, %c2_257, %c0_258, %c0_259] : memref<2x4x2x4x2x128xf32, #tpu.memory_space<vmem>>, vector<2x2x1x2x1x128xf32>
    %246 = vector.shape_cast %245 : vector<2x2x1x2x1x128xf32> to vector<2x2x2x128xf32>
    %247 = vector.shape_cast %246 : vector<2x2x2x128xf32> to vector<8x128xf32>
    %248 = arith.truncf %247 : vector<8x128xf32> to vector<8x128xbf16>
    %c384_260 = arith.constant 384 : index
    %c0_261 = arith.constant 0 : index
    %249 = vector.load %arg4[%c384_260, %c0_261] : memref<2048x256xbf16, #tpu.memory_space<vmem>>, vector<128x256xbf16>
    %cst_262 = arith.constant dense<0.000000e+00> : vector<8x256xf32>
    %250 = tpu.matmul %248, %249, %cst_262 {dimension_numbers = #tpu.dot_dimension_numbers<[1], [0], [0], [1], [0, 0, 1, 1], [], []>} : vector<8x128xbf16>, vector<128x256xbf16>, vector<8x256xf32> -> vector<8x256xf32>
    %251 = arith.addf %244, %250 : vector<8x256xf32>
    %c0_263 = arith.constant 0 : index
    %c1_264 = arith.constant 1 : index
    %c0_265 = arith.constant 0 : index
    %c0_266 = arith.constant 0 : index
    %c1_267 = arith.constant 1 : index
    %c0_268 = arith.constant 0 : index
    %252 = vector.load %arg11[%c0_263, %c1_264, %c0_265, %c0_266, %c1_267, %c0_268] : memref<2x4x2x4x2x128xf32, #tpu.memory_space<vmem>>, vector<2x2x1x2x1x128xf32>
    %253 = vector.shape_cast %252 : vector<2x2x1x2x1x128xf32> to vector<2x2x2x128xf32>
    %254 = vector.shape_cast %253 : vector<2x2x2x128xf32> to vector<8x128xf32>
    %255 = arith.truncf %254 : vector<8x128xf32> to vector<8x128xbf16>
    %c512_269 = arith.constant 512 : index
    %c0_270 = arith.constant 0 : index
    %256 = vector.load %arg4[%c512_269, %c0_270] : memref<2048x256xbf16, #tpu.memory_space<vmem>>, vector<128x256xbf16>
    %cst_271 = arith.constant dense<0.000000e+00> : vector<8x256xf32>
    %257 = tpu.matmul %255, %256, %cst_271 {dimension_numbers = #tpu.dot_dimension_numbers<[1], [0], [0], [1], [0, 0, 1, 1], [], []>} : vector<8x128xbf16>, vector<128x256xbf16>, vector<8x256xf32> -> vector<8x256xf32>
    %258 = arith.addf %251, %257 : vector<8x256xf32>
    %c0_272 = arith.constant 0 : index
    %c1_273 = arith.constant 1 : index
    %c0_274 = arith.constant 0 : index
    %c1_275 = arith.constant 1 : index
    %c0_276 = arith.constant 0 : index
    %c0_277 = arith.constant 0 : index
    %259 = vector.load %arg11[%c0_272, %c1_273, %c0_274, %c1_275, %c0_276, %c0_277] : memref<2x4x2x4x2x128xf32, #tpu.memory_space<vmem>>, vector<2x2x1x2x1x128xf32>
    %260 = vector.shape_cast %259 : vector<2x2x1x2x1x128xf32> to vector<2x2x2x128xf32>
    %261 = vector.shape_cast %260 : vector<2x2x2x128xf32> to vector<8x128xf32>
    %262 = arith.truncf %261 : vector<8x128xf32> to vector<8x128xbf16>
    %c640_278 = arith.constant 640 : index
    %c0_279 = arith.constant 0 : index
    %263 = vector.load %arg4[%c640_278, %c0_279] : memref<2048x256xbf16, #tpu.memory_space<vmem>>, vector<128x256xbf16>
    %cst_280 = arith.constant dense<0.000000e+00> : vector<8x256xf32>
    %264 = tpu.matmul %262, %263, %cst_280 {dimension_numbers = #tpu.dot_dimension_numbers<[1], [0], [0], [1], [0, 0, 1, 1], [], []>} : vector<8x128xbf16>, vector<128x256xbf16>, vector<8x256xf32> -> vector<8x256xf32>
    %265 = arith.addf %258, %264 : vector<8x256xf32>
    %c0_281 = arith.constant 0 : index
    %c1_282 = arith.constant 1 : index
    %c0_283 = arith.constant 0 : index
    %c1_284 = arith.constant 1 : index
    %c1_285 = arith.constant 1 : index
    %c0_286 = arith.constant 0 : index
    %266 = vector.load %arg11[%c0_281, %c1_282, %c0_283, %c1_284, %c1_285, %c0_286] : memref<2x4x2x4x2x128xf32, #tpu.memory_space<vmem>>, vector<2x2x1x2x1x128xf32>
    %267 = vector.shape_cast %266 : vector<2x2x1x2x1x128xf32> to vector<2x2x2x128xf32>
    %268 = vector.shape_cast %267 : vector<2x2x2x128xf32> to vector<8x128xf32>
    %269 = arith.truncf %268 : vector<8x128xf32> to vector<8x128xbf16>
    %c768_287 = arith.constant 768 : index
    %c0_288 = arith.constant 0 : index
    %270 = vector.load %arg4[%c768_287, %c0_288] : memref<2048x256xbf16, #tpu.memory_space<vmem>>, vector<128x256xbf16>
    %cst_289 = arith.constant dense<0.000000e+00> : vector<8x256xf32>
    %271 = tpu.matmul %269, %270, %cst_289 {dimension_numbers = #tpu.dot_dimension_numbers<[1], [0], [0], [1], [0, 0, 1, 1], [], []>} : vector<8x128xbf16>, vector<128x256xbf16>, vector<8x256xf32> -> vector<8x256xf32>
    %272 = arith.addf %265, %271 : vector<8x256xf32>
    %c0_290 = arith.constant 0 : index
    %c1_291 = arith.constant 1 : index
    %c0_292 = arith.constant 0 : index
    %c2_293 = arith.constant 2 : index
    %c0_294 = arith.constant 0 : index
    %c0_295 = arith.constant 0 : index
    %273 = vector.load %arg11[%c0_290, %c1_291, %c0_292, %c2_293, %c0_294, %c0_295] : memref<2x4x2x4x2x128xf32, #tpu.memory_space<vmem>>, vector<2x2x1x2x1x128xf32>
    %274 = vector.shape_cast %273 : vector<2x2x1x2x1x128xf32> to vector<2x2x2x128xf32>
    %275 = vector.shape_cast %274 : vector<2x2x2x128xf32> to vector<8x128xf32>
    %276 = arith.truncf %275 : vector<8x128xf32> to vector<8x128xbf16>
    %c896_296 = arith.constant 896 : index
    %c0_297 = arith.constant 0 : index
    %277 = vector.load %arg4[%c896_296, %c0_297] : memref<2048x256xbf16, #tpu.memory_space<vmem>>, vector<128x256xbf16>
    %cst_298 = arith.constant dense<0.000000e+00> : vector<8x256xf32>
    %278 = tpu.matmul %276, %277, %cst_298 {dimension_numbers = #tpu.dot_dimension_numbers<[1], [0], [0], [1], [0, 0, 1, 1], [], []>} : vector<8x128xbf16>, vector<128x256xbf16>, vector<8x256xf32> -> vector<8x256xf32>
    %279 = arith.addf %272, %278 : vector<8x256xf32>
    %c0_299 = arith.constant 0 : index
    %c1_300 = arith.constant 1 : index
    %c1_301 = arith.constant 1 : index
    %c0_302 = arith.constant 0 : index
    %c1_303 = arith.constant 1 : index
    %c0_304 = arith.constant 0 : index
    %280 = vector.load %arg11[%c0_299, %c1_300, %c1_301, %c0_302, %c1_303, %c0_304] : memref<2x4x2x4x2x128xf32, #tpu.memory_space<vmem>>, vector<2x2x1x2x1x128xf32>
    %281 = vector.shape_cast %280 : vector<2x2x1x2x1x128xf32> to vector<2x2x2x128xf32>
    %282 = vector.shape_cast %281 : vector<2x2x2x128xf32> to vector<8x128xf32>
    %283 = arith.truncf %282 : vector<8x128xf32> to vector<8x128xbf16>
    %c1024 = arith.constant 1024 : index
    %c0_305 = arith.constant 0 : index
    %284 = vector.load %arg4[%c1024, %c0_305] : memref<2048x256xbf16, #tpu.memory_space<vmem>>, vector<128x256xbf16>
    %cst_306 = arith.constant dense<0.000000e+00> : vector<8x256xf32>
    %285 = tpu.matmul %283, %284, %cst_306 {dimension_numbers = #tpu.dot_dimension_numbers<[1], [0], [0], [1], [0, 0, 1, 1], [], []>} : vector<8x128xbf16>, vector<128x256xbf16>, vector<8x256xf32> -> vector<8x256xf32>
    %286 = arith.addf %279, %285 : vector<8x256xf32>
    %c0_307 = arith.constant 0 : index
    %c1_308 = arith.constant 1 : index
    %c1_309 = arith.constant 1 : index
    %c1_310 = arith.constant 1 : index
    %c0_311 = arith.constant 0 : index
    %c0_312 = arith.constant 0 : index
    %287 = vector.load %arg11[%c0_307, %c1_308, %c1_309, %c1_310, %c0_311, %c0_312] : memref<2x4x2x4x2x128xf32, #tpu.memory_space<vmem>>, vector<2x2x1x2x1x128xf32>
    %288 = vector.shape_cast %287 : vector<2x2x1x2x1x128xf32> to vector<2x2x2x128xf32>
    %289 = vector.shape_cast %288 : vector<2x2x2x128xf32> to vector<8x128xf32>
    %290 = arith.truncf %289 : vector<8x128xf32> to vector<8x128xbf16>
    %c1152 = arith.constant 1152 : index
    %c0_313 = arith.constant 0 : index
    %291 = vector.load %arg4[%c1152, %c0_313] : memref<2048x256xbf16, #tpu.memory_space<vmem>>, vector<128x256xbf16>
    %cst_314 = arith.constant dense<0.000000e+00> : vector<8x256xf32>
    %292 = tpu.matmul %290, %291, %cst_314 {dimension_numbers = #tpu.dot_dimension_numbers<[1], [0], [0], [1], [0, 0, 1, 1], [], []>} : vector<8x128xbf16>, vector<128x256xbf16>, vector<8x256xf32> -> vector<8x256xf32>
    %293 = arith.addf %286, %292 : vector<8x256xf32>
    %c0_315 = arith.constant 0 : index
    %c1_316 = arith.constant 1 : index
    %c1_317 = arith.constant 1 : index
    %c1_318 = arith.constant 1 : index
    %c1_319 = arith.constant 1 : index
    %c0_320 = arith.constant 0 : index
    %294 = vector.load %arg11[%c0_315, %c1_316, %c1_317, %c1_318, %c1_319, %c0_320] : memref<2x4x2x4x2x128xf32, #tpu.memory_space<vmem>>, vector<2x2x1x2x1x128xf32>
    %295 = vector.shape_cast %294 : vector<2x2x1x2x1x128xf32> to vector<2x2x2x128xf32>
    %296 = vector.shape_cast %295 : vector<2x2x2x128xf32> to vector<8x128xf32>
    %297 = arith.truncf %296 : vector<8x128xf32> to vector<8x128xbf16>
    %c1280 = arith.constant 1280 : index
    %c0_321 = arith.constant 0 : index
    %298 = vector.load %arg4[%c1280, %c0_321] : memref<2048x256xbf16, #tpu.memory_space<vmem>>, vector<128x256xbf16>
    %cst_322 = arith.constant dense<0.000000e+00> : vector<8x256xf32>
    %299 = tpu.matmul %297, %298, %cst_322 {dimension_numbers = #tpu.dot_dimension_numbers<[1], [0], [0], [1], [0, 0, 1, 1], [], []>} : vector<8x128xbf16>, vector<128x256xbf16>, vector<8x256xf32> -> vector<8x256xf32>
    %300 = arith.addf %293, %299 : vector<8x256xf32>
    %c0_323 = arith.constant 0 : index
    %c1_324 = arith.constant 1 : index
    %c1_325 = arith.constant 1 : index
    %c2_326 = arith.constant 2 : index
    %c0_327 = arith.constant 0 : index
    %c0_328 = arith.constant 0 : index
    %301 = vector.load %arg11[%c0_323, %c1_324, %c1_325, %c2_326, %c0_327, %c0_328] : memref<2x4x2x4x2x128xf32, #tpu.memory_space<vmem>>, vector<2x2x1x2x1x128xf32>
    %302 = vector.shape_cast %301 : vector<2x2x1x2x1x128xf32> to vector<2x2x2x128xf32>
    %303 = vector.shape_cast %302 : vector<2x2x2x128xf32> to vector<8x128xf32>
    %304 = arith.truncf %303 : vector<8x128xf32> to vector<8x128xbf16>
    %c1408 = arith.constant 1408 : index
    %c0_329 = arith.constant 0 : index
    %305 = vector.load %arg4[%c1408, %c0_329] : memref<2048x256xbf16, #tpu.memory_space<vmem>>, vector<128x256xbf16>
    %cst_330 = arith.constant dense<0.000000e+00> : vector<8x256xf32>
    %306 = tpu.matmul %304, %305, %cst_330 {dimension_numbers = #tpu.dot_dimension_numbers<[1], [0], [0], [1], [0, 0, 1, 1], [], []>} : vector<8x128xbf16>, vector<128x256xbf16>, vector<8x256xf32> -> vector<8x256xf32>
    %307 = arith.addf %300, %306 : vector<8x256xf32>
    %c0_331 = arith.constant 0 : index
    %c2_332 = arith.constant 2 : index
    %c0_333 = arith.constant 0 : index
    %c0_334 = arith.constant 0 : index
    %c1_335 = arith.constant 1 : index
    %c0_336 = arith.constant 0 : index
    %308 = vector.load %arg11[%c0_331, %c2_332, %c0_333, %c0_334, %c1_335, %c0_336] : memref<2x4x2x4x2x128xf32, #tpu.memory_space<vmem>>, vector<2x2x1x2x1x128xf32>
    %309 = vector.shape_cast %308 : vector<2x2x1x2x1x128xf32> to vector<2x2x2x128xf32>
    %310 = vector.shape_cast %309 : vector<2x2x2x128xf32> to vector<8x128xf32>
    %311 = arith.truncf %310 : vector<8x128xf32> to vector<8x128xbf16>
    %c1536 = arith.constant 1536 : index
    %c0_337 = arith.constant 0 : index
    %312 = vector.load %arg4[%c1536, %c0_337] : memref<2048x256xbf16, #tpu.memory_space<vmem>>, vector<128x256xbf16>
    %cst_338 = arith.constant dense<0.000000e+00> : vector<8x256xf32>
    %313 = tpu.matmul %311, %312, %cst_338 {dimension_numbers = #tpu.dot_dimension_numbers<[1], [0], [0], [1], [0, 0, 1, 1], [], []>} : vector<8x128xbf16>, vector<128x256xbf16>, vector<8x256xf32> -> vector<8x256xf32>
    %314 = arith.addf %307, %313 : vector<8x256xf32>
    %c0_339 = arith.constant 0 : index
    %c2_340 = arith.constant 2 : index
    %c0_341 = arith.constant 0 : index
    %c1_342 = arith.constant 1 : index
    %c0_343 = arith.constant 0 : index
    %c0_344 = arith.constant 0 : index
    %315 = vector.load %arg11[%c0_339, %c2_340, %c0_341, %c1_342, %c0_343, %c0_344] : memref<2x4x2x4x2x128xf32, #tpu.memory_space<vmem>>, vector<2x2x1x2x1x128xf32>
    %316 = vector.shape_cast %315 : vector<2x2x1x2x1x128xf32> to vector<2x2x2x128xf32>
    %317 = vector.shape_cast %316 : vector<2x2x2x128xf32> to vector<8x128xf32>
    %318 = arith.truncf %317 : vector<8x128xf32> to vector<8x128xbf16>
    %c1664 = arith.constant 1664 : index
    %c0_345 = arith.constant 0 : index
    %319 = vector.load %arg4[%c1664, %c0_345] : memref<2048x256xbf16, #tpu.memory_space<vmem>>, vector<128x256xbf16>
    %cst_346 = arith.constant dense<0.000000e+00> : vector<8x256xf32>
    %320 = tpu.matmul %318, %319, %cst_346 {dimension_numbers = #tpu.dot_dimension_numbers<[1], [0], [0], [1], [0, 0, 1, 1], [], []>} : vector<8x128xbf16>, vector<128x256xbf16>, vector<8x256xf32> -> vector<8x256xf32>
    %321 = arith.addf %314, %320 : vector<8x256xf32>
    %c0_347 = arith.constant 0 : index
    %c2_348 = arith.constant 2 : index
    %c0_349 = arith.constant 0 : index
    %c1_350 = arith.constant 1 : index
    %c1_351 = arith.constant 1 : index
    %c0_352 = arith.constant 0 : index
    %322 = vector.load %arg11[%c0_347, %c2_348, %c0_349, %c1_350, %c1_351, %c0_352] : memref<2x4x2x4x2x128xf32, #tpu.memory_space<vmem>>, vector<2x2x1x2x1x128xf32>
    %323 = vector.shape_cast %322 : vector<2x2x1x2x1x128xf32> to vector<2x2x2x128xf32>
    %324 = vector.shape_cast %323 : vector<2x2x2x128xf32> to vector<8x128xf32>
    %325 = arith.truncf %324 : vector<8x128xf32> to vector<8x128xbf16>
    %c1792 = arith.constant 1792 : index
    %c0_353 = arith.constant 0 : index
    %326 = vector.load %arg4[%c1792, %c0_353] : memref<2048x256xbf16, #tpu.memory_space<vmem>>, vector<128x256xbf16>
    %cst_354 = arith.constant dense<0.000000e+00> : vector<8x256xf32>
    %327 = tpu.matmul %325, %326, %cst_354 {dimension_numbers = #tpu.dot_dimension_numbers<[1], [0], [0], [1], [0, 0, 1, 1], [], []>} : vector<8x128xbf16>, vector<128x256xbf16>, vector<8x256xf32> -> vector<8x256xf32>
    %328 = arith.addf %321, %327 : vector<8x256xf32>
    %c0_355 = arith.constant 0 : index
    %c2_356 = arith.constant 2 : index
    %c0_357 = arith.constant 0 : index
    %c2_358 = arith.constant 2 : index
    %c0_359 = arith.constant 0 : index
    %c0_360 = arith.constant 0 : index
    %329 = vector.load %arg11[%c0_355, %c2_356, %c0_357, %c2_358, %c0_359, %c0_360] : memref<2x4x2x4x2x128xf32, #tpu.memory_space<vmem>>, vector<2x2x1x2x1x128xf32>
    %330 = vector.shape_cast %329 : vector<2x2x1x2x1x128xf32> to vector<2x2x2x128xf32>
    %331 = vector.shape_cast %330 : vector<2x2x2x128xf32> to vector<8x128xf32>
    %332 = arith.truncf %331 : vector<8x128xf32> to vector<8x128xbf16>
    %c1920 = arith.constant 1920 : index
    %c0_361 = arith.constant 0 : index
    %333 = vector.load %arg4[%c1920, %c0_361] : memref<2048x256xbf16, #tpu.memory_space<vmem>>, vector<128x256xbf16>
    %cst_362 = arith.constant dense<0.000000e+00> : vector<8x256xf32>
    %334 = tpu.matmul %332, %333, %cst_362 {dimension_numbers = #tpu.dot_dimension_numbers<[1], [0], [0], [1], [0, 0, 1, 1], [], []>} : vector<8x128xbf16>, vector<128x256xbf16>, vector<8x256xf32> -> vector<8x256xf32>
    %335 = arith.addf %328, %334 : vector<8x256xf32>
    %c0_363 = arith.constant 0 : index
    %c0_364 = arith.constant 0 : index
    %336 = vector.load %arg7[%c0_363, %c0_364] : memref<1x256xf32, #tpu.memory_space<vmem>>, vector<1x256xf32>
    %c0_365 = arith.constant 0 : index
    %c0_366 = arith.constant 0 : index
    %337 = vector.load %arg8[%c0_365, %c0_366] : memref<1x256xf32, #tpu.memory_space<vmem>>, vector<1x256xf32>
    %cst_367 = arith.constant dense<0.000000e+00> : vector<256xf32>
    %338 = vector.multi_reduction <add>, %335, %cst_367 [0] : vector<8x256xf32> to vector<256xf32>
    %339 = vector.shape_cast %338 : vector<256xf32> to vector<1x256xf32>
    %cst_368 = arith.constant 1.250000e-01 : f32
    %340 = vector.broadcast %cst_368 : f32 to vector<1x256xf32>
    %341 = arith.mulf %339, %340 : vector<1x256xf32>
    %342 = arith.mulf %335, %335 : vector<8x256xf32>
    %cst_369 = arith.constant dense<0.000000e+00> : vector<256xf32>
    %343 = vector.multi_reduction <add>, %342, %cst_369 [0] : vector<8x256xf32> to vector<256xf32>
    %344 = vector.shape_cast %343 : vector<256xf32> to vector<1x256xf32>
    %cst_370 = arith.constant 1.250000e-01 : f32
    %345 = vector.broadcast %cst_370 : f32 to vector<1x256xf32>
    %346 = arith.mulf %344, %345 : vector<1x256xf32>
    %347 = arith.mulf %341, %341 : vector<1x256xf32>
    %348 = arith.subf %346, %347 : vector<1x256xf32>
    %cst_371 = arith.constant 9.99999974E-6 : f32
    %349 = vector.broadcast %cst_371 : f32 to vector<1x256xf32>
    %350 = arith.addf %348, %349 : vector<1x256xf32>
    %351 = math.rsqrt %350 : vector<1x256xf32>
    %352 = arith.mulf %336, %351 : vector<1x256xf32>
    %353 = arith.mulf %341, %352 : vector<1x256xf32>
    %354 = arith.subf %337, %353 : vector<1x256xf32>
    %355 = vector.broadcast %352 : vector<1x256xf32> to vector<8x256xf32>
    %356 = arith.mulf %335, %355 : vector<8x256xf32>
    %357 = vector.broadcast %354 : vector<1x256xf32> to vector<8x256xf32>
    %358 = arith.addf %356, %357 : vector<8x256xf32>
    %cst_372 = arith.constant 1.000000e-01 : f32
    %359 = vector.broadcast %cst_372 : f32 to vector<8x256xf32>
    %360 = arith.mulf %359, %358 : vector<8x256xf32>
    %361 = arith.maximumf %358, %360 : vector<8x256xf32>
    %c0_373 = arith.constant 0 : index
    %c0_374 = arith.constant 0 : index
    %362 = vector.load %arg9[%c0_373, %c0_374] : memref<8x256xf32, #tpu.memory_space<vmem>>, vector<8x256xf32>
    tpu.vector_store %arg9[%c0_373, %c0_374], %361 {strides = array<i32>} : memref<8x256xf32, #tpu.memory_space<vmem>>, vector<8x256xf32>,
    return
  }
  func.func @transform_0(%arg0: i32) -> (i32, i32) {
    %c0_i32 = arith.constant 0 : i32
    %c0_i32_0 = arith.constant 0 : i32
    %c0_i32_1 = arith.constant 0 : i32
    return %c0_i32, %c0_i32_0 : i32, i32
  }
  func.func @transform_1(%arg0: i32) -> (i32, i32) {
    %c0_i32 = arith.constant 0 : i32
    %c0_i32_0 = arith.constant 0 : i32
    %c0_i32_1 = arith.constant 0 : i32
    return %c0_i32, %c0_i32_0 : i32, i32
  }
  func.func @transform_2(%arg0: i32) -> (i32, i32) {
    %c0_i32 = arith.constant 0 : i32
    %c0_i32_0 = arith.constant 0 : i32
    %c0_i32_1 = arith.constant 0 : i32
    return %c0_i32, %c0_i32_0 : i32, i32
  }
  func.func @transform_3(%arg0: i32) -> (i32, i32) {
    %c0_i32 = arith.constant 0 : i32
    %c0_i32_0 = arith.constant 0 : i32
    %c0_i32_1 = arith.constant 0 : i32
    return %c0_i32, %c0_i32_0 : i32, i32
  }
  func.func @transform_4(%arg0: i32) -> (i32, i32) {
    %c0_i32 = arith.constant 0 : i32
    %c0_i32_0 = arith.constant 0 : i32
    %c0_i32_1 = arith.constant 0 : i32
    return %c0_i32, %c0_i32_0 : i32, i32
  }
  func.func @transform_5(%arg0: i32) -> (i32, i32) {
    %c0_i32 = arith.constant 0 : i32
    %c0_i32_0 = arith.constant 0 : i32
    %c0_i32_1 = arith.constant 0 : i32
    return %c0_i32, %c0_i32_0 : i32, i32
  }
  func.func @transform_6(%arg0: i32) -> (i32, i32) {
    %c0_i32 = arith.constant 0 : i32
    %c0_i32_0 = arith.constant 0 : i32
    %c0_i32_1 = arith.constant 0 : i32
    return %c0_i32, %c0_i32_0 : i32, i32
  }
  func.func @transform_7(%arg0: i32) -> (i32, i32) {
    %c0_i32 = arith.constant 0 : i32
    %c0_i32_0 = arith.constant 0 : i32
    %c0_i32_1 = arith.constant 0 : i32
    return %c0_i32, %c0_i32_0 : i32, i32
  }
  func.func @transform_8(%arg0: i32) -> (i32, i32) {
    %c0_i32 = arith.constant 0 : i32
    %c0_i32_0 = arith.constant 0 : i32
    %c0_i32_1 = arith.constant 0 : i32
    return %c0_i32, %c0_i32_0 : i32, i32
  }
}

</mosaic_0001>

<llo_original>
// kernel: d_svhn_forward.1
$region0: #{d_svhn_forward.1}
  #allocation0 [shape = 'u32[]', space=smem, size = 0x4, offset = 0x4, fixed_abs, tag = 'smem constant byte address 0x4 - core index']
  #allocation1 [shape = 'u32[144,128]{1,0:T(1,128)}', space=vmem, size = 0x12000, scoped, tag = 'internal scratch']
  #allocation2 [shape = 'f32[2,6,2,6,2,64]{5,4,3,2,1,0:T(2,128)}', space=vmem, size = 0x24000, scoped, tag = 'scratch operand']
  #allocation3 [shape = 'f32[2,4,2,4,2,128]{5,4,3,2,1,0:T(2,128)}', space=vmem, size = 0x10000, scoped, tag = 'scratch operand']
  %s0 = inlined_call_operand.vmem [shape: bf16[128,64], index: 0, kind: input, shape index: {}]
  %s1 = inlined_call_operand.vmem [shape: bf16[64,64], index: 1, kind: input, shape index: {}]
  %s2 = inlined_call_operand.vmem [shape: bf16[1024,128], index: 2, kind: input, shape index: {}]
  %s3 = inlined_call_operand.vmem [shape: bf16[2048,256], index: 3, kind: input, shape index: {}]
  %s4 = inlined_call_operand.vmem [shape: f32[1,128], index: 4, kind: input, shape index: {}]
  %s5 = inlined_call_operand.vmem [shape: f32[1,128], index: 5, kind: input, shape index: {}]
  %s6 = inlined_call_operand.vmem [shape: f32[1,256], index: 6, kind: input, shape index: {}]
  %s7 = inlined_call_operand.vmem [shape: f32[1,256], index: 7, kind: input, shape index: {}]
  %s8 = inlined_call_operand.vmem [shape: f32[8,256], index: 8, kind: output, shape index: {}]
  %s9 = sld [smem:[#allocation0]]
  $region42: #{d_svhn_forward.1} parent=0
    _
  %s11 = ssub.s32 1, %s9
  %s12 = scalar_select 0, %s11, %s9
  // Predicated region
  $region2: #{d_svhn_forward.1} parent=0 // pred_check
    _
  $region3: #{d_svhn_forward.1} parent=0 // pred_check_branch
    %14 = sbr.rel (0) target = $region5
  $region4: #{d_svhn_forward.1} parent=0 // pred_region
    _
  $region5: #{d_svhn_forward.1} parent=0 // pred_fallthru
    _
  // Predicated region
  $region6: #{d_svhn_forward.1} parent=0 // pred_check
    _
  $region7: #{d_svhn_forward.1} parent=0 // pred_check_branch
    %16 = sbr.rel (0) target = $region9
  $region8: #{d_svhn_forward.1} parent=0 // pred_region
    _
  $region9: #{d_svhn_forward.1} parent=0 // pred_fallthru
    _
  // Predicated region
  $region10: #{d_svhn_forward.1} parent=0 // pred_check
    _
  $region11: #{d_svhn_forward.1} parent=0 // pred_check_branch
    %18 = sbr.rel (0) target = $region13
  $region12: #{d_svhn_forward.1} parent=0 // pred_region
    _
  $region13: #{d_svhn_forward.1} parent=0 // pred_fallthru
    _
  // Predicated region
  $region14: #{d_svhn_forward.1} parent=0 // pred_check
    _
  $region15: #{d_svhn_forward.1} parent=0 // pred_check_branch
    %20 = sbr.rel (0) target = $region17
  $region16: #{d_svhn_forward.1} parent=0 // pred_region
    _
  $region17: #{d_svhn_forward.1} parent=0 // pred_fallthru
    _
  // Predicated region
  $region18: #{d_svhn_forward.1} parent=0 // pred_check
    _
  $region19: #{d_svhn_forward.1} parent=0 // pred_check_branch
    %22 = sbr.rel (0) target = $region21
  $region20: #{d_svhn_forward.1} parent=0 // pred_region
    _
  $region21: #{d_svhn_forward.1} parent=0 // pred_fallthru
    _
  // Predicated region
  $region22: #{d_svhn_forward.1} parent=0 // pred_check
    _
  $region23: #{d_svhn_forward.1} parent=0 // pred_check_branch
    %24 = sbr.rel (0) target = $region25
  $region24: #{d_svhn_forward.1} parent=0 // pred_region
    _
  $region25: #{d_svhn_forward.1} parent=0 // pred_fallthru
    _
  // Predicated region
  $region26: #{d_svhn_forward.1} parent=0 // pred_check
    _
  $region27: #{d_svhn_forward.1} parent=0 // pred_check_branch
    %26 = sbr.rel (0) target = $region29
  $region28: #{d_svhn_forward.1} parent=0 // pred_region
    _
  $region29: #{d_svhn_forward.1} parent=0 // pred_fallthru
    _
  // Predicated region
  $region30: #{d_svhn_forward.1} parent=0 // pred_check
    _
  $region31: #{d_svhn_forward.1} parent=0 // pred_check_branch
    %28 = sbr.rel (0) target = $region33
  $region32: #{d_svhn_forward.1} parent=0 // pred_region
    _
  $region33: #{d_svhn_forward.1} parent=0 // pred_fallthru
    _
  %vm30 = vcmask 517120
  %31 = vst.msk [vmem:[#allocation2] sm:$0x3] %vm30, 0.0
  %32 = vst.msk [vmem:[#allocation2 + $0x2] sm:$0x3] %vm30, 0.0
  %33 = vst.msk [vmem:[#allocation2 + $0x4] sm:$0x3] %vm30, 0.0
  %34 = vst.msk [vmem:[#allocation2 + $0x6] sm:$0x3] %vm30, 0.0
  %35 = vst.msk [vmem:[#allocation2 + $0x8] sm:$0x3] %vm30, 0.0
  %36 = vst.msk [vmem:[#allocation2 + $0xa] sm:$0x3] %vm30, 0.0
  %37 = vst.msk [vmem:[#allocation2 + $0xc] sm:$0x3] %vm30, 0.0
  %38 = vst.msk [vmem:[#allocation2 + $0xe] sm:$0x3] %vm30, 0.0
  %39 = vst.msk [vmem:[#allocation2 + $0x10] sm:$0x3] %vm30, 0.0
  %40 = vst.msk [vmem:[#allocation2 + $0x12] sm:$0x3] %vm30, 0.0
  %41 = vst.msk [vmem:[#allocation2 + $0x14] sm:$0x3] %vm30, 0.0
  %42 = vst.msk [vmem:[#allocation2 + $0x16] sm:$0x3] %vm30, 0.0
  %43 = vst.msk [vmem:[#allocation2 + $0x18] sm:$0x3] %vm30, 0.0
  %44 = vst.msk [vmem:[#allocation2 + $0x1a] sm:$0x3] %vm30, 0.0
  %45 = vst.msk [vmem:[#allocation2 + $0x1c] sm:$0x3] %vm30, 0.0
  %46 = vst.msk [vmem:[#allocation2 + $0x1e] sm:$0x3] %vm30, 0.0
  %47 = vst.msk [vmem:[#allocation2 + $0x20] sm:$0x3] %vm30, 0.0
  %48 = vst.msk [vmem:[#allocation2 + $0x22] sm:$0x3] %vm30, 0.0
  %49 = vst.msk [vmem:[#allocation2 + $0x24] sm:$0x3] %vm30, 0.0
  %50 = vst.msk [vmem:[#allocation2 + $0x26] sm:$0x3] %vm30, 0.0
  %51 = vst.msk [vmem:[#allocation2 + $0x28] sm:$0x3] %vm30, 0.0
  %52 = vst.msk [vmem:[#allocation2 + $0x2a] sm:$0x3] %vm30, 0.0
  %53 = vst.msk [vmem:[#allocation2 + $0x2c] sm:$0x3] %vm30, 0.0
  %54 = vst.msk [vmem:[#allocation2 + $0x2e] sm:$0x3] %vm30, 0.0
  %55 = vst.msk [vmem:[#allocation2 + $0x30] sm:$0x3] %vm30, 0.0
  %56 = vst.msk [vmem:[#allocation2 + $0x32] sm:$0x3] %vm30, 0.0
  %57 = vst.msk [vmem:[#allocation2 + $0x34] sm:$0x3] %vm30, 0.0
  %58 = vst.msk [vmem:[#allocation2 + $0x36] sm:$0x3] %vm30, 0.0
  %59 = vst.msk [vmem:[#allocation2 + $0x38] sm:$0x3] %vm30, 0.0
  %60 = vst.msk [vmem:[#allocation2 + $0x3a] sm:$0x3] %vm30, 0.0
  %61 = vst.msk [vmem:[#allocation2 + $0x3c] sm:$0x3] %vm30, 0.0
  %62 = vst.msk [vmem:[#allocation2 + $0x3e] sm:$0x3] %vm30, 0.0
  %63 = vst.msk [vmem:[#allocation2 + $0x40] sm:$0x3] %vm30, 0.0
  %64 = vst.msk [vmem:[#allocation2 + $0x42] sm:$0x3] %vm30, 0.0
  %65 = vst.msk [vmem:[#allocation2 + $0x44] sm:$0x3] %vm30, 0.0
  %66 = vst.msk [vmem:[#allocation2 + $0x46] sm:$0x3] %vm30, 0.0
  %67 = vst.msk [vmem:[#allocation2 + $0x48] sm:$0x3] %vm30, 0.0
  %68 = vst.msk [vmem:[#allocation2 + $0x4a] sm:$0x3] %vm30, 0.0
  %69 = vst.msk [vmem:[#allocation2 + $0x4c] sm:$0x3] %vm30, 0.0
  %70 = vst.msk [vmem:[#allocation2 + $0x4e] sm:$0x3] %vm30, 0.0
  %71 = vst.msk [vmem:[#allocation2 + $0x50] sm:$0x3] %vm30, 0.0
  %72 = vst.msk [vmem:[#allocation2 + $0x52] sm:$0x3] %vm30, 0.0
  %73 = vst.msk [vmem:[#allocation2 + $0x54] sm:$0x3] %vm30, 0.0
  %74 = vst.msk [vmem:[#allocation2 + $0x56] sm:$0x3] %vm30, 0.0
  %75 = vst.msk [vmem:[#allocation2 + $0x58] sm:$0x3] %vm30, 0.0
  %76 = vst.msk [vmem:[#allocation2 + $0x5a] sm:$0x3] %vm30, 0.0
  %77 = vst.msk [vmem:[#allocation2 + $0x5c] sm:$0x3] %vm30, 0.0
  %78 = vst.msk [vmem:[#allocation2 + $0x5e] sm:$0x3] %vm30, 0.0
  %79 = vst.msk [vmem:[#allocation2 + $0x60] sm:$0x3] %vm30, 0.0
  %80 = vst.msk [vmem:[#allocation2 + $0x62] sm:$0x3] %vm30, 0.0
  %81 = vst.msk [vmem:[#allocation2 + $0x64] sm:$0x3] %vm30, 0.0
  %82 = vst.msk [vmem:[#allocation2 + $0x66] sm:$0x3] %vm30, 0.0
  %83 = vst.msk [vmem:[#allocation2 + $0x68] sm:$0x3] %vm30, 0.0
  %84 = vst.msk [vmem:[#allocation2 + $0x6a] sm:$0x3] %vm30, 0.0
  %85 = vst.msk [vmem:[#allocation2 + $0x6c] sm:$0x3] %vm30, 0.0
  %86 = vst.msk [vmem:[#allocation2 + $0x6e] sm:$0x3] %vm30, 0.0
  %87 = vst.msk [vmem:[#allocation2 + $0x70] sm:$0x3] %vm30, 0.0
  %88 = vst.msk [vmem:[#allocation2 + $0x72] sm:$0x3] %vm30, 0.0
  %89 = vst.msk [vmem:[#allocation2 + $0x74] sm:$0x3] %vm30, 0.0
  %90 = vst.msk [vmem:[#allocation2 + $0x76] sm:$0x3] %vm30, 0.0
  %91 = vst.msk [vmem:[#allocation2 + $0x78] sm:$0x3] %vm30, 0.0
  %92 = vst.msk [vmem:[#allocation2 + $0x7a] sm:$0x3] %vm30, 0.0
  %93 = vst.msk [vmem:[#allocation2 + $0x7c] sm:$0x3] %vm30, 0.0
  %94 = vst.msk [vmem:[#allocation2 + $0x7e] sm:$0x3] %vm30, 0.0
  %95 = vst.msk [vmem:[#allocation2 + $0x80] sm:$0x3] %vm30, 0.0
  %96 = vst.msk [vmem:[#allocation2 + $0x82] sm:$0x3] %vm30, 0.0
  %97 = vst.msk [vmem:[#allocation2 + $0x84] sm:$0x3] %vm30, 0.0
  %98 = vst.msk [vmem:[#allocation2 + $0x86] sm:$0x3] %vm30, 0.0
  %99 = vst.msk [vmem:[#allocation2 + $0x88] sm:$0x3] %vm30, 0.0
  %100 = vst.msk [vmem:[#allocation2 + $0x8a] sm:$0x3] %vm30, 0.0
  %101 = vst.msk [vmem:[#allocation2 + $0x8c] sm:$0x3] %vm30, 0.0
  %102 = vst.msk [vmem:[#allocation2 + $0x8e] sm:$0x3] %vm30, 0.0
  %103 = vst.msk [vmem:[#allocation2 + $0x90] sm:$0x3] %vm30, 0.0
  %104 = vst.msk [vmem:[#allocation2 + $0x92] sm:$0x3] %vm30, 0.0
  %105 = vst.msk [vmem:[#allocation2 + $0x94] sm:$0x3] %vm30, 0.0
  %106 = vst.msk [vmem:[#allocation2 + $0x96] sm:$0x3] %vm30, 0.0
  %107 = vst.msk [vmem:[#allocation2 + $0x98] sm:$0x3] %vm30, 0.0
  %108 = vst.msk [vmem:[#allocation2 + $0x9a] sm:$0x3] %vm30, 0.0
  %109 = vst.msk [vmem:[#allocation2 + $0x9c] sm:$0x3] %vm30, 0.0
  %110 = vst.msk [vmem:[#allocation2 + $0x9e] sm:$0x3] %vm30, 0.0
  %111 = vst.msk [vmem:[#allocation2 + $0xa0] sm:$0x3] %vm30, 0.0
  %112 = vst.msk [vmem:[#allocation2 + $0xa2] sm:$0x3] %vm30, 0.0
  %113 = vst.msk [vmem:[#allocation2 + $0xa4] sm:$0x3] %vm30, 0.0
  %114 = vst.msk [vmem:[#allocation2 + $0xa6] sm:$0x3] %vm30, 0.0
  %115 = vst.msk [vmem:[#allocation2 + $0xa8] sm:$0x3] %vm30, 0.0
  %116 = vst.msk [vmem:[#allocation2 + $0xaa] sm:$0x3] %vm30, 0.0
  %117 = vst.msk [vmem:[#allocation2 + $0xac] sm:$0x3] %vm30, 0.0
  %118 = vst.msk [vmem:[#allocation2 + $0xae] sm:$0x3] %vm30, 0.0
  %119 = vst.msk [vmem:[#allocation2 + $0xb0] sm:$0x3] %vm30, 0.0
  %120 = vst.msk [vmem:[#allocation2 + $0xb2] sm:$0x3] %vm30, 0.0
  %121 = vst.msk [vmem:[#allocation2 + $0xb4] sm:$0x3] %vm30, 0.0
  %122 = vst.msk [vmem:[#allocation2 + $0xb6] sm:$0x3] %vm30, 0.0
  %123 = vst.msk [vmem:[#allocation2 + $0xb8] sm:$0x3] %vm30, 0.0
  %124 = vst.msk [vmem:[#allocation2 + $0xba] sm:$0x3] %vm30, 0.0
  %125 = vst.msk [vmem:[#allocation2 + $0xbc] sm:$0x3] %vm30, 0.0
  %126 = vst.msk [vmem:[#allocation2 + $0xbe] sm:$0x3] %vm30, 0.0
  %127 = vst.msk [vmem:[#allocation2 + $0xc0] sm:$0x3] %vm30, 0.0
  %128 = vst.msk [vmem:[#allocation2 + $0xc2] sm:$0x3] %vm30, 0.0
  %129 = vst.msk [vmem:[#allocation2 + $0xc4] sm:$0x3] %vm30, 0.0
  %130 = vst.msk [vmem:[#allocation2 + $0xc6] sm:$0x3] %vm30, 0.0
  %131 = vst.msk [vmem:[#allocation2 + $0xc8] sm:$0x3] %vm30, 0.0
  %132 = vst.msk [vmem:[#allocation2 + $0xca] sm:$0x3] %vm30, 0.0
  %133 = vst.msk [vmem:[#allocation2 + $0xcc] sm:$0x3] %vm30, 0.0
  %134 = vst.msk [vmem:[#allocation2 + $0xce] sm:$0x3] %vm30, 0.0
  %135 = vst.msk [vmem:[#allocation2 + $0xd0] sm:$0x3] %vm30, 0.0
  %136 = vst.msk [vmem:[#allocation2 + $0xd2] sm:$0x3] %vm30, 0.0
  %137 = vst.msk [vmem:[#allocation2 + $0xd4] sm:$0x3] %vm30, 0.0
  %138 = vst.msk [vmem:[#allocation2 + $0xd6] sm:$0x3] %vm30, 0.0
  %139 = vst.msk [vmem:[#allocation2 + $0xd8] sm:$0x3] %vm30, 0.0
  %140 = vst.msk [vmem:[#allocation2 + $0xda] sm:$0x3] %vm30, 0.0
  %141 = vst.msk [vmem:[#allocation2 + $0xdc] sm:$0x3] %vm30, 0.0
  %142 = vst.msk [vmem:[#allocation2 + $0xde] sm:$0x3] %vm30, 0.0
  %143 = vst.msk [vmem:[#allocation2 + $0xe0] sm:$0x3] %vm30, 0.0
  %144 = vst.msk [vmem:[#allocation2 + $0xe2] sm:$0x3] %vm30, 0.0
  %145 = vst.msk [vmem:[#allocation2 + $0xe4] sm:$0x3] %vm30, 0.0
  %146 = vst.msk [vmem:[#allocation2 + $0xe6] sm:$0x3] %vm30, 0.0
  %147 = vst.msk [vmem:[#allocation2 + $0xe8] sm:$0x3] %vm30, 0.0
  %148 = vst.msk [vmem:[#allocation2 + $0xea] sm:$0x3] %vm30, 0.0
  %149 = vst.msk [vmem:[#allocation2 + $0xec] sm:$0x3] %vm30, 0.0
  %150 = vst.msk [vmem:[#allocation2 + $0xee] sm:$0x3] %vm30, 0.0
  %151 = vst.msk [vmem:[#allocation2 + $0xf0] sm:$0x3] %vm30, 0.0
  %152 = vst.msk [vmem:[#allocation2 + $0xf2] sm:$0x3] %vm30, 0.0
  %153 = vst.msk [vmem:[#allocation2 + $0xf4] sm:$0x3] %vm30, 0.0
  %154 = vst.msk [vmem:[#allocation2 + $0xf6] sm:$0x3] %vm30, 0.0
  %155 = vst.msk [vmem:[#allocation2 + $0xf8] sm:$0x3] %vm30, 0.0
  %156 = vst.msk [vmem:[#allocation2 + $0xfa] sm:$0x3] %vm30, 0.0
  %157 = vst.msk [vmem:[#allocation2 + $0xfc] sm:$0x3] %vm30, 0.0
  %158 = vst.msk [vmem:[#allocation2 + $0xfe] sm:$0x3] %vm30, 0.0
  %159 = vst.msk [vmem:[#allocation2 + $0x100] sm:$0x3] %vm30, 0.0
  %160 = vst.msk [vmem:[#allocation2 + $0x102] sm:$0x3] %vm30, 0.0
  %161 = vst.msk [vmem:[#allocation2 + $0x104] sm:$0x3] %vm30, 0.0
  %162 = vst.msk [vmem:[#allocation2 + $0x106] sm:$0x3] %vm30, 0.0
  %163 = vst.msk [vmem:[#allocation2 + $0x108] sm:$0x3] %vm30, 0.0
  %164 = vst.msk [vmem:[#allocation2 + $0x10a] sm:$0x3] %vm30, 0.0
  %165 = vst.msk [vmem:[#allocation2 + $0x10c] sm:$0x3] %vm30, 0.0
  %166 = vst.msk [vmem:[#allocation2 + $0x10e] sm:$0x3] %vm30, 0.0
  %167 = vst.msk [vmem:[#allocation2 + $0x110] sm:$0x3] %vm30, 0.0
  %168 = vst.msk [vmem:[#allocation2 + $0x112] sm:$0x3] %vm30, 0.0
  %169 = vst.msk [vmem:[#allocation2 + $0x114] sm:$0x3] %vm30, 0.0
  %170 = vst.msk [vmem:[#allocation2 + $0x116] sm:$0x3] %vm30, 0.0
  %171 = vst.msk [vmem:[#allocation2 + $0x118] sm:$0x3] %vm30, 0.0
  %172 = vst.msk [vmem:[#allocation2 + $0x11a] sm:$0x3] %vm30, 0.0
  %173 = vst.msk [vmem:[#allocation2 + $0x11c] sm:$0x3] %vm30, 0.0
  %174 = vst.msk [vmem:[#allocation2 + $0x11e] sm:$0x3] %vm30, 0.0
  %175 = vst [vmem:[#allocation3] sm:$0x3] 0.0
  %176 = vst [vmem:[#allocation3 + $0x2] sm:$0x3] 0.0
  %177 = vst [vmem:[#allocation3 + $0x4] sm:$0x3] 0.0
  %178 = vst [vmem:[#allocation3 + $0x6] sm:$0x3] 0.0
  %179 = vst [vmem:[#allocation3 + $0x8] sm:$0x3] 0.0
  %180 = vst [vmem:[#allocation3 + $0xa] sm:$0x3] 0.0
  %181 = vst [vmem:[#allocation3 + $0xc] sm:$0x3] 0.0
  %182 = vst [vmem:[#allocation3 + $0xe] sm:$0x3] 0.0
  %183 = vst [vmem:[#allocation3 + $0x10] sm:$0x3] 0.0
  %184 = vst [vmem:[#allocation3 + $0x12] sm:$0x3] 0.0
  %185 = vst [vmem:[#allocation3 + $0x14] sm:$0x3] 0.0
  %186 = vst [vmem:[#allocation3 + $0x16] sm:$0x3] 0.0
  %187 = vst [vmem:[#allocation3 + $0x18] sm:$0x3] 0.0
  %188 = vst [vmem:[#allocation3 + $0x1a] sm:$0x3] 0.0
  %189 = vst [vmem:[#allocation3 + $0x1c] sm:$0x3] 0.0
  %190 = vst [vmem:[#allocation3 + $0x1e] sm:$0x3] 0.0
  %191 = vst [vmem:[#allocation3 + $0x20] sm:$0x3] 0.0
  %192 = vst [vmem:[#allocation3 + $0x22] sm:$0x3] 0.0
  %193 = vst [vmem:[#allocation3 + $0x24] sm:$0x3] 0.0
  %194 = vst [vmem:[#allocation3 + $0x26] sm:$0x3] 0.0
  %195 = vst [vmem:[#allocation3 + $0x28] sm:$0x3] 0.0
  %196 = vst [vmem:[#allocation3 + $0x2a] sm:$0x3] 0.0
  %197 = vst [vmem:[#allocation3 + $0x2c] sm:$0x3] 0.0
  %198 = vst [vmem:[#allocation3 + $0x2e] sm:$0x3] 0.0
  %199 = vst [vmem:[#allocation3 + $0x30] sm:$0x3] 0.0
  %200 = vst [vmem:[#allocation3 + $0x32] sm:$0x3] 0.0
  %201 = vst [vmem:[#allocation3 + $0x34] sm:$0x3] 0.0
  %202 = vst [vmem:[#allocation3 + $0x36] sm:$0x3] 0.0
  %203 = vst [vmem:[#allocation3 + $0x38] sm:$0x3] 0.0
  %204 = vst [vmem:[#allocation3 + $0x3a] sm:$0x3] 0.0
  %205 = vst [vmem:[#allocation3 + $0x3c] sm:$0x3] 0.0
  %206 = vst [vmem:[#allocation3 + $0x3e] sm:$0x3] 0.0
  %207 = vst [vmem:[#allocation3 + $0x40] sm:$0x3] 0.0
  %208 = vst [vmem:[#allocation3 + $0x42] sm:$0x3] 0.0
  %209 = vst [vmem:[#allocation3 + $0x44] sm:$0x3] 0.0
  %210 = vst [vmem:[#allocation3 + $0x46] sm:$0x3] 0.0
  %211 = vst [vmem:[#allocation3 + $0x48] sm:$0x3] 0.0
  %212 = vst [vmem:[#allocation3 + $0x4a] sm:$0x3] 0.0
  %213 = vst [vmem:[#allocation3 + $0x4c] sm:$0x3] 0.0
  %214 = vst [vmem:[#allocation3 + $0x4e] sm:$0x3] 0.0
  %215 = vst [vmem:[#allocation3 + $0x50] sm:$0x3] 0.0
  %216 = vst [vmem:[#allocation3 + $0x52] sm:$0x3] 0.0
  %217 = vst [vmem:[#allocation3 + $0x54] sm:$0x3] 0.0
  %218 = vst [vmem:[#allocation3 + $0x56] sm:$0x3] 0.0
  %219 = vst [vmem:[#allocation3 + $0x58] sm:$0x3] 0.0
  %220 = vst [vmem:[#allocation3 + $0x5a] sm:$0x3] 0.0
  %221 = vst [vmem:[#allocation3 + $0x5c] sm:$0x3] 0.0
  %222 = vst [vmem:[#allocation3 + $0x5e] sm:$0x3] 0.0
  %223 = vst [vmem:[#allocation3 + $0x60] sm:$0x3] 0.0
  %224 = vst [vmem:[#allocation3 + $0x62] sm:$0x3] 0.0
  %225 = vst [vmem:[#allocation3 + $0x64] sm:$0x3] 0.0
  %226 = vst [vmem:[#allocation3 + $0x66] sm:$0x3] 0.0
  %227 = vst [vmem:[#allocation3 + $0x68] sm:$0x3] 0.0
  %228 = vst [vmem:[#allocation3 + $0x6a] sm:$0x3] 0.0
  %229 = vst [vmem:[#allocation3 + $0x6c] sm:$0x3] 0.0
  %230 = vst [vmem:[#allocation3 + $0x6e] sm:$0x3] 0.0
  %231 = vst [vmem:[#allocation3 + $0x70] sm:$0x3] 0.0
  %232 = vst [vmem:[#allocation3 + $0x72] sm:$0x3] 0.0
  %233 = vst [vmem:[#allocation3 + $0x74] sm:$0x3] 0.0
  %234 = vst [vmem:[#allocation3 + $0x76] sm:$0x3] 0.0
  %235 = vst [vmem:[#allocation3 + $0x78] sm:$0x3] 0.0
  %236 = vst [vmem:[#allocation3 + $0x7a] sm:$0x3] 0.0
  %237 = vst [vmem:[#allocation3 + $0x7c] sm:$0x3] 0.0
  %238 = vst [vmem:[#allocation3 + $0x7e] sm:$0x3] 0.0
  %v239 = vld [vmem:[%s0] sm:$0xf]
  %v240 = vld [vmem:[%s0 + $0x4] sm:$0xf]
  %v241 = vld [vmem:[%s0 + $0x8] sm:$0xf]
  %v242 = vld [vmem:[%s0 + $0xc] sm:$0xf]
  %v243 = vld [vmem:[%s0 + $0x10] sm:$0xf]
  %v244 = vld [vmem:[%s0 + $0x14] sm:$0xf]
  %v245 = vld [vmem:[%s0 + $0x18] sm:$0xf]
  %v246 = vld [vmem:[%s0 + $0x1c] sm:$0xf]
  %v247 = vld [vmem:[%s0 + $0x20] sm:$0xf]
  %v248 = vld [vmem:[%s0 + $0x24] sm:$0xf]
  %v249 = vld [vmem:[%s0 + $0x28] sm:$0xf]
  %v250 = vld [vmem:[%s0 + $0x2c] sm:$0xf]
  %v251 = vld [vmem:[%s0 + $0x30] sm:$0xf]
  %v252 = vld [vmem:[%s0 + $0x34] sm:$0xf]
  %v253 = vld [vmem:[%s0 + $0x38] sm:$0xf]
  %v254 = vld [vmem:[%s0 + $0x3c] sm:$0xf]
  %v255 = vld [vmem:[%s1] sm:$0xf]
  %v256 = vld [vmem:[%s1 + $0x4] sm:$0xf]
  %v257 = vld [vmem:[%s1 + $0x8] sm:$0xf]
  %v258 = vld [vmem:[%s1 + $0xc] sm:$0xf]
  %v259 = vld [vmem:[%s1 + $0x10] sm:$0xf]
  %v260 = vld [vmem:[%s1 + $0x14] sm:$0xf]
  %v261 = vld [vmem:[%s1 + $0x18] sm:$0xf]
  %v262 = vld [vmem:[%s1 + $0x1c] sm:$0xf]
  %v279 = vunpack.c.l.b16 %v239
  %v280 = vunpack.c.l.b16 %v240
  %v281 = vunpack.c.l.b16 %v241
  %v282 = vunpack.c.l.b16 %v242
  %v283 = vunpack.c.l.b16 %v243
  %v284 = vunpack.c.l.b16 %v244
  %v285 = vunpack.c.l.b16 %v245
  %v286 = vunpack.c.l.b16 %v246
  %v287 = vunpack.c.l.b16 %v247
  %v288 = vunpack.c.l.b16 %v248
  %v289 = vunpack.c.l.b16 %v249
  %v290 = vunpack.c.l.b16 %v250
  %v291 = vunpack.c.l.b16 %v251
  %v292 = vunpack.c.l.b16 %v252
  %v293 = vunpack.c.l.b16 %v253
  %v294 = vunpack.c.l.b16 %v254
  %v295 = vpack.c.b16 %v280, %v279
  %v296 = vpack.c.b16 %v282, %v281
  %v297 = vpack.c.b16 %v284, %v283
  %v298 = vpack.c.b16 %v286, %v285
  %v299 = vpack.c.b16 %v288, %v287
  %v300 = vpack.c.b16 %v290, %v289
  %v301 = vpack.c.b16 %v292, %v291
  %v302 = vpack.c.b16 %v294, %v293
  %v311 = vunpack.c.l.b16 %v255
  %v312 = vunpack.c.l.b16 %v256
  %v313 = vunpack.c.l.b16 %v257
  %v314 = vunpack.c.l.b16 %v258
  %v315 = vunpack.c.l.b16 %v259
  %v316 = vunpack.c.l.b16 %v260
  %v317 = vunpack.c.l.b16 %v261
  %v318 = vunpack.c.l.b16 %v262
  %v319 = vpack.c.b16 %v312, %v311
  %v320 = vpack.c.b16 %v314, %v313
  %v321 = vpack.c.b16 %v316, %v315
  %v322 = vpack.c.b16 %v318, %v317
  %vm327 = vcmask 523264
  %v329 = vsel %vm327, %v295, 0
  %v332 = vsel %vm327, %v296, 0
  %v335 = vsel %vm327, %v297, 0
  %v338 = vsel %vm327, %v298, 0
  %v341 = vsel %vm327, %v299, 0
  %v344 = vsel %vm327, %v300, 0
  %v347 = vsel %vm327, %v301, 0
  %v350 = vsel %vm327, %v302, 0
  %352 = vmatprep.subr.bf16.mxu0 0
  %353 = vmatpush1.bf16.msra.mxu0 %v319
  %354 = vmatprep.subr.bf16.mxu0 0
  %355 = vmatpush1.bf16.msra.mxu0 %v320
  %356 = vmatprep.subr.bf16.mxu0 0
  %357 = vmatpush1.bf16.msra.mxu0 %v321
  %358 = vmatprep.subr.bf16.mxu0 0
  %359 = vmatpush1.bf16.msra.mxu0 %v322
  %360 = vmatprep.subr.bf16.mxu0 0
  %361 = vmatpush1.bf16.msra.mxu0 0
  %362 = vmatprep.subr.bf16.mxu0 0
  %363 = vmatpush1.bf16.msra.mxu0 0
  %364 = vmatprep.subr.bf16.mxu0 0
  %365 = vmatpush1.bf16.msra.mxu0 0
  %366 = vmatprep.subr.bf16.mxu0 0
  %367 = vmatpush1.bf16.msra.mxu0 0
  %368 = vmatprep.subr.bf16.mxu0 0
  %369 = vmatpush1.bf16.msra.mxu0 0
  %370 = vmatprep.subr.bf16.mxu0 0
  %371 = vmatpush1.bf16.msra.mxu0 0
  %372 = vmatprep.subr.bf16.mxu0 0
  %373 = vmatpush1.bf16.msra.mxu0 0
  %374 = vmatprep.subr.bf16.mxu0 0
  %375 = vmatpush1.bf16.msra.mxu0 0
  %376 = vmatprep.subr.bf16.mxu0 0
  %377 = vmatpush1.bf16.msra.mxu0 0
  %378 = vmatprep.subr.bf16.mxu0 0
  %379 = vmatpush1.bf16.msra.mxu0 0
  %380 = vmatprep.subr.bf16.mxu0 0
  %381 = vmatpush1.bf16.msra.mxu0 0
  %382 = vmatprep.subr.bf16.mxu0 0
  %383 = vmatpush1.bf16.msra.mxu0 0
  %384 = vmatprep.mubr.bf16.mxu0 0
  %385 = vmatmul.mubr.bf16.gmra.mrb[0].mxu0 %v329
  %v386 = vpop.f32.mrb[0].mxu0
  %v387 = vadd.f32 0.0, %v386
  %v388 = vpop.f32.mrb[0].mxu0
  %v389 = vpop.f32.mrb[0].mxu0
  %v390 = vadd.f32 0.0, %v389
  %v391 = vpop.f32.mrb[0].mxu0
  %392 = vmatprep.mubr.bf16.mxu0 0
  %393 = vmatmul.mubr.bf16.gmra.mrb[0].mxu0 %v332
  %v394 = vpop.f32.mrb[0].mxu0
  %v395 = vadd.f32 0.0, %v394
  %v396 = vpop.f32.mrb[0].mxu0
  %v397 = vpop.f32.mrb[0].mxu0
  %v398 = vadd.f32 0.0, %v397
  %v399 = vpop.f32.mrb[0].mxu0
  %400 = vmatprep.mubr.bf16.mxu0 0
  %401 = vmatmul.mubr.bf16.gmra.mrb[0].mxu0 %v335
  %v402 = vpop.f32.mrb[0].mxu0
  %v403 = vadd.f32 0.0, %v402
  %v404 = vpop.f32.mrb[0].mxu0
  %v405 = vpop.f32.mrb[0].mxu0
  %v406 = vadd.f32 0.0, %v405
  %v407 = vpop.f32.mrb[0].mxu0
  %408 = vmatprep.mubr.bf16.mxu0 0
  %409 = vmatmul.mubr.bf16.gmra.mrb[0].mxu0 %v338
  %v410 = vpop.f32.mrb[0].mxu0
  %v411 = vadd.f32 0.0, %v410
  %v412 = vpop.f32.mrb[0].mxu0
  %v413 = vpop.f32.mrb[0].mxu0
  %v414 = vadd.f32 0.0, %v413
  %v415 = vpop.f32.mrb[0].mxu0
  %416 = vmatprep.mubr.bf16.mxu0 0
  %417 = vmatmul.mubr.bf16.gmra.mrb[0].mxu0 %v341
  %v418 = vpop.f32.mrb[0].mxu0
  %v419 = vadd.f32 0.0, %v418
  %v420 = vpop.f32.mrb[0].mxu0
  %v421 = vpop.f32.mrb[0].mxu0
  %v422 = vadd.f32 0.0, %v421
  %v423 = vpop.f32.mrb[0].mxu0
  %424 = vmatprep.mubr.bf16.mxu0 0
  %425 = vmatmul.mubr.bf16.gmra.mrb[0].mxu0 %v344
  %v426 = vpop.f32.mrb[0].mxu0
  %v427 = vadd.f32 0.0, %v426
  %v428 = vpop.f32.mrb[0].mxu0
  %v429 = vpop.f32.mrb[0].mxu0
  %v430 = vadd.f32 0.0, %v429
  %v431 = vpop.f32.mrb[0].mxu0
  %432 = vmatprep.mubr.bf16.mxu0 0
  %433 = vmatmul.mubr.bf16.gmra.mrb[0].mxu0 %v347
  %v434 = vpop.f32.mrb[0].mxu0
  %v435 = vadd.f32 0.0, %v434
  %v436 = vpop.f32.mrb[0].mxu0
  %v437 = vpop.f32.mrb[0].mxu0
  %v438 = vadd.f32 0.0, %v437
  %v439 = vpop.f32.mrb[0].mxu0
  %440 = vmatprep.mubr.bf16.mxu0 0
  %441 = vmatmul.mubr.bf16.gmra.mrb[0].mxu0 %v350
  %v442 = vpop.f32.mrb[0].mxu0
  %v443 = vadd.f32 0.0, %v442
  %v444 = vpop.f32.mrb[0].mxu0
  %v445 = vpop.f32.mrb[0].mxu0
  %v446 = vadd.f32 0.0, %v445
  %v447 = vpop.f32.mrb[0].mxu0
  %448 = vdwg.mxu0
  %v449 = vmul.f32 %v387, 0.1
  %v450 = vmul.f32 %v390, 0.1
  %v451 = vmul.f32 %v395, 0.1
  %v452 = vmul.f32 %v398, 0.1
  %v453 = vmul.f32 %v403, 0.1
  %v454 = vmul.f32 %v406, 0.1
  %v455 = vmul.f32 %v411, 0.1
  %v456 = vmul.f32 %v414, 0.1
  %v457 = vmul.f32 %v419, 0.1
  %v458 = vmul.f32 %v422, 0.1
  %v459 = vmul.f32 %v427, 0.1
  %v460 = vmul.f32 %v430, 0.1
  %v461 = vmul.f32 %v435, 0.1
  %v462 = vmul.f32 %v438, 0.1
  %v463 = vmul.f32 %v443, 0.1
  %v464 = vmul.f32 %v446, 0.1
  %v465 = vmax.f32 %v387, %v449
  %v466 = vmax.f32 %v390, %v450
  %v467 = vmax.f32 %v395, %v451
  %v468 = vmax.f32 %v398, %v452
  %v469 = vmax.f32 %v403, %v453
  %v470 = vmax.f32 %v406, %v454
  %v471 = vmax.f32 %v411, %v455
  %v472 = vmax.f32 %v414, %v456
  %v473 = vmax.f32 %v419, %v457
  %v474 = vmax.f32 %v422, %v458
  %v475 = vmax.f32 %v427, %v459
  %v476 = vmax.f32 %v430, %v460
  %v477 = vmax.f32 %v435, %v461
  %v478 = vmax.f32 %v438, %v462
  %v479 = vmax.f32 %v443, %v463
  %v480 = vmax.f32 %v446, %v464
  %v483 = vcombine.high %v465, %v465
  %v485 = vunpack.c.l.s4 1983009808
  %v486 = vunpack.c.0.s8 %v485
  %v487 = vlaneseq
  %v488 = vshrl.u32 %v487, 7
  %v489 = vsub.s32 %v486, %v488
  %v490 = vrot.slane %v465, %v489
  %v492 = vunpack.c.l.s4 1983009808
  %v493 = vunpack.c.0.s8 %v492
  %v494 = vlaneseq
  %v495 = vshrl.u32 %v494, 7
  %v496 = vsub.s32 %v493, %v495
  %v497 = vrot.slane %v483, %v496
  %v498 = vcombine.high %v490, %v490
  %v499 = vcombine.high %v497, %v497
  %v500 = vcombine.high %v473, %v473
  %v502 = vunpack.c.l.s4 1983009808
  %v503 = vunpack.c.0.s8 %v502
  %v504 = vlaneseq
  %v505 = vshrl.u32 %v504, 7
  %v506 = vsub.s32 %v503, %v505
  %v507 = vrot.slane %v473, %v506
  %v509 = vunpack.c.l.s4 1983009808
  %v510 = vunpack.c.0.s8 %v509
  %v511 = vlaneseq
  %v512 = vshrl.u32 %v511, 7
  %v513 = vsub.s32 %v510, %v512
  %v514 = vrot.slane %v500, %v513
  %v515 = vcombine.high %v507, %v507
  %v516 = vcombine.high %v514, %v514
  %s525 = scalar_lea.vmem [#allocation2], 26
  %526 = vst.msk [vmem:[%s525] sm:$0x3] %vm30, %v490
  %527 = vst.msk [vmem:[%s525 + $0x2] sm:$0x3] %vm30, %v498
  %528 = vst.msk [vmem:[%s525 + $0x4] sm:$0x3] %vm30, %v497
  %529 = vst.msk [vmem:[%s525 + $0x6] sm:$0x3] %vm30, %v499
  %530 = vst.msk [vmem:[%s525 + $0x90] sm:$0x3] %vm30, %v507
  %531 = vst.msk [vmem:[%s525 + $0x92] sm:$0x3] %vm30, %v515
  %532 = vst.msk [vmem:[%s525 + $0x94] sm:$0x3] %vm30, %v514
  %533 = vst.msk [vmem:[%s525 + $0x96] sm:$0x3] %vm30, %v516
  %v536 = vcombine.high %v466, %v466
  %v538 = vunpack.c.l.s4 1983009808
  %v539 = vunpack.c.0.s8 %v538
  %v540 = vlaneseq
  %v541 = vshrl.u32 %v540, 7
  %v542 = vsub.s32 %v539, %v541
  %v543 = vrot.slane %v466, %v542
  %v545 = vunpack.c.l.s4 1983009808
  %v546 = vunpack.c.0.s8 %v545
  %v547 = vlaneseq
  %v548 = vshrl.u32 %v547, 7
  %v549 = vsub.s32 %v546, %v548
  %v550 = vrot.slane %v536, %v549
  %v551 = vcombine.high %v543, %v543
  %v552 = vcombine.high %v550, %v550
  %v553 = vcombine.high %v474, %v474
  %v555 = vunpack.c.l.s4 1983009808
  %v556 = vunpack.c.0.s8 %v555
  %v557 = vlaneseq
  %v558 = vshrl.u32 %v557, 7
  %v559 = vsub.s32 %v556, %v558
  %v560 = vrot.slane %v474, %v559
  %v562 = vunpack.c.l.s4 1983009808
  %v563 = vunpack.c.0.s8 %v562
  %v564 = vlaneseq
  %v565 = vshrl.u32 %v564, 7
  %v566 = vsub.s32 %v563, %v565
  %v567 = vrot.slane %v553, %v566
  %v568 = vcombine.high %v560, %v560
  %v569 = vcombine.high %v567, %v567
  %s578 = scalar_lea.vmem [#allocation2], 38
  %579 = vst.msk [vmem:[%s578] sm:$0x3] %vm30, %v543
  %580 = vst.msk [vmem:[%s578 + $0x2] sm:$0x3] %vm30, %v551
  %581 = vst.msk [vmem:[%s578 + $0x4] sm:$0x3] %vm30, %v550
  %582 = vst.msk [vmem:[%s578 + $0x6] sm:$0x3] %vm30, %v552
  %583 = vst.msk [vmem:[%s578 + $0x90] sm:$0x3] %vm30, %v560
  %584 = vst.msk [vmem:[%s578 + $0x92] sm:$0x3] %vm30, %v568
  %585 = vst.msk [vmem:[%s578 + $0x94] sm:$0x3] %vm30, %v567
  %586 = vst.msk [vmem:[%s578 + $0x96] sm:$0x3] %vm30, %v569
  %v589 = vcombine.high %v467, %v467
  %v591 = vunpack.c.l.s4 1983009808
  %v592 = vunpack.c.0.s8 %v591
  %v593 = vlaneseq
  %v594 = vshrl.u32 %v593, 7
  %v595 = vsub.s32 %v592, %v594
  %v596 = vrot.slane %v467, %v595
  %v598 = vunpack.c.l.s4 1983009808
  %v599 = vunpack.c.0.s8 %v598
  %v600 = vlaneseq
  %v601 = vshrl.u32 %v600, 7
  %v602 = vsub.s32 %v599, %v601
  %v603 = vrot.slane %v589, %v602
  %v604 = vcombine.high %v596, %v596
  %v605 = vcombine.high %v603, %v603
  %v606 = vcombine.high %v475, %v475
  %v608 = vunpack.c.l.s4 1983009808
  %v609 = vunpack.c.0.s8 %v608
  %v610 = vlaneseq
  %v611 = vshrl.u32 %v610, 7
  %v612 = vsub.s32 %v609, %v611
  %v613 = vrot.slane %v475, %v612
  %v615 = vunpack.c.l.s4 1983009808
  %v616 = vunpack.c.0.s8 %v615
  %v617 = vlaneseq
  %v618 = vshrl.u32 %v617, 7
  %v619 = vsub.s32 %v616, %v618
  %v620 = vrot.slane %v606, %v619
  %v621 = vcombine.high %v613, %v613
  %v622 = vcombine.high %v620, %v620
  %s631 = scalar_lea.vmem [#allocation2], 50
  %632 = vst.msk [vmem:[%s631] sm:$0x3] %vm30, %v596
  %633 = vst.msk [vmem:[%s631 + $0x2] sm:$0x3] %vm30, %v604
  %634 = vst.msk [vmem:[%s631 + $0x4] sm:$0x3] %vm30, %v603
  %635 = vst.msk [vmem:[%s631 + $0x6] sm:$0x3] %vm30, %v605
  %636 = vst.msk [vmem:[%s631 + $0x90] sm:$0x3] %vm30, %v613
  %637 = vst.msk [vmem:[%s631 + $0x92] sm:$0x3] %vm30, %v621
  %638 = vst.msk [vmem:[%s631 + $0x94] sm:$0x3] %vm30, %v620
  %639 = vst.msk [vmem:[%s631 + $0x96] sm:$0x3] %vm30, %v622
  %v642 = vcombine.high %v468, %v468
  %v644 = vunpack.c.l.s4 1983009808
  %v645 = vunpack.c.0.s8 %v644
  %v646 = vlaneseq
  %v647 = vshrl.u32 %v646, 7
  %v648 = vsub.s32 %v645, %v647
  %v649 = vrot.slane %v468, %v648
  %v651 = vunpack.c.l.s4 1983009808
  %v652 = vunpack.c.0.s8 %v651
  %v653 = vlaneseq
  %v654 = vshrl.u32 %v653, 7
  %v655 = vsub.s32 %v652, %v654
  %v656 = vrot.slane %v642, %v655
  %v657 = vcombine.high %v649, %v649
  %v658 = vcombine.high %v656, %v656
  %v659 = vcombine.high %v476, %v476
  %v661 = vunpack.c.l.s4 1983009808
  %v662 = vunpack.c.0.s8 %v661
  %v663 = vlaneseq
  %v664 = vshrl.u32 %v663, 7
  %v665 = vsub.s32 %v662, %v664
  %v666 = vrot.slane %v476, %v665
  %v668 = vunpack.c.l.s4 1983009808
  %v669 = vunpack.c.0.s8 %v668
  %v670 = vlaneseq
  %v671 = vshrl.u32 %v670, 7
  %v672 = vsub.s32 %v669, %v671
  %v673 = vrot.slane %v659, %v672
  %v674 = vcombine.high %v666, %v666
  %v675 = vcombine.high %v673, %v673
  %s684 = scalar_lea.vmem [#allocation2], 62
  %685 = vst.msk [vmem:[%s684] sm:$0x3] %vm30, %v649
  %686 = vst.msk [vmem:[%s684 + $0x2] sm:$0x3] %vm30, %v657
  %687 = vst.msk [vmem:[%s684 + $0x4] sm:$0x3] %vm30, %v656
  %688 = vst.msk [vmem:[%s684 + $0x6] sm:$0x3] %vm30, %v658
  %689 = vst.msk [vmem:[%s684 + $0x90] sm:$0x3] %vm30, %v666
  %690 = vst.msk [vmem:[%s684 + $0x92] sm:$0x3] %vm30, %v674
  %691 = vst.msk [vmem:[%s684 + $0x94] sm:$0x3] %vm30, %v673
  %692 = vst.msk [vmem:[%s684 + $0x96] sm:$0x3] %vm30, %v675
  %v695 = vcombine.high %v469, %v469
  %v697 = vunpack.c.l.s4 1983009808
  %v698 = vunpack.c.0.s8 %v697
  %v699 = vlaneseq
  %v700 = vshrl.u32 %v699, 7
  %v701 = vsub.s32 %v698, %v700
  %v702 = vrot.slane %v469, %v701
  %v704 = vunpack.c.l.s4 1983009808
  %v705 = vunpack.c.0.s8 %v704
  %v706 = vlaneseq
  %v707 = vshrl.u32 %v706, 7
  %v708 = vsub.s32 %v705, %v707
  %v709 = vrot.slane %v695, %v708
  %v710 = vcombine.high %v702, %v702
  %v711 = vcombine.high %v709, %v709
  %v712 = vcombine.high %v477, %v477
  %v714 = vunpack.c.l.s4 1983009808
  %v715 = vunpack.c.0.s8 %v714
  %v716 = vlaneseq
  %v717 = vshrl.u32 %v716, 7
  %v718 = vsub.s32 %v715, %v717
  %v719 = vrot.slane %v477, %v718
  %v721 = vunpack.c.l.s4 1983009808
  %v722 = vunpack.c.0.s8 %v721
  %v723 = vlaneseq
  %v724 = vshrl.u32 %v723, 7
  %v725 = vsub.s32 %v722, %v724
  %v726 = vrot.slane %v712, %v725
  %v727 = vcombine.high %v719, %v719
  %v728 = vcombine.high %v726, %v726
  %s737 = scalar_lea.vmem [#allocation2], 74
  %738 = vst.msk [vmem:[%s737] sm:$0x3] %vm30, %v702
  %739 = vst.msk [vmem:[%s737 + $0x2] sm:$0x3] %vm30, %v710
  %740 = vst.msk [vmem:[%s737 + $0x4] sm:$0x3] %vm30, %v709
  %741 = vst.msk [vmem:[%s737 + $0x6] sm:$0x3] %vm30, %v711
  %742 = vst.msk [vmem:[%s737 + $0x90] sm:$0x3] %vm30, %v719
  %743 = vst.msk [vmem:[%s737 + $0x92] sm:$0x3] %vm30, %v727
  %744 = vst.msk [vmem:[%s737 + $0x94] sm:$0x3] %vm30, %v726
  %745 = vst.msk [vmem:[%s737 + $0x96] sm:$0x3] %vm30, %v728
  %v748 = vcombine.high %v470, %v470
  %v750 = vunpack.c.l.s4 1983009808
  %v751 = vunpack.c.0.s8 %v750
  %v752 = vlaneseq
  %v753 = vshrl.u32 %v752, 7
  %v754 = vsub.s32 %v751, %v753
  %v755 = vrot.slane %v470, %v754
  %v757 = vunpack.c.l.s4 1983009808
  %v758 = vunpack.c.0.s8 %v757
  %v759 = vlaneseq
  %v760 = vshrl.u32 %v759, 7
  %v761 = vsub.s32 %v758, %v760
  %v762 = vrot.slane %v748, %v761
  %v763 = vcombine.high %v755, %v755
  %v764 = vcombine.high %v762, %v762
  %v765 = vcombine.high %v478, %v478
  %v767 = vunpack.c.l.s4 1983009808
  %v768 = vunpack.c.0.s8 %v767
  %v769 = vlaneseq
  %v770 = vshrl.u32 %v769, 7
  %v771 = vsub.s32 %v768, %v770
  %v772 = vrot.slane %v478, %v771
  %v774 = vunpack.c.l.s4 1983009808
  %v775 = vunpack.c.0.s8 %v774
  %v776 = vlaneseq
  %v777 = vshrl.u32 %v776, 7
  %v778 = vsub.s32 %v775, %v777
  %v779 = vrot.slane %v765, %v778
  %v780 = vcombine.high %v772, %v772
  %v781 = vcombine.high %v779, %v779
  %s790 = scalar_lea.vmem [#allocation2], 86
  %791 = vst.msk [vmem:[%s790] sm:$0x3] %vm30, %v755
  %792 = vst.msk [vmem:[%s790 + $0x2] sm:$0x3] %vm30, %v763
  %793 = vst.msk [vmem:[%s790 + $0x4] sm:$0x3] %vm30, %v762
  %794 = vst.msk [vmem:[%s790 + $0x6] sm:$0x3] %vm30, %v764
  %795 = vst.msk [vmem:[%s790 + $0x90] sm:$0x3] %vm30, %v772
  %796 = vst.msk [vmem:[%s790 + $0x92] sm:$0x3] %vm30, %v780
  %797 = vst.msk [vmem:[%s790 + $0x94] sm:$0x3] %vm30, %v779
  %798 = vst.msk [vmem:[%s790 + $0x96] sm:$0x3] %vm30, %v781
  %v801 = vcombine.high %v471, %v471
  %v803 = vunpack.c.l.s4 1983009808
  %v804 = vunpack.c.0.s8 %v803
  %v805 = vlaneseq
  %v806 = vshrl.u32 %v805, 7
  %v807 = vsub.s32 %v804, %v806
  %v808 = vrot.slane %v471, %v807
  %v810 = vunpack.c.l.s4 1983009808
  %v811 = vunpack.c.0.s8 %v810
  %v812 = vlaneseq
  %v813 = vshrl.u32 %v812, 7
  %v814 = vsub.s32 %v811, %v813
  %v815 = vrot.slane %v801, %v814
  %v816 = vcombine.high %v808, %v808
  %v817 = vcombine.high %v815, %v815
  %v818 = vcombine.high %v479, %v479
  %v820 = vunpack.c.l.s4 1983009808
  %v821 = vunpack.c.0.s8 %v820
  %v822 = vlaneseq
  %v823 = vshrl.u32 %v822, 7
  %v824 = vsub.s32 %v821, %v823
  %v825 = vrot.slane %v479, %v824
  %v827 = vunpack.c.l.s4 1983009808
  %v828 = vunpack.c.0.s8 %v827
  %v829 = vlaneseq
  %v830 = vshrl.u32 %v829, 7
  %v831 = vsub.s32 %v828, %v830
  %v832 = vrot.slane %v818, %v831
  %v833 = vcombine.high %v825, %v825
  %v834 = vcombine.high %v832, %v832
  %s843 = scalar_lea.vmem [#allocation2], 98
  %844 = vst.msk [vmem:[%s843] sm:$0x3] %vm30, %v808
  %845 = vst.msk [vmem:[%s843 + $0x2] sm:$0x3] %vm30, %v816
  %846 = vst.msk [vmem:[%s843 + $0x4] sm:$0x3] %vm30, %v815
  %847 = vst.msk [vmem:[%s843 + $0x6] sm:$0x3] %vm30, %v817
  %848 = vst.msk [vmem:[%s843 + $0x90] sm:$0x3] %vm30, %v825
  %849 = vst.msk [vmem:[%s843 + $0x92] sm:$0x3] %vm30, %v833
  %850 = vst.msk [vmem:[%s843 + $0x94] sm:$0x3] %vm30, %v832
  %851 = vst.msk [vmem:[%s843 + $0x96] sm:$0x3] %vm30, %v834
  %v854 = vcombine.high %v472, %v472
  %v856 = vunpack.c.l.s4 1983009808
  %v857 = vunpack.c.0.s8 %v856
  %v858 = vlaneseq
  %v859 = vshrl.u32 %v858, 7
  %v860 = vsub.s32 %v857, %v859
  %v861 = vrot.slane %v472, %v860
  %v863 = vunpack.c.l.s4 1983009808
  %v864 = vunpack.c.0.s8 %v863
  %v865 = vlaneseq
  %v866 = vshrl.u32 %v865, 7
  %v867 = vsub.s32 %v864, %v866
  %v868 = vrot.slane %v854, %v867
  %v869 = vcombine.high %v861, %v861
  %v870 = vcombine.high %v868, %v868
  %v871 = vcombine.high %v480, %v480
  %v873 = vunpack.c.l.s4 1983009808
  %v874 = vunpack.c.0.s8 %v873
  %v875 = vlaneseq
  %v876 = vshrl.u32 %v875, 7
  %v877 = vsub.s32 %v874, %v876
  %v878 = vrot.slane %v480, %v877
  %v880 = vunpack.c.l.s4 1983009808
  %v881 = vunpack.c.0.s8 %v880
  %v882 = vlaneseq
  %v883 = vshrl.u32 %v882, 7
  %v884 = vsub.s32 %v881, %v883
  %v885 = vrot.slane %v871, %v884
  %v886 = vcombine.high %v878, %v878
  %v887 = vcombine.high %v885, %v885
  %s896 = scalar_lea.vmem [#allocation2], 110
  %897 = vst.msk [vmem:[%s896] sm:$0x3] %vm30, %v861
  %898 = vst.msk [vmem:[%s896 + $0x2] sm:$0x3] %vm30, %v869
  %899 = vst.msk [vmem:[%s896 + $0x4] sm:$0x3] %vm30, %v868
  %900 = vst.msk [vmem:[%s896 + $0x6] sm:$0x3] %vm30, %v870
  %901 = vst.msk [vmem:[%s896 + $0x90] sm:$0x3] %vm30, %v878
  %902 = vst.msk [vmem:[%s896 + $0x92] sm:$0x3] %vm30, %v886
  %903 = vst.msk [vmem:[%s896 + $0x94] sm:$0x3] %vm30, %v885
  %904 = vst.msk [vmem:[%s896 + $0x96] sm:$0x3] %vm30, %v887
  %s905 = scalar_lea.vmem [#allocation2], 12
  %v906 = vld [vmem:[%s905 + $0x1] sm:$0x1]
  %v907 = vld [vmem:[%s905 + $0x3] sm:$0x1]
  %v908 = vld [vmem:[%s905 + $0x5] sm:$0x1]
  %v909 = vld [vmem:[%s905 + $0x7] sm:$0x1]
  %v910 = vld [vmem:[%s905 + $0x19] sm:$0x1]
  %v911 = vld [vmem:[%s905 + $0x1b] sm:$0x1]
  %v912 = vld [vmem:[%s905 + $0x1d] sm:$0x1]
  %v913 = vld [vmem:[%s905 + $0x1f] sm:$0x1]
  %v914 = vld [vmem:[%s905 + $0x31] sm:$0x1]
  %v915 = vld [vmem:[%s905 + $0x33] sm:$0x1]
  %v916 = vld [vmem:[%s905 + $0x35] sm:$0x1]
  %v917 = vld [vmem:[%s905 + $0x37] sm:$0x1]
  %v918 = vld [vmem:[%s905 + $0x49] sm:$0x1]
  %v919 = vld [vmem:[%s905 + $0x4b] sm:$0x1]
  %v920 = vld [vmem:[%s905 + $0x4d] sm:$0x1]
  %v921 = vld [vmem:[%s905 + $0x4f] sm:$0x1]
  %v922 = vld [vmem:[%s905 + $0x91] sm:$0x1]
  %v923 = vld [vmem:[%s905 + $0x93] sm:$0x1]
  %v924 = vld [vmem:[%s905 + $0x95] sm:$0x1]
  %v925 = vld [vmem:[%s905 + $0x97] sm:$0x1]
  %v926 = vld [vmem:[%s905 + $0xa9] sm:$0x1]
  %v927 = vld [vmem:[%s905 + $0xab] sm:$0x1]
  %v928 = vld [vmem:[%s905 + $0xad] sm:$0x1]
  %v929 = vld [vmem:[%s905 + $0xaf] sm:$0x1]
  %v930 = vld [vmem:[%s905 + $0xc1] sm:$0x1]
  %v931 = vld [vmem:[%s905 + $0xc3] sm:$0x1]
  %v932 = vld [vmem:[%s905 + $0xc5] sm:$0x1]
  %v933 = vld [vmem:[%s905 + $0xc7] sm:$0x1]
  %v934 = vld [vmem:[%s905 + $0xd9] sm:$0x1]
  %v935 = vld [vmem:[%s905 + $0xdb] sm:$0x1]
  %v936 = vld [vmem:[%s905 + $0xdd] sm:$0x1]
  %v937 = vld [vmem:[%s905 + $0xdf] sm:$0x1]
  %v938 = vpack.c.bf16 %v906, %v906
  %v939 = vpack.c.bf16 %v907, %v907
  %v940 = vpack.c.bf16 %v908, %v908
  %v941 = vpack.c.bf16 %v909, %v909
  %v942 = vpack.c.bf16 %v910, %v910
  %v943 = vpack.c.bf16 %v911, %v911
  %v944 = vpack.c.bf16 %v912, %v912
  %v945 = vpack.c.bf16 %v913, %v913
  %v946 = vpack.c.bf16 %v914, %v914
  %v947 = vpack.c.bf16 %v915, %v915
  %v948 = vpack.c.bf16 %v916, %v916
  %v949 = vpack.c.bf16 %v917, %v917
  %v950 = vpack.c.bf16 %v918, %v918
  %v951 = vpack.c.bf16 %v919, %v919
  %v952 = vpack.c.bf16 %v920, %v920
  %v953 = vpack.c.bf16 %v921, %v921
  %v954 = vpack.c.bf16 %v922, %v922
  %v955 = vpack.c.bf16 %v923, %v923
  %v956 = vpack.c.bf16 %v924, %v924
  %v957 = vpack.c.bf16 %v925, %v925
  %v958 = vpack.c.bf16 %v926, %v926
  %v959 = vpack.c.bf16 %v927, %v927
  %v960 = vpack.c.bf16 %v928, %v928
  %v961 = vpack.c.bf16 %v929, %v929
  %v962 = vpack.c.bf16 %v930, %v930
  %v963 = vpack.c.bf16 %v931, %v931
  %v964 = vpack.c.bf16 %v932, %v932
  %v965 = vpack.c.bf16 %v933, %v933
  %v966 = vpack.c.bf16 %v934, %v934
  %v967 = vpack.c.bf16 %v935, %v935
  %v968 = vpack.c.bf16 %v936, %v936
  %v969 = vpack.c.bf16 %v937, %v937
  %v970 = vld [vmem:[%s2] sm:$0xf]
  %v971 = vld [vmem:[%s2 + $0x4] sm:$0xf]
  %v972 = vld [vmem:[%s2 + $0x8] sm:$0xf]
  %v973 = vld [vmem:[%s2 + $0xc] sm:$0xf]
  %v974 = vld [vmem:[%s2 + $0x10] sm:$0xf]
  %v975 = vld [vmem:[%s2 + $0x14] sm:$0xf]
  %v976 = vld [vmem:[%s2 + $0x18] sm:$0xf]
  %v977 = vld [vmem:[%s2 + $0x1c] sm:$0xf]
  %s978 = scalar_lea.vmem [#allocation2], 14
  %v979 = vld [vmem:[%s978] sm:$0x1]
  %v980 = vld [vmem:[%s978 + $0x2] sm:$0x1]
  %v981 = vld [vmem:[%s978 + $0x4] sm:$0x1]
  %v982 = vld [vmem:[%s978 + $0x6] sm:$0x1]
  %v983 = vld [vmem:[%s978 + $0x18] sm:$0x1]
  %v984 = vld [vmem:[%s978 + $0x1a] sm:$0x1]
  %v985 = vld [vmem:[%s978 + $0x1c] sm:$0x1]
  %v986 = vld [vmem:[%s978 + $0x1e] sm:$0x1]
  %v987 = vld [vmem:[%s978 + $0x30] sm:$0x1]
  %v988 = vld [vmem:[%s978 + $0x32] sm:$0x1]
  %v989 = vld [vmem:[%s978 + $0x34] sm:$0x1]
  %v990 = vld [vmem:[%s978 + $0x36] sm:$0x1]
  %v991 = vld [vmem:[%s978 + $0x48] sm:$0x1]
  %v992 = vld [vmem:[%s978 + $0x4a] sm:$0x1]
  %v993 = vld [vmem:[%s978 + $0x4c] sm:$0x1]
  %v994 = vld [vmem:[%s978 + $0x4e] sm:$0x1]
  %v995 = vld [vmem:[%s978 + $0x90] sm:$0x1]
  %v996 = vld [vmem:[%s978 + $0x92] sm:$0x1]
  %v997 = vld [vmem:[%s978 + $0x94] sm:$0x1]
  %v998 = vld [vmem:[%s978 + $0x96] sm:$0x1]
  %v999 = vld [vmem:[%s978 + $0xa8] sm:$0x1]
  %v1000 = vld [vmem:[%s978 + $0xaa] sm:$0x1]
  %v1001 = vld [vmem:[%s978 + $0xac] sm:$0x1]
  %v1002 = vld [vmem:[%s978 + $0xae] sm:$0x1]
  %v1003 = vld [vmem:[%s978 + $0xc0] sm:$0x1]
  %v1004 = vld [vmem:[%s978 + $0xc2] sm:$0x1]
  %v1005 = vld [vmem:[%s978 + $0xc4] sm:$0x1]
  %v1006 = vld [vmem:[%s978 + $0xc6] sm:$0x1]
  %v1007 = vld [vmem:[%s978 + $0xd8] sm:$0x1]
  %v1008 = vld [vmem:[%s978 + $0xda] sm:$0x1]
  %v1009 = vld [vmem:[%s978 + $0xdc] sm:$0x1]
  %v1010 = vld [vmem:[%s978 + $0xde] sm:$0x1]
  %v1011 = vpack.c.bf16 %v979, %v979
  %v1012 = vpack.c.bf16 %v980, %v980
  %v1013 = vpack.c.bf16 %v981, %v981
  %v1014 = vpack.c.bf16 %v982, %v982
  %v1015 = vpack.c.bf16 %v983, %v983
  %v1016 = vpack.c.bf16 %v984, %v984
  %v1017 = vpack.c.bf16 %v985, %v985
  %v1018 = vpack.c.bf16 %v986, %v986
  %v1019 = vpack.c.bf16 %v987, %v987
  %v1020 = vpack.c.bf16 %v988, %v988
  %v1021 = vpack.c.bf16 %v989, %v989
  %v1022 = vpack.c.bf16 %v990, %v990
  %v1023 = vpack.c.bf16 %v991, %v991
  %v1024 = vpack.c.bf16 %v992, %v992
  %v1025 = vpack.c.bf16 %v993, %v993
  %v1026 = vpack.c.bf16 %v994, %v994
  %v1027 = vpack.c.bf16 %v995, %v995
  %v1028 = vpack.c.bf16 %v996, %v996
  %v1029 = vpack.c.bf16 %v997, %v997
  %v1030 = vpack.c.bf16 %v998, %v998
  %v1031 = vpack.c.bf16 %v999, %v999
  %v1032 = vpack.c.bf16 %v1000, %v1000
  %v1033 = vpack.c.bf16 %v1001, %v1001
  %v1034 = vpack.c.bf16 %v1002, %v1002
  %v1035 = vpack.c.bf16 %v1003, %v1003
  %v1036 = vpack.c.bf16 %v1004, %v1004
  %v1037 = vpack.c.bf16 %v1005, %v1005
  %v1038 = vpack.c.bf16 %v1006, %v1006
  %v1039 = vpack.c.bf16 %v1007, %v1007
  %v1040 = vpack.c.bf16 %v1008, %v1008
  %v1041 = vpack.c.bf16 %v1009, %v1009
  %v1042 = vpack.c.bf16 %v1010, %v1010
  %v1043 = vld [vmem:[%s2 + $0x20] sm:$0xf]
  %v1044 = vld [vmem:[%s2 + $0x24] sm:$0xf]
  %v1045 = vld [vmem:[%s2 + $0x28] sm:$0xf]
  %v1046 = vld [vmem:[%s2 + $0x2c] sm:$0xf]
  %v1047 = vld [vmem:[%s2 + $0x30] sm:$0xf]
  %v1048 = vld [vmem:[%s2 + $0x34] sm:$0xf]
  %v1049 = vld [vmem:[%s2 + $0x38] sm:$0xf]
  %v1050 = vld [vmem:[%s2 + $0x3c] sm:$0xf]
  %v1083 = vunpack.c.l.b16 %v1011
  %v1084 = vunpack.c.l.b16 %v1012
  %v1085 = vunpack.c.l.b16 %v1013
  %v1086 = vunpack.c.l.b16 %v1014
  %v1087 = vunpack.c.l.b16 %v1015
  %v1088 = vunpack.c.l.b16 %v1016
  %v1089 = vunpack.c.l.b16 %v1017
  %v1090 = vunpack.c.l.b16 %v1018
  %v1091 = vunpack.c.l.b16 %v1019
  %v1092 = vunpack.c.l.b16 %v1020
  %v1093 = vunpack.c.l.b16 %v1021
  %v1094 = vunpack.c.l.b16 %v1022
  %v1095 = vunpack.c.l.b16 %v1023
  %v1096 = vunpack.c.l.b16 %v1024
  %v1097 = vunpack.c.l.b16 %v1025
  %v1098 = vunpack.c.l.b16 %v1026
  %v1099 = vunpack.c.l.b16 %v1027
  %v1100 = vunpack.c.l.b16 %v1028
  %v1101 = vunpack.c.l.b16 %v1029
  %v1102 = vunpack.c.l.b16 %v1030
  %v1103 = vunpack.c.l.b16 %v1031
  %v1104 = vunpack.c.l.b16 %v1032
  %v1105 = vunpack.c.l.b16 %v1033
  %v1106 = vunpack.c.l.b16 %v1034
  %v1107 = vunpack.c.l.b16 %v1035
  %v1108 = vunpack.c.l.b16 %v1036
  %v1109 = vunpack.c.l.b16 %v1037
  %v1110 = vunpack.c.l.b16 %v1038
  %v1111 = vunpack.c.l.b16 %v1039
  %v1112 = vunpack.c.l.b16 %v1040
  %v1113 = vunpack.c.l.b16 %v1041
  %v1114 = vunpack.c.l.b16 %v1042
  %v1115 = vrot.slane %v1084, 7
  %vm1116 = vcmask 1041409
  %v1117 = vsel %vm1116, %v1115, %v1083
  %v1118 = vrot.slane %v1085, 6
  %vm1119 = vcmask 1042434
  %v1120 = vsel %vm1119, %v1118, %v1117
  %v1121 = vrot.slane %v1086, 5
  %vm1122 = vcmask 1043459
  %v1123 = vsel %vm1122, %v1121, %v1120
  %v1124 = vrot.slane %v1087, 4
  %vm1125 = vcmask 1044484
  %v1126 = vsel %vm1125, %v1124, %v1123
  %v1127 = vrot.slane %v1088, 3
  %vm1128 = vcmask 1045509
  %v1129 = vsel %vm1128, %v1127, %v1126
  %v1130 = vrot.slane %v1089, 2
  %vm1131 = vcmask 1046534
  %v1132 = vsel %vm1131, %v1130, %v1129
  %v1133 = vrot.slane %v1090, 1
  %vm1134 = vcmask 1047559
  %v1135 = vsel %vm1134, %v1133, %v1132
  %v1136 = vrot.slane %v1092, 7
  %v1137 = vsel %vm1116, %v1136, %v1091
  %v1138 = vrot.slane %v1093, 6
  %v1139 = vsel %vm1119, %v1138, %v1137
  %v1140 = vrot.slane %v1094, 5
  %v1141 = vsel %vm1122, %v1140, %v1139
  %v1142 = vrot.slane %v1095, 4
  %v1143 = vsel %vm1125, %v1142, %v1141
  %v1144 = vrot.slane %v1096, 3
  %v1145 = vsel %vm1128, %v1144, %v1143
  %v1146 = vrot.slane %v1097, 2
  %v1147 = vsel %vm1131, %v1146, %v1145
  %v1148 = vrot.slane %v1098, 1
  %v1149 = vsel %vm1134, %v1148, %v1147
  %v1150 = vrot.slane %v1100, 7
  %v1151 = vsel %vm1116, %v1150, %v1099
  %v1152 = vrot.slane %v1101, 6
  %v1153 = vsel %vm1119, %v1152, %v1151
  %v1154 = vrot.slane %v1102, 5
  %v1155 = vsel %vm1122, %v1154, %v1153
  %v1156 = vrot.slane %v1103, 4
  %v1157 = vsel %vm1125, %v1156, %v1155
  %v1158 = vrot.slane %v1104, 3
  %v1159 = vsel %vm1128, %v1158, %v1157
  %v1160 = vrot.slane %v1105, 2
  %v1161 = vsel %vm1131, %v1160, %v1159
  %v1162 = vrot.slane %v1106, 1
  %v1163 = vsel %vm1134, %v1162, %v1161
  %v1164 = vrot.slane %v1108, 7
  %v1165 = vsel %vm1116, %v1164, %v1107
  %v1166 = vrot.slane %v1109, 6
  %v1167 = vsel %vm1119, %v1166, %v1165
  %v1168 = vrot.slane %v1110, 5
  %v1169 = vsel %vm1122, %v1168, %v1167
  %v1170 = vrot.slane %v1111, 4
  %v1171 = vsel %vm1125, %v1170, %v1169
  %v1172 = vrot.slane %v1112, 3
  %v1173 = vsel %vm1128, %v1172, %v1171
  %v1174 = vrot.slane %v1113, 2
  %v1175 = vsel %vm1131, %v1174, %v1173
  %v1176 = vrot.slane %v1114, 1
  %v1177 = vsel %vm1134, %v1176, %v1175
  %v1178 = vpack.c.b16 %v1149, %v1135
  %v1179 = vpack.c.b16 %v1177, %v1163
  %v1188 = vunpack.c.l.b16 %v1043
  %v1189 = vunpack.c.l.b16 %v1044
  %v1190 = vunpack.c.l.b16 %v1045
  %v1191 = vunpack.c.l.b16 %v1046
  %v1192 = vunpack.c.l.b16 %v1047
  %v1193 = vunpack.c.l.b16 %v1048
  %v1194 = vunpack.c.l.b16 %v1049
  %v1195 = vunpack.c.l.b16 %v1050
  %v1196 = vpack.c.b16 %v1189, %v1188
  %v1197 = vpack.c.b16 %v1191, %v1190
  %v1198 = vpack.c.b16 %v1193, %v1192
  %v1199 = vpack.c.b16 %v1195, %v1194
  %v1205 = vsel %vm327, %v1178, 0
  %v1208 = vsel %vm327, %v1179, 0
  %1210 = vmatprep.subr.bf16.mxu0 0
  %1211 = vmatpush1.bf16.msra.mxu0 %v1196
  %1212 = vmatprep.subr.bf16.mxu0 0
  %1213 = vmatpush1.bf16.msra.mxu0 %v1197
  %1214 = vmatprep.subr.bf16.mxu0 0
  %1215 = vmatpush1.bf16.msra.mxu0 %v1198
  %1216 = vmatprep.subr.bf16.mxu0 0
  %1217 = vmatpush1.bf16.msra.mxu0 %v1199
  %1218 = vmatprep.subr.bf16.mxu0 0
  %1219 = vmatpush1.bf16.msra.mxu0 0
  %1220 = vmatprep.subr.bf16.mxu0 0
  %1221 = vmatpush1.bf16.msra.mxu0 0
  %1222 = vmatprep.subr.bf16.mxu0 0
  %1223 = vmatpush1.bf16.msra.mxu0 0
  %1224 = vmatprep.subr.bf16.mxu0 0
  %1225 = vmatpush1.bf16.msra.mxu0 0
  %1226 = vmatprep.subr.bf16.mxu0 0
  %1227 = vmatpush1.bf16.msra.mxu0 0
  %1228 = vmatprep.subr.bf16.mxu0 0
  %1229 = vmatpush1.bf16.msra.mxu0 0
  %1230 = vmatprep.subr.bf16.mxu0 0
  %1231 = vmatpush1.bf16.msra.mxu0 0
  %1232 = vmatprep.subr.bf16.mxu0 0
  %1233 = vmatpush1.bf16.msra.mxu0 0
  %1234 = vmatprep.subr.bf16.mxu0 0
  %1235 = vmatpush1.bf16.msra.mxu0 0
  %1236 = vmatprep.subr.bf16.mxu0 0
  %1237 = vmatpush1.bf16.msra.mxu0 0
  %1238 = vmatprep.subr.bf16.mxu0 0
  %1239 = vmatpush1.bf16.msra.mxu0 0
  %1240 = vmatprep.subr.bf16.mxu0 0
  %1241 = vmatpush1.bf16.msra.mxu0 0
  %1242 = vmatprep.mubr.bf16.mxu0 0
  %1243 = vmatmul.mubr.bf16.gmra.mrb[0].mxu0 %v1205
  %v1244 = vpop.f32.mrb[0].mxu0
  %v1245 = vadd.f32 0.0, %v1244
  %v1246 = vpop.f32.mrb[0].mxu0
  %v1247 = vpop.f32.mrb[0].mxu0
  %v1248 = vadd.f32 0.0, %v1247
  %v1249 = vpop.f32.mrb[0].mxu0
  %1250 = vmatprep.mubr.bf16.mxu0 0
  %1251 = vmatmul.mubr.bf16.gmra.mrb[0].mxu0 %v1208
  %v1252 = vpop.f32.mrb[0].mxu0
  %v1253 = vadd.f32 0.0, %v1252
  %v1254 = vpop.f32.mrb[0].mxu0
  %v1255 = vpop.f32.mrb[0].mxu0
  %v1256 = vadd.f32 0.0, %v1255
  %v1257 = vpop.f32.mrb[0].mxu0
  %1258 = vdwg.mxu0
  %v1291 = vunpack.c.l.b16 %v938
  %v1292 = vunpack.c.l.b16 %v939
  %v1293 = vunpack.c.l.b16 %v940
  %v1294 = vunpack.c.l.b16 %v941
  %v1295 = vunpack.c.l.b16 %v942
  %v1296 = vunpack.c.l.b16 %v943
  %v1297 = vunpack.c.l.b16 %v944
  %v1298 = vunpack.c.l.b16 %v945
  %v1299 = vunpack.c.l.b16 %v946
  %v1300 = vunpack.c.l.b16 %v947
  %v1301 = vunpack.c.l.b16 %v948
  %v1302 = vunpack.c.l.b16 %v949
  %v1303 = vunpack.c.l.b16 %v950
  %v1304 = vunpack.c.l.b16 %v951
  %v1305 = vunpack.c.l.b16 %v952
  %v1306 = vunpack.c.l.b16 %v953
  %v1307 = vunpack.c.l.b16 %v954
  %v1308 = vunpack.c.l.b16 %v955
  %v1309 = vunpack.c.l.b16 %v956
  %v1310 = vunpack.c.l.b16 %v957
  %v1311 = vunpack.c.l.b16 %v958
  %v1312 = vunpack.c.l.b16 %v959
  %v1313 = vunpack.c.l.b16 %v960
  %v1314 = vunpack.c.l.b16 %v961
  %v1315 = vunpack.c.l.b16 %v962
  %v1316 = vunpack.c.l.b16 %v963
  %v1317 = vunpack.c.l.b16 %v964
  %v1318 = vunpack.c.l.b16 %v965
  %v1319 = vunpack.c.l.b16 %v966
  %v1320 = vunpack.c.l.b16 %v967
  %v1321 = vunpack.c.l.b16 %v968
  %v1322 = vunpack.c.l.b16 %v969
  %v1323 = vrot.slane %v1292, 7
  %v1324 = vsel %vm1116, %v1323, %v1291
  %v1325 = vrot.slane %v1293, 6
  %v1326 = vsel %vm1119, %v1325, %v1324
  %v1327 = vrot.slane %v1294, 5
  %v1328 = vsel %vm1122, %v1327, %v1326
  %v1329 = vrot.slane %v1295, 4
  %v1330 = vsel %vm1125, %v1329, %v1328
  %v1331 = vrot.slane %v1296, 3
  %v1332 = vsel %vm1128, %v1331, %v1330
  %v1333 = vrot.slane %v1297, 2
  %v1334 = vsel %vm1131, %v1333, %v1332
  %v1335 = vrot.slane %v1298, 1
  %v1336 = vsel %vm1134, %v1335, %v1334
  %v1337 = vrot.slane %v1300, 7
  %v1338 = vsel %vm1116, %v1337, %v1299
  %v1339 = vrot.slane %v1301, 6
  %v1340 = vsel %vm1119, %v1339, %v1338
  %v1341 = vrot.slane %v1302, 5
  %v1342 = vsel %vm1122, %v1341, %v1340
  %v1343 = vrot.slane %v1303, 4
  %v1344 = vsel %vm1125, %v1343, %v1342
  %v1345 = vrot.slane %v1304, 3
  %v1346 = vsel %vm1128, %v1345, %v1344
  %v1347 = vrot.slane %v1305, 2
  %v1348 = vsel %vm1131, %v1347, %v1346
  %v1349 = vrot.slane %v1306, 1
  %v1350 = vsel %vm1134, %v1349, %v1348
  %v1351 = vrot.slane %v1308, 7
  %v1352 = vsel %vm1116, %v1351, %v1307
  %v1353 = vrot.slane %v1309, 6
  %v1354 = vsel %vm1119, %v1353, %v1352
  %v1355 = vrot.slane %v1310, 5
  %v1356 = vsel %vm1122, %v1355, %v1354
  %v1357 = vrot.slane %v1311, 4
  %v1358 = vsel %vm1125, %v1357, %v1356
  %v1359 = vrot.slane %v1312, 3
  %v1360 = vsel %vm1128, %v1359, %v1358
  %v1361 = vrot.slane %v1313, 2
  %v1362 = vsel %vm1131, %v1361, %v1360
  %v1363 = vrot.slane %v1314, 1
  %v1364 = vsel %vm1134, %v1363, %v1362
  %v1365 = vrot.slane %v1316, 7
  %v1366 = vsel %vm1116, %v1365, %v1315
  %v1367 = vrot.slane %v1317, 6
  %v1368 = vsel %vm1119, %v1367, %v1366
  %v1369 = vrot.slane %v1318, 5
  %v1370 = vsel %vm1122, %v1369, %v1368
  %v1371 = vrot.slane %v1319, 4
  %v1372 = vsel %vm1125, %v1371, %v1370
  %v1373 = vrot.slane %v1320, 3
  %v1374 = vsel %vm1128, %v1373, %v1372
  %v1375 = vrot.slane %v1321, 2
  %v1376 = vsel %vm1131, %v1375, %v1374
  %v1377 = vrot.slane %v1322, 1
  %v1378 = vsel %vm1134, %v1377, %v1376
  %v1379 = vpack.c.b16 %v1350, %v1336
  %v1380 = vpack.c.b16 %v1378, %v1364
  %v1389 = vunpack.c.l.b16 %v970
  %v1390 = vunpack.c.l.b16 %v971
  %v1391 = vunpack.c.l.b16 %v972
  %v1392 = vunpack.c.l.b16 %v973
  %v1393 = vunpack.c.l.b16 %v974
  %v1394 = vunpack.c.l.b16 %v975
  %v1395 = vunpack.c.l.b16 %v976
  %v1396 = vunpack.c.l.b16 %v977
  %v1397 = vpack.c.b16 %v1390, %v1389
  %v1398 = vpack.c.b16 %v1392, %v1391
  %v1399 = vpack.c.b16 %v1394, %v1393
  %v1400 = vpack.c.b16 %v1396, %v1395
  %v1406 = vsel %vm327, %v1379, 0
  %v1409 = vsel %vm327, %v1380, 0
  %1411 = vmatprep.subr.bf16.mxu0 0
  %1412 = vmatpush1.bf16.msra.mxu0 %v1397
  %1413 = vmatprep.subr.bf16.mxu0 0
  %1414 = vmatpush1.bf16.msra.mxu0 %v1398
  %1415 = vmatprep.subr.bf16.mxu0 0
  %1416 = vmatpush1.bf16.msra.mxu0 %v1399
  %1417 = vmatprep.subr.bf16.mxu0 0
  %1418 = vmatpush1.bf16.msra.mxu0 %v1400
  %1419 = vmatprep.subr.bf16.mxu0 0
  %1420 = vmatpush1.bf16.msra.mxu0 0
  %1421 = vmatprep.subr.bf16.mxu0 0
  %1422 = vmatpush1.bf16.msra.mxu0 0
  %1423 = vmatprep.subr.bf16.mxu0 0
  %1424 = vmatpush1.bf16.msra.mxu0 0
  %1425 = vmatprep.subr.bf16.mxu0 0
  %1426 = vmatpush1.bf16.msra.mxu0 0
  %1427 = vmatprep.subr.bf16.mxu0 0
  %1428 = vmatpush1.bf16.msra.mxu0 0
  %1429 = vmatprep.subr.bf16.mxu0 0
  %1430 = vmatpush1.bf16.msra.mxu0 0
  %1431 = vmatprep.subr.bf16.mxu0 0
  %1432 = vmatpush1.bf16.msra.mxu0 0
  %1433 = vmatprep.subr.bf16.mxu0 0
  %1434 = vmatpush1.bf16.msra.mxu0 0
  %1435 = vmatprep.subr.bf16.mxu0 0
  %1436 = vmatpush1.bf16.msra.mxu0 0
  %1437 = vmatprep.subr.bf16.mxu0 0
  %1438 = vmatpush1.bf16.msra.mxu0 0
  %1439 = vmatprep.subr.bf16.mxu0 0
  %1440 = vmatpush1.bf16.msra.mxu0 0
  %1441 = vmatprep.subr.bf16.mxu0 0
  %1442 = vmatpush1.bf16.msra.mxu0 0
  %1443 = vmatprep.mubr.bf16.mxu0 0
  %1444 = vmatmul.mubr.bf16.gmra.mrb[0].mxu0 %v1406
  %v1445 = vpop.f32.mrb[0].mxu0
  %v1446 = vadd.f32 %v1245, %v1445
  %v1447 = vpop.f32.mrb[0].mxu0
  %v1448 = vpop.f32.mrb[0].mxu0
  %v1449 = vadd.f32 %v1248, %v1448
  %v1450 = vpop.f32.mrb[0].mxu0
  %1451 = vmatprep.mubr.bf16.mxu0 0
  %1452 = vmatmul.mubr.bf16.gmra.mrb[0].mxu0 %v1409
  %v1453 = vpop.f32.mrb[0].mxu0
  %v1454 = vadd.f32 %v1253, %v1453
  %v1455 = vpop.f32.mrb[0].mxu0
  %v1456 = vpop.f32.mrb[0].mxu0
  %v1457 = vadd.f32 %v1256, %v1456
  %v1458 = vpop.f32.mrb[0].mxu0
  %1459 = vdwg.mxu0
  %v1460 = vld [vmem:[%s978 + $0x1] sm:$0x1]
  %v1461 = vld [vmem:[%s978 + $0x3] sm:$0x1]
  %v1462 = vld [vmem:[%s978 + $0x5] sm:$0x1]
  %v1463 = vld [vmem:[%s978 + $0x7] sm:$0x1]
  %v1464 = vld [vmem:[%s978 + $0x19] sm:$0x1]
  %v1465 = vld [vmem:[%s978 + $0x1b] sm:$0x1]
  %v1466 = vld [vmem:[%s978 + $0x1d] sm:$0x1]
  %v1467 = vld [vmem:[%s978 + $0x1f] sm:$0x1]
  %v1468 = vld [vmem:[%s978 + $0x31] sm:$0x1]
  %v1469 = vld [vmem:[%s978 + $0x33] sm:$0x1]
  %v1470 = vld [vmem:[%s978 + $0x35] sm:$0x1]
  %v1471 = vld [vmem:[%s978 + $0x37] sm:$0x1]
  %v1472 = vld [vmem:[%s978 + $0x49] sm:$0x1]
  %v1473 = vld [vmem:[%s978 + $0x4b] sm:$0x1]
  %v1474 = vld [vmem:[%s978 + $0x4d] sm:$0x1]
  %v1475 = vld [vmem:[%s978 + $0x4f] sm:$0x1]
  %v1476 = vld [vmem:[%s978 + $0x91] sm:$0x1]
  %v1477 = vld [vmem:[%s978 + $0x93] sm:$0x1]
  %v1478 = vld [vmem:[%s978 + $0x95] sm:$0x1]
  %v1479 = vld [vmem:[%s978 + $0x97] sm:$0x1]
  %v1480 = vld [vmem:[%s978 + $0xa9] sm:$0x1]
  %v1481 = vld [vmem:[%s978 + $0xab] sm:$0x1]
  %v1482 = vld [vmem:[%s978 + $0xad] sm:$0x1]
  %v1483 = vld [vmem:[%s978 + $0xaf] sm:$0x1]
  %v1484 = vld [vmem:[%s978 + $0xc1] sm:$0x1]
  %v1485 = vld [vmem:[%s978 + $0xc3] sm:$0x1]
  %v1486 = vld [vmem:[%s978 + $0xc5] sm:$0x1]
  %v1487 = vld [vmem:[%s978 + $0xc7] sm:$0x1]
  %v1488 = vld [vmem:[%s978 + $0xd9] sm:$0x1]
  %v1489 = vld [vmem:[%s978 + $0xdb] sm:$0x1]
  %v1490 = vld [vmem:[%s978 + $0xdd] sm:$0x1]
  %v1491 = vld [vmem:[%s978 + $0xdf] sm:$0x1]
  %v1492 = vpack.c.bf16 %v1460, %v1460
  %v1493 = vpack.c.bf16 %v1461, %v1461
  %v1494 = vpack.c.bf16 %v1462, %v1462
  %v1495 = vpack.c.bf16 %v1463, %v1463
  %v1496 = vpack.c.bf16 %v1464, %v1464
  %v1497 = vpack.c.bf16 %v1465, %v1465
  %v1498 = vpack.c.bf16 %v1466, %v1466
  %v1499 = vpack.c.bf16 %v1467, %v1467
  %v1500 = vpack.c.bf16 %v1468, %v1468
  %v1501 = vpack.c.bf16 %v1469, %v1469
  %v1502 = vpack.c.bf16 %v1470, %v1470
  %v1503 = vpack.c.bf16 %v1471, %v1471
  %v1504 = vpack.c.bf16 %v1472, %v1472
  %v1505 = vpack.c.bf16 %v1473, %v1473
  %v1506 = vpack.c.bf16 %v1474, %v1474
  %v1507 = vpack.c.bf16 %v1475, %v1475
  %v1508 = vpack.c.bf16 %v1476, %v1476
  %v1509 = vpack.c.bf16 %v1477, %v1477
  %v1510 = vpack.c.bf16 %v1478, %v1478
  %v1511 = vpack.c.bf16 %v1479, %v1479
  %v1512 = vpack.c.bf16 %v1480, %v1480
  %v1513 = vpack.c.bf16 %v1481, %v1481
  %v1514 = vpack.c.bf16 %v1482, %v1482
  %v1515 = vpack.c.bf16 %v1483, %v1483
  %v1516 = vpack.c.bf16 %v1484, %v1484
  %v1517 = vpack.c.bf16 %v1485, %v1485
  %v1518 = vpack.c.bf16 %v1486, %v1486
  %v1519 = vpack.c.bf16 %v1487, %v1487
  %v1520 = vpack.c.bf16 %v1488, %v1488
  %v1521 = vpack.c.bf16 %v1489, %v1489
  %v1522 = vpack.c.bf16 %v1490, %v1490
  %v1523 = vpack.c.bf16 %v1491, %v1491
  %v1524 = vld [vmem:[%s2 + $0x40] sm:$0xf]
  %v1525 = vld [vmem:[%s2 + $0x44] sm:$0xf]
  %v1526 = vld [vmem:[%s2 + $0x48] sm:$0xf]
  %v1527 = vld [vmem:[%s2 + $0x4c] sm:$0xf]
  %v1528 = vld [vmem:[%s2 + $0x50] sm:$0xf]
  %v1529 = vld [vmem:[%s2 + $0x54] sm:$0xf]
  %v1530 = vld [vmem:[%s2 + $0x58] sm:$0xf]
  %v1531 = vld [vmem:[%s2 + $0x5c] sm:$0xf]
  %v1564 = vunpack.c.l.b16 %v1492
  %v1565 = vunpack.c.l.b16 %v1493
  %v1566 = vunpack.c.l.b16 %v1494
  %v1567 = vunpack.c.l.b16 %v1495
  %v1568 = vunpack.c.l.b16 %v1496
  %v1569 = vunpack.c.l.b16 %v1497
  %v1570 = vunpack.c.l.b16 %v1498
  %v1571 = vunpack.c.l.b16 %v1499
  %v1572 = vunpack.c.l.b16 %v1500
  %v1573 = vunpack.c.l.b16 %v1501
  %v1574 = vunpack.c.l.b16 %v1502
  %v1575 = vunpack.c.l.b16 %v1503
  %v1576 = vunpack.c.l.b16 %v1504
  %v1577 = vunpack.c.l.b16 %v1505
  %v1578 = vunpack.c.l.b16 %v1506
  %v1579 = vunpack.c.l.b16 %v1507
  %v1580 = vunpack.c.l.b16 %v1508
  %v1581 = vunpack.c.l.b16 %v1509
  %v1582 = vunpack.c.l.b16 %v1510
  %v1583 = vunpack.c.l.b16 %v1511
  %v1584 = vunpack.c.l.b16 %v1512
  %v1585 = vunpack.c.l.b16 %v1513
  %v1586 = vunpack.c.l.b16 %v1514
  %v1587 = vunpack.c.l.b16 %v1515
  %v1588 = vunpack.c.l.b16 %v1516
  %v1589 = vunpack.c.l.b16 %v1517
  %v1590 = vunpack.c.l.b16 %v1518
  %v1591 = vunpack.c.l.b16 %v1519
  %v1592 = vunpack.c.l.b16 %v1520
  %v1593 = vunpack.c.l.b16 %v1521
  %v1594 = vunpack.c.l.b16 %v1522
  %v1595 = vunpack.c.l.b16 %v1523
  %v1596 = vrot.slane %v1565, 7
  %v1597 = vsel %vm1116, %v1596, %v1564
  %v1598 = vrot.slane %v1566, 6
  %v1599 = vsel %vm1119, %v1598, %v1597
  %v1600 = vrot.slane %v1567, 5
  %v1601 = vsel %vm1122, %v1600, %v1599
  %v1602 = vrot.slane %v1568, 4
  %v1603 = vsel %vm1125, %v1602, %v1601
  %v1604 = vrot.slane %v1569, 3
  %v1605 = vsel %vm1128, %v1604, %v1603
  %v1606 = vrot.slane %v1570, 2
  %v1607 = vsel %vm1131, %v1606, %v1605
  %v1608 = vrot.slane %v1571, 1
  %v1609 = vsel %vm1134, %v1608, %v1607
  %v1610 = vrot.slane %v1573, 7
  %v1611 = vsel %vm1116, %v1610, %v1572
  %v1612 = vrot.slane %v1574, 6
  %v1613 = vsel %vm1119, %v1612, %v1611
  %v1614 = vrot.slane %v1575, 5
  %v1615 = vsel %vm1122, %v1614, %v1613
  %v1616 = vrot.slane %v1576, 4
  %v1617 = vsel %vm1125, %v1616, %v1615
  %v1618 = vrot.slane %v1577, 3
  %v1619 = vsel %vm1128, %v1618, %v1617
  %v1620 = vrot.slane %v1578, 2
  %v1621 = vsel %vm1131, %v1620, %v1619
  %v1622 = vrot.slane %v1579, 1
  %v1623 = vsel %vm1134, %v1622, %v1621
  %v1624 = vrot.slane %v1581, 7
  %v1625 = vsel %vm1116, %v1624, %v1580
  %v1626 = vrot.slane %v1582, 6
  %v1627 = vsel %vm1119, %v1626, %v1625
  %v1628 = vrot.slane %v1583, 5
  %v1629 = vsel %vm1122, %v1628, %v1627
  %v1630 = vrot.slane %v1584, 4
  %v1631 = vsel %vm1125, %v1630, %v1629
  %v1632 = vrot.slane %v1585, 3
  %v1633 = vsel %vm1128, %v1632, %v1631
  %v1634 = vrot.slane %v1586, 2
  %v1635 = vsel %vm1131, %v1634, %v1633
  %v1636 = vrot.slane %v1587, 1
  %v1637 = vsel %vm1134, %v1636, %v1635
  %v1638 = vrot.slane %v1589, 7
  %v1639 = vsel %vm1116, %v1638, %v1588
  %v1640 = vrot.slane %v1590, 6
  %v1641 = vsel %vm1119, %v1640, %v1639
  %v1642 = vrot.slane %v1591, 5
  %v1643 = vsel %vm1122, %v1642, %v1641
  %v1644 = vrot.slane %v1592, 4
  %v1645 = vsel %vm1125, %v1644, %v1643
  %v1646 = vrot.slane %v1593, 3
  %v1647 = vsel %vm1128, %v1646, %v1645
  %v1648 = vrot.slane %v1594, 2
  %v1649 = vsel %vm1131, %v1648, %v1647
  %v1650 = vrot.slane %v1595, 1
  %v1651 = vsel %vm1134, %v1650, %v1649
  %v1652 = vpack.c.b16 %v1623, %v1609
  %v1653 = vpack.c.b16 %v1651, %v1637
  %v1662 = vunpack.c.l.b16 %v1524
  %v1663 = vunpack.c.l.b16 %v1525
  %v1664 = vunpack.c.l.b16 %v1526
  %v1665 = vunpack.c.l.b16 %v1527
  %v1666 = vunpack.c.l.b16 %v1528
  %v1667 = vunpack.c.l.b16 %v1529
  %v1668 = vunpack.c.l.b16 %v1530
  %v1669 = vunpack.c.l.b16 %v1531
  %v1670 = vpack.c.b16 %v1663, %v1662
  %v1671 = vpack.c.b16 %v1665, %v1664
  %v1672 = vpack.c.b16 %v1667, %v1666
  %v1673 = vpack.c.b16 %v1669, %v1668
  %v1679 = vsel %vm327, %v1652, 0
  %v1682 = vsel %vm327, %v1653, 0
  %1684 = vmatprep.subr.bf16.mxu0 0
  %1685 = vmatpush1.bf16.msra.mxu0 %v1670
  %1686 = vmatprep.subr.bf16.mxu0 0
  %1687 = vmatpush1.bf16.msra.mxu0 %v1671
  %1688 = vmatprep.subr.bf16.mxu0 0
  %1689 = vmatpush1.bf16.msra.mxu0 %v1672
  %1690 = vmatprep.subr.bf16.mxu0 0
  %1691 = vmatpush1.bf16.msra.mxu0 %v1673
  %1692 = vmatprep.subr.bf16.mxu0 0
  %1693 = vmatpush1.bf16.msra.mxu0 0
  %1694 = vmatprep.subr.bf16.mxu0 0
  %1695 = vmatpush1.bf16.msra.mxu0 0
  %1696 = vmatprep.subr.bf16.mxu0 0
  %1697 = vmatpush1.bf16.msra.mxu0 0
  %1698 = vmatprep.subr.bf16.mxu0 0
  %1699 = vmatpush1.bf16.msra.mxu0 0
  %1700 = vmatprep.subr.bf16.mxu0 0
  %1701 = vmatpush1.bf16.msra.mxu0 0
  %1702 = vmatprep.subr.bf16.mxu0 0
  %1703 = vmatpush1.bf16.msra.mxu0 0
  %1704 = vmatprep.subr.bf16.mxu0 0
  %1705 = vmatpush1.bf16.msra.mxu0 0
  %1706 = vmatprep.subr.bf16.mxu0 0
  %1707 = vmatpush1.bf16.msra.mxu0 0
  %1708 = vmatprep.subr.bf16.mxu0 0
  %1709 = vmatpush1.bf16.msra.mxu0 0
  %1710 = vmatprep.subr.bf16.mxu0 0
  %1711 = vmatpush1.bf16.msra.mxu0 0
  %1712 = vmatprep.subr.bf16.mxu0 0
  %1713 = vmatpush1.bf16.msra.mxu0 0
  %1714 = vmatprep.subr.bf16.mxu0 0
  %1715 = vmatpush1.bf16.msra.mxu0 0
  %1716 = vmatprep.mubr.bf16.mxu0 0
  %1717 = vmatmul.mubr.bf16.gmra.mrb[0].mxu0 %v1679
  %v1718 = vpop.f32.mrb[0].mxu0
  %v1719 = vadd.f32 0.0, %v1718
  %v1720 = vpop.f32.mrb[0].mxu0
  %v1721 = vpop.f32.mrb[0].mxu0
  %v1722 = vadd.f32 0.0, %v1721
  %v1723 = vpop.f32.mrb[0].mxu0
  %1724 = vmatprep.mubr.bf16.mxu0 0
  %1725 = vmatmul.mubr.bf16.gmra.mrb[0].mxu0 %v1682
  %v1726 = vpop.f32.mrb[0].mxu0
  %v1727 = vadd.f32 0.0, %v1726
  %v1728 = vpop.f32.mrb[0].mxu0
  %v1729 = vpop.f32.mrb[0].mxu0
  %v1730 = vadd.f32 0.0, %v1729
  %v1731 = vpop.f32.mrb[0].mxu0
  %1732 = vdwg.mxu0
  %v1733 = vadd.f32 %v1446, %v1719
  %v1734 = vadd.f32 %v1449, %v1722
  %v1735 = vadd.f32 %v1454, %v1727
  %v1736 = vadd.f32 %v1457, %v1730
  %s1737 = scalar_lea.vmem [#allocation2], 16
  %v1738 = vld [vmem:[%s1737] sm:$0x1]
  %v1739 = vld [vmem:[%s1737 + $0x2] sm:$0x1]
  %v1740 = vld [vmem:[%s1737 + $0x4] sm:$0x1]
  %v1741 = vld [vmem:[%s1737 + $0x6] sm:$0x1]
  %v1742 = vld [vmem:[%s1737 + $0x18] sm:$0x1]
  %v1743 = vld [vmem:[%s1737 + $0x1a] sm:$0x1]
  %v1744 = vld [vmem:[%s1737 + $0x1c] sm:$0x1]
  %v1745 = vld [vmem:[%s1737 + $0x1e] sm:$0x1]
  %v1746 = vld [vmem:[%s1737 + $0x30] sm:$0x1]
  %v1747 = vld [vmem:[%s1737 + $0x32] sm:$0x1]
  %v1748 = vld [vmem:[%s1737 + $0x34] sm:$0x1]
  %v1749 = vld [vmem:[%s1737 + $0x36] sm:$0x1]
  %v1750 = vld [vmem:[%s1737 + $0x48] sm:$0x1]
  %v1751 = vld [vmem:[%s1737 + $0x4a] sm:$0x1]
  %v1752 = vld [vmem:[%s1737 + $0x4c] sm:$0x1]
  %v1753 = vld [vmem:[%s1737 + $0x4e] sm:$0x1]
  %v1754 = vld [vmem:[%s1737 + $0x90] sm:$0x1]
  %v1755 = vld [vmem:[%s1737 + $0x92] sm:$0x1]
  %v1756 = vld [vmem:[%s1737 + $0x94] sm:$0x1]
  %v1757 = vld [vmem:[%s1737 + $0x96] sm:$0x1]
  %v1758 = vld [vmem:[%s1737 + $0xa8] sm:$0x1]
  %v1759 = vld [vmem:[%s1737 + $0xaa] sm:$0x1]
  %v1760 = vld [vmem:[%s1737 + $0xac] sm:$0x1]
  %v1761 = vld [vmem:[%s1737 + $0xae] sm:$0x1]
  %v1762 = vld [vmem:[%s1737 + $0xc0] sm:$0x1]
  %v1763 = vld [vmem:[%s1737 + $0xc2] sm:$0x1]
  %v1764 = vld [vmem:[%s1737 + $0xc4] sm:$0x1]
  %v1765 = vld [vmem:[%s1737 + $0xc6] sm:$0x1]
  %v1766 = vld [vmem:[%s1737 + $0xd8] sm:$0x1]
  %v1767 = vld [vmem:[%s1737 + $0xda] sm:$0x1]
  %v1768 = vld [vmem:[%s1737 + $0xdc] sm:$0x1]
  %v1769 = vld [vmem:[%s1737 + $0xde] sm:$0x1]
  %v1770 = vpack.c.bf16 %v1738, %v1738
  %v1771 = vpack.c.bf16 %v1739, %v1739
  %v1772 = vpack.c.bf16 %v1740, %v1740
  %v1773 = vpack.c.bf16 %v1741, %v1741
  %v1774 = vpack.c.bf16 %v1742, %v1742
  %v1775 = vpack.c.bf16 %v1743, %v1743
  %v1776 = vpack.c.bf16 %v1744, %v1744
  %v1777 = vpack.c.bf16 %v1745, %v1745
  %v1778 = vpack.c.bf16 %v1746, %v1746
  %v1779 = vpack.c.bf16 %v1747, %v1747
  %v1780 = vpack.c.bf16 %v1748, %v1748
  %v1781 = vpack.c.bf16 %v1749, %v1749
  %v1782 = vpack.c.bf16 %v1750, %v1750
  %v1783 = vpack.c.bf16 %v1751, %v1751
  %v1784 = vpack.c.bf16 %v1752, %v1752
  %v1785 = vpack.c.bf16 %v1753, %v1753
  %v1786 = vpack.c.bf16 %v1754, %v1754
  %v1787 = vpack.c.bf16 %v1755, %v1755
  %v1788 = vpack.c.bf16 %v1756, %v1756
  %v1789 = vpack.c.bf16 %v1757, %v1757
  %v1790 = vpack.c.bf16 %v1758, %v1758
  %v1791 = vpack.c.bf16 %v1759, %v1759
  %v1792 = vpack.c.bf16 %v1760, %v1760
  %v1793 = vpack.c.bf16 %v1761, %v1761
  %v1794 = vpack.c.bf16 %v1762, %v1762
  %v1795 = vpack.c.bf16 %v1763, %v1763
  %v1796 = vpack.c.bf16 %v1764, %v1764
  %v1797 = vpack.c.bf16 %v1765, %v1765
  %v1798 = vpack.c.bf16 %v1766, %v1766
  %v1799 = vpack.c.bf16 %v1767, %v1767
  %v1800 = vpack.c.bf16 %v1768, %v1768
  %v1801 = vpack.c.bf16 %v1769, %v1769
  %v1802 = vld [vmem:[%s2 + $0x60] sm:$0xf]
  %v1803 = vld [vmem:[%s2 + $0x64] sm:$0xf]
  %v1804 = vld [vmem:[%s2 + $0x68] sm:$0xf]
  %v1805 = vld [vmem:[%s2 + $0x6c] sm:$0xf]
  %v1806 = vld [vmem:[%s2 + $0x70] sm:$0xf]
  %v1807 = vld [vmem:[%s2 + $0x74] sm:$0xf]
  %v1808 = vld [vmem:[%s2 + $0x78] sm:$0xf]
  %v1809 = vld [vmem:[%s2 + $0x7c] sm:$0xf]
  %v1842 = vunpack.c.l.b16 %v1770
  %v1843 = vunpack.c.l.b16 %v1771
  %v1844 = vunpack.c.l.b16 %v1772
  %v1845 = vunpack.c.l.b16 %v1773
  %v1846 = vunpack.c.l.b16 %v1774
  %v1847 = vunpack.c.l.b16 %v1775
  %v1848 = vunpack.c.l.b16 %v1776
  %v1849 = vunpack.c.l.b16 %v1777
  %v1850 = vunpack.c.l.b16 %v1778
  %v1851 = vunpack.c.l.b16 %v1779
  %v1852 = vunpack.c.l.b16 %v1780
  %v1853 = vunpack.c.l.b16 %v1781
  %v1854 = vunpack.c.l.b16 %v1782
  %v1855 = vunpack.c.l.b16 %v1783
  %v1856 = vunpack.c.l.b16 %v1784
  %v1857 = vunpack.c.l.b16 %v1785
  %v1858 = vunpack.c.l.b16 %v1786
  %v1859 = vunpack.c.l.b16 %v1787
  %v1860 = vunpack.c.l.b16 %v1788
  %v1861 = vunpack.c.l.b16 %v1789
  %v1862 = vunpack.c.l.b16 %v1790
  %v1863 = vunpack.c.l.b16 %v1791
  %v1864 = vunpack.c.l.b16 %v1792
  %v1865 = vunpack.c.l.b16 %v1793
  %v1866 = vunpack.c.l.b16 %v1794
  %v1867 = vunpack.c.l.b16 %v1795
  %v1868 = vunpack.c.l.b16 %v1796
  %v1869 = vunpack.c.l.b16 %v1797
  %v1870 = vunpack.c.l.b16 %v1798
  %v1871 = vunpack.c.l.b16 %v1799
  %v1872 = vunpack.c.l.b16 %v1800
  %v1873 = vunpack.c.l.b16 %v1801
  %v1874 = vrot.slane %v1843, 7
  %v1875 = vsel %vm1116, %v1874, %v1842
  %v1876 = vrot.slane %v1844, 6
  %v1877 = vsel %vm1119, %v1876, %v1875
  %v1878 = vrot.slane %v1845, 5
  %v1879 = vsel %vm1122, %v1878, %v1877
  %v1880 = vrot.slane %v1846, 4
  %v1881 = vsel %vm1125, %v1880, %v1879
  %v1882 = vrot.slane %v1847, 3
  %v1883 = vsel %vm1128, %v1882, %v1881
  %v1884 = vrot.slane %v1848, 2
  %v1885 = vsel %vm1131, %v1884, %v1883
  %v1886 = vrot.slane %v1849, 1
  %v1887 = vsel %vm1134, %v1886, %v1885
  %v1888 = vrot.slane %v1851, 7
  %v1889 = vsel %vm1116, %v1888, %v1850
  %v1890 = vrot.slane %v1852, 6
  %v1891 = vsel %vm1119, %v1890, %v1889
  %v1892 = vrot.slane %v1853, 5
  %v1893 = vsel %vm1122, %v1892, %v1891
  %v1894 = vrot.slane %v1854, 4
  %v1895 = vsel %vm1125, %v1894, %v1893
  %v1896 = vrot.slane %v1855, 3
  %v1897 = vsel %vm1128, %v1896, %v1895
  %v1898 = vrot.slane %v1856, 2
  %v1899 = vsel %vm1131, %v1898, %v1897
  %v1900 = vrot.slane %v1857, 1
  %v1901 = vsel %vm1134, %v1900, %v1899
  %v1902 = vrot.slane %v1859, 7
  %v1903 = vsel %vm1116, %v1902, %v1858
  %v1904 = vrot.slane %v1860, 6
  %v1905 = vsel %vm1119, %v1904, %v1903
  %v1906 = vrot.slane %v1861, 5
  %v1907 = vsel %vm1122, %v1906, %v1905
  %v1908 = vrot.slane %v1862, 4
  %v1909 = vsel %vm1125, %v1908, %v1907
  %v1910 = vrot.slane %v1863, 3
  %v1911 = vsel %vm1128, %v1910, %v1909
  %v1912 = vrot.slane %v1864, 2
  %v1913 = vsel %vm1131, %v1912, %v1911
  %v1914 = vrot.slane %v1865, 1
  %v1915 = vsel %vm1134, %v1914, %v1913
  %v1916 = vrot.slane %v1867, 7
  %v1917 = vsel %vm1116, %v1916, %v1866
  %v1918 = vrot.slane %v1868, 6
  %v1919 = vsel %vm1119, %v1918, %v1917
  %v1920 = vrot.slane %v1869, 5
  %v1921 = vsel %vm1122, %v1920, %v1919
  %v1922 = vrot.slane %v1870, 4
  %v1923 = vsel %vm1125, %v1922, %v1921
  %v1924 = vrot.slane %v1871, 3
  %v1925 = vsel %vm1128, %v1924, %v1923
  %v1926 = vrot.slane %v1872, 2
  %v1927 = vsel %vm1131, %v1926, %v1925
  %v1928 = vrot.slane %v1873, 1
  %v1929 = vsel %vm1134, %v1928, %v1927
  %v1930 = vpack.c.b16 %v1901, %v1887
  %v1931 = vpack.c.b16 %v1929, %v1915
  %v1940 = vunpack.c.l.b16 %v1802
  %v1941 = vunpack.c.l.b16 %v1803
  %v1942 = vunpack.c.l.b16 %v1804
  %v1943 = vunpack.c.l.b16 %v1805
  %v1944 = vunpack.c.l.b16 %v1806
  %v1945 = vunpack.c.l.b16 %v1807
  %v1946 = vunpack.c.l.b16 %v1808
  %v1947 = vunpack.c.l.b16 %v1809
  %v1948 = vpack.c.b16 %v1941, %v1940
  %v1949 = vpack.c.b16 %v1943, %v1942
  %v1950 = vpack.c.b16 %v1945, %v1944
  %v1951 = vpack.c.b16 %v1947, %v1946
  %v1957 = vsel %vm327, %v1930, 0
  %v1960 = vsel %vm327, %v1931, 0
  %1962 = vmatprep.subr.bf16.mxu0 0
  %1963 = vmatpush1.bf16.msra.mxu0 %v1948
  %1964 = vmatprep.subr.bf16.mxu0 0
  %1965 = vmatpush1.bf16.msra.mxu0 %v1949
  %1966 = vmatprep.subr.bf16.mxu0 0
  %1967 = vmatpush1.bf16.msra.mxu0 %v1950
  %1968 = vmatprep.subr.bf16.mxu0 0
  %1969 = vmatpush1.bf16.msra.mxu0 %v1951
  %1970 = vmatprep.subr.bf16.mxu0 0
  %1971 = vmatpush1.bf16.msra.mxu0 0
  %1972 = vmatprep.subr.bf16.mxu0 0
  %1973 = vmatpush1.bf16.msra.mxu0 0
  %1974 = vmatprep.subr.bf16.mxu0 0
  %1975 = vmatpush1.bf16.msra.mxu0 0
  %1976 = vmatprep.subr.bf16.mxu0 0
  %1977 = vmatpush1.bf16.msra.mxu0 0
  %1978 = vmatprep.subr.bf16.mxu0 0
  %1979 = vmatpush1.bf16.msra.mxu0 0
  %1980 = vmatprep.subr.bf16.mxu0 0
  %1981 = vmatpush1.bf16.msra.mxu0 0
  %1982 = vmatprep.subr.bf16.mxu0 0
  %1983 = vmatpush1.bf16.msra.mxu0 0
  %1984 = vmatprep.subr.bf16.mxu0 0
  %1985 = vmatpush1.bf16.msra.mxu0 0
  %1986 = vmatprep.subr.bf16.mxu0 0
  %1987 = vmatpush1.bf16.msra.mxu0 0
  %1988 = vmatprep.subr.bf16.mxu0 0
  %1989 = vmatpush1.bf16.msra.mxu0 0
  %1990 = vmatprep.subr.bf16.mxu0 0
  %1991 = vmatpush1.bf16.msra.mxu0 0
  %1992 = vmatprep.subr.bf16.mxu0 0
  %1993 = vmatpush1.bf16.msra.mxu0 0
  %1994 = vmatprep.mubr.bf16.mxu0 0
  %1995 = vmatmul.mubr.bf16.gmra.mrb[0].mxu0 %v1957
  %v1996 = vpop.f32.mrb[0].mxu0
  %v1997 = vadd.f32 0.0, %v1996
  %v1998 = vpop.f32.mrb[0].mxu0
  %v1999 = vpop.f32.mrb[0].mxu0
  %v2000 = vadd.f32 0.0, %v1999
  %v2001 = vpop.f32.mrb[0].mxu0
  %2002 = vmatprep.mubr.bf16.mxu0 0
  %2003 = vmatmul.mubr.bf16.gmra.mrb[0].mxu0 %v1960
  %v2004 = vpop.f32.mrb[0].mxu0
  %v2005 = vadd.f32 0.0, %v2004
  %v2006 = vpop.f32.mrb[0].mxu0
  %v2007 = vpop.f32.mrb[0].mxu0
  %v2008 = vadd.f32 0.0, %v2007
  %v2009 = vpop.f32.mrb[0].mxu0
  %2010 = vdwg.mxu0
  %v2011 = vadd.f32 %v1733, %v1997
  %v2012 = vadd.f32 %v1734, %v2000
  %v2013 = vadd.f32 %v1735, %v2005
  %v2014 = vadd.f32 %v1736, %v2008
  %s2015 = scalar_lea.vmem [#allocation2], 24
  %v2016 = vld [vmem:[%s2015 + $0x1] sm:$0x1]
  %v2017 = vld [vmem:[%s2015 + $0x3] sm:$0x1]
  %v2018 = vld [vmem:[%s2015 + $0x5] sm:$0x1]
  %v2019 = vld [vmem:[%s2015 + $0x7] sm:$0x1]
  %v2020 = vld [vmem:[%s2015 + $0x19] sm:$0x1]
  %v2021 = vld [vmem:[%s2015 + $0x1b] sm:$0x1]
  %v2022 = vld [vmem:[%s2015 + $0x1d] sm:$0x1]
  %v2023 = vld [vmem:[%s2015 + $0x1f] sm:$0x1]
  %v2024 = vld [vmem:[%s2015 + $0x31] sm:$0x1]
  %v2025 = vld [vmem:[%s2015 + $0x33] sm:$0x1]
  %v2026 = vld [vmem:[%s2015 + $0x35] sm:$0x1]
  %v2027 = vld [vmem:[%s2015 + $0x37] sm:$0x1]
  %v2028 = vld [vmem:[%s2015 + $0x49] sm:$0x1]
  %v2029 = vld [vmem:[%s2015 + $0x4b] sm:$0x1]
  %v2030 = vld [vmem:[%s2015 + $0x4d] sm:$0x1]
  %v2031 = vld [vmem:[%s2015 + $0x4f] sm:$0x1]
  %v2032 = vld [vmem:[%s2015 + $0x91] sm:$0x1]
  %v2033 = vld [vmem:[%s2015 + $0x93] sm:$0x1]
  %v2034 = vld [vmem:[%s2015 + $0x95] sm:$0x1]
  %v2035 = vld [vmem:[%s2015 + $0x97] sm:$0x1]
  %v2036 = vld [vmem:[%s2015 + $0xa9] sm:$0x1]
  %v2037 = vld [vmem:[%s2015 + $0xab] sm:$0x1]
  %v2038 = vld [vmem:[%s2015 + $0xad] sm:$0x1]
  %v2039 = vld [vmem:[%s2015 + $0xaf] sm:$0x1]
  %v2040 = vld [vmem:[%s2015 + $0xc1] sm:$0x1]
  %v2041 = vld [vmem:[%s2015 + $0xc3] sm:$0x1]
  %v2042 = vld [vmem:[%s2015 + $0xc5] sm:$0x1]
  %v2043 = vld [vmem:[%s2015 + $0xc7] sm:$0x1]
  %v2044 = vld [vmem:[%s2015 + $0xd9] sm:$0x1]
  %v2045 = vld [vmem:[%s2015 + $0xdb] sm:$0x1]
  %v2046 = vld [vmem:[%s2015 + $0xdd] sm:$0x1]
  %v2047 = vld [vmem:[%s2015 + $0xdf] sm:$0x1]
  %v2048 = vpack.c.bf16 %v2016, %v2016
  %v2049 = vpack.c.bf16 %v2017, %v2017
  %v2050 = vpack.c.bf16 %v2018, %v2018
  %v2051 = vpack.c.bf16 %v2019, %v2019
  %v2052 = vpack.c.bf16 %v2020, %v2020
  %v2053 = vpack.c.bf16 %v2021, %v2021
  %v2054 = vpack.c.bf16 %v2022, %v2022
  %v2055 = vpack.c.bf16 %v2023, %v2023
  %v2056 = vpack.c.bf16 %v2024, %v2024
  %v2057 = vpack.c.bf16 %v2025, %v2025
  %v2058 = vpack.c.bf16 %v2026, %v2026
  %v2059 = vpack.c.bf16 %v2027, %v2027
  %v2060 = vpack.c.bf16 %v2028, %v2028
  %v2061 = vpack.c.bf16 %v2029, %v2029
  %v2062 = vpack.c.bf16 %v2030, %v2030
  %v2063 = vpack.c.bf16 %v2031, %v2031
  %v2064 = vpack.c.bf16 %v2032, %v2032
  %v2065 = vpack.c.bf16 %v2033, %v2033
  %v2066 = vpack.c.bf16 %v2034, %v2034
  %v2067 = vpack.c.bf16 %v2035, %v2035
  %v2068 = vpack.c.bf16 %v2036, %v2036
  %v2069 = vpack.c.bf16 %v2037, %v2037
  %v2070 = vpack.c.bf16 %v2038, %v2038
  %v2071 = vpack.c.bf16 %v2039, %v2039
  %v2072 = vpack.c.bf16 %v2040, %v2040
  %v2073 = vpack.c.bf16 %v2041, %v2041
  %v2074 = vpack.c.bf16 %v2042, %v2042
  %v2075 = vpack.c.bf16 %v2043, %v2043
  %v2076 = vpack.c.bf16 %v2044, %v2044
  %v2077 = vpack.c.bf16 %v2045, %v2045
  %v2078 = vpack.c.bf16 %v2046, %v2046
  %v2079 = vpack.c.bf16 %v2047, %v2047
  %v2080 = vld [vmem:[%s2 + $0x80] sm:$0xf]
  %v2081 = vld [vmem:[%s2 + $0x84] sm:$0xf]
  %v2082 = vld [vmem:[%s2 + $0x88] sm:$0xf]
  %v2083 = vld [vmem:[%s2 + $0x8c] sm:$0xf]
  %v2084 = vld [vmem:[%s2 + $0x90] sm:$0xf]
  %v2085 = vld [vmem:[%s2 + $0x94] sm:$0xf]
  %v2086 = vld [vmem:[%s2 + $0x98] sm:$0xf]
  %v2087 = vld [vmem:[%s2 + $0x9c] sm:$0xf]
  %v2120 = vunpack.c.l.b16 %v2048
  %v2121 = vunpack.c.l.b16 %v2049
  %v2122 = vunpack.c.l.b16 %v2050
  %v2123 = vunpack.c.l.b16 %v2051
  %v2124 = vunpack.c.l.b16 %v2052
  %v2125 = vunpack.c.l.b16 %v2053
  %v2126 = vunpack.c.l.b16 %v2054
  %v2127 = vunpack.c.l.b16 %v2055
  %v2128 = vunpack.c.l.b16 %v2056
  %v2129 = vunpack.c.l.b16 %v2057
  %v2130 = vunpack.c.l.b16 %v2058
  %v2131 = vunpack.c.l.b16 %v2059
  %v2132 = vunpack.c.l.b16 %v2060
  %v2133 = vunpack.c.l.b16 %v2061
  %v2134 = vunpack.c.l.b16 %v2062
  %v2135 = vunpack.c.l.b16 %v2063
  %v2136 = vunpack.c.l.b16 %v2064
  %v2137 = vunpack.c.l.b16 %v2065
  %v2138 = vunpack.c.l.b16 %v2066
  %v2139 = vunpack.c.l.b16 %v2067
  %v2140 = vunpack.c.l.b16 %v2068
  %v2141 = vunpack.c.l.b16 %v2069
  %v2142 = vunpack.c.l.b16 %v2070
  %v2143 = vunpack.c.l.b16 %v2071
  %v2144 = vunpack.c.l.b16 %v2072
  %v2145 = vunpack.c.l.b16 %v2073
  %v2146 = vunpack.c.l.b16 %v2074
  %v2147 = vunpack.c.l.b16 %v2075
  %v2148 = vunpack.c.l.b16 %v2076
  %v2149 = vunpack.c.l.b16 %v2077
  %v2150 = vunpack.c.l.b16 %v2078
  %v2151 = vunpack.c.l.b16 %v2079
  %v2152 = vrot.slane %v2121, 7
  %v2153 = vsel %vm1116, %v2152, %v2120
  %v2154 = vrot.slane %v2122, 6
  %v2155 = vsel %vm1119, %v2154, %v2153
  %v2156 = vrot.slane %v2123, 5
  %v2157 = vsel %vm1122, %v2156, %v2155
  %v2158 = vrot.slane %v2124, 4
  %v2159 = vsel %vm1125, %v2158, %v2157
  %v2160 = vrot.slane %v2125, 3
  %v2161 = vsel %vm1128, %v2160, %v2159
  %v2162 = vrot.slane %v2126, 2
  %v2163 = vsel %vm1131, %v2162, %v2161
  %v2164 = vrot.slane %v2127, 1
  %v2165 = vsel %vm1134, %v2164, %v2163
  %v2166 = vrot.slane %v2129, 7
  %v2167 = vsel %vm1116, %v2166, %v2128
  %v2168 = vrot.slane %v2130, 6
  %v2169 = vsel %vm1119, %v2168, %v2167
  %v2170 = vrot.slane %v2131, 5
  %v2171 = vsel %vm1122, %v2170, %v2169
  %v2172 = vrot.slane %v2132, 4
  %v2173 = vsel %vm1125, %v2172, %v2171
  %v2174 = vrot.slane %v2133, 3
  %v2175 = vsel %vm1128, %v2174, %v2173
  %v2176 = vrot.slane %v2134, 2
  %v2177 = vsel %vm1131, %v2176, %v2175
  %v2178 = vrot.slane %v2135, 1
  %v2179 = vsel %vm1134, %v2178, %v2177
  %v2180 = vrot.slane %v2137, 7
  %v2181 = vsel %vm1116, %v2180, %v2136
  %v2182 = vrot.slane %v2138, 6
  %v2183 = vsel %vm1119, %v2182, %v2181
  %v2184 = vrot.slane %v2139, 5
  %v2185 = vsel %vm1122, %v2184, %v2183
  %v2186 = vrot.slane %v2140, 4
  %v2187 = vsel %vm1125, %v2186, %v2185
  %v2188 = vrot.slane %v2141, 3
  %v2189 = vsel %vm1128, %v2188, %v2187
  %v2190 = vrot.slane %v2142, 2
  %v2191 = vsel %vm1131, %v2190, %v2189
  %v2192 = vrot.slane %v2143, 1
  %v2193 = vsel %vm1134, %v2192, %v2191
  %v2194 = vrot.slane %v2145, 7
  %v2195 = vsel %vm1116, %v2194, %v2144
  %v2196 = vrot.slane %v2146, 6
  %v2197 = vsel %vm1119, %v2196, %v2195
  %v2198 = vrot.slane %v2147, 5
  %v2199 = vsel %vm1122, %v2198, %v2197
  %v2200 = vrot.slane %v2148, 4
  %v2201 = vsel %vm1125, %v2200, %v2199
  %v2202 = vrot.slane %v2149, 3
  %v2203 = vsel %vm1128, %v2202, %v2201
  %v2204 = vrot.slane %v2150, 2
  %v2205 = vsel %vm1131, %v2204, %v2203
  %v2206 = vrot.slane %v2151, 1
  %v2207 = vsel %vm1134, %v2206, %v2205
  %v2208 = vpack.c.b16 %v2179, %v2165
  %v2209 = vpack.c.b16 %v2207, %v2193
  %v2218 = vunpack.c.l.b16 %v2080
  %v2219 = vunpack.c.l.b16 %v2081
  %v2220 = vunpack.c.l.b16 %v2082
  %v2221 = vunpack.c.l.b16 %v2083
  %v2222 = vunpack.c.l.b16 %v2084
  %v2223 = vunpack.c.l.b16 %v2085
  %v2224 = vunpack.c.l.b16 %v2086
  %v2225 = vunpack.c.l.b16 %v2087
  %v2226 = vpack.c.b16 %v2219, %v2218
  %v2227 = vpack.c.b16 %v2221, %v2220
  %v2228 = vpack.c.b16 %v2223, %v2222
  %v2229 = vpack.c.b16 %v2225, %v2224
  %v2235 = vsel %vm327, %v2208, 0
  %v2238 = vsel %vm327, %v2209, 0
  %2240 = vmatprep.subr.bf16.mxu0 0
  %2241 = vmatpush1.bf16.msra.mxu0 %v2226
  %2242 = vmatprep.subr.bf16.mxu0 0
  %2243 = vmatpush1.bf16.msra.mxu0 %v2227
  %2244 = vmatprep.subr.bf16.mxu0 0
  %2245 = vmatpush1.bf16.msra.mxu0 %v2228
  %2246 = vmatprep.subr.bf16.mxu0 0
  %2247 = vmatpush1.bf16.msra.mxu0 %v2229
  %2248 = vmatprep.subr.bf16.mxu0 0
  %2249 = vmatpush1.bf16.msra.mxu0 0
  %2250 = vmatprep.subr.bf16.mxu0 0
  %2251 = vmatpush1.bf16.msra.mxu0 0
  %2252 = vmatprep.subr.bf16.mxu0 0
  %2253 = vmatpush1.bf16.msra.mxu0 0
  %2254 = vmatprep.subr.bf16.mxu0 0
  %2255 = vmatpush1.bf16.msra.mxu0 0
  %2256 = vmatprep.subr.bf16.mxu0 0
  %2257 = vmatpush1.bf16.msra.mxu0 0
  %2258 = vmatprep.subr.bf16.mxu0 0
  %2259 = vmatpush1.bf16.msra.mxu0 0
  %2260 = vmatprep.subr.bf16.mxu0 0
  %2261 = vmatpush1.bf16.msra.mxu0 0
  %2262 = vmatprep.subr.bf16.mxu0 0
  %2263 = vmatpush1.bf16.msra.mxu0 0
  %2264 = vmatprep.subr.bf16.mxu0 0
  %2265 = vmatpush1.bf16.msra.mxu0 0
  %2266 = vmatprep.subr.bf16.mxu0 0
  %2267 = vmatpush1.bf16.msra.mxu0 0
  %2268 = vmatprep.subr.bf16.mxu0 0
  %2269 = vmatpush1.bf16.msra.mxu0 0
  %2270 = vmatprep.subr.bf16.mxu0 0
  %2271 = vmatpush1.bf16.msra.mxu0 0
  %2272 = vmatprep.mubr.bf16.mxu0 0
  %2273 = vmatmul.mubr.bf16.gmra.mrb[0].mxu0 %v2235
  %v2274 = vpop.f32.mrb[0].mxu0
  %v2275 = vadd.f32 0.0, %v2274
  %v2276 = vpop.f32.mrb[0].mxu0
  %v2277 = vpop.f32.mrb[0].mxu0
  %v2278 = vadd.f32 0.0, %v2277
  %v2279 = vpop.f32.mrb[0].mxu0
  %2280 = vmatprep.mubr.bf16.mxu0 0
  %2281 = vmatmul.mubr.bf16.gmra.mrb[0].mxu0 %v2238
  %v2282 = vpop.f32.mrb[0].mxu0
  %v2283 = vadd.f32 0.0, %v2282
  %v2284 = vpop.f32.mrb[0].mxu0
  %v2285 = vpop.f32.mrb[0].mxu0
  %v2286 = vadd.f32 0.0, %v2285
  %v2287 = vpop.f32.mrb[0].mxu0
  %2288 = vdwg.mxu0
  %v2289 = vadd.f32 %v2011, %v2275
  %v2290 = vadd.f32 %v2012, %v2278
  %v2291 = vadd.f32 %v2013, %v2283
  %v2292 = vadd.f32 %v2014, %v2286
  %v2293 = vld [vmem:[%s525] sm:$0x1]
  %v2294 = vld [vmem:[%s525 + $0x2] sm:$0x1]
  %v2295 = vld [vmem:[%s525 + $0x4] sm:$0x1]
  %v2296 = vld [vmem:[%s525 + $0x6] sm:$0x1]
  %v2297 = vld [vmem:[%s525 + $0x18] sm:$0x1]
  %v2298 = vld [vmem:[%s525 + $0x1a] sm:$0x1]
  %v2299 = vld [vmem:[%s525 + $0x1c] sm:$0x1]
  %v2300 = vld [vmem:[%s525 + $0x1e] sm:$0x1]
  %v2301 = vld [vmem:[%s525 + $0x30] sm:$0x1]
  %v2302 = vld [vmem:[%s525 + $0x32] sm:$0x1]
  %v2303 = vld [vmem:[%s525 + $0x34] sm:$0x1]
  %v2304 = vld [vmem:[%s525 + $0x36] sm:$0x1]
  %v2305 = vld [vmem:[%s525 + $0x48] sm:$0x1]
  %v2306 = vld [vmem:[%s525 + $0x4a] sm:$0x1]
  %v2307 = vld [vmem:[%s525 + $0x4c] sm:$0x1]
  %v2308 = vld [vmem:[%s525 + $0x4e] sm:$0x1]
  %v2309 = vld [vmem:[%s525 + $0x90] sm:$0x1]
  %v2310 = vld [vmem:[%s525 + $0x92] sm:$0x1]
  %v2311 = vld [vmem:[%s525 + $0x94] sm:$0x1]
  %v2312 = vld [vmem:[%s525 + $0x96] sm:$0x1]
  %v2313 = vld [vmem:[%s525 + $0xa8] sm:$0x1]
  %v2314 = vld [vmem:[%s525 + $0xaa] sm:$0x1]
  %v2315 = vld [vmem:[%s525 + $0xac] sm:$0x1]
  %v2316 = vld [vmem:[%s525 + $0xae] sm:$0x1]
  %v2317 = vld [vmem:[%s525 + $0xc0] sm:$0x1]
  %v2318 = vld [vmem:[%s525 + $0xc2] sm:$0x1]
  %v2319 = vld [vmem:[%s525 + $0xc4] sm:$0x1]
  %v2320 = vld [vmem:[%s525 + $0xc6] sm:$0x1]
  %v2321 = vld [vmem:[%s525 + $0xd8] sm:$0x1]
  %v2322 = vld [vmem:[%s525 + $0xda] sm:$0x1]
  %v2323 = vld [vmem:[%s525 + $0xdc] sm:$0x1]
  %v2324 = vld [vmem:[%s525 + $0xde] sm:$0x1]
  %v2325 = vpack.c.bf16 %v2293, %v2293
  %v2326 = vpack.c.bf16 %v2294, %v2294
  %v2327 = vpack.c.bf16 %v2295, %v2295
  %v2328 = vpack.c.bf16 %v2296, %v2296
  %v2329 = vpack.c.bf16 %v2297, %v2297
  %v2330 = vpack.c.bf16 %v2298, %v2298
  %v2331 = vpack.c.bf16 %v2299, %v2299
  %v2332 = vpack.c.bf16 %v2300, %v2300
  %v2333 = vpack.c.bf16 %v2301, %v2301
  %v2334 = vpack.c.bf16 %v2302, %v2302
  %v2335 = vpack.c.bf16 %v2303, %v2303
  %v2336 = vpack.c.bf16 %v2304, %v2304
  %v2337 = vpack.c.bf16 %v2305, %v2305
  %v2338 = vpack.c.bf16 %v2306, %v2306
  %v2339 = vpack.c.bf16 %v2307, %v2307
  %v2340 = vpack.c.bf16 %v2308, %v2308
  %v2341 = vpack.c.bf16 %v2309, %v2309
  %v2342 = vpack.c.bf16 %v2310, %v2310
  %v2343 = vpack.c.bf16 %v2311, %v2311
  %v2344 = vpack.c.bf16 %v2312, %v2312
  %v2345 = vpack.c.bf16 %v2313, %v2313
  %v2346 = vpack.c.bf16 %v2314, %v2314
  %v2347 = vpack.c.bf16 %v2315, %v2315
  %v2348 = vpack.c.bf16 %v2316, %v2316
  %v2349 = vpack.c.bf16 %v2317, %v2317
  %v2350 = vpack.c.bf16 %v2318, %v2318
  %v2351 = vpack.c.bf16 %v2319, %v2319
  %v2352 = vpack.c.bf16 %v2320, %v2320
  %v2353 = vpack.c.bf16 %v2321, %v2321
  %v2354 = vpack.c.bf16 %v2322, %v2322
  %v2355 = vpack.c.bf16 %v2323, %v2323
  %v2356 = vpack.c.bf16 %v2324, %v2324
  %v2357 = vld [vmem:[%s2 + $0xa0] sm:$0xf]
  %v2358 = vld [vmem:[%s2 + $0xa4] sm:$0xf]
  %v2359 = vld [vmem:[%s2 + $0xa8] sm:$0xf]
  %v2360 = vld [vmem:[%s2 + $0xac] sm:$0xf]
  %v2361 = vld [vmem:[%s2 + $0xb0] sm:$0xf]
  %v2362 = vld [vmem:[%s2 + $0xb4] sm:$0xf]
  %v2363 = vld [vmem:[%s2 + $0xb8] sm:$0xf]
  %v2364 = vld [vmem:[%s2 + $0xbc] sm:$0xf]
  %v2397 = vunpack.c.l.b16 %v2325
  %v2398 = vunpack.c.l.b16 %v2326
  %v2399 = vunpack.c.l.b16 %v2327
  %v2400 = vunpack.c.l.b16 %v2328
  %v2401 = vunpack.c.l.b16 %v2329
  %v2402 = vunpack.c.l.b16 %v2330
  %v2403 = vunpack.c.l.b16 %v2331
  %v2404 = vunpack.c.l.b16 %v2332
  %v2405 = vunpack.c.l.b16 %v2333
  %v2406 = vunpack.c.l.b16 %v2334
  %v2407 = vunpack.c.l.b16 %v2335
  %v2408 = vunpack.c.l.b16 %v2336
  %v2409 = vunpack.c.l.b16 %v2337
  %v2410 = vunpack.c.l.b16 %v2338
  %v2411 = vunpack.c.l.b16 %v2339
  %v2412 = vunpack.c.l.b16 %v2340
  %v2413 = vunpack.c.l.b16 %v2341
  %v2414 = vunpack.c.l.b16 %v2342
  %v2415 = vunpack.c.l.b16 %v2343
  %v2416 = vunpack.c.l.b16 %v2344
  %v2417 = vunpack.c.l.b16 %v2345
  %v2418 = vunpack.c.l.b16 %v2346
  %v2419 = vunpack.c.l.b16 %v2347
  %v2420 = vunpack.c.l.b16 %v2348
  %v2421 = vunpack.c.l.b16 %v2349
  %v2422 = vunpack.c.l.b16 %v2350
  %v2423 = vunpack.c.l.b16 %v2351
  %v2424 = vunpack.c.l.b16 %v2352
  %v2425 = vunpack.c.l.b16 %v2353
  %v2426 = vunpack.c.l.b16 %v2354
  %v2427 = vunpack.c.l.b16 %v2355
  %v2428 = vunpack.c.l.b16 %v2356
  %v2429 = vrot.slane %v2398, 7
  %v2430 = vsel %vm1116, %v2429, %v2397
  %v2431 = vrot.slane %v2399, 6
  %v2432 = vsel %vm1119, %v2431, %v2430
  %v2433 = vrot.slane %v2400, 5
  %v2434 = vsel %vm1122, %v2433, %v2432
  %v2435 = vrot.slane %v2401, 4
  %v2436 = vsel %vm1125, %v2435, %v2434
  %v2437 = vrot.slane %v2402, 3
  %v2438 = vsel %vm1128, %v2437, %v2436
  %v2439 = vrot.slane %v2403, 2
  %v2440 = vsel %vm1131, %v2439, %v2438
  %v2441 = vrot.slane %v2404, 1
  %v2442 = vsel %vm1134, %v2441, %v2440
  %v2443 = vrot.slane %v2406, 7
  %v2444 = vsel %vm1116, %v2443, %v2405
  %v2445 = vrot.slane %v2407, 6
  %v2446 = vsel %vm1119, %v2445, %v2444
  %v2447 = vrot.slane %v2408, 5
  %v2448 = vsel %vm1122, %v2447, %v2446
  %v2449 = vrot.slane %v2409, 4
  %v2450 = vsel %vm1125, %v2449, %v2448
  %v2451 = vrot.slane %v2410, 3
  %v2452 = vsel %vm1128, %v2451, %v2450
  %v2453 = vrot.slane %v2411, 2
  %v2454 = vsel %vm1131, %v2453, %v2452
  %v2455 = vrot.slane %v2412, 1
  %v2456 = vsel %vm1134, %v2455, %v2454
  %v2457 = vrot.slane %v2414, 7
  %v2458 = vsel %vm1116, %v2457, %v2413
  %v2459 = vrot.slane %v2415, 6
  %v2460 = vsel %vm1119, %v2459, %v2458
  %v2461 = vrot.slane %v2416, 5
  %v2462 = vsel %vm1122, %v2461, %v2460
  %v2463 = vrot.slane %v2417, 4
  %v2464 = vsel %vm1125, %v2463, %v2462
  %v2465 = vrot.slane %v2418, 3
  %v2466 = vsel %vm1128, %v2465, %v2464
  %v2467 = vrot.slane %v2419, 2
  %v2468 = vsel %vm1131, %v2467, %v2466
  %v2469 = vrot.slane %v2420, 1
  %v2470 = vsel %vm1134, %v2469, %v2468
  %v2471 = vrot.slane %v2422, 7
  %v2472 = vsel %vm1116, %v2471, %v2421
  %v2473 = vrot.slane %v2423, 6
  %v2474 = vsel %vm1119, %v2473, %v2472
  %v2475 = vrot.slane %v2424, 5
  %v2476 = vsel %vm1122, %v2475, %v2474
  %v2477 = vrot.slane %v2425, 4
  %v2478 = vsel %vm1125, %v2477, %v2476
  %v2479 = vrot.slane %v2426, 3
  %v2480 = vsel %vm1128, %v2479, %v2478
  %v2481 = vrot.slane %v2427, 2
  %v2482 = vsel %vm1131, %v2481, %v2480
  %v2483 = vrot.slane %v2428, 1
  %v2484 = vsel %vm1134, %v2483, %v2482
  %v2485 = vpack.c.b16 %v2456, %v2442
  %v2486 = vpack.c.b16 %v2484, %v2470
  %v2495 = vunpack.c.l.b16 %v2357
  %v2496 = vunpack.c.l.b16 %v2358
  %v2497 = vunpack.c.l.b16 %v2359
  %v2498 = vunpack.c.l.b16 %v2360
  %v2499 = vunpack.c.l.b16 %v2361
  %v2500 = vunpack.c.l.b16 %v2362
  %v2501 = vunpack.c.l.b16 %v2363
  %v2502 = vunpack.c.l.b16 %v2364
  %v2503 = vpack.c.b16 %v2496, %v2495
  %v2504 = vpack.c.b16 %v2498, %v2497
  %v2505 = vpack.c.b16 %v2500, %v2499
  %v2506 = vpack.c.b16 %v2502, %v2501
  %v2512 = vsel %vm327, %v2485, 0
  %v2515 = vsel %vm327, %v2486, 0
  %2517 = vmatprep.subr.bf16.mxu0 0
  %2518 = vmatpush1.bf16.msra.mxu0 %v2503
  %2519 = vmatprep.subr.bf16.mxu0 0
  %2520 = vmatpush1.bf16.msra.mxu0 %v2504
  %2521 = vmatprep.subr.bf16.mxu0 0
  %2522 = vmatpush1.bf16.msra.mxu0 %v2505
  %2523 = vmatprep.subr.bf16.mxu0 0
  %2524 = vmatpush1.bf16.msra.mxu0 %v2506
  %2525 = vmatprep.subr.bf16.mxu0 0
  %2526 = vmatpush1.bf16.msra.mxu0 0
  %2527 = vmatprep.subr.bf16.mxu0 0
  %2528 = vmatpush1.bf16.msra.mxu0 0
  %2529 = vmatprep.subr.bf16.mxu0 0
  %2530 = vmatpush1.bf16.msra.mxu0 0
  %2531 = vmatprep.subr.bf16.mxu0 0
  %2532 = vmatpush1.bf16.msra.mxu0 0
  %2533 = vmatprep.subr.bf16.mxu0 0
  %2534 = vmatpush1.bf16.msra.mxu0 0
  %2535 = vmatprep.subr.bf16.mxu0 0
  %2536 = vmatpush1.bf16.msra.mxu0 0
  %2537 = vmatprep.subr.bf16.mxu0 0
  %2538 = vmatpush1.bf16.msra.mxu0 0
  %2539 = vmatprep.subr.bf16.mxu0 0
  %2540 = vmatpush1.bf16.msra.mxu0 0
  %2541 = vmatprep.subr.bf16.mxu0 0
  %2542 = vmatpush1.bf16.msra.mxu0 0
  %2543 = vmatprep.subr.bf16.mxu0 0
  %2544 = vmatpush1.bf16.msra.mxu0 0
  %2545 = vmatprep.subr.bf16.mxu0 0
  %2546 = vmatpush1.bf16.msra.mxu0 0
  %2547 = vmatprep.subr.bf16.mxu0 0
  %2548 = vmatpush1.bf16.msra.mxu0 0
  %2549 = vmatprep.mubr.bf16.mxu0 0
  %2550 = vmatmul.mubr.bf16.gmra.mrb[0].mxu0 %v2512
  %v2551 = vpop.f32.mrb[0].mxu0
  %v2552 = vadd.f32 0.0, %v2551
  %v2553 = vpop.f32.mrb[0].mxu0
  %v2554 = vpop.f32.mrb[0].mxu0
  %v2555 = vadd.f32 0.0, %v2554
  %v2556 = vpop.f32.mrb[0].mxu0
  %2557 = vmatprep.mubr.bf16.mxu0 0
  %2558 = vmatmul.mubr.bf16.gmra.mrb[0].mxu0 %v2515
  %v2559 = vpop.f32.mrb[0].mxu0
  %v2560 = vadd.f32 0.0, %v2559
  %v2561 = vpop.f32.mrb[0].mxu0
  %v2562 = vpop.f32.mrb[0].mxu0
  %v2563 = vadd.f32 0.0, %v2562
  %v2564 = vpop.f32.mrb[0].mxu0
  %2565 = vdwg.mxu0
  %v2566 = vadd.f32 %v2289, %v2552
  %v2567 = vadd.f32 %v2290, %v2555
  %v2568 = vadd.f32 %v2291, %v2560
  %v2569 = vadd.f32 %v2292, %v2563
  %v2570 = vld [vmem:[%s525 + $0x1] sm:$0x1]
  %v2571 = vld [vmem:[%s525 + $0x3] sm:$0x1]
  %v2572 = vld [vmem:[%s525 + $0x5] sm:$0x1]
  %v2573 = vld [vmem:[%s525 + $0x7] sm:$0x1]
  %v2574 = vld [vmem:[%s525 + $0x19] sm:$0x1]
  %v2575 = vld [vmem:[%s525 + $0x1b] sm:$0x1]
  %v2576 = vld [vmem:[%s525 + $0x1d] sm:$0x1]
  %v2577 = vld [vmem:[%s525 + $0x1f] sm:$0x1]
  %v2578 = vld [vmem:[%s525 + $0x31] sm:$0x1]
  %v2579 = vld [vmem:[%s525 + $0x33] sm:$0x1]
  %v2580 = vld [vmem:[%s525 + $0x35] sm:$0x1]
  %v2581 = vld [vmem:[%s525 + $0x37] sm:$0x1]
  %v2582 = vld [vmem:[%s525 + $0x49] sm:$0x1]
  %v2583 = vld [vmem:[%s525 + $0x4b] sm:$0x1]
  %v2584 = vld [vmem:[%s525 + $0x4d] sm:$0x1]
  %v2585 = vld [vmem:[%s525 + $0x4f] sm:$0x1]
  %v2586 = vld [vmem:[%s525 + $0x91] sm:$0x1]
  %v2587 = vld [vmem:[%s525 + $0x93] sm:$0x1]
  %v2588 = vld [vmem:[%s525 + $0x95] sm:$0x1]
  %v2589 = vld [vmem:[%s525 + $0x97] sm:$0x1]
  %v2590 = vld [vmem:[%s525 + $0xa9] sm:$0x1]
  %v2591 = vld [vmem:[%s525 + $0xab] sm:$0x1]
  %v2592 = vld [vmem:[%s525 + $0xad] sm:$0x1]
  %v2593 = vld [vmem:[%s525 + $0xaf] sm:$0x1]
  %v2594 = vld [vmem:[%s525 + $0xc1] sm:$0x1]
  %v2595 = vld [vmem:[%s525 + $0xc3] sm:$0x1]
  %v2596 = vld [vmem:[%s525 + $0xc5] sm:$0x1]
  %v2597 = vld [vmem:[%s525 + $0xc7] sm:$0x1]
  %v2598 = vld [vmem:[%s525 + $0xd9] sm:$0x1]
  %v2599 = vld [vmem:[%s525 + $0xdb] sm:$0x1]
  %v2600 = vld [vmem:[%s525 + $0xdd] sm:$0x1]
  %v2601 = vld [vmem:[%s525 + $0xdf] sm:$0x1]
  %v2602 = vpack.c.bf16 %v2570, %v2570
  %v2603 = vpack.c.bf16 %v2571, %v2571
  %v2604 = vpack.c.bf16 %v2572, %v2572
  %v2605 = vpack.c.bf16 %v2573, %v2573
  %v2606 = vpack.c.bf16 %v2574, %v2574
  %v2607 = vpack.c.bf16 %v2575, %v2575
  %v2608 = vpack.c.bf16 %v2576, %v2576
  %v2609 = vpack.c.bf16 %v2577, %v2577
  %v2610 = vpack.c.bf16 %v2578, %v2578
  %v2611 = vpack.c.bf16 %v2579, %v2579
  %v2612 = vpack.c.bf16 %v2580, %v2580
  %v2613 = vpack.c.bf16 %v2581, %v2581
  %v2614 = vpack.c.bf16 %v2582, %v2582
  %v2615 = vpack.c.bf16 %v2583, %v2583
  %v2616 = vpack.c.bf16 %v2584, %v2584
  %v2617 = vpack.c.bf16 %v2585, %v2585
  %v2618 = vpack.c.bf16 %v2586, %v2586
  %v2619 = vpack.c.bf16 %v2587, %v2587
  %v2620 = vpack.c.bf16 %v2588, %v2588
  %v2621 = vpack.c.bf16 %v2589, %v2589
  %v2622 = vpack.c.bf16 %v2590, %v2590
  %v2623 = vpack.c.bf16 %v2591, %v2591
  %v2624 = vpack.c.bf16 %v2592, %v2592
  %v2625 = vpack.c.bf16 %v2593, %v2593
  %v2626 = vpack.c.bf16 %v2594, %v2594
  %v2627 = vpack.c.bf16 %v2595, %v2595
  %v2628 = vpack.c.bf16 %v2596, %v2596
  %v2629 = vpack.c.bf16 %v2597, %v2597
  %v2630 = vpack.c.bf16 %v2598, %v2598
  %v2631 = vpack.c.bf16 %v2599, %v2599
  %v2632 = vpack.c.bf16 %v2600, %v2600
  %v2633 = vpack.c.bf16 %v2601, %v2601
  %v2634 = vld [vmem:[%s2 + $0xc0] sm:$0xf]
  %v2635 = vld [vmem:[%s2 + $0xc4] sm:$0xf]
  %v2636 = vld [vmem:[%s2 + $0xc8] sm:$0xf]
  %v2637 = vld [vmem:[%s2 + $0xcc] sm:$0xf]
  %v2638 = vld [vmem:[%s2 + $0xd0] sm:$0xf]
  %v2639 = vld [vmem:[%s2 + $0xd4] sm:$0xf]
  %v2640 = vld [vmem:[%s2 + $0xd8] sm:$0xf]
  %v2641 = vld [vmem:[%s2 + $0xdc] sm:$0xf]
  %v2674 = vunpack.c.l.b16 %v2602
  %v2675 = vunpack.c.l.b16 %v2603
  %v2676 = vunpack.c.l.b16 %v2604
  %v2677 = vunpack.c.l.b16 %v2605
  %v2678 = vunpack.c.l.b16 %v2606
  %v2679 = vunpack.c.l.b16 %v2607
  %v2680 = vunpack.c.l.b16 %v2608
  %v2681 = vunpack.c.l.b16 %v2609
  %v2682 = vunpack.c.l.b16 %v2610
  %v2683 = vunpack.c.l.b16 %v2611
  %v2684 = vunpack.c.l.b16 %v2612
  %v2685 = vunpack.c.l.b16 %v2613
  %v2686 = vunpack.c.l.b16 %v2614
  %v2687 = vunpack.c.l.b16 %v2615
  %v2688 = vunpack.c.l.b16 %v2616
  %v2689 = vunpack.c.l.b16 %v2617
  %v2690 = vunpack.c.l.b16 %v2618
  %v2691 = vunpack.c.l.b16 %v2619
  %v2692 = vunpack.c.l.b16 %v2620
  %v2693 = vunpack.c.l.b16 %v2621
  %v2694 = vunpack.c.l.b16 %v2622
  %v2695 = vunpack.c.l.b16 %v2623
  %v2696 = vunpack.c.l.b16 %v2624
  %v2697 = vunpack.c.l.b16 %v2625
  %v2698 = vunpack.c.l.b16 %v2626
  %v2699 = vunpack.c.l.b16 %v2627
  %v2700 = vunpack.c.l.b16 %v2628
  %v2701 = vunpack.c.l.b16 %v2629
  %v2702 = vunpack.c.l.b16 %v2630
  %v2703 = vunpack.c.l.b16 %v2631
  %v2704 = vunpack.c.l.b16 %v2632
  %v2705 = vunpack.c.l.b16 %v2633
  %v2706 = vrot.slane %v2675, 7
  %v2707 = vsel %vm1116, %v2706, %v2674
  %v2708 = vrot.slane %v2676, 6
  %v2709 = vsel %vm1119, %v2708, %v2707
  %v2710 = vrot.slane %v2677, 5
  %v2711 = vsel %vm1122, %v2710, %v2709
  %v2712 = vrot.slane %v2678, 4
  %v2713 = vsel %vm1125, %v2712, %v2711
  %v2714 = vrot.slane %v2679, 3
  %v2715 = vsel %vm1128, %v2714, %v2713
  %v2716 = vrot.slane %v2680, 2
  %v2717 = vsel %vm1131, %v2716, %v2715
  %v2718 = vrot.slane %v2681, 1
  %v2719 = vsel %vm1134, %v2718, %v2717
  %v2720 = vrot.slane %v2683, 7
  %v2721 = vsel %vm1116, %v2720, %v2682
  %v2722 = vrot.slane %v2684, 6
  %v2723 = vsel %vm1119, %v2722, %v2721
  %v2724 = vrot.slane %v2685, 5
  %v2725 = vsel %vm1122, %v2724, %v2723
  %v2726 = vrot.slane %v2686, 4
  %v2727 = vsel %vm1125, %v2726, %v2725
  %v2728 = vrot.slane %v2687, 3
  %v2729 = vsel %vm1128, %v2728, %v2727
  %v2730 = vrot.slane %v2688, 2
  %v2731 = vsel %vm1131, %v2730, %v2729
  %v2732 = vrot.slane %v2689, 1
  %v2733 = vsel %vm1134, %v2732, %v2731
  %v2734 = vrot.slane %v2691, 7
  %v2735 = vsel %vm1116, %v2734, %v2690
  %v2736 = vrot.slane %v2692, 6
  %v2737 = vsel %vm1119, %v2736, %v2735
  %v2738 = vrot.slane %v2693, 5
  %v2739 = vsel %vm1122, %v2738, %v2737
  %v2740 = vrot.slane %v2694, 4
  %v2741 = vsel %vm1125, %v2740, %v2739
  %v2742 = vrot.slane %v2695, 3
  %v2743 = vsel %vm1128, %v2742, %v2741
  %v2744 = vrot.slane %v2696, 2
  %v2745 = vsel %vm1131, %v2744, %v2743
  %v2746 = vrot.slane %v2697, 1
  %v2747 = vsel %vm1134, %v2746, %v2745
  %v2748 = vrot.slane %v2699, 7
  %v2749 = vsel %vm1116, %v2748, %v2698
  %v2750 = vrot.slane %v2700, 6
  %v2751 = vsel %vm1119, %v2750, %v2749
  %v2752 = vrot.slane %v2701, 5
  %v2753 = vsel %vm1122, %v2752, %v2751
  %v2754 = vrot.slane %v2702, 4
  %v2755 = vsel %vm1125, %v2754, %v2753
  %v2756 = vrot.slane %v2703, 3
  %v2757 = vsel %vm1128, %v2756, %v2755
  %v2758 = vrot.slane %v2704, 2
  %v2759 = vsel %vm1131, %v2758, %v2757
  %v2760 = vrot.slane %v2705, 1
  %v2761 = vsel %vm1134, %v2760, %v2759
  %v2762 = vpack.c.b16 %v2733, %v2719
  %v2763 = vpack.c.b16 %v2761, %v2747
  %v2772 = vunpack.c.l.b16 %v2634
  %v2773 = vunpack.c.l.b16 %v2635
  %v2774 = vunpack.c.l.b16 %v2636
  %v2775 = vunpack.c.l.b16 %v2637
  %v2776 = vunpack.c.l.b16 %v2638
  %v2777 = vunpack.c.l.b16 %v2639
  %v2778 = vunpack.c.l.b16 %v2640
  %v2779 = vunpack.c.l.b16 %v2641
  %v2780 = vpack.c.b16 %v2773, %v2772
  %v2781 = vpack.c.b16 %v2775, %v2774
  %v2782 = vpack.c.b16 %v2777, %v2776
  %v2783 = vpack.c.b16 %v2779, %v2778
  %v2789 = vsel %vm327, %v2762, 0
  %v2792 = vsel %vm327, %v2763, 0
  %2794 = vmatprep.subr.bf16.mxu0 0
  %2795 = vmatpush1.bf16.msra.mxu0 %v2780
  %2796 = vmatprep.subr.bf16.mxu0 0
  %2797 = vmatpush1.bf16.msra.mxu0 %v2781
  %2798 = vmatprep.subr.bf16.mxu0 0
  %2799 = vmatpush1.bf16.msra.mxu0 %v2782
  %2800 = vmatprep.subr.bf16.mxu0 0
  %2801 = vmatpush1.bf16.msra.mxu0 %v2783
  %2802 = vmatprep.subr.bf16.mxu0 0
  %2803 = vmatpush1.bf16.msra.mxu0 0
  %2804 = vmatprep.subr.bf16.mxu0 0
  %2805 = vmatpush1.bf16.msra.mxu0 0
  %2806 = vmatprep.subr.bf16.mxu0 0
  %2807 = vmatpush1.bf16.msra.mxu0 0
  %2808 = vmatprep.subr.bf16.mxu0 0
  %2809 = vmatpush1.bf16.msra.mxu0 0
  %2810 = vmatprep.subr.bf16.mxu0 0
  %2811 = vmatpush1.bf16.msra.mxu0 0
  %2812 = vmatprep.subr.bf16.mxu0 0
  %2813 = vmatpush1.bf16.msra.mxu0 0
  %2814 = vmatprep.subr.bf16.mxu0 0
  %2815 = vmatpush1.bf16.msra.mxu0 0
  %2816 = vmatprep.subr.bf16.mxu0 0
  %2817 = vmatpush1.bf16.msra.mxu0 0
  %2818 = vmatprep.subr.bf16.mxu0 0
  %2819 = vmatpush1.bf16.msra.mxu0 0
  %2820 = vmatprep.subr.bf16.mxu0 0
  %2821 = vmatpush1.bf16.msra.mxu0 0
  %2822 = vmatprep.subr.bf16.mxu0 0
  %2823 = vmatpush1.bf16.msra.mxu0 0
  %2824 = vmatprep.subr.bf16.mxu0 0
  %2825 = vmatpush1.bf16.msra.mxu0 0
  %2826 = vmatprep.mubr.bf16.mxu0 0
  %2827 = vmatmul.mubr.bf16.gmra.mrb[0].mxu0 %v2789
  %v2828 = vpop.f32.mrb[0].mxu0
  %v2829 = vadd.f32 0.0, %v2828
  %v2830 = vpop.f32.mrb[0].mxu0
  %v2831 = vpop.f32.mrb[0].mxu0
  %v2832 = vadd.f32 0.0, %v2831
  %v2833 = vpop.f32.mrb[0].mxu0
  %2834 = vmatprep.mubr.bf16.mxu0 0
  %2835 = vmatmul.mubr.bf16.gmra.mrb[0].mxu0 %v2792
  %v2836 = vpop.f32.mrb[0].mxu0
  %v2837 = vadd.f32 0.0, %v2836
  %v2838 = vpop.f32.mrb[0].mxu0
  %v2839 = vpop.f32.mrb[0].mxu0
  %v2840 = vadd.f32 0.0, %v2839
  %v2841 = vpop.f32.mrb[0].mxu0
  %2842 = vdwg.mxu0
  %v2843 = vadd.f32 %v2566, %v2829
  %v2844 = vadd.f32 %v2567, %v2832
  %v2845 = vadd.f32 %v2568, %v2837
  %v2846 = vadd.f32 %v2569, %v2840
  %s2847 = scalar_lea.vmem [#allocation2], 28
  %v2848 = vld [vmem:[%s2847] sm:$0x1]
  %v2849 = vld [vmem:[%s2847 + $0x2] sm:$0x1]
  %v2850 = vld [vmem:[%s2847 + $0x4] sm:$0x1]
  %v2851 = vld [vmem:[%s2847 + $0x6] sm:$0x1]
  %v2852 = vld [vmem:[%s2847 + $0x18] sm:$0x1]
  %v2853 = vld [vmem:[%s2847 + $0x1a] sm:$0x1]
  %v2854 = vld [vmem:[%s2847 + $0x1c] sm:$0x1]
  %v2855 = vld [vmem:[%s2847 + $0x1e] sm:$0x1]
  %v2856 = vld [vmem:[%s2847 + $0x30] sm:$0x1]
  %v2857 = vld [vmem:[%s2847 + $0x32] sm:$0x1]
  %v2858 = vld [vmem:[%s2847 + $0x34] sm:$0x1]
  %v2859 = vld [vmem:[%s2847 + $0x36] sm:$0x1]
  %v2860 = vld [vmem:[%s2847 + $0x48] sm:$0x1]
  %v2861 = vld [vmem:[%s2847 + $0x4a] sm:$0x1]
  %v2862 = vld [vmem:[%s2847 + $0x4c] sm:$0x1]
  %v2863 = vld [vmem:[%s2847 + $0x4e] sm:$0x1]
  %v2864 = vld [vmem:[%s2847 + $0x90] sm:$0x1]
  %v2865 = vld [vmem:[%s2847 + $0x92] sm:$0x1]
  %v2866 = vld [vmem:[%s2847 + $0x94] sm:$0x1]
  %v2867 = vld [vmem:[%s2847 + $0x96] sm:$0x1]
  %v2868 = vld [vmem:[%s2847 + $0xa8] sm:$0x1]
  %v2869 = vld [vmem:[%s2847 + $0xaa] sm:$0x1]
  %v2870 = vld [vmem:[%s2847 + $0xac] sm:$0x1]
  %v2871 = vld [vmem:[%s2847 + $0xae] sm:$0x1]
  %v2872 = vld [vmem:[%s2847 + $0xc0] sm:$0x1]
  %v2873 = vld [vmem:[%s2847 + $0xc2] sm:$0x1]
  %v2874 = vld [vmem:[%s2847 + $0xc4] sm:$0x1]
  %v2875 = vld [vmem:[%s2847 + $0xc6] sm:$0x1]
  %v2876 = vld [vmem:[%s2847 + $0xd8] sm:$0x1]
  %v2877 = vld [vmem:[%s2847 + $0xda] sm:$0x1]
  %v2878 = vld [vmem:[%s2847 + $0xdc] sm:$0x1]
  %v2879 = vld [vmem:[%s2847 + $0xde] sm:$0x1]
  %v2880 = vpack.c.bf16 %v2848, %v2848
  %v2881 = vpack.c.bf16 %v2849, %v2849
  %v2882 = vpack.c.bf16 %v2850, %v2850
  %v2883 = vpack.c.bf16 %v2851, %v2851
  %v2884 = vpack.c.bf16 %v2852, %v2852
  %v2885 = vpack.c.bf16 %v2853, %v2853
  %v2886 = vpack.c.bf16 %v2854, %v2854
  %v2887 = vpack.c.bf16 %v2855, %v2855
  %v2888 = vpack.c.bf16 %v2856, %v2856
  %v2889 = vpack.c.bf16 %v2857, %v2857
  %v2890 = vpack.c.bf16 %v2858, %v2858
  %v2891 = vpack.c.bf16 %v2859, %v2859
  %v2892 = vpack.c.bf16 %v2860, %v2860
  %v2893 = vpack.c.bf16 %v2861, %v2861
  %v2894 = vpack.c.bf16 %v2862, %v2862
  %v2895 = vpack.c.bf16 %v2863, %v2863
  %v2896 = vpack.c.bf16 %v2864, %v2864
  %v2897 = vpack.c.bf16 %v2865, %v2865
  %v2898 = vpack.c.bf16 %v2866, %v2866
  %v2899 = vpack.c.bf16 %v2867, %v2867
  %v2900 = vpack.c.bf16 %v2868, %v2868
  %v2901 = vpack.c.bf16 %v2869, %v2869
  %v2902 = vpack.c.bf16 %v2870, %v2870
  %v2903 = vpack.c.bf16 %v2871, %v2871
  %v2904 = vpack.c.bf16 %v2872, %v2872
  %v2905 = vpack.c.bf16 %v2873, %v2873
  %v2906 = vpack.c.bf16 %v2874, %v2874
  %v2907 = vpack.c.bf16 %v2875, %v2875
  %v2908 = vpack.c.bf16 %v2876, %v2876
  %v2909 = vpack.c.bf16 %v2877, %v2877
  %v2910 = vpack.c.bf16 %v2878, %v2878
  %v2911 = vpack.c.bf16 %v2879, %v2879
  %v2912 = vld [vmem:[%s2 + $0xe0] sm:$0xf]
  %v2913 = vld [vmem:[%s2 + $0xe4] sm:$0xf]
  %v2914 = vld [vmem:[%s2 + $0xe8] sm:$0xf]
  %v2915 = vld [vmem:[%s2 + $0xec] sm:$0xf]
  %v2916 = vld [vmem:[%s2 + $0xf0] sm:$0xf]
  %v2917 = vld [vmem:[%s2 + $0xf4] sm:$0xf]
  %v2918 = vld [vmem:[%s2 + $0xf8] sm:$0xf]
  %v2919 = vld [vmem:[%s2 + $0xfc] sm:$0xf]
  %v2952 = vunpack.c.l.b16 %v2880
  %v2953 = vunpack.c.l.b16 %v2881
  %v2954 = vunpack.c.l.b16 %v2882
  %v2955 = vunpack.c.l.b16 %v2883
  %v2956 = vunpack.c.l.b16 %v2884
  %v2957 = vunpack.c.l.b16 %v2885
  %v2958 = vunpack.c.l.b16 %v2886
  %v2959 = vunpack.c.l.b16 %v2887
  %v2960 = vunpack.c.l.b16 %v2888
  %v2961 = vunpack.c.l.b16 %v2889
  %v2962 = vunpack.c.l.b16 %v2890
  %v2963 = vunpack.c.l.b16 %v2891
  %v2964 = vunpack.c.l.b16 %v2892
  %v2965 = vunpack.c.l.b16 %v2893
  %v2966 = vunpack.c.l.b16 %v2894
  %v2967 = vunpack.c.l.b16 %v2895
  %v2968 = vunpack.c.l.b16 %v2896
  %v2969 = vunpack.c.l.b16 %v2897
  %v2970 = vunpack.c.l.b16 %v2898
  %v2971 = vunpack.c.l.b16 %v2899
  %v2972 = vunpack.c.l.b16 %v2900
  %v2973 = vunpack.c.l.b16 %v2901
  %v2974 = vunpack.c.l.b16 %v2902
  %v2975 = vunpack.c.l.b16 %v2903
  %v2976 = vunpack.c.l.b16 %v2904
  %v2977 = vunpack.c.l.b16 %v2905
  %v2978 = vunpack.c.l.b16 %v2906
  %v2979 = vunpack.c.l.b16 %v2907
  %v2980 = vunpack.c.l.b16 %v2908
  %v2981 = vunpack.c.l.b16 %v2909
  %v2982 = vunpack.c.l.b16 %v2910
  %v2983 = vunpack.c.l.b16 %v2911
  %v2984 = vrot.slane %v2953, 7
  %v2985 = vsel %vm1116, %v2984, %v2952
  %v2986 = vrot.slane %v2954, 6
  %v2987 = vsel %vm1119, %v2986, %v2985
  %v2988 = vrot.slane %v2955, 5
  %v2989 = vsel %vm1122, %v2988, %v2987
  %v2990 = vrot.slane %v2956, 4
  %v2991 = vsel %vm1125, %v2990, %v2989
  %v2992 = vrot.slane %v2957, 3
  %v2993 = vsel %vm1128, %v2992, %v2991
  %v2994 = vrot.slane %v2958, 2
  %v2995 = vsel %vm1131, %v2994, %v2993
  %v2996 = vrot.slane %v2959, 1
  %v2997 = vsel %vm1134, %v2996, %v2995
  %v2998 = vrot.slane %v2961, 7
  %v2999 = vsel %vm1116, %v2998, %v2960
  %v3000 = vrot.slane %v2962, 6
  %v3001 = vsel %vm1119, %v3000, %v2999
  %v3002 = vrot.slane %v2963, 5
  %v3003 = vsel %vm1122, %v3002, %v3001
  %v3004 = vrot.slane %v2964, 4
  %v3005 = vsel %vm1125, %v3004, %v3003
  %v3006 = vrot.slane %v2965, 3
  %v3007 = vsel %vm1128, %v3006, %v3005
  %v3008 = vrot.slane %v2966, 2
  %v3009 = vsel %vm1131, %v3008, %v3007
  %v3010 = vrot.slane %v2967, 1
  %v3011 = vsel %vm1134, %v3010, %v3009
  %v3012 = vrot.slane %v2969, 7
  %v3013 = vsel %vm1116, %v3012, %v2968
  %v3014 = vrot.slane %v2970, 6
  %v3015 = vsel %vm1119, %v3014, %v3013
  %v3016 = vrot.slane %v2971, 5
  %v3017 = vsel %vm1122, %v3016, %v3015
  %v3018 = vrot.slane %v2972, 4
  %v3019 = vsel %vm1125, %v3018, %v3017
  %v3020 = vrot.slane %v2973, 3
  %v3021 = vsel %vm1128, %v3020, %v3019
  %v3022 = vrot.slane %v2974, 2
  %v3023 = vsel %vm1131, %v3022, %v3021
  %v3024 = vrot.slane %v2975, 1
  %v3025 = vsel %vm1134, %v3024, %v3023
  %v3026 = vrot.slane %v2977, 7
  %v3027 = vsel %vm1116, %v3026, %v2976
  %v3028 = vrot.slane %v2978, 6
  %v3029 = vsel %vm1119, %v3028, %v3027
  %v3030 = vrot.slane %v2979, 5
  %v3031 = vsel %vm1122, %v3030, %v3029
  %v3032 = vrot.slane %v2980, 4
  %v3033 = vsel %vm1125, %v3032, %v3031
  %v3034 = vrot.slane %v2981, 3
  %v3035 = vsel %vm1128, %v3034, %v3033
  %v3036 = vrot.slane %v2982, 2
  %v3037 = vsel %vm1131, %v3036, %v3035
  %v3038 = vrot.slane %v2983, 1
  %v3039 = vsel %vm1134, %v3038, %v3037
  %v3040 = vpack.c.b16 %v3011, %v2997
  %v3041 = vpack.c.b16 %v3039, %v3025
  %v3050 = vunpack.c.l.b16 %v2912
  %v3051 = vunpack.c.l.b16 %v2913
  %v3052 = vunpack.c.l.b16 %v2914
  %v3053 = vunpack.c.l.b16 %v2915
  %v3054 = vunpack.c.l.b16 %v2916
  %v3055 = vunpack.c.l.b16 %v2917
  %v3056 = vunpack.c.l.b16 %v2918
  %v3057 = vunpack.c.l.b16 %v2919
  %v3058 = vpack.c.b16 %v3051, %v3050
  %v3059 = vpack.c.b16 %v3053, %v3052
  %v3060 = vpack.c.b16 %v3055, %v3054
  %v3061 = vpack.c.b16 %v3057, %v3056
  %v3067 = vsel %vm327, %v3040, 0
  %v3070 = vsel %vm327, %v3041, 0
  %3072 = vmatprep.subr.bf16.mxu0 0
  %3073 = vmatpush1.bf16.msra.mxu0 %v3058
  %3074 = vmatprep.subr.bf16.mxu0 0
  %3075 = vmatpush1.bf16.msra.mxu0 %v3059
  %3076 = vmatprep.subr.bf16.mxu0 0
  %3077 = vmatpush1.bf16.msra.mxu0 %v3060
  %3078 = vmatprep.subr.bf16.mxu0 0
  %3079 = vmatpush1.bf16.msra.mxu0 %v3061
  %3080 = vmatprep.subr.bf16.mxu0 0
  %3081 = vmatpush1.bf16.msra.mxu0 0
  %3082 = vmatprep.subr.bf16.mxu0 0
  %3083 = vmatpush1.bf16.msra.mxu0 0
  %3084 = vmatprep.subr.bf16.mxu0 0
  %3085 = vmatpush1.bf16.msra.mxu0 0
  %3086 = vmatprep.subr.bf16.mxu0 0
  %3087 = vmatpush1.bf16.msra.mxu0 0
  %3088 = vmatprep.subr.bf16.mxu0 0
  %3089 = vmatpush1.bf16.msra.mxu0 0
  %3090 = vmatprep.subr.bf16.mxu0 0
  %3091 = vmatpush1.bf16.msra.mxu0 0
  %3092 = vmatprep.subr.bf16.mxu0 0
  %3093 = vmatpush1.bf16.msra.mxu0 0
  %3094 = vmatprep.subr.bf16.mxu0 0
  %3095 = vmatpush1.bf16.msra.mxu0 0
  %3096 = vmatprep.subr.bf16.mxu0 0
  %3097 = vmatpush1.bf16.msra.mxu0 0
  %3098 = vmatprep.subr.bf16.mxu0 0
  %3099 = vmatpush1.bf16.msra.mxu0 0
  %3100 = vmatprep.subr.bf16.mxu0 0
  %3101 = vmatpush1.bf16.msra.mxu0 0
  %3102 = vmatprep.subr.bf16.mxu0 0
  %3103 = vmatpush1.bf16.msra.mxu0 0
  %3104 = vmatprep.mubr.bf16.mxu0 0
  %3105 = vmatmul.mubr.bf16.gmra.mrb[0].mxu0 %v3067
  %v3106 = vpop.f32.mrb[0].mxu0
  %v3107 = vadd.f32 0.0, %v3106
  %v3108 = vpop.f32.mrb[0].mxu0
  %v3109 = vpop.f32.mrb[0].mxu0
  %v3110 = vadd.f32 0.0, %v3109
  %v3111 = vpop.f32.mrb[0].mxu0
  %3112 = vmatprep.mubr.bf16.mxu0 0
  %3113 = vmatmul.mubr.bf16.gmra.mrb[0].mxu0 %v3070
  %v3114 = vpop.f32.mrb[0].mxu0
  %v3115 = vadd.f32 0.0, %v3114
  %v3116 = vpop.f32.mrb[0].mxu0
  %v3117 = vpop.f32.mrb[0].mxu0
  %v3118 = vadd.f32 0.0, %v3117
  %v3119 = vpop.f32.mrb[0].mxu0
  %3120 = vdwg.mxu0
  %v3121 = vadd.f32 %v2843, %v3107
  %v3122 = vadd.f32 %v2844, %v3110
  %v3123 = vadd.f32 %v2845, %v3115
  %v3124 = vadd.f32 %v2846, %v3118
  %s3125 = scalar_lea.vmem [#allocation2], 36
  %v3126 = vld [vmem:[%s3125 + $0x1] sm:$0x1]
  %v3127 = vld [vmem:[%s3125 + $0x3] sm:$0x1]
  %v3128 = vld [vmem:[%s3125 + $0x5] sm:$0x1]
  %v3129 = vld [vmem:[%s3125 + $0x7] sm:$0x1]
  %v3130 = vld [vmem:[%s3125 + $0x19] sm:$0x1]
  %v3131 = vld [vmem:[%s3125 + $0x1b] sm:$0x1]
  %v3132 = vld [vmem:[%s3125 + $0x1d] sm:$0x1]
  %v3133 = vld [vmem:[%s3125 + $0x1f] sm:$0x1]
  %v3134 = vld [vmem:[%s3125 + $0x31] sm:$0x1]
  %v3135 = vld [vmem:[%s3125 + $0x33] sm:$0x1]
  %v3136 = vld [vmem:[%s3125 + $0x35] sm:$0x1]
  %v3137 = vld [vmem:[%s3125 + $0x37] sm:$0x1]
  %v3138 = vld [vmem:[%s3125 + $0x49] sm:$0x1]
  %v3139 = vld [vmem:[%s3125 + $0x4b] sm:$0x1]
  %v3140 = vld [vmem:[%s3125 + $0x4d] sm:$0x1]
  %v3141 = vld [vmem:[%s3125 + $0x4f] sm:$0x1]
  %v3142 = vld [vmem:[%s3125 + $0x91] sm:$0x1]
  %v3143 = vld [vmem:[%s3125 + $0x93] sm:$0x1]
  %v3144 = vld [vmem:[%s3125 + $0x95] sm:$0x1]
  %v3145 = vld [vmem:[%s3125 + $0x97] sm:$0x1]
  %v3146 = vld [vmem:[%s3125 + $0xa9] sm:$0x1]
  %v3147 = vld [vmem:[%s3125 + $0xab] sm:$0x1]
  %v3148 = vld [vmem:[%s3125 + $0xad] sm:$0x1]
  %v3149 = vld [vmem:[%s3125 + $0xaf] sm:$0x1]
  %v3150 = vld [vmem:[%s3125 + $0xc1] sm:$0x1]
  %v3151 = vld [vmem:[%s3125 + $0xc3] sm:$0x1]
  %v3152 = vld [vmem:[%s3125 + $0xc5] sm:$0x1]
  %v3153 = vld [vmem:[%s3125 + $0xc7] sm:$0x1]
  %v3154 = vld [vmem:[%s3125 + $0xd9] sm:$0x1]
  %v3155 = vld [vmem:[%s3125 + $0xdb] sm:$0x1]
  %v3156 = vld [vmem:[%s3125 + $0xdd] sm:$0x1]
  %v3157 = vld [vmem:[%s3125 + $0xdf] sm:$0x1]
  %v3158 = vpack.c.bf16 %v3126, %v3126
  %v3159 = vpack.c.bf16 %v3127, %v3127
  %v3160 = vpack.c.bf16 %v3128, %v3128
  %v3161 = vpack.c.bf16 %v3129, %v3129
  %v3162 = vpack.c.bf16 %v3130, %v3130
  %v3163 = vpack.c.bf16 %v3131, %v3131
  %v3164 = vpack.c.bf16 %v3132, %v3132
  %v3165 = vpack.c.bf16 %v3133, %v3133
  %v3166 = vpack.c.bf16 %v3134, %v3134
  %v3167 = vpack.c.bf16 %v3135, %v3135
  %v3168 = vpack.c.bf16 %v3136, %v3136
  %v3169 = vpack.c.bf16 %v3137, %v3137
  %v3170 = vpack.c.bf16 %v3138, %v3138
  %v3171 = vpack.c.bf16 %v3139, %v3139
  %v3172 = vpack.c.bf16 %v3140, %v3140
  %v3173 = vpack.c.bf16 %v3141, %v3141
  %v3174 = vpack.c.bf16 %v3142, %v3142
  %v3175 = vpack.c.bf16 %v3143, %v3143
  %v3176 = vpack.c.bf16 %v3144, %v3144
  %v3177 = vpack.c.bf16 %v3145, %v3145
  %v3178 = vpack.c.bf16 %v3146, %v3146
  %v3179 = vpack.c.bf16 %v3147, %v3147
  %v3180 = vpack.c.bf16 %v3148, %v3148
  %v3181 = vpack.c.bf16 %v3149, %v3149
  %v3182 = vpack.c.bf16 %v3150, %v3150
  %v3183 = vpack.c.bf16 %v3151, %v3151
  %v3184 = vpack.c.bf16 %v3152, %v3152
  %v3185 = vpack.c.bf16 %v3153, %v3153
  %v3186 = vpack.c.bf16 %v3154, %v3154
  %v3187 = vpack.c.bf16 %v3155, %v3155
  %v3188 = vpack.c.bf16 %v3156, %v3156
  %v3189 = vpack.c.bf16 %v3157, %v3157
  %v3190 = vld [vmem:[%s2 + $0x100] sm:$0xf]
  %v3191 = vld [vmem:[%s2 + $0x104] sm:$0xf]
  %v3192 = vld [vmem:[%s2 + $0x108] sm:$0xf]
  %v3193 = vld [vmem:[%s2 + $0x10c] sm:$0xf]
  %v3194 = vld [vmem:[%s2 + $0x110] sm:$0xf]
  %v3195 = vld [vmem:[%s2 + $0x114] sm:$0xf]
  %v3196 = vld [vmem:[%s2 + $0x118] sm:$0xf]
  %v3197 = vld [vmem:[%s2 + $0x11c] sm:$0xf]
  %v3230 = vunpack.c.l.b16 %v3158
  %v3231 = vunpack.c.l.b16 %v3159
  %v3232 = vunpack.c.l.b16 %v3160
  %v3233 = vunpack.c.l.b16 %v3161
  %v3234 = vunpack.c.l.b16 %v3162
  %v3235 = vunpack.c.l.b16 %v3163
  %v3236 = vunpack.c.l.b16 %v3164
  %v3237 = vunpack.c.l.b16 %v3165
  %v3238 = vunpack.c.l.b16 %v3166
  %v3239 = vunpack.c.l.b16 %v3167
  %v3240 = vunpack.c.l.b16 %v3168
  %v3241 = vunpack.c.l.b16 %v3169
  %v3242 = vunpack.c.l.b16 %v3170
  %v3243 = vunpack.c.l.b16 %v3171
  %v3244 = vunpack.c.l.b16 %v3172
  %v3245 = vunpack.c.l.b16 %v3173
  %v3246 = vunpack.c.l.b16 %v3174
  %v3247 = vunpack.c.l.b16 %v3175
  %v3248 = vunpack.c.l.b16 %v3176
  %v3249 = vunpack.c.l.b16 %v3177
  %v3250 = vunpack.c.l.b16 %v3178
  %v3251 = vunpack.c.l.b16 %v3179
  %v3252 = vunpack.c.l.b16 %v3180
  %v3253 = vunpack.c.l.b16 %v3181
  %v3254 = vunpack.c.l.b16 %v3182
  %v3255 = vunpack.c.l.b16 %v3183
  %v3256 = vunpack.c.l.b16 %v3184
  %v3257 = vunpack.c.l.b16 %v3185
  %v3258 = vunpack.c.l.b16 %v3186
  %v3259 = vunpack.c.l.b16 %v3187
  %v3260 = vunpack.c.l.b16 %v3188
  %v3261 = vunpack.c.l.b16 %v3189
  %v3262 = vrot.slane %v3231, 7
  %v3263 = vsel %vm1116, %v3262, %v3230
  %v3264 = vrot.slane %v3232, 6
  %v3265 = vsel %vm1119, %v3264, %v3263
  %v3266 = vrot.slane %v3233, 5
  %v3267 = vsel %vm1122, %v3266, %v3265
  %v3268 = vrot.slane %v3234, 4
  %v3269 = vsel %vm1125, %v3268, %v3267
  %v3270 = vrot.slane %v3235, 3
  %v3271 = vsel %vm1128, %v3270, %v3269
  %v3272 = vrot.slane %v3236, 2
  %v3273 = vsel %vm1131, %v3272, %v3271
  %v3274 = vrot.slane %v3237, 1
  %v3275 = vsel %vm1134, %v3274, %v3273
  %v3276 = vrot.slane %v3239, 7
  %v3277 = vsel %vm1116, %v3276, %v3238
  %v3278 = vrot.slane %v3240, 6
  %v3279 = vsel %vm1119, %v3278, %v3277
  %v3280 = vrot.slane %v3241, 5
  %v3281 = vsel %vm1122, %v3280, %v3279
  %v3282 = vrot.slane %v3242, 4
  %v3283 = vsel %vm1125, %v3282, %v3281
  %v3284 = vrot.slane %v3243, 3
  %v3285 = vsel %vm1128, %v3284, %v3283
  %v3286 = vrot.slane %v3244, 2
  %v3287 = vsel %vm1131, %v3286, %v3285
  %v3288 = vrot.slane %v3245, 1
  %v3289 = vsel %vm1134, %v3288, %v3287
  %v3290 = vrot.slane %v3247, 7
  %v3291 = vsel %vm1116, %v3290, %v3246
  %v3292 = vrot.slane %v3248, 6
  %v3293 = vsel %vm1119, %v3292, %v3291
  %v3294 = vrot.slane %v3249, 5
  %v3295 = vsel %vm1122, %v3294, %v3293
  %v3296 = vrot.slane %v3250, 4
  %v3297 = vsel %vm1125, %v3296, %v3295
  %v3298 = vrot.slane %v3251, 3
  %v3299 = vsel %vm1128, %v3298, %v3297
  %v3300 = vrot.slane %v3252, 2
  %v3301 = vsel %vm1131, %v3300, %v3299
  %v3302 = vrot.slane %v3253, 1
  %v3303 = vsel %vm1134, %v3302, %v3301
  %v3304 = vrot.slane %v3255, 7
  %v3305 = vsel %vm1116, %v3304, %v3254
  %v3306 = vrot.slane %v3256, 6
  %v3307 = vsel %vm1119, %v3306, %v3305
  %v3308 = vrot.slane %v3257, 5
  %v3309 = vsel %vm1122, %v3308, %v3307
  %v3310 = vrot.slane %v3258, 4
  %v3311 = vsel %vm1125, %v3310, %v3309
  %v3312 = vrot.slane %v3259, 3
  %v3313 = vsel %vm1128, %v3312, %v3311
  %v3314 = vrot.slane %v3260, 2
  %v3315 = vsel %vm1131, %v3314, %v3313
  %v3316 = vrot.slane %v3261, 1
  %v3317 = vsel %vm1134, %v3316, %v3315
  %v3318 = vpack.c.b16 %v3289, %v3275
  %v3319 = vpack.c.b16 %v3317, %v3303
  %v3328 = vunpack.c.l.b16 %v3190
  %v3329 = vunpack.c.l.b16 %v3191
  %v3330 = vunpack.c.l.b16 %v3192
  %v3331 = vunpack.c.l.b16 %v3193
  %v3332 = vunpack.c.l.b16 %v3194
  %v3333 = vunpack.c.l.b16 %v3195
  %v3334 = vunpack.c.l.b16 %v3196
  %v3335 = vunpack.c.l.b16 %v3197
  %v3336 = vpack.c.b16 %v3329, %v3328
  %v3337 = vpack.c.b16 %v3331, %v3330
  %v3338 = vpack.c.b16 %v3333, %v3332
  %v3339 = vpack.c.b16 %v3335, %v3334
  %v3345 = vsel %vm327, %v3318, 0
  %v3348 = vsel %vm327, %v3319, 0
  %3350 = vmatprep.subr.bf16.mxu0 0
  %3351 = vmatpush1.bf16.msra.mxu0 %v3336
  %3352 = vmatprep.subr.bf16.mxu0 0
  %3353 = vmatpush1.bf16.msra.mxu0 %v3337
  %3354 = vmatprep.subr.bf16.mxu0 0
  %3355 = vmatpush1.bf16.msra.mxu0 %v3338
  %3356 = vmatprep.subr.bf16.mxu0 0
  %3357 = vmatpush1.bf16.msra.mxu0 %v3339
  %3358 = vmatprep.subr.bf16.mxu0 0
  %3359 = vmatpush1.bf16.msra.mxu0 0
  %3360 = vmatprep.subr.bf16.mxu0 0
  %3361 = vmatpush1.bf16.msra.mxu0 0
  %3362 = vmatprep.subr.bf16.mxu0 0
  %3363 = vmatpush1.bf16.msra.mxu0 0
  %3364 = vmatprep.subr.bf16.mxu0 0
  %3365 = vmatpush1.bf16.msra.mxu0 0
  %3366 = vmatprep.subr.bf16.mxu0 0
  %3367 = vmatpush1.bf16.msra.mxu0 0
  %3368 = vmatprep.subr.bf16.mxu0 0
  %3369 = vmatpush1.bf16.msra.mxu0 0
  %3370 = vmatprep.subr.bf16.mxu0 0
  %3371 = vmatpush1.bf16.msra.mxu0 0
  %3372 = vmatprep.subr.bf16.mxu0 0
  %3373 = vmatpush1.bf16.msra.mxu0 0
  %3374 = vmatprep.subr.bf16.mxu0 0
  %3375 = vmatpush1.bf16.msra.mxu0 0
  %3376 = vmatprep.subr.bf16.mxu0 0
  %3377 = vmatpush1.bf16.msra.mxu0 0
  %3378 = vmatprep.subr.bf16.mxu0 0
  %3379 = vmatpush1.bf16.msra.mxu0 0
  %3380 = vmatprep.subr.bf16.mxu0 0
  %3381 = vmatpush1.bf16.msra.mxu0 0
  %3382 = vmatprep.mubr.bf16.mxu0 0
  %3383 = vmatmul.mubr.bf16.gmra.mrb[0].mxu0 %v3345
  %v3384 = vpop.f32.mrb[0].mxu0
  %v3385 = vadd.f32 0.0, %v3384
  %v3386 = vpop.f32.mrb[0].mxu0
  %v3387 = vpop.f32.mrb[0].mxu0
  %v3388 = vadd.f32 0.0, %v3387
  %v3389 = vpop.f32.mrb[0].mxu0
  %3390 = vmatprep.mubr.bf16.mxu0 0
  %3391 = vmatmul.mubr.bf16.gmra.mrb[0].mxu0 %v3348
  %v3392 = vpop.f32.mrb[0].mxu0
  %v3393 = vadd.f32 0.0, %v3392
  %v3394 = vpop.f32.mrb[0].mxu0
  %v3395 = vpop.f32.mrb[0].mxu0
  %v3396 = vadd.f32 0.0, %v3395
  %v3397 = vpop.f32.mrb[0].mxu0
  %3398 = vdwg.mxu0
  %v3399 = vadd.f32 %v3121, %v3385
  %v3400 = vadd.f32 %v3122, %v3388
  %v3401 = vadd.f32 %v3123, %v3393
  %v3402 = vadd.f32 %v3124, %v3396
  %v3403 = vld [vmem:[%s578] sm:$0x1]
  %v3404 = vld [vmem:[%s578 + $0x2] sm:$0x1]
  %v3405 = vld [vmem:[%s578 + $0x4] sm:$0x1]
  %v3406 = vld [vmem:[%s578 + $0x6] sm:$0x1]
  %v3407 = vld [vmem:[%s578 + $0x18] sm:$0x1]
  %v3408 = vld [vmem:[%s578 + $0x1a] sm:$0x1]
  %v3409 = vld [vmem:[%s578 + $0x1c] sm:$0x1]
  %v3410 = vld [vmem:[%s578 + $0x1e] sm:$0x1]
  %v3411 = vld [vmem:[%s578 + $0x30] sm:$0x1]
  %v3412 = vld [vmem:[%s578 + $0x32] sm:$0x1]
  %v3413 = vld [vmem:[%s578 + $0x34] sm:$0x1]
  %v3414 = vld [vmem:[%s578 + $0x36] sm:$0x1]
  %v3415 = vld [vmem:[%s578 + $0x48] sm:$0x1]
  %v3416 = vld [vmem:[%s578 + $0x4a] sm:$0x1]
  %v3417 = vld [vmem:[%s578 + $0x4c] sm:$0x1]
  %v3418 = vld [vmem:[%s578 + $0x4e] sm:$0x1]
  %v3419 = vld [vmem:[%s578 + $0x90] sm:$0x1]
  %v3420 = vld [vmem:[%s578 + $0x92] sm:$0x1]
  %v3421 = vld [vmem:[%s578 + $0x94] sm:$0x1]
  %v3422 = vld [vmem:[%s578 + $0x96] sm:$0x1]
  %v3423 = vld [vmem:[%s578 + $0xa8] sm:$0x1]
  %v3424 = vld [vmem:[%s578 + $0xaa] sm:$0x1]
  %v3425 = vld [vmem:[%s578 + $0xac] sm:$0x1]
  %v3426 = vld [vmem:[%s578 + $0xae] sm:$0x1]
  %v3427 = vld [vmem:[%s578 + $0xc0] sm:$0x1]
  %v3428 = vld [vmem:[%s578 + $0xc2] sm:$0x1]
  %v3429 = vld [vmem:[%s578 + $0xc4] sm:$0x1]
  %v3430 = vld [vmem:[%s578 + $0xc6] sm:$0x1]
  %v3431 = vld [vmem:[%s578 + $0xd8] sm:$0x1]
  %v3432 = vld [vmem:[%s578 + $0xda] sm:$0x1]
  %v3433 = vld [vmem:[%s578 + $0xdc] sm:$0x1]
  %v3434 = vld [vmem:[%s578 + $0xde] sm:$0x1]
  %v3435 = vpack.c.bf16 %v3403, %v3403
  %v3436 = vpack.c.bf16 %v3404, %v3404
  %v3437 = vpack.c.bf16 %v3405, %v3405
  %v3438 = vpack.c.bf16 %v3406, %v3406
  %v3439 = vpack.c.bf16 %v3407, %v3407
  %v3440 = vpack.c.bf16 %v3408, %v3408
  %v3441 = vpack.c.bf16 %v3409, %v3409
  %v3442 = vpack.c.bf16 %v3410, %v3410
  %v3443 = vpack.c.bf16 %v3411, %v3411
  %v3444 = vpack.c.bf16 %v3412, %v3412
  %v3445 = vpack.c.bf16 %v3413, %v3413
  %v3446 = vpack.c.bf16 %v3414, %v3414
  %v3447 = vpack.c.bf16 %v3415, %v3415
  %v3448 = vpack.c.bf16 %v3416, %v3416
  %v3449 = vpack.c.bf16 %v3417, %v3417
  %v3450 = vpack.c.bf16 %v3418, %v3418
  %v3451 = vpack.c.bf16 %v3419, %v3419
  %v3452 = vpack.c.bf16 %v3420, %v3420
  %v3453 = vpack.c.bf16 %v3421, %v3421
  %v3454 = vpack.c.bf16 %v3422, %v3422
  %v3455 = vpack.c.bf16 %v3423, %v3423
  %v3456 = vpack.c.bf16 %v3424, %v3424
  %v3457 = vpack.c.bf16 %v3425, %v3425
  %v3458 = vpack.c.bf16 %v3426, %v3426
  %v3459 = vpack.c.bf16 %v3427, %v3427
  %v3460 = vpack.c.bf16 %v3428, %v3428
  %v3461 = vpack.c.bf16 %v3429, %v3429
  %v3462 = vpack.c.bf16 %v3430, %v3430
  %v3463 = vpack.c.bf16 %v3431, %v3431
  %v3464 = vpack.c.bf16 %v3432, %v3432
  %v3465 = vpack.c.bf16 %v3433, %v3433
  %v3466 = vpack.c.bf16 %v3434, %v3434
  %v3467 = vld [vmem:[%s2 + $0x120] sm:$0xf]
  %v3468 = vld [vmem:[%s2 + $0x124] sm:$0xf]
  %v3469 = vld [vmem:[%s2 + $0x128] sm:$0xf]
  %v3470 = vld [vmem:[%s2 + $0x12c] sm:$0xf]
  %v3471 = vld [vmem:[%s2 + $0x130] sm:$0xf]
  %v3472 = vld [vmem:[%s2 + $0x134] sm:$0xf]
  %v3473 = vld [vmem:[%s2 + $0x138] sm:$0xf]
  %v3474 = vld [vmem:[%s2 + $0x13c] sm:$0xf]
  %v3507 = vunpack.c.l.b16 %v3435
  %v3508 = vunpack.c.l.b16 %v3436
  %v3509 = vunpack.c.l.b16 %v3437
  %v3510 = vunpack.c.l.b16 %v3438
  %v3511 = vunpack.c.l.b16 %v3439
  %v3512 = vunpack.c.l.b16 %v3440
  %v3513 = vunpack.c.l.b16 %v3441
  %v3514 = vunpack.c.l.b16 %v3442
  %v3515 = vunpack.c.l.b16 %v3443
  %v3516 = vunpack.c.l.b16 %v3444
  %v3517 = vunpack.c.l.b16 %v3445
  %v3518 = vunpack.c.l.b16 %v3446
  %v3519 = vunpack.c.l.b16 %v3447
  %v3520 = vunpack.c.l.b16 %v3448
  %v3521 = vunpack.c.l.b16 %v3449
  %v3522 = vunpack.c.l.b16 %v3450
  %v3523 = vunpack.c.l.b16 %v3451
  %v3524 = vunpack.c.l.b16 %v3452
  %v3525 = vunpack.c.l.b16 %v3453
  %v3526 = vunpack.c.l.b16 %v3454
  %v3527 = vunpack.c.l.b16 %v3455
  %v3528 = vunpack.c.l.b16 %v3456
  %v3529 = vunpack.c.l.b16 %v3457
  %v3530 = vunpack.c.l.b16 %v3458
  %v3531 = vunpack.c.l.b16 %v3459
  %v3532 = vunpack.c.l.b16 %v3460
  %v3533 = vunpack.c.l.b16 %v3461
  %v3534 = vunpack.c.l.b16 %v3462
  %v3535 = vunpack.c.l.b16 %v3463
  %v3536 = vunpack.c.l.b16 %v3464
  %v3537 = vunpack.c.l.b16 %v3465
  %v3538 = vunpack.c.l.b16 %v3466
  %v3539 = vrot.slane %v3508, 7
  %v3540 = vsel %vm1116, %v3539, %v3507
  %v3541 = vrot.slane %v3509, 6
  %v3542 = vsel %vm1119, %v3541, %v3540
  %v3543 = vrot.slane %v3510, 5
  %v3544 = vsel %vm1122, %v3543, %v3542
  %v3545 = vrot.slane %v3511, 4
  %v3546 = vsel %vm1125, %v3545, %v3544
  %v3547 = vrot.slane %v3512, 3
  %v3548 = vsel %vm1128, %v3547, %v3546
  %v3549 = vrot.slane %v3513, 2
  %v3550 = vsel %vm1131, %v3549, %v3548
  %v3551 = vrot.slane %v3514, 1
  %v3552 = vsel %vm1134, %v3551, %v3550
  %v3553 = vrot.slane %v3516, 7
  %v3554 = vsel %vm1116, %v3553, %v3515
  %v3555 = vrot.slane %v3517, 6
  %v3556 = vsel %vm1119, %v3555, %v3554
  %v3557 = vrot.slane %v3518, 5
  %v3558 = vsel %vm1122, %v3557, %v3556
  %v3559 = vrot.slane %v3519, 4
  %v3560 = vsel %vm1125, %v3559, %v3558
  %v3561 = vrot.slane %v3520, 3
  %v3562 = vsel %vm1128, %v3561, %v3560
  %v3563 = vrot.slane %v3521, 2
  %v3564 = vsel %vm1131, %v3563, %v3562
  %v3565 = vrot.slane %v3522, 1
  %v3566 = vsel %vm1134, %v3565, %v3564
  %v3567 = vrot.slane %v3524, 7
  %v3568 = vsel %vm1116, %v3567, %v3523
  %v3569 = vrot.slane %v3525, 6
  %v3570 = vsel %vm1119, %v3569, %v3568
  %v3571 = vrot.slane %v3526, 5
  %v3572 = vsel %vm1122, %v3571, %v3570
  %v3573 = vrot.slane %v3527, 4
  %v3574 = vsel %vm1125, %v3573, %v3572
  %v3575 = vrot.slane %v3528, 3
  %v3576 = vsel %vm1128, %v3575, %v3574
  %v3577 = vrot.slane %v3529, 2
  %v3578 = vsel %vm1131, %v3577, %v3576
  %v3579 = vrot.slane %v3530, 1
  %v3580 = vsel %vm1134, %v3579, %v3578
  %v3581 = vrot.slane %v3532, 7
  %v3582 = vsel %vm1116, %v3581, %v3531
  %v3583 = vrot.slane %v3533, 6
  %v3584 = vsel %vm1119, %v3583, %v3582
  %v3585 = vrot.slane %v3534, 5
  %v3586 = vsel %vm1122, %v3585, %v3584
  %v3587 = vrot.slane %v3535, 4
  %v3588 = vsel %vm1125, %v3587, %v3586
  %v3589 = vrot.slane %v3536, 3
  %v3590 = vsel %vm1128, %v3589, %v3588
  %v3591 = vrot.slane %v3537, 2
  %v3592 = vsel %vm1131, %v3591, %v3590
  %v3593 = vrot.slane %v3538, 1
  %v3594 = vsel %vm1134, %v3593, %v3592
  %v3595 = vpack.c.b16 %v3566, %v3552
  %v3596 = vpack.c.b16 %v3594, %v3580
  %v3605 = vunpack.c.l.b16 %v3467
  %v3606 = vunpack.c.l.b16 %v3468
  %v3607 = vunpack.c.l.b16 %v3469
  %v3608 = vunpack.c.l.b16 %v3470
  %v3609 = vunpack.c.l.b16 %v3471
  %v3610 = vunpack.c.l.b16 %v3472
  %v3611 = vunpack.c.l.b16 %v3473
  %v3612 = vunpack.c.l.b16 %v3474
  %v3613 = vpack.c.b16 %v3606, %v3605
  %v3614 = vpack.c.b16 %v3608, %v3607
  %v3615 = vpack.c.b16 %v3610, %v3609
  %v3616 = vpack.c.b16 %v3612, %v3611
  %v3622 = vsel %vm327, %v3595, 0
  %v3625 = vsel %vm327, %v3596, 0
  %3627 = vmatprep.subr.bf16.mxu0 0
  %3628 = vmatpush1.bf16.msra.mxu0 %v3613
  %3629 = vmatprep.subr.bf16.mxu0 0
  %3630 = vmatpush1.bf16.msra.mxu0 %v3614
  %3631 = vmatprep.subr.bf16.mxu0 0
  %3632 = vmatpush1.bf16.msra.mxu0 %v3615
  %3633 = vmatprep.subr.bf16.mxu0 0
  %3634 = vmatpush1.bf16.msra.mxu0 %v3616
  %3635 = vmatprep.subr.bf16.mxu0 0
  %3636 = vmatpush1.bf16.msra.mxu0 0
  %3637 = vmatprep.subr.bf16.mxu0 0
  %3638 = vmatpush1.bf16.msra.mxu0 0
  %3639 = vmatprep.subr.bf16.mxu0 0
  %3640 = vmatpush1.bf16.msra.mxu0 0
  %3641 = vmatprep.subr.bf16.mxu0 0
  %3642 = vmatpush1.bf16.msra.mxu0 0
  %3643 = vmatprep.subr.bf16.mxu0 0
  %3644 = vmatpush1.bf16.msra.mxu0 0
  %3645 = vmatprep.subr.bf16.mxu0 0
  %3646 = vmatpush1.bf16.msra.mxu0 0
  %3647 = vmatprep.subr.bf16.mxu0 0
  %3648 = vmatpush1.bf16.msra.mxu0 0
  %3649 = vmatprep.subr.bf16.mxu0 0
  %3650 = vmatpush1.bf16.msra.mxu0 0
  %3651 = vmatprep.subr.bf16.mxu0 0
  %3652 = vmatpush1.bf16.msra.mxu0 0
  %3653 = vmatprep.subr.bf16.mxu0 0
  %3654 = vmatpush1.bf16.msra.mxu0 0
  %3655 = vmatprep.subr.bf16.mxu0 0
  %3656 = vmatpush1.bf16.msra.mxu0 0
  %3657 = vmatprep.subr.bf16.mxu0 0
  %3658 = vmatpush1.bf16.msra.mxu0 0
  %3659 = vmatprep.mubr.bf16.mxu0 0
  %3660 = vmatmul.mubr.bf16.gmra.mrb[0].mxu0 %v3622
  %v3661 = vpop.f32.mrb[0].mxu0
  %v3662 = vadd.f32 0.0, %v3661
  %v3663 = vpop.f32.mrb[0].mxu0
  %v3664 = vpop.f32.mrb[0].mxu0
  %v3665 = vadd.f32 0.0, %v3664
  %v3666 = vpop.f32.mrb[0].mxu0
  %3667 = vmatprep.mubr.bf16.mxu0 0
  %3668 = vmatmul.mubr.bf16.gmra.mrb[0].mxu0 %v3625
  %v3669 = vpop.f32.mrb[0].mxu0
  %v3670 = vadd.f32 0.0, %v3669
  %v3671 = vpop.f32.mrb[0].mxu0
  %v3672 = vpop.f32.mrb[0].mxu0
  %v3673 = vadd.f32 0.0, %v3672
  %v3674 = vpop.f32.mrb[0].mxu0
  %3675 = vdwg.mxu0
  %v3676 = vadd.f32 %v3399, %v3662
  %v3677 = vadd.f32 %v3400, %v3665
  %v3678 = vadd.f32 %v3401, %v3670
  %v3679 = vadd.f32 %v3402, %v3673
  %v3680 = vld [vmem:[%s578 + $0x1] sm:$0x1]
  %v3681 = vld [vmem:[%s578 + $0x3] sm:$0x1]
  %v3682 = vld [vmem:[%s578 + $0x5] sm:$0x1]
  %v3683 = vld [vmem:[%s578 + $0x7] sm:$0x1]
  %v3684 = vld [vmem:[%s578 + $0x19] sm:$0x1]
  %v3685 = vld [vmem:[%s578 + $0x1b] sm:$0x1]
  %v3686 = vld [vmem:[%s578 + $0x1d] sm:$0x1]
  %v3687 = vld [vmem:[%s578 + $0x1f] sm:$0x1]
  %v3688 = vld [vmem:[%s578 + $0x31] sm:$0x1]
  %v3689 = vld [vmem:[%s578 + $0x33] sm:$0x1]
  %v3690 = vld [vmem:[%s578 + $0x35] sm:$0x1]
  %v3691 = vld [vmem:[%s578 + $0x37] sm:$0x1]
  %v3692 = vld [vmem:[%s578 + $0x49] sm:$0x1]
  %v3693 = vld [vmem:[%s578 + $0x4b] sm:$0x1]
  %v3694 = vld [vmem:[%s578 + $0x4d] sm:$0x1]
  %v3695 = vld [vmem:[%s578 + $0x4f] sm:$0x1]
  %v3696 = vld [vmem:[%s578 + $0x91] sm:$0x1]
  %v3697 = vld [vmem:[%s578 + $0x93] sm:$0x1]
  %v3698 = vld [vmem:[%s578 + $0x95] sm:$0x1]
  %v3699 = vld [vmem:[%s578 + $0x97] sm:$0x1]
  %v3700 = vld [vmem:[%s578 + $0xa9] sm:$0x1]
  %v3701 = vld [vmem:[%s578 + $0xab] sm:$0x1]
  %v3702 = vld [vmem:[%s578 + $0xad] sm:$0x1]
  %v3703 = vld [vmem:[%s578 + $0xaf] sm:$0x1]
  %v3704 = vld [vmem:[%s578 + $0xc1] sm:$0x1]
  %v3705 = vld [vmem:[%s578 + $0xc3] sm:$0x1]
  %v3706 = vld [vmem:[%s578 + $0xc5] sm:$0x1]
  %v3707 = vld [vmem:[%s578 + $0xc7] sm:$0x1]
  %v3708 = vld [vmem:[%s578 + $0xd9] sm:$0x1]
  %v3709 = vld [vmem:[%s578 + $0xdb] sm:$0x1]
  %v3710 = vld [vmem:[%s578 + $0xdd] sm:$0x1]
  %v3711 = vld [vmem:[%s578 + $0xdf] sm:$0x1]
  %v3712 = vpack.c.bf16 %v3680, %v3680
  %v3713 = vpack.c.bf16 %v3681, %v3681
  %v3714 = vpack.c.bf16 %v3682, %v3682
  %v3715 = vpack.c.bf16 %v3683, %v3683
  %v3716 = vpack.c.bf16 %v3684, %v3684
  %v3717 = vpack.c.bf16 %v3685, %v3685
  %v3718 = vpack.c.bf16 %v3686, %v3686
  %v3719 = vpack.c.bf16 %v3687, %v3687
  %v3720 = vpack.c.bf16 %v3688, %v3688
  %v3721 = vpack.c.bf16 %v3689, %v3689
  %v3722 = vpack.c.bf16 %v3690, %v3690
  %v3723 = vpack.c.bf16 %v3691, %v3691
  %v3724 = vpack.c.bf16 %v3692, %v3692
  %v3725 = vpack.c.bf16 %v3693, %v3693
  %v3726 = vpack.c.bf16 %v3694, %v3694
  %v3727 = vpack.c.bf16 %v3695, %v3695
  %v3728 = vpack.c.bf16 %v3696, %v3696
  %v3729 = vpack.c.bf16 %v3697, %v3697
  %v3730 = vpack.c.bf16 %v3698, %v3698
  %v3731 = vpack.c.bf16 %v3699, %v3699
  %v3732 = vpack.c.bf16 %v3700, %v3700
  %v3733 = vpack.c.bf16 %v3701, %v3701
  %v3734 = vpack.c.bf16 %v3702, %v3702
  %v3735 = vpack.c.bf16 %v3703, %v3703
  %v3736 = vpack.c.bf16 %v3704, %v3704
  %v3737 = vpack.c.bf16 %v3705, %v3705
  %v3738 = vpack.c.bf16 %v3706, %v3706
  %v3739 = vpack.c.bf16 %v3707, %v3707
  %v3740 = vpack.c.bf16 %v3708, %v3708
  %v3741 = vpack.c.bf16 %v3709, %v3709
  %v3742 = vpack.c.bf16 %v3710, %v3710
  %v3743 = vpack.c.bf16 %v3711, %v3711
  %v3744 = vld [vmem:[%s2 + $0x140] sm:$0xf]
  %v3745 = vld [vmem:[%s2 + $0x144] sm:$0xf]
  %v3746 = vld [vmem:[%s2 + $0x148] sm:$0xf]
  %v3747 = vld [vmem:[%s2 + $0x14c] sm:$0xf]
  %v3748 = vld [vmem:[%s2 + $0x150] sm:$0xf]
  %v3749 = vld [vmem:[%s2 + $0x154] sm:$0xf]
  %v3750 = vld [vmem:[%s2 + $0x158] sm:$0xf]
  %v3751 = vld [vmem:[%s2 + $0x15c] sm:$0xf]
  %v3784 = vunpack.c.l.b16 %v3712
  %v3785 = vunpack.c.l.b16 %v3713
  %v3786 = vunpack.c.l.b16 %v3714
  %v3787 = vunpack.c.l.b16 %v3715
  %v3788 = vunpack.c.l.b16 %v3716
  %v3789 = vunpack.c.l.b16 %v3717
  %v3790 = vunpack.c.l.b16 %v3718
  %v3791 = vunpack.c.l.b16 %v3719
  %v3792 = vunpack.c.l.b16 %v3720
  %v3793 = vunpack.c.l.b16 %v3721
  %v3794 = vunpack.c.l.b16 %v3722
  %v3795 = vunpack.c.l.b16 %v3723
  %v3796 = vunpack.c.l.b16 %v3724
  %v3797 = vunpack.c.l.b16 %v3725
  %v3798 = vunpack.c.l.b16 %v3726
  %v3799 = vunpack.c.l.b16 %v3727
  %v3800 = vunpack.c.l.b16 %v3728
  %v3801 = vunpack.c.l.b16 %v3729
  %v3802 = vunpack.c.l.b16 %v3730
  %v3803 = vunpack.c.l.b16 %v3731
  %v3804 = vunpack.c.l.b16 %v3732
  %v3805 = vunpack.c.l.b16 %v3733
  %v3806 = vunpack.c.l.b16 %v3734
  %v3807 = vunpack.c.l.b16 %v3735
  %v3808 = vunpack.c.l.b16 %v3736
  %v3809 = vunpack.c.l.b16 %v3737
  %v3810 = vunpack.c.l.b16 %v3738
  %v3811 = vunpack.c.l.b16 %v3739
  %v3812 = vunpack.c.l.b16 %v3740
  %v3813 = vunpack.c.l.b16 %v3741
  %v3814 = vunpack.c.l.b16 %v3742
  %v3815 = vunpack.c.l.b16 %v3743
  %v3816 = vrot.slane %v3785, 7
  %v3817 = vsel %vm1116, %v3816, %v3784
  %v3818 = vrot.slane %v3786, 6
  %v3819 = vsel %vm1119, %v3818, %v3817
  %v3820 = vrot.slane %v3787, 5
  %v3821 = vsel %vm1122, %v3820, %v3819
  %v3822 = vrot.slane %v3788, 4
  %v3823 = vsel %vm1125, %v3822, %v3821
  %v3824 = vrot.slane %v3789, 3
  %v3825 = vsel %vm1128, %v3824, %v3823
  %v3826 = vrot.slane %v3790, 2
  %v3827 = vsel %vm1131, %v3826, %v3825
  %v3828 = vrot.slane %v3791, 1
  %v3829 = vsel %vm1134, %v3828, %v3827
  %v3830 = vrot.slane %v3793, 7
  %v3831 = vsel %vm1116, %v3830, %v3792
  %v3832 = vrot.slane %v3794, 6
  %v3833 = vsel %vm1119, %v3832, %v3831
  %v3834 = vrot.slane %v3795, 5
  %v3835 = vsel %vm1122, %v3834, %v3833
  %v3836 = vrot.slane %v3796, 4
  %v3837 = vsel %vm1125, %v3836, %v3835
  %v3838 = vrot.slane %v3797, 3
  %v3839 = vsel %vm1128, %v3838, %v3837
  %v3840 = vrot.slane %v3798, 2
  %v3841 = vsel %vm1131, %v3840, %v3839
  %v3842 = vrot.slane %v3799, 1
  %v3843 = vsel %vm1134, %v3842, %v3841
  %v3844 = vrot.slane %v3801, 7
  %v3845 = vsel %vm1116, %v3844, %v3800
  %v3846 = vrot.slane %v3802, 6
  %v3847 = vsel %vm1119, %v3846, %v3845
  %v3848 = vrot.slane %v3803, 5
  %v3849 = vsel %vm1122, %v3848, %v3847
  %v3850 = vrot.slane %v3804, 4
  %v3851 = vsel %vm1125, %v3850, %v3849
  %v3852 = vrot.slane %v3805, 3
  %v3853 = vsel %vm1128, %v3852, %v3851
  %v3854 = vrot.slane %v3806, 2
  %v3855 = vsel %vm1131, %v3854, %v3853
  %v3856 = vrot.slane %v3807, 1
  %v3857 = vsel %vm1134, %v3856, %v3855
  %v3858 = vrot.slane %v3809, 7
  %v3859 = vsel %vm1116, %v3858, %v3808
  %v3860 = vrot.slane %v3810, 6
  %v3861 = vsel %vm1119, %v3860, %v3859
  %v3862 = vrot.slane %v3811, 5
  %v3863 = vsel %vm1122, %v3862, %v3861
  %v3864 = vrot.slane %v3812, 4
  %v3865 = vsel %vm1125, %v3864, %v3863
  %v3866 = vrot.slane %v3813, 3
  %v3867 = vsel %vm1128, %v3866, %v3865
  %v3868 = vrot.slane %v3814, 2
  %v3869 = vsel %vm1131, %v3868, %v3867
  %v3870 = vrot.slane %v3815, 1
  %v3871 = vsel %vm1134, %v3870, %v3869
  %v3872 = vpack.c.b16 %v3843, %v3829
  %v3873 = vpack.c.b16 %v3871, %v3857
  %v3882 = vunpack.c.l.b16 %v3744
  %v3883 = vunpack.c.l.b16 %v3745
  %v3884 = vunpack.c.l.b16 %v3746
  %v3885 = vunpack.c.l.b16 %v3747
  %v3886 = vunpack.c.l.b16 %v3748
  %v3887 = vunpack.c.l.b16 %v3749
  %v3888 = vunpack.c.l.b16 %v3750
  %v3889 = vunpack.c.l.b16 %v3751
  %v3890 = vpack.c.b16 %v3883, %v3882
  %v3891 = vpack.c.b16 %v3885, %v3884
  %v3892 = vpack.c.b16 %v3887, %v3886
  %v3893 = vpack.c.b16 %v3889, %v3888
  %v3899 = vsel %vm327, %v3872, 0
  %v3902 = vsel %vm327, %v3873, 0
  %3904 = vmatprep.subr.bf16.mxu0 0
  %3905 = vmatpush1.bf16.msra.mxu0 %v3890
  %3906 = vmatprep.subr.bf16.mxu0 0
  %3907 = vmatpush1.bf16.msra.mxu0 %v3891
  %3908 = vmatprep.subr.bf16.mxu0 0
  %3909 = vmatpush1.bf16.msra.mxu0 %v3892
  %3910 = vmatprep.subr.bf16.mxu0 0
  %3911 = vmatpush1.bf16.msra.mxu0 %v3893
  %3912 = vmatprep.subr.bf16.mxu0 0
  %3913 = vmatpush1.bf16.msra.mxu0 0
  %3914 = vmatprep.subr.bf16.mxu0 0
  %3915 = vmatpush1.bf16.msra.mxu0 0
  %3916 = vmatprep.subr.bf16.mxu0 0
  %3917 = vmatpush1.bf16.msra.mxu0 0
  %3918 = vmatprep.subr.bf16.mxu0 0
  %3919 = vmatpush1.bf16.msra.mxu0 0
  %3920 = vmatprep.subr.bf16.mxu0 0
  %3921 = vmatpush1.bf16.msra.mxu0 0
  %3922 = vmatprep.subr.bf16.mxu0 0
  %3923 = vmatpush1.bf16.msra.mxu0 0
  %3924 = vmatprep.subr.bf16.mxu0 0
  %3925 = vmatpush1.bf16.msra.mxu0 0
  %3926 = vmatprep.subr.bf16.mxu0 0
  %3927 = vmatpush1.bf16.msra.mxu0 0
  %3928 = vmatprep.subr.bf16.mxu0 0
  %3929 = vmatpush1.bf16.msra.mxu0 0
  %3930 = vmatprep.subr.bf16.mxu0 0
  %3931 = vmatpush1.bf16.msra.mxu0 0
  %3932 = vmatprep.subr.bf16.mxu0 0
  %3933 = vmatpush1.bf16.msra.mxu0 0
  %3934 = vmatprep.subr.bf16.mxu0 0
  %3935 = vmatpush1.bf16.msra.mxu0 0
  %3936 = vmatprep.mubr.bf16.mxu0 0
  %3937 = vmatmul.mubr.bf16.gmra.mrb[0].mxu0 %v3899
  %v3938 = vpop.f32.mrb[0].mxu0
  %v3939 = vadd.f32 0.0, %v3938
  %v3940 = vpop.f32.mrb[0].mxu0
  %v3941 = vpop.f32.mrb[0].mxu0
  %v3942 = vadd.f32 0.0, %v3941
  %v3943 = vpop.f32.mrb[0].mxu0
  %3944 = vmatprep.mubr.bf16.mxu0 0
  %3945 = vmatmul.mubr.bf16.gmra.mrb[0].mxu0 %v3902
  %v3946 = vpop.f32.mrb[0].mxu0
  %v3947 = vadd.f32 0.0, %v3946
  %v3948 = vpop.f32.mrb[0].mxu0
  %v3949 = vpop.f32.mrb[0].mxu0
  %v3950 = vadd.f32 0.0, %v3949
  %v3951 = vpop.f32.mrb[0].mxu0
  %3952 = vdwg.mxu0
  %v3953 = vadd.f32 %v3676, %v3939
  %v3954 = vadd.f32 %v3677, %v3942
  %v3955 = vadd.f32 %v3678, %v3947
  %v3956 = vadd.f32 %v3679, %v3950
  %s3957 = scalar_lea.vmem [#allocation2], 40
  %v3958 = vld [vmem:[%s3957] sm:$0x1]
  %v3959 = vld [vmem:[%s3957 + $0x2] sm:$0x1]
  %v3960 = vld [vmem:[%s3957 + $0x4] sm:$0x1]
  %v3961 = vld [vmem:[%s3957 + $0x6] sm:$0x1]
  %v3962 = vld [vmem:[%s3957 + $0x18] sm:$0x1]
  %v3963 = vld [vmem:[%s3957 + $0x1a] sm:$0x1]
  %v3964 = vld [vmem:[%s3957 + $0x1c] sm:$0x1]
  %v3965 = vld [vmem:[%s3957 + $0x1e] sm:$0x1]
  %v3966 = vld [vmem:[%s3957 + $0x30] sm:$0x1]
  %v3967 = vld [vmem:[%s3957 + $0x32] sm:$0x1]
  %v3968 = vld [vmem:[%s3957 + $0x34] sm:$0x1]
  %v3969 = vld [vmem:[%s3957 + $0x36] sm:$0x1]
  %v3970 = vld [vmem:[%s3957 + $0x48] sm:$0x1]
  %v3971 = vld [vmem:[%s3957 + $0x4a] sm:$0x1]
  %v3972 = vld [vmem:[%s3957 + $0x4c] sm:$0x1]
  %v3973 = vld [vmem:[%s3957 + $0x4e] sm:$0x1]
  %v3974 = vld [vmem:[%s3957 + $0x90] sm:$0x1]
  %v3975 = vld [vmem:[%s3957 + $0x92] sm:$0x1]
  %v3976 = vld [vmem:[%s3957 + $0x94] sm:$0x1]
  %v3977 = vld [vmem:[%s3957 + $0x96] sm:$0x1]
  %v3978 = vld [vmem:[%s3957 + $0xa8] sm:$0x1]
  %v3979 = vld [vmem:[%s3957 + $0xaa] sm:$0x1]
  %v3980 = vld [vmem:[%s3957 + $0xac] sm:$0x1]
  %v3981 = vld [vmem:[%s3957 + $0xae] sm:$0x1]
  %v3982 = vld [vmem:[%s3957 + $0xc0] sm:$0x1]
  %v3983 = vld [vmem:[%s3957 + $0xc2] sm:$0x1]
  %v3984 = vld [vmem:[%s3957 + $0xc4] sm:$0x1]
  %v3985 = vld [vmem:[%s3957 + $0xc6] sm:$0x1]
  %v3986 = vld [vmem:[%s3957 + $0xd8] sm:$0x1]
  %v3987 = vld [vmem:[%s3957 + $0xda] sm:$0x1]
  %v3988 = vld [vmem:[%s3957 + $0xdc] sm:$0x1]
  %v3989 = vld [vmem:[%s3957 + $0xde] sm:$0x1]
  %v3990 = vpack.c.bf16 %v3958, %v3958
  %v3991 = vpack.c.bf16 %v3959, %v3959
  %v3992 = vpack.c.bf16 %v3960, %v3960
  %v3993 = vpack.c.bf16 %v3961, %v3961
  %v3994 = vpack.c.bf16 %v3962, %v3962
  %v3995 = vpack.c.bf16 %v3963, %v3963
  %v3996 = vpack.c.bf16 %v3964, %v3964
  %v3997 = vpack.c.bf16 %v3965, %v3965
  %v3998 = vpack.c.bf16 %v3966, %v3966
  %v3999 = vpack.c.bf16 %v3967, %v3967
  %v4000 = vpack.c.bf16 %v3968, %v3968
  %v4001 = vpack.c.bf16 %v3969, %v3969
  %v4002 = vpack.c.bf16 %v3970, %v3970
  %v4003 = vpack.c.bf16 %v3971, %v3971
  %v4004 = vpack.c.bf16 %v3972, %v3972
  %v4005 = vpack.c.bf16 %v3973, %v3973
  %v4006 = vpack.c.bf16 %v3974, %v3974
  %v4007 = vpack.c.bf16 %v3975, %v3975
  %v4008 = vpack.c.bf16 %v3976, %v3976
  %v4009 = vpack.c.bf16 %v3977, %v3977
  %v4010 = vpack.c.bf16 %v3978, %v3978
  %v4011 = vpack.c.bf16 %v3979, %v3979
  %v4012 = vpack.c.bf16 %v3980, %v3980
  %v4013 = vpack.c.bf16 %v3981, %v3981
  %v4014 = vpack.c.bf16 %v3982, %v3982
  %v4015 = vpack.c.bf16 %v3983, %v3983
  %v4016 = vpack.c.bf16 %v3984, %v3984
  %v4017 = vpack.c.bf16 %v3985, %v3985
  %v4018 = vpack.c.bf16 %v3986, %v3986
  %v4019 = vpack.c.bf16 %v3987, %v3987
  %v4020 = vpack.c.bf16 %v3988, %v3988
  %v4021 = vpack.c.bf16 %v3989, %v3989
  %v4022 = vld [vmem:[%s2 + $0x160] sm:$0xf]
  %v4023 = vld [vmem:[%s2 + $0x164] sm:$0xf]
  %v4024 = vld [vmem:[%s2 + $0x168] sm:$0xf]
  %v4025 = vld [vmem:[%s2 + $0x16c] sm:$0xf]
  %v4026 = vld [vmem:[%s2 + $0x170] sm:$0xf]
  %v4027 = vld [vmem:[%s2 + $0x174] sm:$0xf]
  %v4028 = vld [vmem:[%s2 + $0x178] sm:$0xf]
  %v4029 = vld [vmem:[%s2 + $0x17c] sm:$0xf]
  %v4062 = vunpack.c.l.b16 %v3990
  %v4063 = vunpack.c.l.b16 %v3991
  %v4064 = vunpack.c.l.b16 %v3992
  %v4065 = vunpack.c.l.b16 %v3993
  %v4066 = vunpack.c.l.b16 %v3994
  %v4067 = vunpack.c.l.b16 %v3995
  %v4068 = vunpack.c.l.b16 %v3996
  %v4069 = vunpack.c.l.b16 %v3997
  %v4070 = vunpack.c.l.b16 %v3998
  %v4071 = vunpack.c.l.b16 %v3999
  %v4072 = vunpack.c.l.b16 %v4000
  %v4073 = vunpack.c.l.b16 %v4001
  %v4074 = vunpack.c.l.b16 %v4002
  %v4075 = vunpack.c.l.b16 %v4003
  %v4076 = vunpack.c.l.b16 %v4004
  %v4077 = vunpack.c.l.b16 %v4005
  %v4078 = vunpack.c.l.b16 %v4006
  %v4079 = vunpack.c.l.b16 %v4007
  %v4080 = vunpack.c.l.b16 %v4008
  %v4081 = vunpack.c.l.b16 %v4009
  %v4082 = vunpack.c.l.b16 %v4010
  %v4083 = vunpack.c.l.b16 %v4011
  %v4084 = vunpack.c.l.b16 %v4012
  %v4085 = vunpack.c.l.b16 %v4013
  %v4086 = vunpack.c.l.b16 %v4014
  %v4087 = vunpack.c.l.b16 %v4015
  %v4088 = vunpack.c.l.b16 %v4016
  %v4089 = vunpack.c.l.b16 %v4017
  %v4090 = vunpack.c.l.b16 %v4018
  %v4091 = vunpack.c.l.b16 %v4019
  %v4092 = vunpack.c.l.b16 %v4020
  %v4093 = vunpack.c.l.b16 %v4021
  %v4094 = vrot.slane %v4063, 7
  %v4095 = vsel %vm1116, %v4094, %v4062
  %v4096 = vrot.slane %v4064, 6
  %v4097 = vsel %vm1119, %v4096, %v4095
  %v4098 = vrot.slane %v4065, 5
  %v4099 = vsel %vm1122, %v4098, %v4097
  %v4100 = vrot.slane %v4066, 4
  %v4101 = vsel %vm1125, %v4100, %v4099
  %v4102 = vrot.slane %v4067, 3
  %v4103 = vsel %vm1128, %v4102, %v4101
  %v4104 = vrot.slane %v4068, 2
  %v4105 = vsel %vm1131, %v4104, %v4103
  %v4106 = vrot.slane %v4069, 1
  %v4107 = vsel %vm1134, %v4106, %v4105
  %v4108 = vrot.slane %v4071, 7
  %v4109 = vsel %vm1116, %v4108, %v4070
  %v4110 = vrot.slane %v4072, 6
  %v4111 = vsel %vm1119, %v4110, %v4109
  %v4112 = vrot.slane %v4073, 5
  %v4113 = vsel %vm1122, %v4112, %v4111
  %v4114 = vrot.slane %v4074, 4
  %v4115 = vsel %vm1125, %v4114, %v4113
  %v4116 = vrot.slane %v4075, 3
  %v4117 = vsel %vm1128, %v4116, %v4115
  %v4118 = vrot.slane %v4076, 2
  %v4119 = vsel %vm1131, %v4118, %v4117
  %v4120 = vrot.slane %v4077, 1
  %v4121 = vsel %vm1134, %v4120, %v4119
  %v4122 = vrot.slane %v4079, 7
  %v4123 = vsel %vm1116, %v4122, %v4078
  %v4124 = vrot.slane %v4080, 6
  %v4125 = vsel %vm1119, %v4124, %v4123
  %v4126 = vrot.slane %v4081, 5
  %v4127 = vsel %vm1122, %v4126, %v4125
  %v4128 = vrot.slane %v4082, 4
  %v4129 = vsel %vm1125, %v4128, %v4127
  %v4130 = vrot.slane %v4083, 3
  %v4131 = vsel %vm1128, %v4130, %v4129
  %v4132 = vrot.slane %v4084, 2
  %v4133 = vsel %vm1131, %v4132, %v4131
  %v4134 = vrot.slane %v4085, 1
  %v4135 = vsel %vm1134, %v4134, %v4133
  %v4136 = vrot.slane %v4087, 7
  %v4137 = vsel %vm1116, %v4136, %v4086
  %v4138 = vrot.slane %v4088, 6
  %v4139 = vsel %vm1119, %v4138, %v4137
  %v4140 = vrot.slane %v4089, 5
  %v4141 = vsel %vm1122, %v4140, %v4139
  %v4142 = vrot.slane %v4090, 4
  %v4143 = vsel %vm1125, %v4142, %v4141
  %v4144 = vrot.slane %v4091, 3
  %v4145 = vsel %vm1128, %v4144, %v4143
  %v4146 = vrot.slane %v4092, 2
  %v4147 = vsel %vm1131, %v4146, %v4145
  %v4148 = vrot.slane %v4093, 1
  %v4149 = vsel %vm1134, %v4148, %v4147
  %v4150 = vpack.c.b16 %v4121, %v4107
  %v4151 = vpack.c.b16 %v4149, %v4135
  %v4160 = vunpack.c.l.b16 %v4022
  %v4161 = vunpack.c.l.b16 %v4023
  %v4162 = vunpack.c.l.b16 %v4024
  %v4163 = vunpack.c.l.b16 %v4025
  %v4164 = vunpack.c.l.b16 %v4026
  %v4165 = vunpack.c.l.b16 %v4027
  %v4166 = vunpack.c.l.b16 %v4028
  %v4167 = vunpack.c.l.b16 %v4029
  %v4168 = vpack.c.b16 %v4161, %v4160
  %v4169 = vpack.c.b16 %v4163, %v4162
  %v4170 = vpack.c.b16 %v4165, %v4164
  %v4171 = vpack.c.b16 %v4167, %v4166
  %v4177 = vsel %vm327, %v4150, 0
  %v4180 = vsel %vm327, %v4151, 0
  %4182 = vmatprep.subr.bf16.mxu0 0
  %4183 = vmatpush1.bf16.msra.mxu0 %v4168
  %4184 = vmatprep.subr.bf16.mxu0 0
  %4185 = vmatpush1.bf16.msra.mxu0 %v4169
  %4186 = vmatprep.subr.bf16.mxu0 0
  %4187 = vmatpush1.bf16.msra.mxu0 %v4170
  %4188 = vmatprep.subr.bf16.mxu0 0
  %4189 = vmatpush1.bf16.msra.mxu0 %v4171
  %4190 = vmatprep.subr.bf16.mxu0 0
  %4191 = vmatpush1.bf16.msra.mxu0 0
  %4192 = vmatprep.subr.bf16.mxu0 0
  %4193 = vmatpush1.bf16.msra.mxu0 0
  %4194 = vmatprep.subr.bf16.mxu0 0
  %4195 = vmatpush1.bf16.msra.mxu0 0
  %4196 = vmatprep.subr.bf16.mxu0 0
  %4197 = vmatpush1.bf16.msra.mxu0 0
  %4198 = vmatprep.subr.bf16.mxu0 0
  %4199 = vmatpush1.bf16.msra.mxu0 0
  %4200 = vmatprep.subr.bf16.mxu0 0
  %4201 = vmatpush1.bf16.msra.mxu0 0
  %4202 = vmatprep.subr.bf16.mxu0 0
  %4203 = vmatpush1.bf16.msra.mxu0 0
  %4204 = vmatprep.subr.bf16.mxu0 0
  %4205 = vmatpush1.bf16.msra.mxu0 0
  %4206 = vmatprep.subr.bf16.mxu0 0
  %4207 = vmatpush1.bf16.msra.mxu0 0
  %4208 = vmatprep.subr.bf16.mxu0 0
  %4209 = vmatpush1.bf16.msra.mxu0 0
  %4210 = vmatprep.subr.bf16.mxu0 0
  %4211 = vmatpush1.bf16.msra.mxu0 0
  %4212 = vmatprep.subr.bf16.mxu0 0
  %4213 = vmatpush1.bf16.msra.mxu0 0
  %4214 = vmatprep.mubr.bf16.mxu0 0
  %4215 = vmatmul.mubr.bf16.gmra.mrb[0].mxu0 %v4177
  %v4216 = vpop.f32.mrb[0].mxu0
  %v4217 = vadd.f32 0.0, %v4216
  %v4218 = vpop.f32.mrb[0].mxu0
  %v4219 = vpop.f32.mrb[0].mxu0
  %v4220 = vadd.f32 0.0, %v4219
  %v4221 = vpop.f32.mrb[0].mxu0
  %4222 = vmatprep.mubr.bf16.mxu0 0
  %4223 = vmatmul.mubr.bf16.gmra.mrb[0].mxu0 %v4180
  %v4224 = vpop.f32.mrb[0].mxu0
  %v4225 = vadd.f32 0.0, %v4224
  %v4226 = vpop.f32.mrb[0].mxu0
  %v4227 = vpop.f32.mrb[0].mxu0
  %v4228 = vadd.f32 0.0, %v4227
  %v4229 = vpop.f32.mrb[0].mxu0
  %4230 = vdwg.mxu0
  %v4231 = vadd.f32 %v3953, %v4217
  %v4232 = vadd.f32 %v3954, %v4220
  %v4233 = vadd.f32 %v3955, %v4225
  %v4234 = vadd.f32 %v3956, %v4228
  %s4235 = scalar_lea.vmem [#allocation2], 48
  %v4236 = vld [vmem:[%s4235 + $0x1] sm:$0x1]
  %v4237 = vld [vmem:[%s4235 + $0x3] sm:$0x1]
  %v4238 = vld [vmem:[%s4235 + $0x5] sm:$0x1]
  %v4239 = vld [vmem:[%s4235 + $0x7] sm:$0x1]
  %v4240 = vld [vmem:[%s4235 + $0x19] sm:$0x1]
  %v4241 = vld [vmem:[%s4235 + $0x1b] sm:$0x1]
  %v4242 = vld [vmem:[%s4235 + $0x1d] sm:$0x1]
  %v4243 = vld [vmem:[%s4235 + $0x1f] sm:$0x1]
  %v4244 = vld [vmem:[%s4235 + $0x31] sm:$0x1]
  %v4245 = vld [vmem:[%s4235 + $0x33] sm:$0x1]
  %v4246 = vld [vmem:[%s4235 + $0x35] sm:$0x1]
  %v4247 = vld [vmem:[%s4235 + $0x37] sm:$0x1]
  %v4248 = vld [vmem:[%s4235 + $0x49] sm:$0x1]
  %v4249 = vld [vmem:[%s4235 + $0x4b] sm:$0x1]
  %v4250 = vld [vmem:[%s4235 + $0x4d] sm:$0x1]
  %v4251 = vld [vmem:[%s4235 + $0x4f] sm:$0x1]
  %v4252 = vld [vmem:[%s4235 + $0x91] sm:$0x1]
  %v4253 = vld [vmem:[%s4235 + $0x93] sm:$0x1]
  %v4254 = vld [vmem:[%s4235 + $0x95] sm:$0x1]
  %v4255 = vld [vmem:[%s4235 + $0x97] sm:$0x1]
  %v4256 = vld [vmem:[%s4235 + $0xa9] sm:$0x1]
  %v4257 = vld [vmem:[%s4235 + $0xab] sm:$0x1]
  %v4258 = vld [vmem:[%s4235 + $0xad] sm:$0x1]
  %v4259 = vld [vmem:[%s4235 + $0xaf] sm:$0x1]
  %v4260 = vld [vmem:[%s4235 + $0xc1] sm:$0x1]
  %v4261 = vld [vmem:[%s4235 + $0xc3] sm:$0x1]
  %v4262 = vld [vmem:[%s4235 + $0xc5] sm:$0x1]
  %v4263 = vld [vmem:[%s4235 + $0xc7] sm:$0x1]
  %v4264 = vld [vmem:[%s4235 + $0xd9] sm:$0x1]
  %v4265 = vld [vmem:[%s4235 + $0xdb] sm:$0x1]
  %v4266 = vld [vmem:[%s4235 + $0xdd] sm:$0x1]
  %v4267 = vld [vmem:[%s4235 + $0xdf] sm:$0x1]
  %v4268 = vpack.c.bf16 %v4236, %v4236
  %v4269 = vpack.c.bf16 %v4237, %v4237
  %v4270 = vpack.c.bf16 %v4238, %v4238
  %v4271 = vpack.c.bf16 %v4239, %v4239
  %v4272 = vpack.c.bf16 %v4240, %v4240
  %v4273 = vpack.c.bf16 %v4241, %v4241
  %v4274 = vpack.c.bf16 %v4242, %v4242
  %v4275 = vpack.c.bf16 %v4243, %v4243
  %v4276 = vpack.c.bf16 %v4244, %v4244
  %v4277 = vpack.c.bf16 %v4245, %v4245
  %v4278 = vpack.c.bf16 %v4246, %v4246
  %v4279 = vpack.c.bf16 %v4247, %v4247
  %v4280 = vpack.c.bf16 %v4248, %v4248
  %v4281 = vpack.c.bf16 %v4249, %v4249
  %v4282 = vpack.c.bf16 %v4250, %v4250
  %v4283 = vpack.c.bf16 %v4251, %v4251
  %v4284 = vpack.c.bf16 %v4252, %v4252
  %v4285 = vpack.c.bf16 %v4253, %v4253
  %v4286 = vpack.c.bf16 %v4254, %v4254
  %v4287 = vpack.c.bf16 %v4255, %v4255
  %v4288 = vpack.c.bf16 %v4256, %v4256
  %v4289 = vpack.c.bf16 %v4257, %v4257
  %v4290 = vpack.c.bf16 %v4258, %v4258
  %v4291 = vpack.c.bf16 %v4259, %v4259
  %v4292 = vpack.c.bf16 %v4260, %v4260
  %v4293 = vpack.c.bf16 %v4261, %v4261
  %v4294 = vpack.c.bf16 %v4262, %v4262
  %v4295 = vpack.c.bf16 %v4263, %v4263
  %v4296 = vpack.c.bf16 %v4264, %v4264
  %v4297 = vpack.c.bf16 %v4265, %v4265
  %v4298 = vpack.c.bf16 %v4266, %v4266
  %v4299 = vpack.c.bf16 %v4267, %v4267
  %v4300 = vld [vmem:[%s2 + $0x180] sm:$0xf]
  %v4301 = vld [vmem:[%s2 + $0x184] sm:$0xf]
  %v4302 = vld [vmem:[%s2 + $0x188] sm:$0xf]
  %v4303 = vld [vmem:[%s2 + $0x18c] sm:$0xf]
  %v4304 = vld [vmem:[%s2 + $0x190] sm:$0xf]
  %v4305 = vld [vmem:[%s2 + $0x194] sm:$0xf]
  %v4306 = vld [vmem:[%s2 + $0x198] sm:$0xf]
  %v4307 = vld [vmem:[%s2 + $0x19c] sm:$0xf]
  %v4340 = vunpack.c.l.b16 %v4268
  %v4341 = vunpack.c.l.b16 %v4269
  %v4342 = vunpack.c.l.b16 %v4270
  %v4343 = vunpack.c.l.b16 %v4271
  %v4344 = vunpack.c.l.b16 %v4272
  %v4345 = vunpack.c.l.b16 %v4273
  %v4346 = vunpack.c.l.b16 %v4274
  %v4347 = vunpack.c.l.b16 %v4275
  %v4348 = vunpack.c.l.b16 %v4276
  %v4349 = vunpack.c.l.b16 %v4277
  %v4350 = vunpack.c.l.b16 %v4278
  %v4351 = vunpack.c.l.b16 %v4279
  %v4352 = vunpack.c.l.b16 %v4280
  %v4353 = vunpack.c.l.b16 %v4281
  %v4354 = vunpack.c.l.b16 %v4282
  %v4355 = vunpack.c.l.b16 %v4283
  %v4356 = vunpack.c.l.b16 %v4284
  %v4357 = vunpack.c.l.b16 %v4285
  %v4358 = vunpack.c.l.b16 %v4286
  %v4359 = vunpack.c.l.b16 %v4287
  %v4360 = vunpack.c.l.b16 %v4288
  %v4361 = vunpack.c.l.b16 %v4289
  %v4362 = vunpack.c.l.b16 %v4290
  %v4363 = vunpack.c.l.b16 %v4291
  %v4364 = vunpack.c.l.b16 %v4292
  %v4365 = vunpack.c.l.b16 %v4293
  %v4366 = vunpack.c.l.b16 %v4294
  %v4367 = vunpack.c.l.b16 %v4295
  %v4368 = vunpack.c.l.b16 %v4296
  %v4369 = vunpack.c.l.b16 %v4297
  %v4370 = vunpack.c.l.b16 %v4298
  %v4371 = vunpack.c.l.b16 %v4299
  %v4372 = vrot.slane %v4341, 7
  %v4373 = vsel %vm1116, %v4372, %v4340
  %v4374 = vrot.slane %v4342, 6
  %v4375 = vsel %vm1119, %v4374, %v4373
  %v4376 = vrot.slane %v4343, 5
  %v4377 = vsel %vm1122, %v4376, %v4375
  %v4378 = vrot.slane %v4344, 4
  %v4379 = vsel %vm1125, %v4378, %v4377
  %v4380 = vrot.slane %v4345, 3
  %v4381 = vsel %vm1128, %v4380, %v4379
  %v4382 = vrot.slane %v4346, 2
  %v4383 = vsel %vm1131, %v4382, %v4381
  %v4384 = vrot.slane %v4347, 1
  %v4385 = vsel %vm1134, %v4384, %v4383
  %v4386 = vrot.slane %v4349, 7
  %v4387 = vsel %vm1116, %v4386, %v4348
  %v4388 = vrot.slane %v4350, 6
  %v4389 = vsel %vm1119, %v4388, %v4387
  %v4390 = vrot.slane %v4351, 5
  %v4391 = vsel %vm1122, %v4390, %v4389
  %v4392 = vrot.slane %v4352, 4
  %v4393 = vsel %vm1125, %v4392, %v4391
  %v4394 = vrot.slane %v4353, 3
  %v4395 = vsel %vm1128, %v4394, %v4393
  %v4396 = vrot.slane %v4354, 2
  %v4397 = vsel %vm1131, %v4396, %v4395
  %v4398 = vrot.slane %v4355, 1
  %v4399 = vsel %vm1134, %v4398, %v4397
  %v4400 = vrot.slane %v4357, 7
  %v4401 = vsel %vm1116, %v4400, %v4356
  %v4402 = vrot.slane %v4358, 6
  %v4403 = vsel %vm1119, %v4402, %v4401
  %v4404 = vrot.slane %v4359, 5
  %v4405 = vsel %vm1122, %v4404, %v4403
  %v4406 = vrot.slane %v4360, 4
  %v4407 = vsel %vm1125, %v4406, %v4405
  %v4408 = vrot.slane %v4361, 3
  %v4409 = vsel %vm1128, %v4408, %v4407
  %v4410 = vrot.slane %v4362, 2
  %v4411 = vsel %vm1131, %v4410, %v4409
  %v4412 = vrot.slane %v4363, 1
  %v4413 = vsel %vm1134, %v4412, %v4411
  %v4414 = vrot.slane %v4365, 7
  %v4415 = vsel %vm1116, %v4414, %v4364
  %v4416 = vrot.slane %v4366, 6
  %v4417 = vsel %vm1119, %v4416, %v4415
  %v4418 = vrot.slane %v4367, 5
  %v4419 = vsel %vm1122, %v4418, %v4417
  %v4420 = vrot.slane %v4368, 4
  %v4421 = vsel %vm1125, %v4420, %v4419
  %v4422 = vrot.slane %v4369, 3
  %v4423 = vsel %vm1128, %v4422, %v4421
  %v4424 = vrot.slane %v4370, 2
  %v4425 = vsel %vm1131, %v4424, %v4423
  %v4426 = vrot.slane %v4371, 1
  %v4427 = vsel %vm1134, %v4426, %v4425
  %v4428 = vpack.c.b16 %v4399, %v4385
  %v4429 = vpack.c.b16 %v4427, %v4413
  %v4438 = vunpack.c.l.b16 %v4300
  %v4439 = vunpack.c.l.b16 %v4301
  %v4440 = vunpack.c.l.b16 %v4302
  %v4441 = vunpack.c.l.b16 %v4303
  %v4442 = vunpack.c.l.b16 %v4304
  %v4443 = vunpack.c.l.b16 %v4305
  %v4444 = vunpack.c.l.b16 %v4306
  %v4445 = vunpack.c.l.b16 %v4307
  %v4446 = vpack.c.b16 %v4439, %v4438
  %v4447 = vpack.c.b16 %v4441, %v4440
  %v4448 = vpack.c.b16 %v4443, %v4442
  %v4449 = vpack.c.b16 %v4445, %v4444
  %v4455 = vsel %vm327, %v4428, 0
  %v4458 = vsel %vm327, %v4429, 0
  %4460 = vmatprep.subr.bf16.mxu0 0
  %4461 = vmatpush1.bf16.msra.mxu0 %v4446
  %4462 = vmatprep.subr.bf16.mxu0 0
  %4463 = vmatpush1.bf16.msra.mxu0 %v4447
  %4464 = vmatprep.subr.bf16.mxu0 0
  %4465 = vmatpush1.bf16.msra.mxu0 %v4448
  %4466 = vmatprep.subr.bf16.mxu0 0
  %4467 = vmatpush1.bf16.msra.mxu0 %v4449
  %4468 = vmatprep.subr.bf16.mxu0 0
  %4469 = vmatpush1.bf16.msra.mxu0 0
  %4470 = vmatprep.subr.bf16.mxu0 0
  %4471 = vmatpush1.bf16.msra.mxu0 0
  %4472 = vmatprep.subr.bf16.mxu0 0
  %4473 = vmatpush1.bf16.msra.mxu0 0
  %4474 = vmatprep.subr.bf16.mxu0 0
  %4475 = vmatpush1.bf16.msra.mxu0 0
  %4476 = vmatprep.subr.bf16.mxu0 0
  %4477 = vmatpush1.bf16.msra.mxu0 0
  %4478 = vmatprep.subr.bf16.mxu0 0
  %4479 = vmatpush1.bf16.msra.mxu0 0
  %4480 = vmatprep.subr.bf16.mxu0 0
  %4481 = vmatpush1.bf16.msra.mxu0 0
  %4482 = vmatprep.subr.bf16.mxu0 0
  %4483 = vmatpush1.bf16.msra.mxu0 0
  %4484 = vmatprep.subr.bf16.mxu0 0
  %4485 = vmatpush1.bf16.msra.mxu0 0
  %4486 = vmatprep.subr.bf16.mxu0 0
  %4487 = vmatpush1.bf16.msra.mxu0 0
  %4488 = vmatprep.subr.bf16.mxu0 0
  %4489 = vmatpush1.bf16.msra.mxu0 0
  %4490 = vmatprep.subr.bf16.mxu0 0
  %4491 = vmatpush1.bf16.msra.mxu0 0
  %4492 = vmatprep.mubr.bf16.mxu0 0
  %4493 = vmatmul.mubr.bf16.gmra.mrb[0].mxu0 %v4455
  %v4494 = vpop.f32.mrb[0].mxu0
  %v4495 = vadd.f32 0.0, %v4494
  %v4496 = vpop.f32.mrb[0].mxu0
  %v4497 = vpop.f32.mrb[0].mxu0
  %v4498 = vadd.f32 0.0, %v4497
  %v4499 = vpop.f32.mrb[0].mxu0
  %4500 = vmatprep.mubr.bf16.mxu0 0
  %4501 = vmatmul.mubr.bf16.gmra.mrb[0].mxu0 %v4458
  %v4502 = vpop.f32.mrb[0].mxu0
  %v4503 = vadd.f32 0.0, %v4502
  %v4504 = vpop.f32.mrb[0].mxu0
  %v4505 = vpop.f32.mrb[0].mxu0
  %v4506 = vadd.f32 0.0, %v4505
  %v4507 = vpop.f32.mrb[0].mxu0
  %4508 = vdwg.mxu0
  %v4509 = vadd.f32 %v4231, %v4495
  %v4510 = vadd.f32 %v4232, %v4498
  %v4511 = vadd.f32 %v4233, %v4503
  %v4512 = vadd.f32 %v4234, %v4506
  %v4513 = vld [vmem:[%s631] sm:$0x1]
  %v4514 = vld [vmem:[%s631 + $0x2] sm:$0x1]
  %v4515 = vld [vmem:[%s631 + $0x4] sm:$0x1]
  %v4516 = vld [vmem:[%s631 + $0x6] sm:$0x1]
  %v4517 = vld [vmem:[%s631 + $0x18] sm:$0x1]
  %v4518 = vld [vmem:[%s631 + $0x1a] sm:$0x1]
  %v4519 = vld [vmem:[%s631 + $0x1c] sm:$0x1]
  %v4520 = vld [vmem:[%s631 + $0x1e] sm:$0x1]
  %v4521 = vld [vmem:[%s631 + $0x30] sm:$0x1]
  %v4522 = vld [vmem:[%s631 + $0x32] sm:$0x1]
  %v4523 = vld [vmem:[%s631 + $0x34] sm:$0x1]
  %v4524 = vld [vmem:[%s631 + $0x36] sm:$0x1]
  %v4525 = vld [vmem:[%s631 + $0x48] sm:$0x1]
  %v4526 = vld [vmem:[%s631 + $0x4a] sm:$0x1]
  %v4527 = vld [vmem:[%s631 + $0x4c] sm:$0x1]
  %v4528 = vld [vmem:[%s631 + $0x4e] sm:$0x1]
  %v4529 = vld [vmem:[%s631 + $0x90] sm:$0x1]
  %v4530 = vld [vmem:[%s631 + $0x92] sm:$0x1]
  %v4531 = vld [vmem:[%s631 + $0x94] sm:$0x1]
  %v4532 = vld [vmem:[%s631 + $0x96] sm:$0x1]
  %v4533 = vld [vmem:[%s631 + $0xa8] sm:$0x1]
  %v4534 = vld [vmem:[%s631 + $0xaa] sm:$0x1]
  %v4535 = vld [vmem:[%s631 + $0xac] sm:$0x1]
  %v4536 = vld [vmem:[%s631 + $0xae] sm:$0x1]
  %v4537 = vld [vmem:[%s631 + $0xc0] sm:$0x1]
  %v4538 = vld [vmem:[%s631 + $0xc2] sm:$0x1]
  %v4539 = vld [vmem:[%s631 + $0xc4] sm:$0x1]
  %v4540 = vld [vmem:[%s631 + $0xc6] sm:$0x1]
  %v4541 = vld [vmem:[%s631 + $0xd8] sm:$0x1]
  %v4542 = vld [vmem:[%s631 + $0xda] sm:$0x1]
  %v4543 = vld [vmem:[%s631 + $0xdc] sm:$0x1]
  %v4544 = vld [vmem:[%s631 + $0xde] sm:$0x1]
  %v4545 = vpack.c.bf16 %v4513, %v4513
  %v4546 = vpack.c.bf16 %v4514, %v4514
  %v4547 = vpack.c.bf16 %v4515, %v4515
  %v4548 = vpack.c.bf16 %v4516, %v4516
  %v4549 = vpack.c.bf16 %v4517, %v4517
  %v4550 = vpack.c.bf16 %v4518, %v4518
  %v4551 = vpack.c.bf16 %v4519, %v4519
  %v4552 = vpack.c.bf16 %v4520, %v4520
  %v4553 = vpack.c.bf16 %v4521, %v4521
  %v4554 = vpack.c.bf16 %v4522, %v4522
  %v4555 = vpack.c.bf16 %v4523, %v4523
  %v4556 = vpack.c.bf16 %v4524, %v4524
  %v4557 = vpack.c.bf16 %v4525, %v4525
  %v4558 = vpack.c.bf16 %v4526, %v4526
  %v4559 = vpack.c.bf16 %v4527, %v4527
  %v4560 = vpack.c.bf16 %v4528, %v4528
  %v4561 = vpack.c.bf16 %v4529, %v4529
  %v4562 = vpack.c.bf16 %v4530, %v4530
  %v4563 = vpack.c.bf16 %v4531, %v4531
  %v4564 = vpack.c.bf16 %v4532, %v4532
  %v4565 = vpack.c.bf16 %v4533, %v4533
  %v4566 = vpack.c.bf16 %v4534, %v4534
  %v4567 = vpack.c.bf16 %v4535, %v4535
  %v4568 = vpack.c.bf16 %v4536, %v4536
  %v4569 = vpack.c.bf16 %v4537, %v4537
  %v4570 = vpack.c.bf16 %v4538, %v4538
  %v4571 = vpack.c.bf16 %v4539, %v4539
  %v4572 = vpack.c.bf16 %v4540, %v4540
  %v4573 = vpack.c.bf16 %v4541, %v4541
  %v4574 = vpack.c.bf16 %v4542, %v4542
  %v4575 = vpack.c.bf16 %v4543, %v4543
  %v4576 = vpack.c.bf16 %v4544, %v4544
  %v4577 = vld [vmem:[%s2 + $0x1a0] sm:$0xf]
  %v4578 = vld [vmem:[%s2 + $0x1a4] sm:$0xf]
  %v4579 = vld [vmem:[%s2 + $0x1a8] sm:$0xf]
  %v4580 = vld [vmem:[%s2 + $0x1ac] sm:$0xf]
  %v4581 = vld [vmem:[%s2 + $0x1b0] sm:$0xf]
  %v4582 = vld [vmem:[%s2 + $0x1b4] sm:$0xf]
  %v4583 = vld [vmem:[%s2 + $0x1b8] sm:$0xf]
  %v4584 = vld [vmem:[%s2 + $0x1bc] sm:$0xf]
  %v4617 = vunpack.c.l.b16 %v4545
  %v4618 = vunpack.c.l.b16 %v4546
  %v4619 = vunpack.c.l.b16 %v4547
  %v4620 = vunpack.c.l.b16 %v4548
  %v4621 = vunpack.c.l.b16 %v4549
  %v4622 = vunpack.c.l.b16 %v4550
  %v4623 = vunpack.c.l.b16 %v4551
  %v4624 = vunpack.c.l.b16 %v4552
  %v4625 = vunpack.c.l.b16 %v4553
  %v4626 = vunpack.c.l.b16 %v4554
  %v4627 = vunpack.c.l.b16 %v4555
  %v4628 = vunpack.c.l.b16 %v4556
  %v4629 = vunpack.c.l.b16 %v4557
  %v4630 = vunpack.c.l.b16 %v4558
  %v4631 = vunpack.c.l.b16 %v4559
  %v4632 = vunpack.c.l.b16 %v4560
  %v4633 = vunpack.c.l.b16 %v4561
  %v4634 = vunpack.c.l.b16 %v4562
  %v4635 = vunpack.c.l.b16 %v4563
  %v4636 = vunpack.c.l.b16 %v4564
  %v4637 = vunpack.c.l.b16 %v4565
  %v4638 = vunpack.c.l.b16 %v4566
  %v4639 = vunpack.c.l.b16 %v4567
  %v4640 = vunpack.c.l.b16 %v4568
  %v4641 = vunpack.c.l.b16 %v4569
  %v4642 = vunpack.c.l.b16 %v4570
  %v4643 = vunpack.c.l.b16 %v4571
  %v4644 = vunpack.c.l.b16 %v4572
  %v4645 = vunpack.c.l.b16 %v4573
  %v4646 = vunpack.c.l.b16 %v4574
  %v4647 = vunpack.c.l.b16 %v4575
  %v4648 = vunpack.c.l.b16 %v4576
  %v4649 = vrot.slane %v4618, 7
  %v4650 = vsel %vm1116, %v4649, %v4617
  %v4651 = vrot.slane %v4619, 6
  %v4652 = vsel %vm1119, %v4651, %v4650
  %v4653 = vrot.slane %v4620, 5
  %v4654 = vsel %vm1122, %v4653, %v4652
  %v4655 = vrot.slane %v4621, 4
  %v4656 = vsel %vm1125, %v4655, %v4654
  %v4657 = vrot.slane %v4622, 3
  %v4658 = vsel %vm1128, %v4657, %v4656
  %v4659 = vrot.slane %v4623, 2
  %v4660 = vsel %vm1131, %v4659, %v4658
  %v4661 = vrot.slane %v4624, 1
  %v4662 = vsel %vm1134, %v4661, %v4660
  %v4663 = vrot.slane %v4626, 7
  %v4664 = vsel %vm1116, %v4663, %v4625
  %v4665 = vrot.slane %v4627, 6
  %v4666 = vsel %vm1119, %v4665, %v4664
  %v4667 = vrot.slane %v4628, 5
  %v4668 = vsel %vm1122, %v4667, %v4666
  %v4669 = vrot.slane %v4629, 4
  %v4670 = vsel %vm1125, %v4669, %v4668
  %v4671 = vrot.slane %v4630, 3
  %v4672 = vsel %vm1128, %v4671, %v4670
  %v4673 = vrot.slane %v4631, 2
  %v4674 = vsel %vm1131, %v4673, %v4672
  %v4675 = vrot.slane %v4632, 1
  %v4676 = vsel %vm1134, %v4675, %v4674
  %v4677 = vrot.slane %v4634, 7
  %v4678 = vsel %vm1116, %v4677, %v4633
  %v4679 = vrot.slane %v4635, 6
  %v4680 = vsel %vm1119, %v4679, %v4678
  %v4681 = vrot.slane %v4636, 5
  %v4682 = vsel %vm1122, %v4681, %v4680
  %v4683 = vrot.slane %v4637, 4
  %v4684 = vsel %vm1125, %v4683, %v4682
  %v4685 = vrot.slane %v4638, 3
  %v4686 = vsel %vm1128, %v4685, %v4684
  %v4687 = vrot.slane %v4639, 2
  %v4688 = vsel %vm1131, %v4687, %v4686
  %v4689 = vrot.slane %v4640, 1
  %v4690 = vsel %vm1134, %v4689, %v4688
  %v4691 = vrot.slane %v4642, 7
  %v4692 = vsel %vm1116, %v4691, %v4641
  %v4693 = vrot.slane %v4643, 6
  %v4694 = vsel %vm1119, %v4693, %v4692
  %v4695 = vrot.slane %v4644, 5
  %v4696 = vsel %vm1122, %v4695, %v4694
  %v4697 = vrot.slane %v4645, 4
  %v4698 = vsel %vm1125, %v4697, %v4696
  %v4699 = vrot.slane %v4646, 3
  %v4700 = vsel %vm1128, %v4699, %v4698
  %v4701 = vrot.slane %v4647, 2
  %v4702 = vsel %vm1131, %v4701, %v4700
  %v4703 = vrot.slane %v4648, 1
  %v4704 = vsel %vm1134, %v4703, %v4702
  %v4705 = vpack.c.b16 %v4676, %v4662
  %v4706 = vpack.c.b16 %v4704, %v4690
  %v4715 = vunpack.c.l.b16 %v4577
  %v4716 = vunpack.c.l.b16 %v4578
  %v4717 = vunpack.c.l.b16 %v4579
  %v4718 = vunpack.c.l.b16 %v4580
  %v4719 = vunpack.c.l.b16 %v4581
  %v4720 = vunpack.c.l.b16 %v4582
  %v4721 = vunpack.c.l.b16 %v4583
  %v4722 = vunpack.c.l.b16 %v4584
  %v4723 = vpack.c.b16 %v4716, %v4715
  %v4724 = vpack.c.b16 %v4718, %v4717
  %v4725 = vpack.c.b16 %v4720, %v4719
  %v4726 = vpack.c.b16 %v4722, %v4721
  %v4732 = vsel %vm327, %v4705, 0
  %v4735 = vsel %vm327, %v4706, 0
  %4737 = vmatprep.subr.bf16.mxu0 0
  %4738 = vmatpush1.bf16.msra.mxu0 %v4723
  %4739 = vmatprep.subr.bf16.mxu0 0
  %4740 = vmatpush1.bf16.msra.mxu0 %v4724
  %4741 = vmatprep.subr.bf16.mxu0 0
  %4742 = vmatpush1.bf16.msra.mxu0 %v4725
  %4743 = vmatprep.subr.bf16.mxu0 0
  %4744 = vmatpush1.bf16.msra.mxu0 %v4726
  %4745 = vmatprep.subr.bf16.mxu0 0
  %4746 = vmatpush1.bf16.msra.mxu0 0
  %4747 = vmatprep.subr.bf16.mxu0 0
  %4748 = vmatpush1.bf16.msra.mxu0 0
  %4749 = vmatprep.subr.bf16.mxu0 0
  %4750 = vmatpush1.bf16.msra.mxu0 0
  %4751 = vmatprep.subr.bf16.mxu0 0
  %4752 = vmatpush1.bf16.msra.mxu0 0
  %4753 = vmatprep.subr.bf16.mxu0 0
  %4754 = vmatpush1.bf16.msra.mxu0 0
  %4755 = vmatprep.subr.bf16.mxu0 0
  %4756 = vmatpush1.bf16.msra.mxu0 0
  %4757 = vmatprep.subr.bf16.mxu0 0
  %4758 = vmatpush1.bf16.msra.mxu0 0
  %4759 = vmatprep.subr.bf16.mxu0 0
  %4760 = vmatpush1.bf16.msra.mxu0 0
  %4761 = vmatprep.subr.bf16.mxu0 0
  %4762 = vmatpush1.bf16.msra.mxu0 0
  %4763 = vmatprep.subr.bf16.mxu0 0
  %4764 = vmatpush1.bf16.msra.mxu0 0
  %4765 = vmatprep.subr.bf16.mxu0 0
  %4766 = vmatpush1.bf16.msra.mxu0 0
  %4767 = vmatprep.subr.bf16.mxu0 0
  %4768 = vmatpush1.bf16.msra.mxu0 0
  %4769 = vmatprep.mubr.bf16.mxu0 0
  %4770 = vmatmul.mubr.bf16.gmra.mrb[0].mxu0 %v4732
  %v4771 = vpop.f32.mrb[0].mxu0
  %v4772 = vadd.f32 0.0, %v4771
  %v4773 = vpop.f32.mrb[0].mxu0
  %v4774 = vpop.f32.mrb[0].mxu0
  %v4775 = vadd.f32 0.0, %v4774
  %v4776 = vpop.f32.mrb[0].mxu0
  %4777 = vmatprep.mubr.bf16.mxu0 0
  %4778 = vmatmul.mubr.bf16.gmra.mrb[0].mxu0 %v4735
  %v4779 = vpop.f32.mrb[0].mxu0
  %v4780 = vadd.f32 0.0, %v4779
  %v4781 = vpop.f32.mrb[0].mxu0
  %v4782 = vpop.f32.mrb[0].mxu0
  %v4783 = vadd.f32 0.0, %v4782
  %v4784 = vpop.f32.mrb[0].mxu0
  %4785 = vdwg.mxu0
  %v4786 = vadd.f32 %v4509, %v4772
  %v4787 = vadd.f32 %v4510, %v4775
  %v4788 = vadd.f32 %v4511, %v4780
  %v4789 = vadd.f32 %v4512, %v4783
  %v4790 = vld [vmem:[%s631 + $0x1] sm:$0x1]
  %v4791 = vld [vmem:[%s631 + $0x3] sm:$0x1]
  %v4792 = vld [vmem:[%s631 + $0x5] sm:$0x1]
  %v4793 = vld [vmem:[%s631 + $0x7] sm:$0x1]
  %v4794 = vld [vmem:[%s631 + $0x19] sm:$0x1]
  %v4795 = vld [vmem:[%s631 + $0x1b] sm:$0x1]
  %v4796 = vld [vmem:[%s631 + $0x1d] sm:$0x1]
  %v4797 = vld [vmem:[%s631 + $0x1f] sm:$0x1]
  %v4798 = vld [vmem:[%s631 + $0x31] sm:$0x1]
  %v4799 = vld [vmem:[%s631 + $0x33] sm:$0x1]
  %v4800 = vld [vmem:[%s631 + $0x35] sm:$0x1]
  %v4801 = vld [vmem:[%s631 + $0x37] sm:$0x1]
  %v4802 = vld [vmem:[%s631 + $0x49] sm:$0x1]
  %v4803 = vld [vmem:[%s631 + $0x4b] sm:$0x1]
  %v4804 = vld [vmem:[%s631 + $0x4d] sm:$0x1]
  %v4805 = vld [vmem:[%s631 + $0x4f] sm:$0x1]
  %v4806 = vld [vmem:[%s631 + $0x91] sm:$0x1]
  %v4807 = vld [vmem:[%s631 + $0x93] sm:$0x1]
  %v4808 = vld [vmem:[%s631 + $0x95] sm:$0x1]
  %v4809 = vld [vmem:[%s631 + $0x97] sm:$0x1]
  %v4810 = vld [vmem:[%s631 + $0xa9] sm:$0x1]
  %v4811 = vld [vmem:[%s631 + $0xab] sm:$0x1]
  %v4812 = vld [vmem:[%s631 + $0xad] sm:$0x1]
  %v4813 = vld [vmem:[%s631 + $0xaf] sm:$0x1]
  %v4814 = vld [vmem:[%s631 + $0xc1] sm:$0x1]
  %v4815 = vld [vmem:[%s631 + $0xc3] sm:$0x1]
  %v4816 = vld [vmem:[%s631 + $0xc5] sm:$0x1]
  %v4817 = vld [vmem:[%s631 + $0xc7] sm:$0x1]
  %v4818 = vld [vmem:[%s631 + $0xd9] sm:$0x1]
  %v4819 = vld [vmem:[%s631 + $0xdb] sm:$0x1]
  %v4820 = vld [vmem:[%s631 + $0xdd] sm:$0x1]
  %v4821 = vld [vmem:[%s631 + $0xdf] sm:$0x1]
  %v4822 = vpack.c.bf16 %v4790, %v4790
  %v4823 = vpack.c.bf16 %v4791, %v4791
  %v4824 = vpack.c.bf16 %v4792, %v4792
  %v4825 = vpack.c.bf16 %v4793, %v4793
  %v4826 = vpack.c.bf16 %v4794, %v4794
  %v4827 = vpack.c.bf16 %v4795, %v4795
  %v4828 = vpack.c.bf16 %v4796, %v4796
  %v4829 = vpack.c.bf16 %v4797, %v4797
  %v4830 = vpack.c.bf16 %v4798, %v4798
  %v4831 = vpack.c.bf16 %v4799, %v4799
  %v4832 = vpack.c.bf16 %v4800, %v4800
  %v4833 = vpack.c.bf16 %v4801, %v4801
  %v4834 = vpack.c.bf16 %v4802, %v4802
  %v4835 = vpack.c.bf16 %v4803, %v4803
  %v4836 = vpack.c.bf16 %v4804, %v4804
  %v4837 = vpack.c.bf16 %v4805, %v4805
  %v4838 = vpack.c.bf16 %v4806, %v4806
  %v4839 = vpack.c.bf16 %v4807, %v4807
  %v4840 = vpack.c.bf16 %v4808, %v4808
  %v4841 = vpack.c.bf16 %v4809, %v4809
  %v4842 = vpack.c.bf16 %v4810, %v4810
  %v4843 = vpack.c.bf16 %v4811, %v4811
  %v4844 = vpack.c.bf16 %v4812, %v4812
  %v4845 = vpack.c.bf16 %v4813, %v4813
  %v4846 = vpack.c.bf16 %v4814, %v4814
  %v4847 = vpack.c.bf16 %v4815, %v4815
  %v4848 = vpack.c.bf16 %v4816, %v4816
  %v4849 = vpack.c.bf16 %v4817, %v4817
  %v4850 = vpack.c.bf16 %v4818, %v4818
  %v4851 = vpack.c.bf16 %v4819, %v4819
  %v4852 = vpack.c.bf16 %v4820, %v4820
  %v4853 = vpack.c.bf16 %v4821, %v4821
  %v4854 = vld [vmem:[%s2 + $0x1c0] sm:$0xf]
  %v4855 = vld [vmem:[%s2 + $0x1c4] sm:$0xf]
  %v4856 = vld [vmem:[%s2 + $0x1c8] sm:$0xf]
  %v4857 = vld [vmem:[%s2 + $0x1cc] sm:$0xf]
  %v4858 = vld [vmem:[%s2 + $0x1d0] sm:$0xf]
  %v4859 = vld [vmem:[%s2 + $0x1d4] sm:$0xf]
  %v4860 = vld [vmem:[%s2 + $0x1d8] sm:$0xf]
  %v4861 = vld [vmem:[%s2 + $0x1dc] sm:$0xf]
  %v4894 = vunpack.c.l.b16 %v4822
  %v4895 = vunpack.c.l.b16 %v4823
  %v4896 = vunpack.c.l.b16 %v4824
  %v4897 = vunpack.c.l.b16 %v4825
  %v4898 = vunpack.c.l.b16 %v4826
  %v4899 = vunpack.c.l.b16 %v4827
  %v4900 = vunpack.c.l.b16 %v4828
  %v4901 = vunpack.c.l.b16 %v4829
  %v4902 = vunpack.c.l.b16 %v4830
  %v4903 = vunpack.c.l.b16 %v4831
  %v4904 = vunpack.c.l.b16 %v4832
  %v4905 = vunpack.c.l.b16 %v4833
  %v4906 = vunpack.c.l.b16 %v4834
  %v4907 = vunpack.c.l.b16 %v4835
  %v4908 = vunpack.c.l.b16 %v4836
  %v4909 = vunpack.c.l.b16 %v4837
  %v4910 = vunpack.c.l.b16 %v4838
  %v4911 = vunpack.c.l.b16 %v4839
  %v4912 = vunpack.c.l.b16 %v4840
  %v4913 = vunpack.c.l.b16 %v4841
  %v4914 = vunpack.c.l.b16 %v4842
  %v4915 = vunpack.c.l.b16 %v4843
  %v4916 = vunpack.c.l.b16 %v4844
  %v4917 = vunpack.c.l.b16 %v4845
  %v4918 = vunpack.c.l.b16 %v4846
  %v4919 = vunpack.c.l.b16 %v4847
  %v4920 = vunpack.c.l.b16 %v4848
  %v4921 = vunpack.c.l.b16 %v4849
  %v4922 = vunpack.c.l.b16 %v4850
  %v4923 = vunpack.c.l.b16 %v4851
  %v4924 = vunpack.c.l.b16 %v4852
  %v4925 = vunpack.c.l.b16 %v4853
  %v4926 = vrot.slane %v4895, 7
  %v4927 = vsel %vm1116, %v4926, %v4894
  %v4928 = vrot.slane %v4896, 6
  %v4929 = vsel %vm1119, %v4928, %v4927
  %v4930 = vrot.slane %v4897, 5
  %v4931 = vsel %vm1122, %v4930, %v4929
  %v4932 = vrot.slane %v4898, 4
  %v4933 = vsel %vm1125, %v4932, %v4931
  %v4934 = vrot.slane %v4899, 3
  %v4935 = vsel %vm1128, %v4934, %v4933
  %v4936 = vrot.slane %v4900, 2
  %v4937 = vsel %vm1131, %v4936, %v4935
  %v4938 = vrot.slane %v4901, 1
  %v4939 = vsel %vm1134, %v4938, %v4937
  %v4940 = vrot.slane %v4903, 7
  %v4941 = vsel %vm1116, %v4940, %v4902
  %v4942 = vrot.slane %v4904, 6
  %v4943 = vsel %vm1119, %v4942, %v4941
  %v4944 = vrot.slane %v4905, 5
  %v4945 = vsel %vm1122, %v4944, %v4943
  %v4946 = vrot.slane %v4906, 4
  %v4947 = vsel %vm1125, %v4946, %v4945
  %v4948 = vrot.slane %v4907, 3
  %v4949 = vsel %vm1128, %v4948, %v4947
  %v4950 = vrot.slane %v4908, 2
  %v4951 = vsel %vm1131, %v4950, %v4949
  %v4952 = vrot.slane %v4909, 1
  %v4953 = vsel %vm1134, %v4952, %v4951
  %v4954 = vrot.slane %v4911, 7
  %v4955 = vsel %vm1116, %v4954, %v4910
  %v4956 = vrot.slane %v4912, 6
  %v4957 = vsel %vm1119, %v4956, %v4955
  %v4958 = vrot.slane %v4913, 5
  %v4959 = vsel %vm1122, %v4958, %v4957
  %v4960 = vrot.slane %v4914, 4
  %v4961 = vsel %vm1125, %v4960, %v4959
  %v4962 = vrot.slane %v4915, 3
  %v4963 = vsel %vm1128, %v4962, %v4961
  %v4964 = vrot.slane %v4916, 2
  %v4965 = vsel %vm1131, %v4964, %v4963
  %v4966 = vrot.slane %v4917, 1
  %v4967 = vsel %vm1134, %v4966, %v4965
  %v4968 = vrot.slane %v4919, 7
  %v4969 = vsel %vm1116, %v4968, %v4918
  %v4970 = vrot.slane %v4920, 6
  %v4971 = vsel %vm1119, %v4970, %v4969
  %v4972 = vrot.slane %v4921, 5
  %v4973 = vsel %vm1122, %v4972, %v4971
  %v4974 = vrot.slane %v4922, 4
  %v4975 = vsel %vm1125, %v4974, %v4973
  %v4976 = vrot.slane %v4923, 3
  %v4977 = vsel %vm1128, %v4976, %v4975
  %v4978 = vrot.slane %v4924, 2
  %v4979 = vsel %vm1131, %v4978, %v4977
  %v4980 = vrot.slane %v4925, 1
  %v4981 = vsel %vm1134, %v4980, %v4979
  %v4982 = vpack.c.b16 %v4953, %v4939
  %v4983 = vpack.c.b16 %v4981, %v4967
  %v4992 = vunpack.c.l.b16 %v4854
  %v4993 = vunpack.c.l.b16 %v4855
  %v4994 = vunpack.c.l.b16 %v4856
  %v4995 = vunpack.c.l.b16 %v4857
  %v4996 = vunpack.c.l.b16 %v4858
  %v4997 = vunpack.c.l.b16 %v4859
  %v4998 = vunpack.c.l.b16 %v4860
  %v4999 = vunpack.c.l.b16 %v4861
  %v5000 = vpack.c.b16 %v4993, %v4992
  %v5001 = vpack.c.b16 %v4995, %v4994
  %v5002 = vpack.c.b16 %v4997, %v4996
  %v5003 = vpack.c.b16 %v4999, %v4998
  %v5009 = vsel %vm327, %v4982, 0
  %v5012 = vsel %vm327, %v4983, 0
  %5014 = vmatprep.subr.bf16.mxu0 0
  %5015 = vmatpush1.bf16.msra.mxu0 %v5000
  %5016 = vmatprep.subr.bf16.mxu0 0
  %5017 = vmatpush1.bf16.msra.mxu0 %v5001
  %5018 = vmatprep.subr.bf16.mxu0 0
  %5019 = vmatpush1.bf16.msra.mxu0 %v5002
  %5020 = vmatprep.subr.bf16.mxu0 0
  %5021 = vmatpush1.bf16.msra.mxu0 %v5003
  %5022 = vmatprep.subr.bf16.mxu0 0
  %5023 = vmatpush1.bf16.msra.mxu0 0
  %5024 = vmatprep.subr.bf16.mxu0 0
  %5025 = vmatpush1.bf16.msra.mxu0 0
  %5026 = vmatprep.subr.bf16.mxu0 0
  %5027 = vmatpush1.bf16.msra.mxu0 0
  %5028 = vmatprep.subr.bf16.mxu0 0
  %5029 = vmatpush1.bf16.msra.mxu0 0
  %5030 = vmatprep.subr.bf16.mxu0 0
  %5031 = vmatpush1.bf16.msra.mxu0 0
  %5032 = vmatprep.subr.bf16.mxu0 0
  %5033 = vmatpush1.bf16.msra.mxu0 0
  %5034 = vmatprep.subr.bf16.mxu0 0
  %5035 = vmatpush1.bf16.msra.mxu0 0
  %5036 = vmatprep.subr.bf16.mxu0 0
  %5037 = vmatpush1.bf16.msra.mxu0 0
  %5038 = vmatprep.subr.bf16.mxu0 0
  %5039 = vmatpush1.bf16.msra.mxu0 0
  %5040 = vmatprep.subr.bf16.mxu0 0
  %5041 = vmatpush1.bf16.msra.mxu0 0
  %5042 = vmatprep.subr.bf16.mxu0 0
  %5043 = vmatpush1.bf16.msra.mxu0 0
  %5044 = vmatprep.subr.bf16.mxu0 0
  %5045 = vmatpush1.bf16.msra.mxu0 0
  %5046 = vmatprep.mubr.bf16.mxu0 0
  %5047 = vmatmul.mubr.bf16.gmra.mrb[0].mxu0 %v5009
  %v5048 = vpop.f32.mrb[0].mxu0
  %v5049 = vadd.f32 0.0, %v5048
  %v5050 = vpop.f32.mrb[0].mxu0
  %v5051 = vpop.f32.mrb[0].mxu0
  %v5052 = vadd.f32 0.0, %v5051
  %v5053 = vpop.f32.mrb[0].mxu0
  %5054 = vmatprep.mubr.bf16.mxu0 0
  %5055 = vmatmul.mubr.bf16.gmra.mrb[0].mxu0 %v5012
  %v5056 = vpop.f32.mrb[0].mxu0
  %v5057 = vadd.f32 0.0, %v5056
  %v5058 = vpop.f32.mrb[0].mxu0
  %v5059 = vpop.f32.mrb[0].mxu0
  %v5060 = vadd.f32 0.0, %v5059
  %v5061 = vpop.f32.mrb[0].mxu0
  %5062 = vdwg.mxu0
  %v5063 = vadd.f32 %v4786, %v5049
  %v5064 = vadd.f32 %v4787, %v5052
  %v5065 = vadd.f32 %v4788, %v5057
  %v5066 = vadd.f32 %v4789, %v5060
  %s5067 = scalar_lea.vmem [#allocation2], 52
  %v5068 = vld [vmem:[%s5067] sm:$0x1]
  %v5069 = vld [vmem:[%s5067 + $0x2] sm:$0x1]
  %v5070 = vld [vmem:[%s5067 + $0x4] sm:$0x1]
  %v5071 = vld [vmem:[%s5067 + $0x6] sm:$0x1]
  %v5072 = vld [vmem:[%s5067 + $0x18] sm:$0x1]
  %v5073 = vld [vmem:[%s5067 + $0x1a] sm:$0x1]
  %v5074 = vld [vmem:[%s5067 + $0x1c] sm:$0x1]
  %v5075 = vld [vmem:[%s5067 + $0x1e] sm:$0x1]
  %v5076 = vld [vmem:[%s5067 + $0x30] sm:$0x1]
  %v5077 = vld [vmem:[%s5067 + $0x32] sm:$0x1]
  %v5078 = vld [vmem:[%s5067 + $0x34] sm:$0x1]
  %v5079 = vld [vmem:[%s5067 + $0x36] sm:$0x1]
  %v5080 = vld [vmem:[%s5067 + $0x48] sm:$0x1]
  %v5081 = vld [vmem:[%s5067 + $0x4a] sm:$0x1]
  %v5082 = vld [vmem:[%s5067 + $0x4c] sm:$0x1]
  %v5083 = vld [vmem:[%s5067 + $0x4e] sm:$0x1]
  %v5084 = vld [vmem:[%s5067 + $0x90] sm:$0x1]
  %v5085 = vld [vmem:[%s5067 + $0x92] sm:$0x1]
  %v5086 = vld [vmem:[%s5067 + $0x94] sm:$0x1]
  %v5087 = vld [vmem:[%s5067 + $0x96] sm:$0x1]
  %v5088 = vld [vmem:[%s5067 + $0xa8] sm:$0x1]
  %v5089 = vld [vmem:[%s5067 + $0xaa] sm:$0x1]
  %v5090 = vld [vmem:[%s5067 + $0xac] sm:$0x1]
  %v5091 = vld [vmem:[%s5067 + $0xae] sm:$0x1]
  %v5092 = vld [vmem:[%s5067 + $0xc0] sm:$0x1]
  %v5093 = vld [vmem:[%s5067 + $0xc2] sm:$0x1]
  %v5094 = vld [vmem:[%s5067 + $0xc4] sm:$0x1]
  %v5095 = vld [vmem:[%s5067 + $0xc6] sm:$0x1]
  %v5096 = vld [vmem:[%s5067 + $0xd8] sm:$0x1]
  %v5097 = vld [vmem:[%s5067 + $0xda] sm:$0x1]
  %v5098 = vld [vmem:[%s5067 + $0xdc] sm:$0x1]
  %v5099 = vld [vmem:[%s5067 + $0xde] sm:$0x1]
  %v5100 = vpack.c.bf16 %v5068, %v5068
  %v5101 = vpack.c.bf16 %v5069, %v5069
  %v5102 = vpack.c.bf16 %v5070, %v5070
  %v5103 = vpack.c.bf16 %v5071, %v5071
  %v5104 = vpack.c.bf16 %v5072, %v5072
  %v5105 = vpack.c.bf16 %v5073, %v5073
  %v5106 = vpack.c.bf16 %v5074, %v5074
  %v5107 = vpack.c.bf16 %v5075, %v5075
  %v5108 = vpack.c.bf16 %v5076, %v5076
  %v5109 = vpack.c.bf16 %v5077, %v5077
  %v5110 = vpack.c.bf16 %v5078, %v5078
  %v5111 = vpack.c.bf16 %v5079, %v5079
  %v5112 = vpack.c.bf16 %v5080, %v5080
  %v5113 = vpack.c.bf16 %v5081, %v5081
  %v5114 = vpack.c.bf16 %v5082, %v5082
  %v5115 = vpack.c.bf16 %v5083, %v5083
  %v5116 = vpack.c.bf16 %v5084, %v5084
  %v5117 = vpack.c.bf16 %v5085, %v5085
  %v5118 = vpack.c.bf16 %v5086, %v5086
  %v5119 = vpack.c.bf16 %v5087, %v5087
  %v5120 = vpack.c.bf16 %v5088, %v5088
  %v5121 = vpack.c.bf16 %v5089, %v5089
  %v5122 = vpack.c.bf16 %v5090, %v5090
  %v5123 = vpack.c.bf16 %v5091, %v5091
  %v5124 = vpack.c.bf16 %v5092, %v5092
  %v5125 = vpack.c.bf16 %v5093, %v5093
  %v5126 = vpack.c.bf16 %v5094, %v5094
  %v5127 = vpack.c.bf16 %v5095, %v5095
  %v5128 = vpack.c.bf16 %v5096, %v5096
  %v5129 = vpack.c.bf16 %v5097, %v5097
  %v5130 = vpack.c.bf16 %v5098, %v5098
  %v5131 = vpack.c.bf16 %v5099, %v5099
  %v5132 = vld [vmem:[%s2 + $0x1e0] sm:$0xf]
  %v5133 = vld [vmem:[%s2 + $0x1e4] sm:$0xf]
  %v5134 = vld [vmem:[%s2 + $0x1e8] sm:$0xf]
  %v5135 = vld [vmem:[%s2 + $0x1ec] sm:$0xf]
  %v5136 = vld [vmem:[%s2 + $0x1f0] sm:$0xf]
  %v5137 = vld [vmem:[%s2 + $0x1f4] sm:$0xf]
  %v5138 = vld [vmem:[%s2 + $0x1f8] sm:$0xf]
  %v5139 = vld [vmem:[%s2 + $0x1fc] sm:$0xf]
  %v5172 = vunpack.c.l.b16 %v5100
  %v5173 = vunpack.c.l.b16 %v5101
  %v5174 = vunpack.c.l.b16 %v5102
  %v5175 = vunpack.c.l.b16 %v5103
  %v5176 = vunpack.c.l.b16 %v5104
  %v5177 = vunpack.c.l.b16 %v5105
  %v5178 = vunpack.c.l.b16 %v5106
  %v5179 = vunpack.c.l.b16 %v5107
  %v5180 = vunpack.c.l.b16 %v5108
  %v5181 = vunpack.c.l.b16 %v5109
  %v5182 = vunpack.c.l.b16 %v5110
  %v5183 = vunpack.c.l.b16 %v5111
  %v5184 = vunpack.c.l.b16 %v5112
  %v5185 = vunpack.c.l.b16 %v5113
  %v5186 = vunpack.c.l.b16 %v5114
  %v5187 = vunpack.c.l.b16 %v5115
  %v5188 = vunpack.c.l.b16 %v5116
  %v5189 = vunpack.c.l.b16 %v5117
  %v5190 = vunpack.c.l.b16 %v5118
  %v5191 = vunpack.c.l.b16 %v5119
  %v5192 = vunpack.c.l.b16 %v5120
  %v5193 = vunpack.c.l.b16 %v5121
  %v5194 = vunpack.c.l.b16 %v5122
  %v5195 = vunpack.c.l.b16 %v5123
  %v5196 = vunpack.c.l.b16 %v5124
  %v5197 = vunpack.c.l.b16 %v5125
  %v5198 = vunpack.c.l.b16 %v5126
  %v5199 = vunpack.c.l.b16 %v5127
  %v5200 = vunpack.c.l.b16 %v5128
  %v5201 = vunpack.c.l.b16 %v5129
  %v5202 = vunpack.c.l.b16 %v5130
  %v5203 = vunpack.c.l.b16 %v5131
  %v5204 = vrot.slane %v5173, 7
  %v5205 = vsel %vm1116, %v5204, %v5172
  %v5206 = vrot.slane %v5174, 6
  %v5207 = vsel %vm1119, %v5206, %v5205
  %v5208 = vrot.slane %v5175, 5
  %v5209 = vsel %vm1122, %v5208, %v5207
  %v5210 = vrot.slane %v5176, 4
  %v5211 = vsel %vm1125, %v5210, %v5209
  %v5212 = vrot.slane %v5177, 3
  %v5213 = vsel %vm1128, %v5212, %v5211
  %v5214 = vrot.slane %v5178, 2
  %v5215 = vsel %vm1131, %v5214, %v5213
  %v5216 = vrot.slane %v5179, 1
  %v5217 = vsel %vm1134, %v5216, %v5215
  %v5218 = vrot.slane %v5181, 7
  %v5219 = vsel %vm1116, %v5218, %v5180
  %v5220 = vrot.slane %v5182, 6
  %v5221 = vsel %vm1119, %v5220, %v5219
  %v5222 = vrot.slane %v5183, 5
  %v5223 = vsel %vm1122, %v5222, %v5221
  %v5224 = vrot.slane %v5184, 4
  %v5225 = vsel %vm1125, %v5224, %v5223
  %v5226 = vrot.slane %v5185, 3
  %v5227 = vsel %vm1128, %v5226, %v5225
  %v5228 = vrot.slane %v5186, 2
  %v5229 = vsel %vm1131, %v5228, %v5227
  %v5230 = vrot.slane %v5187, 1
  %v5231 = vsel %vm1134, %v5230, %v5229
  %v5232 = vrot.slane %v5189, 7
  %v5233 = vsel %vm1116, %v5232, %v5188
  %v5234 = vrot.slane %v5190, 6
  %v5235 = vsel %vm1119, %v5234, %v5233
  %v5236 = vrot.slane %v5191, 5
  %v5237 = vsel %vm1122, %v5236, %v5235
  %v5238 = vrot.slane %v5192, 4
  %v5239 = vsel %vm1125, %v5238, %v5237
  %v5240 = vrot.slane %v5193, 3
  %v5241 = vsel %vm1128, %v5240, %v5239
  %v5242 = vrot.slane %v5194, 2
  %v5243 = vsel %vm1131, %v5242, %v5241
  %v5244 = vrot.slane %v5195, 1
  %v5245 = vsel %vm1134, %v5244, %v5243
  %v5246 = vrot.slane %v5197, 7
  %v5247 = vsel %vm1116, %v5246, %v5196
  %v5248 = vrot.slane %v5198, 6
  %v5249 = vsel %vm1119, %v5248, %v5247
  %v5250 = vrot.slane %v5199, 5
  %v5251 = vsel %vm1122, %v5250, %v5249
  %v5252 = vrot.slane %v5200, 4
  %v5253 = vsel %vm1125, %v5252, %v5251
  %v5254 = vrot.slane %v5201, 3
  %v5255 = vsel %vm1128, %v5254, %v5253
  %v5256 = vrot.slane %v5202, 2
  %v5257 = vsel %vm1131, %v5256, %v5255
  %v5258 = vrot.slane %v5203, 1
  %v5259 = vsel %vm1134, %v5258, %v5257
  %v5260 = vpack.c.b16 %v5231, %v5217
  %v5261 = vpack.c.b16 %v5259, %v5245
  %v5270 = vunpack.c.l.b16 %v5132
  %v5271 = vunpack.c.l.b16 %v5133
  %v5272 = vunpack.c.l.b16 %v5134
  %v5273 = vunpack.c.l.b16 %v5135
  %v5274 = vunpack.c.l.b16 %v5136
  %v5275 = vunpack.c.l.b16 %v5137
  %v5276 = vunpack.c.l.b16 %v5138
  %v5277 = vunpack.c.l.b16 %v5139
  %v5278 = vpack.c.b16 %v5271, %v5270
  %v5279 = vpack.c.b16 %v5273, %v5272
  %v5280 = vpack.c.b16 %v5275, %v5274
  %v5281 = vpack.c.b16 %v5277, %v5276
  %v5287 = vsel %vm327, %v5260, 0
  %v5290 = vsel %vm327, %v5261, 0
  %5292 = vmatprep.subr.bf16.mxu0 0
  %5293 = vmatpush1.bf16.msra.mxu0 %v5278
  %5294 = vmatprep.subr.bf16.mxu0 0
  %5295 = vmatpush1.bf16.msra.mxu0 %v5279
  %5296 = vmatprep.subr.bf16.mxu0 0
  %5297 = vmatpush1.bf16.msra.mxu0 %v5280
  %5298 = vmatprep.subr.bf16.mxu0 0
  %5299 = vmatpush1.bf16.msra.mxu0 %v5281
  %5300 = vmatprep.subr.bf16.mxu0 0
  %5301 = vmatpush1.bf16.msra.mxu0 0
  %5302 = vmatprep.subr.bf16.mxu0 0
  %5303 = vmatpush1.bf16.msra.mxu0 0
  %5304 = vmatprep.subr.bf16.mxu0 0
  %5305 = vmatpush1.bf16.msra.mxu0 0
  %5306 = vmatprep.subr.bf16.mxu0 0
  %5307 = vmatpush1.bf16.msra.mxu0 0
  %5308 = vmatprep.subr.bf16.mxu0 0
  %5309 = vmatpush1.bf16.msra.mxu0 0
  %5310 = vmatprep.subr.bf16.mxu0 0
  %5311 = vmatpush1.bf16.msra.mxu0 0
  %5312 = vmatprep.subr.bf16.mxu0 0
  %5313 = vmatpush1.bf16.msra.mxu0 0
  %5314 = vmatprep.subr.bf16.mxu0 0
  %5315 = vmatpush1.bf16.msra.mxu0 0
  %5316 = vmatprep.subr.bf16.mxu0 0
  %5317 = vmatpush1.bf16.msra.mxu0 0
  %5318 = vmatprep.subr.bf16.mxu0 0
  %5319 = vmatpush1.bf16.msra.mxu0 0
  %5320 = vmatprep.subr.bf16.mxu0 0
  %5321 = vmatpush1.bf16.msra.mxu0 0
  %5322 = vmatprep.subr.bf16.mxu0 0
  %5323 = vmatpush1.bf16.msra.mxu0 0
  %5324 = vmatprep.mubr.bf16.mxu0 0
  %5325 = vmatmul.mubr.bf16.gmra.mrb[0].mxu0 %v5287
  %v5326 = vpop.f32.mrb[0].mxu0
  %v5327 = vadd.f32 0.0, %v5326
  %v5328 = vpop.f32.mrb[0].mxu0
  %v5329 = vpop.f32.mrb[0].mxu0
  %v5330 = vadd.f32 0.0, %v5329
  %v5331 = vpop.f32.mrb[0].mxu0
  %5332 = vmatprep.mubr.bf16.mxu0 0
  %5333 = vmatmul.mubr.bf16.gmra.mrb[0].mxu0 %v5290
  %v5334 = vpop.f32.mrb[0].mxu0
  %v5335 = vadd.f32 0.0, %v5334
  %v5336 = vpop.f32.mrb[0].mxu0
  %v5337 = vpop.f32.mrb[0].mxu0
  %v5338 = vadd.f32 0.0, %v5337
  %v5339 = vpop.f32.mrb[0].mxu0
  %5340 = vdwg.mxu0
  %v5341 = vadd.f32 %v5063, %v5327
  %v5342 = vadd.f32 %v5064, %v5330
  %v5343 = vadd.f32 %v5065, %v5335
  %v5344 = vadd.f32 %v5066, %v5338
  %v5345 = vld [vmem:[%s4] sm:$0x1]
  %v5346 = vld [vmem:[%s5] sm:$0x1]
  %v5347 = vadd.f32 %v5341, %v5342
  %v5348 = vadd.f32 %v5347, %v5343
  %v5349 = vadd.f32 %v5348, %v5344
  %v5350 = vrot.slane %v5349, 4
  %v5351 = vadd.f32 %v5349, %v5350
  %v5352 = vrot.slane %v5351, 2
  %v5353 = vadd.f32 %v5351, %v5352
  %v5354 = vrot.slane %v5353, 1
  %v5355 = vadd.f32 %v5353, %v5354
  %v5356 = vmul.f32 %v5355, 0.03125
  %v5357 = vmul.f32 %v5341, %v5341
  %v5358 = vmul.f32 %v5342, %v5342
  %v5359 = vmul.f32 %v5343, %v5343
  %v5360 = vmul.f32 %v5344, %v5344
  %v5361 = vadd.f32 %v5357, %v5358
  %v5362 = vadd.f32 %v5361, %v5359
  %v5363 = vadd.f32 %v5362, %v5360
  %v5364 = vrot.slane %v5363, 4
  %v5365 = vadd.f32 %v5363, %v5364
  %v5366 = vrot.slane %v5365, 2
  %v5367 = vadd.f32 %v5365, %v5366
  %v5368 = vrot.slane %v5367, 1
  %v5369 = vadd.f32 %v5367, %v5368
  %v5370 = vmul.f32 %v5369, 0.03125
  %v5371 = vmul.f32 %v5356, %v5356
  %v5372 = vsub.f32 %v5370, %v5371
  %v5373 = vadd.f32 %v5372, 1e-05
  %v5374 = vrsqrt.pop %v5373
  %v5375 = vmul.f32 %v5345, %v5374
  %v5376 = vmul.f32 %v5356, %v5375
  %v5377 = vsub.f32 %v5346, %v5376
  %v5379 = vlaneseq
  %v5380 = vshrl.u32 %v5379, 7
  %v5381 = vsub.s32 0, %v5380
  %v5382 = vrot.slane %v5375, %v5381
  %v5384 = vmul.f32 %v5341, %v5382
  %v5385 = vmul.f32 %v5342, %v5382
  %v5386 = vmul.f32 %v5343, %v5382
  %v5387 = vmul.f32 %v5344, %v5382
  %v5389 = vlaneseq
  %v5390 = vshrl.u32 %v5389, 7
  %v5391 = vsub.s32 0, %v5390
  %v5392 = vrot.slane %v5377, %v5391
  %v5394 = vadd.f32 %v5384, %v5392
  %v5395 = vadd.f32 %v5385, %v5392
  %v5396 = vadd.f32 %v5386, %v5392
  %v5397 = vadd.f32 %v5387, %v5392
  %v5398 = vmul.f32 %v5394, 0.1
  %v5399 = vmul.f32 %v5395, 0.1
  %v5400 = vmul.f32 %v5396, 0.1
  %v5401 = vmul.f32 %v5397, 0.1
  %v5402 = vmax.f32 %v5394, %v5398
  %v5403 = vmax.f32 %v5395, %v5399
  %v5404 = vmax.f32 %v5396, %v5400
  %v5405 = vmax.f32 %v5397, %v5401
  %v5410 = vcombine.high %v5402, %v5402
  %v5411 = vcombine.high %v5403, %v5403
  %v5412 = vcombine.high %v5404, %v5404
  %v5413 = vcombine.high %v5405, %v5405
  %v5415 = vunpack.c.l.s4 1983009808
  %v5416 = vunpack.c.0.s8 %v5415
  %v5417 = vlaneseq
  %v5418 = vshrl.u32 %v5417, 7
  %v5419 = vsub.s32 %v5416, %v5418
  %v5420 = vrot.slane %v5402, %v5419
  %v5421 = vcombine.high %v5420, %v5420
  %v5423 = vunpack.c.l.s4 1983009808
  %v5424 = vunpack.c.0.s8 %v5423
  %v5425 = vlaneseq
  %v5426 = vshrl.u32 %v5425, 7
  %v5427 = vsub.s32 %v5424, %v5426
  %v5428 = vrot.slane %v5404, %v5427
  %v5429 = vcombine.high %v5428, %v5428
  %s5434 = scalar_lea.vmem [#allocation3], 18
  %5435 = vst [vmem:[%s5434] sm:$0x3] %v5420
  %5436 = vst [vmem:[%s5434 + $0x2] sm:$0x3] %v5421
  %5437 = vst [vmem:[%s5434 + $0x40] sm:$0x3] %v5428
  %5438 = vst [vmem:[%s5434 + $0x42] sm:$0x3] %v5429
  %v5440 = vunpack.c.l.s4 1983009808
  %v5441 = vunpack.c.0.s8 %v5440
  %v5442 = vlaneseq
  %v5443 = vshrl.u32 %v5442, 7
  %v5444 = vsub.s32 %v5441, %v5443
  %v5445 = vrot.slane %v5410, %v5444
  %v5446 = vcombine.high %v5445, %v5445
  %v5448 = vunpack.c.l.s4 1983009808
  %v5449 = vunpack.c.0.s8 %v5448
  %v5450 = vlaneseq
  %v5451 = vshrl.u32 %v5450, 7
  %v5452 = vsub.s32 %v5449, %v5451
  %v5453 = vrot.slane %v5412, %v5452
  %v5454 = vcombine.high %v5453, %v5453
  %s5459 = scalar_lea.vmem [#allocation3], 26
  %5460 = vst [vmem:[%s5459] sm:$0x3] %v5445
  %5461 = vst [vmem:[%s5459 + $0x2] sm:$0x3] %v5446
  %5462 = vst [vmem:[%s5459 + $0x40] sm:$0x3] %v5453
  %5463 = vst [vmem:[%s5459 + $0x42] sm:$0x3] %v5454
  %v5465 = vunpack.c.l.s4 1983009808
  %v5466 = vunpack.c.0.s8 %v5465
  %v5467 = vlaneseq
  %v5468 = vshrl.u32 %v5467, 7
  %v5469 = vsub.s32 %v5466, %v5468
  %v5470 = vrot.slane %v5403, %v5469
  %v5471 = vcombine.high %v5470, %v5470
  %v5473 = vunpack.c.l.s4 1983009808
  %v5474 = vunpack.c.0.s8 %v5473
  %v5475 = vlaneseq
  %v5476 = vshrl.u32 %v5475, 7
  %v5477 = vsub.s32 %v5474, %v5476
  %v5478 = vrot.slane %v5405, %v5477
  %v5479 = vcombine.high %v5478, %v5478
  %s5484 = scalar_lea.vmem [#allocation3], 34
  %5485 = vst [vmem:[%s5484] sm:$0x3] %v5470
  %5486 = vst [vmem:[%s5484 + $0x2] sm:$0x3] %v5471
  %5487 = vst [vmem:[%s5484 + $0x40] sm:$0x3] %v5478
  %5488 = vst [vmem:[%s5484 + $0x42] sm:$0x3] %v5479
  %v5490 = vunpack.c.l.s4 1983009808
  %v5491 = vunpack.c.0.s8 %v5490
  %v5492 = vlaneseq
  %v5493 = vshrl.u32 %v5492, 7
  %v5494 = vsub.s32 %v5491, %v5493
  %v5495 = vrot.slane %v5411, %v5494
  %v5496 = vcombine.high %v5495, %v5495
  %v5498 = vunpack.c.l.s4 1983009808
  %v5499 = vunpack.c.0.s8 %v5498
  %v5500 = vlaneseq
  %v5501 = vshrl.u32 %v5500, 7
  %v5502 = vsub.s32 %v5499, %v5501
  %v5503 = vrot.slane %v5413, %v5502
  %v5504 = vcombine.high %v5503, %v5503
  %s5509 = scalar_lea.vmem [#allocation3], 42
  %5510 = vst [vmem:[%s5509] sm:$0x3] %v5495
  %5511 = vst [vmem:[%s5509 + $0x2] sm:$0x3] %v5496
  %5512 = vst [vmem:[%s5509 + $0x40] sm:$0x3] %v5503
  %5513 = vst [vmem:[%s5509 + $0x42] sm:$0x3] %v5504
  %s5514 = scalar_lea.vmem [#allocation3], 8
  %v5515 = vld [vmem:[%s5514 + $0x1] sm:$0x1]
  %v5516 = vld [vmem:[%s5514 + $0x3] sm:$0x1]
  %v5517 = vld [vmem:[%s5514 + $0x11] sm:$0x1]
  %v5518 = vld [vmem:[%s5514 + $0x13] sm:$0x1]
  %v5519 = vld [vmem:[%s5514 + $0x41] sm:$0x1]
  %v5520 = vld [vmem:[%s5514 + $0x43] sm:$0x1]
  %v5521 = vld [vmem:[%s5514 + $0x51] sm:$0x1]
  %v5522 = vld [vmem:[%s5514 + $0x53] sm:$0x1]
  %v5523 = vpack.c.bf16 %v5515, %v5515
  %v5524 = vpack.c.bf16 %v5516, %v5516
  %v5525 = vpack.c.bf16 %v5517, %v5517
  %v5526 = vpack.c.bf16 %v5518, %v5518
  %v5527 = vpack.c.bf16 %v5519, %v5519
  %v5528 = vpack.c.bf16 %v5520, %v5520
  %v5529 = vpack.c.bf16 %v5521, %v5521
  %v5530 = vpack.c.bf16 %v5522, %v5522
  %v5531 = vld [vmem:[%s3] sm:$0xff]
  %v5532 = vld [vmem:[%s3 + $0x8] sm:$0xff]
  %v5533 = vld [vmem:[%s3 + $0x10] sm:$0xff]
  %v5534 = vld [vmem:[%s3 + $0x18] sm:$0xff]
  %v5535 = vld [vmem:[%s3 + $0x20] sm:$0xff]
  %v5536 = vld [vmem:[%s3 + $0x28] sm:$0xff]
  %v5537 = vld [vmem:[%s3 + $0x30] sm:$0xff]
  %v5538 = vld [vmem:[%s3 + $0x38] sm:$0xff]
  %v5539 = vld [vmem:[%s3 + $0x40] sm:$0xff]
  %v5540 = vld [vmem:[%s3 + $0x48] sm:$0xff]
  %v5541 = vld [vmem:[%s3 + $0x50] sm:$0xff]
  %v5542 = vld [vmem:[%s3 + $0x58] sm:$0xff]
  %v5543 = vld [vmem:[%s3 + $0x60] sm:$0xff]
  %v5544 = vld [vmem:[%s3 + $0x68] sm:$0xff]
  %v5545 = vld [vmem:[%s3 + $0x70] sm:$0xff]
  %v5546 = vld [vmem:[%s3 + $0x78] sm:$0xff]
  %s5547 = scalar_lea.vmem [#allocation3], 10
  %v5548 = vld [vmem:[%s5547] sm:$0x1]
  %v5549 = vld [vmem:[%s5547 + $0x2] sm:$0x1]
  %v5550 = vld [vmem:[%s5547 + $0x10] sm:$0x1]
  %v5551 = vld [vmem:[%s5547 + $0x12] sm:$0x1]
  %v5552 = vld [vmem:[%s5547 + $0x40] sm:$0x1]
  %v5553 = vld [vmem:[%s5547 + $0x42] sm:$0x1]
  %v5554 = vld [vmem:[%s5547 + $0x50] sm:$0x1]
  %v5555 = vld [vmem:[%s5547 + $0x52] sm:$0x1]
  %v5556 = vpack.c.bf16 %v5548, %v5548
  %v5557 = vpack.c.bf16 %v5549, %v5549
  %v5558 = vpack.c.bf16 %v5550, %v5550
  %v5559 = vpack.c.bf16 %v5551, %v5551
  %v5560 = vpack.c.bf16 %v5552, %v5552
  %v5561 = vpack.c.bf16 %v5553, %v5553
  %v5562 = vpack.c.bf16 %v5554, %v5554
  %v5563 = vpack.c.bf16 %v5555, %v5555
  %v5564 = vld [vmem:[%s3 + $0x80] sm:$0xff]
  %v5565 = vld [vmem:[%s3 + $0x88] sm:$0xff]
  %v5566 = vld [vmem:[%s3 + $0x90] sm:$0xff]
  %v5567 = vld [vmem:[%s3 + $0x98] sm:$0xff]
  %v5568 = vld [vmem:[%s3 + $0xa0] sm:$0xff]
  %v5569 = vld [vmem:[%s3 + $0xa8] sm:$0xff]
  %v5570 = vld [vmem:[%s3 + $0xb0] sm:$0xff]
  %v5571 = vld [vmem:[%s3 + $0xb8] sm:$0xff]
  %v5572 = vld [vmem:[%s3 + $0xc0] sm:$0xff]
  %v5573 = vld [vmem:[%s3 + $0xc8] sm:$0xff]
  %v5574 = vld [vmem:[%s3 + $0xd0] sm:$0xff]
  %v5575 = vld [vmem:[%s3 + $0xd8] sm:$0xff]
  %v5576 = vld [vmem:[%s3 + $0xe0] sm:$0xff]
  %v5577 = vld [vmem:[%s3 + $0xe8] sm:$0xff]
  %v5578 = vld [vmem:[%s3 + $0xf0] sm:$0xff]
  %v5579 = vld [vmem:[%s3 + $0xf8] sm:$0xff]
  %v5588 = vunpack.c.l.b16 %v5556
  %v5589 = vunpack.c.l.b16 %v5557
  %v5590 = vunpack.c.l.b16 %v5558
  %v5591 = vunpack.c.l.b16 %v5559
  %v5592 = vunpack.c.l.b16 %v5560
  %v5593 = vunpack.c.l.b16 %v5561
  %v5594 = vunpack.c.l.b16 %v5562
  %v5595 = vunpack.c.l.b16 %v5563
  %v5596 = vrot.slane %v5589, 7
  %v5597 = vsel %vm1116, %v5596, %v5588
  %v5598 = vrot.slane %v5590, 6
  %v5599 = vsel %vm1119, %v5598, %v5597
  %v5600 = vrot.slane %v5591, 5
  %v5601 = vsel %vm1122, %v5600, %v5599
  %v5602 = vrot.slane %v5592, 4
  %v5603 = vsel %vm1125, %v5602, %v5601
  %v5604 = vrot.slane %v5593, 3
  %v5605 = vsel %vm1128, %v5604, %v5603
  %v5606 = vrot.slane %v5594, 2
  %v5607 = vsel %vm1131, %v5606, %v5605
  %v5608 = vrot.slane %v5595, 1
  %v5609 = vsel %vm1134, %v5608, %v5607
  %v5610 = vpack.c.b16 %v5609, %v5609
  %v5628 = vunpack.c.l.b16 %v5564
  %v5629 = vunpack.c.h.b16 %v5564
  %v5630 = vunpack.c.l.b16 %v5565
  %v5631 = vunpack.c.h.b16 %v5565
  %v5632 = vunpack.c.l.b16 %v5566
  %v5633 = vunpack.c.h.b16 %v5566
  %v5634 = vunpack.c.l.b16 %v5567
  %v5635 = vunpack.c.h.b16 %v5567
  %v5636 = vunpack.c.l.b16 %v5568
  %v5637 = vunpack.c.h.b16 %v5568
  %v5638 = vunpack.c.l.b16 %v5569
  %v5639 = vunpack.c.h.b16 %v5569
  %v5640 = vunpack.c.l.b16 %v5570
  %v5641 = vunpack.c.h.b16 %v5570
  %v5642 = vunpack.c.l.b16 %v5571
  %v5643 = vunpack.c.h.b16 %v5571
  %v5644 = vunpack.c.l.b16 %v5572
  %v5645 = vunpack.c.h.b16 %v5572
  %v5646 = vunpack.c.l.b16 %v5573
  %v5647 = vunpack.c.h.b16 %v5573
  %v5648 = vunpack.c.l.b16 %v5574
  %v5649 = vunpack.c.h.b16 %v5574
  %v5650 = vunpack.c.l.b16 %v5575
  %v5651 = vunpack.c.h.b16 %v5575
  %v5652 = vunpack.c.l.b16 %v5576
  %v5653 = vunpack.c.h.b16 %v5576
  %v5654 = vunpack.c.l.b16 %v5577
  %v5655 = vunpack.c.h.b16 %v5577
  %v5656 = vunpack.c.l.b16 %v5578
  %v5657 = vunpack.c.h.b16 %v5578
  %v5658 = vunpack.c.l.b16 %v5579
  %v5659 = vunpack.c.h.b16 %v5579
  %v5660 = vpack.c.b16 %v5630, %v5628
  %v5661 = vpack.c.b16 %v5631, %v5629
  %v5662 = vpack.c.b16 %v5634, %v5632
  %v5663 = vpack.c.b16 %v5635, %v5633
  %v5664 = vpack.c.b16 %v5638, %v5636
  %v5665 = vpack.c.b16 %v5639, %v5637
  %v5666 = vpack.c.b16 %v5642, %v5640
  %v5667 = vpack.c.b16 %v5643, %v5641
  %v5668 = vpack.c.b16 %v5646, %v5644
  %v5669 = vpack.c.b16 %v5647, %v5645
  %v5670 = vpack.c.b16 %v5650, %v5648
  %v5671 = vpack.c.b16 %v5651, %v5649
  %v5672 = vpack.c.b16 %v5654, %v5652
  %v5673 = vpack.c.b16 %v5655, %v5653
  %v5674 = vpack.c.b16 %v5658, %v5656
  %v5675 = vpack.c.b16 %v5659, %v5657
  %5692 = vmatprep.subr.bf16.mxu0 %v5661
  %5693 = vmatpush1.bf16.msra.mxu0 %v5660
  %5694 = vmatprep.subr.bf16.mxu0 %v5663
  %5695 = vmatpush1.bf16.msra.mxu0 %v5662
  %5696 = vmatprep.subr.bf16.mxu0 %v5665
  %5697 = vmatpush1.bf16.msra.mxu0 %v5664
  %5698 = vmatprep.subr.bf16.mxu0 %v5667
  %5699 = vmatpush1.bf16.msra.mxu0 %v5666
  %5700 = vmatprep.subr.bf16.mxu0 %v5669
  %5701 = vmatpush1.bf16.msra.mxu0 %v5668
  %5702 = vmatprep.subr.bf16.mxu0 %v5671
  %5703 = vmatpush1.bf16.msra.mxu0 %v5670
  %5704 = vmatprep.subr.bf16.mxu0 %v5673
  %5705 = vmatpush1.bf16.msra.mxu0 %v5672
  %5706 = vmatprep.subr.bf16.mxu0 %v5675
  %5707 = vmatpush1.bf16.msra.mxu0 %v5674
  %5708 = vmatprep.subr.bf16.mxu0 0
  %5709 = vmatpush1.bf16.msra.mxu0 0
  %5710 = vmatprep.subr.bf16.mxu0 0
  %5711 = vmatpush1.bf16.msra.mxu0 0
  %5712 = vmatprep.subr.bf16.mxu0 0
  %5713 = vmatpush1.bf16.msra.mxu0 0
  %5714 = vmatprep.subr.bf16.mxu0 0
  %5715 = vmatpush1.bf16.msra.mxu0 0
  %5716 = vmatprep.subr.bf16.mxu0 0
  %5717 = vmatpush1.bf16.msra.mxu0 0
  %5718 = vmatprep.subr.bf16.mxu0 0
  %5719 = vmatpush1.bf16.msra.mxu0 0
  %5720 = vmatprep.subr.bf16.mxu0 0
  %5721 = vmatpush1.bf16.msra.mxu0 0
  %5722 = vmatprep.subr.bf16.mxu0 0
  %5723 = vmatpush1.bf16.msra.mxu0 0
  %5724 = vmatprep.mubr.bf16.mxu0 0
  %5725 = vmatmul.mubr.bf16.gmra.mrb[0].mxu0 %v5610
  %v5726 = vpop.f32.mrb[0].mxu0
  %v5727 = vadd.f32 0.0, %v5726
  %v5728 = vpop.f32.mrb[0].mxu0
  %v5729 = vadd.f32 0.0, %v5728
  %v5730 = vpop.f32.mrb[0].mxu0
  %v5731 = vpop.f32.mrb[0].mxu0
  %5732 = vdwg.mxu0
  %v5741 = vunpack.c.l.b16 %v5523
  %v5742 = vunpack.c.l.b16 %v5524
  %v5743 = vunpack.c.l.b16 %v5525
  %v5744 = vunpack.c.l.b16 %v5526
  %v5745 = vunpack.c.l.b16 %v5527
  %v5746 = vunpack.c.l.b16 %v5528
  %v5747 = vunpack.c.l.b16 %v5529
  %v5748 = vunpack.c.l.b16 %v5530
  %v5749 = vrot.slane %v5742, 7
  %v5750 = vsel %vm1116, %v5749, %v5741
  %v5751 = vrot.slane %v5743, 6
  %v5752 = vsel %vm1119, %v5751, %v5750
  %v5753 = vrot.slane %v5744, 5
  %v5754 = vsel %vm1122, %v5753, %v5752
  %v5755 = vrot.slane %v5745, 4
  %v5756 = vsel %vm1125, %v5755, %v5754
  %v5757 = vrot.slane %v5746, 3
  %v5758 = vsel %vm1128, %v5757, %v5756
  %v5759 = vrot.slane %v5747, 2
  %v5760 = vsel %vm1131, %v5759, %v5758
  %v5761 = vrot.slane %v5748, 1
  %v5762 = vsel %vm1134, %v5761, %v5760
  %v5763 = vpack.c.b16 %v5762, %v5762
  %v5781 = vunpack.c.l.b16 %v5531
  %v5782 = vunpack.c.h.b16 %v5531
  %v5783 = vunpack.c.l.b16 %v5532
  %v5784 = vunpack.c.h.b16 %v5532
  %v5785 = vunpack.c.l.b16 %v5533
  %v5786 = vunpack.c.h.b16 %v5533
  %v5787 = vunpack.c.l.b16 %v5534
  %v5788 = vunpack.c.h.b16 %v5534
  %v5789 = vunpack.c.l.b16 %v5535
  %v5790 = vunpack.c.h.b16 %v5535
  %v5791 = vunpack.c.l.b16 %v5536
  %v5792 = vunpack.c.h.b16 %v5536
  %v5793 = vunpack.c.l.b16 %v5537
  %v5794 = vunpack.c.h.b16 %v5537
  %v5795 = vunpack.c.l.b16 %v5538
  %v5796 = vunpack.c.h.b16 %v5538
  %v5797 = vunpack.c.l.b16 %v5539
  %v5798 = vunpack.c.h.b16 %v5539
  %v5799 = vunpack.c.l.b16 %v5540
  %v5800 = vunpack.c.h.b16 %v5540
  %v5801 = vunpack.c.l.b16 %v5541
  %v5802 = vunpack.c.h.b16 %v5541
  %v5803 = vunpack.c.l.b16 %v5542
  %v5804 = vunpack.c.h.b16 %v5542
  %v5805 = vunpack.c.l.b16 %v5543
  %v5806 = vunpack.c.h.b16 %v5543
  %v5807 = vunpack.c.l.b16 %v5544
  %v5808 = vunpack.c.h.b16 %v5544
  %v5809 = vunpack.c.l.b16 %v5545
  %v5810 = vunpack.c.h.b16 %v5545
  %v5811 = vunpack.c.l.b16 %v5546
  %v5812 = vunpack.c.h.b16 %v5546
  %v5813 = vpack.c.b16 %v5783, %v5781
  %v5814 = vpack.c.b16 %v5784, %v5782
  %v5815 = vpack.c.b16 %v5787, %v5785
  %v5816 = vpack.c.b16 %v5788, %v5786
  %v5817 = vpack.c.b16 %v5791, %v5789
  %v5818 = vpack.c.b16 %v5792, %v5790
  %v5819 = vpack.c.b16 %v5795, %v5793
  %v5820 = vpack.c.b16 %v5796, %v5794
  %v5821 = vpack.c.b16 %v5799, %v5797
  %v5822 = vpack.c.b16 %v5800, %v5798
  %v5823 = vpack.c.b16 %v5803, %v5801
  %v5824 = vpack.c.b16 %v5804, %v5802
  %v5825 = vpack.c.b16 %v5807, %v5805
  %v5826 = vpack.c.b16 %v5808, %v5806
  %v5827 = vpack.c.b16 %v5811, %v5809
  %v5828 = vpack.c.b16 %v5812, %v5810
  %5845 = vmatprep.subr.bf16.mxu0 %v5814
  %5846 = vmatpush1.bf16.msra.mxu0 %v5813
  %5847 = vmatprep.subr.bf16.mxu0 %v5816
  %5848 = vmatpush1.bf16.msra.mxu0 %v5815
  %5849 = vmatprep.subr.bf16.mxu0 %v5818
  %5850 = vmatpush1.bf16.msra.mxu0 %v5817
  %5851 = vmatprep.subr.bf16.mxu0 %v5820
  %5852 = vmatpush1.bf16.msra.mxu0 %v5819
  %5853 = vmatprep.subr.bf16.mxu0 %v5822
  %5854 = vmatpush1.bf16.msra.mxu0 %v5821
  %5855 = vmatprep.subr.bf16.mxu0 %v5824
  %5856 = vmatpush1.bf16.msra.mxu0 %v5823
  %5857 = vmatprep.subr.bf16.mxu0 %v5826
  %5858 = vmatpush1.bf16.msra.mxu0 %v5825
  %5859 = vmatprep.subr.bf16.mxu0 %v5828
  %5860 = vmatpush1.bf16.msra.mxu0 %v5827
  %5861 = vmatprep.subr.bf16.mxu0 0
  %5862 = vmatpush1.bf16.msra.mxu0 0
  %5863 = vmatprep.subr.bf16.mxu0 0
  %5864 = vmatpush1.bf16.msra.mxu0 0
  %5865 = vmatprep.subr.bf16.mxu0 0
  %5866 = vmatpush1.bf16.msra.mxu0 0
  %5867 = vmatprep.subr.bf16.mxu0 0
  %5868 = vmatpush1.bf16.msra.mxu0 0
  %5869 = vmatprep.subr.bf16.mxu0 0
  %5870 = vmatpush1.bf16.msra.mxu0 0
  %5871 = vmatprep.subr.bf16.mxu0 0
  %5872 = vmatpush1.bf16.msra.mxu0 0
  %5873 = vmatprep.subr.bf16.mxu0 0
  %5874 = vmatpush1.bf16.msra.mxu0 0
  %5875 = vmatprep.subr.bf16.mxu0 0
  %5876 = vmatpush1.bf16.msra.mxu0 0
  %5877 = vmatprep.mubr.bf16.mxu0 0
  %5878 = vmatmul.mubr.bf16.gmra.mrb[0].mxu0 %v5763
  %v5879 = vpop.f32.mrb[0].mxu0
  %v5880 = vadd.f32 %v5727, %v5879
  %v5881 = vpop.f32.mrb[0].mxu0
  %v5882 = vadd.f32 %v5729, %v5881
  %v5883 = vpop.f32.mrb[0].mxu0
  %v5884 = vpop.f32.mrb[0].mxu0
  %5885 = vdwg.mxu0
  %v5886 = vld [vmem:[%s5547 + $0x1] sm:$0x1]
  %v5887 = vld [vmem:[%s5547 + $0x3] sm:$0x1]
  %v5888 = vld [vmem:[%s5547 + $0x11] sm:$0x1]
  %v5889 = vld [vmem:[%s5547 + $0x13] sm:$0x1]
  %v5890 = vld [vmem:[%s5547 + $0x41] sm:$0x1]
  %v5891 = vld [vmem:[%s5547 + $0x43] sm:$0x1]
  %v5892 = vld [vmem:[%s5547 + $0x51] sm:$0x1]
  %v5893 = vld [vmem:[%s5547 + $0x53] sm:$0x1]
  %v5894 = vpack.c.bf16 %v5886, %v5886
  %v5895 = vpack.c.bf16 %v5887, %v5887
  %v5896 = vpack.c.bf16 %v5888, %v5888
  %v5897 = vpack.c.bf16 %v5889, %v5889
  %v5898 = vpack.c.bf16 %v5890, %v5890
  %v5899 = vpack.c.bf16 %v5891, %v5891
  %v5900 = vpack.c.bf16 %v5892, %v5892
  %v5901 = vpack.c.bf16 %v5893, %v5893
  %v5902 = vld [vmem:[%s3 + $0x100] sm:$0xff]
  %v5903 = vld [vmem:[%s3 + $0x108] sm:$0xff]
  %v5904 = vld [vmem:[%s3 + $0x110] sm:$0xff]
  %v5905 = vld [vmem:[%s3 + $0x118] sm:$0xff]
  %v5906 = vld [vmem:[%s3 + $0x120] sm:$0xff]
  %v5907 = vld [vmem:[%s3 + $0x128] sm:$0xff]
  %v5908 = vld [vmem:[%s3 + $0x130] sm:$0xff]
  %v5909 = vld [vmem:[%s3 + $0x138] sm:$0xff]
  %v5910 = vld [vmem:[%s3 + $0x140] sm:$0xff]
  %v5911 = vld [vmem:[%s3 + $0x148] sm:$0xff]
  %v5912 = vld [vmem:[%s3 + $0x150] sm:$0xff]
  %v5913 = vld [vmem:[%s3 + $0x158] sm:$0xff]
  %v5914 = vld [vmem:[%s3 + $0x160] sm:$0xff]
  %v5915 = vld [vmem:[%s3 + $0x168] sm:$0xff]
  %v5916 = vld [vmem:[%s3 + $0x170] sm:$0xff]
  %v5917 = vld [vmem:[%s3 + $0x178] sm:$0xff]
  %v5926 = vunpack.c.l.b16 %v5894
  %v5927 = vunpack.c.l.b16 %v5895
  %v5928 = vunpack.c.l.b16 %v5896
  %v5929 = vunpack.c.l.b16 %v5897
  %v5930 = vunpack.c.l.b16 %v5898
  %v5931 = vunpack.c.l.b16 %v5899
  %v5932 = vunpack.c.l.b16 %v5900
  %v5933 = vunpack.c.l.b16 %v5901
  %v5934 = vrot.slane %v5927, 7
  %v5935 = vsel %vm1116, %v5934, %v5926
  %v5936 = vrot.slane %v5928, 6
  %v5937 = vsel %vm1119, %v5936, %v5935
  %v5938 = vrot.slane %v5929, 5
  %v5939 = vsel %vm1122, %v5938, %v5937
  %v5940 = vrot.slane %v5930, 4
  %v5941 = vsel %vm1125, %v5940, %v5939
  %v5942 = vrot.slane %v5931, 3
  %v5943 = vsel %vm1128, %v5942, %v5941
  %v5944 = vrot.slane %v5932, 2
  %v5945 = vsel %vm1131, %v5944, %v5943
  %v5946 = vrot.slane %v5933, 1
  %v5947 = vsel %vm1134, %v5946, %v5945
  %v5948 = vpack.c.b16 %v5947, %v5947
  %v5966 = vunpack.c.l.b16 %v5902
  %v5967 = vunpack.c.h.b16 %v5902
  %v5968 = vunpack.c.l.b16 %v5903
  %v5969 = vunpack.c.h.b16 %v5903
  %v5970 = vunpack.c.l.b16 %v5904
  %v5971 = vunpack.c.h.b16 %v5904
  %v5972 = vunpack.c.l.b16 %v5905
  %v5973 = vunpack.c.h.b16 %v5905
  %v5974 = vunpack.c.l.b16 %v5906
  %v5975 = vunpack.c.h.b16 %v5906
  %v5976 = vunpack.c.l.b16 %v5907
  %v5977 = vunpack.c.h.b16 %v5907
  %v5978 = vunpack.c.l.b16 %v5908
  %v5979 = vunpack.c.h.b16 %v5908
  %v5980 = vunpack.c.l.b16 %v5909
  %v5981 = vunpack.c.h.b16 %v5909
  %v5982 = vunpack.c.l.b16 %v5910
  %v5983 = vunpack.c.h.b16 %v5910
  %v5984 = vunpack.c.l.b16 %v5911
  %v5985 = vunpack.c.h.b16 %v5911
  %v5986 = vunpack.c.l.b16 %v5912
  %v5987 = vunpack.c.h.b16 %v5912
  %v5988 = vunpack.c.l.b16 %v5913
  %v5989 = vunpack.c.h.b16 %v5913
  %v5990 = vunpack.c.l.b16 %v5914
  %v5991 = vunpack.c.h.b16 %v5914
  %v5992 = vunpack.c.l.b16 %v5915
  %v5993 = vunpack.c.h.b16 %v5915
  %v5994 = vunpack.c.l.b16 %v5916
  %v5995 = vunpack.c.h.b16 %v5916
  %v5996 = vunpack.c.l.b16 %v5917
  %v5997 = vunpack.c.h.b16 %v5917
  %v5998 = vpack.c.b16 %v5968, %v5966
  %v5999 = vpack.c.b16 %v5969, %v5967
  %v6000 = vpack.c.b16 %v5972, %v5970
  %v6001 = vpack.c.b16 %v5973, %v5971
  %v6002 = vpack.c.b16 %v5976, %v5974
  %v6003 = vpack.c.b16 %v5977, %v5975
  %v6004 = vpack.c.b16 %v5980, %v5978
  %v6005 = vpack.c.b16 %v5981, %v5979
  %v6006 = vpack.c.b16 %v5984, %v5982
  %v6007 = vpack.c.b16 %v5985, %v5983
  %v6008 = vpack.c.b16 %v5988, %v5986
  %v6009 = vpack.c.b16 %v5989, %v5987
  %v6010 = vpack.c.b16 %v5992, %v5990
  %v6011 = vpack.c.b16 %v5993, %v5991
  %v6012 = vpack.c.b16 %v5996, %v5994
  %v6013 = vpack.c.b16 %v5997, %v5995
  %6030 = vmatprep.subr.bf16.mxu0 %v5999
  %6031 = vmatpush1.bf16.msra.mxu0 %v5998
  %6032 = vmatprep.subr.bf16.mxu0 %v6001
  %6033 = vmatpush1.bf16.msra.mxu0 %v6000
  %6034 = vmatprep.subr.bf16.mxu0 %v6003
  %6035 = vmatpush1.bf16.msra.mxu0 %v6002
  %6036 = vmatprep.subr.bf16.mxu0 %v6005
  %6037 = vmatpush1.bf16.msra.mxu0 %v6004
  %6038 = vmatprep.subr.bf16.mxu0 %v6007
  %6039 = vmatpush1.bf16.msra.mxu0 %v6006
  %6040 = vmatprep.subr.bf16.mxu0 %v6009
  %6041 = vmatpush1.bf16.msra.mxu0 %v6008
  %6042 = vmatprep.subr.bf16.mxu0 %v6011
  %6043 = vmatpush1.bf16.msra.mxu0 %v6010
  %6044 = vmatprep.subr.bf16.mxu0 %v6013
  %6045 = vmatpush1.bf16.msra.mxu0 %v6012
  %6046 = vmatprep.subr.bf16.mxu0 0
  %6047 = vmatpush1.bf16.msra.mxu0 0
  %6048 = vmatprep.subr.bf16.mxu0 0
  %6049 = vmatpush1.bf16.msra.mxu0 0
  %6050 = vmatprep.subr.bf16.mxu0 0
  %6051 = vmatpush1.bf16.msra.mxu0 0
  %6052 = vmatprep.subr.bf16.mxu0 0
  %6053 = vmatpush1.bf16.msra.mxu0 0
  %6054 = vmatprep.subr.bf16.mxu0 0
  %6055 = vmatpush1.bf16.msra.mxu0 0
  %6056 = vmatprep.subr.bf16.mxu0 0
  %6057 = vmatpush1.bf16.msra.mxu0 0
  %6058 = vmatprep.subr.bf16.mxu0 0
  %6059 = vmatpush1.bf16.msra.mxu0 0
  %6060 = vmatprep.subr.bf16.mxu0 0
  %6061 = vmatpush1.bf16.msra.mxu0 0
  %6062 = vmatprep.mubr.bf16.mxu0 0
  %6063 = vmatmul.mubr.bf16.gmra.mrb[0].mxu0 %v5948
  %v6064 = vpop.f32.mrb[0].mxu0
  %v6065 = vadd.f32 0.0, %v6064
  %v6066 = vpop.f32.mrb[0].mxu0
  %v6067 = vadd.f32 0.0, %v6066
  %v6068 = vpop.f32.mrb[0].mxu0
  %v6069 = vpop.f32.mrb[0].mxu0
  %6070 = vdwg.mxu0
  %v6071 = vadd.f32 %v5880, %v6065
  %v6072 = vadd.f32 %v5882, %v6067
  %s6073 = scalar_lea.vmem [#allocation3], 12
  %v6074 = vld [vmem:[%s6073] sm:$0x1]
  %v6075 = vld [vmem:[%s6073 + $0x2] sm:$0x1]
  %v6076 = vld [vmem:[%s6073 + $0x10] sm:$0x1]
  %v6077 = vld [vmem:[%s6073 + $0x12] sm:$0x1]
  %v6078 = vld [vmem:[%s6073 + $0x40] sm:$0x1]
  %v6079 = vld [vmem:[%s6073 + $0x42] sm:$0x1]
  %v6080 = vld [vmem:[%s6073 + $0x50] sm:$0x1]
  %v6081 = vld [vmem:[%s6073 + $0x52] sm:$0x1]
  %v6082 = vpack.c.bf16 %v6074, %v6074
  %v6083 = vpack.c.bf16 %v6075, %v6075
  %v6084 = vpack.c.bf16 %v6076, %v6076
  %v6085 = vpack.c.bf16 %v6077, %v6077
  %v6086 = vpack.c.bf16 %v6078, %v6078
  %v6087 = vpack.c.bf16 %v6079, %v6079
  %v6088 = vpack.c.bf16 %v6080, %v6080
  %v6089 = vpack.c.bf16 %v6081, %v6081
  %v6090 = vld [vmem:[%s3 + $0x180] sm:$0xff]
  %v6091 = vld [vmem:[%s3 + $0x188] sm:$0xff]
  %v6092 = vld [vmem:[%s3 + $0x190] sm:$0xff]
  %v6093 = vld [vmem:[%s3 + $0x198] sm:$0xff]
  %v6094 = vld [vmem:[%s3 + $0x1a0] sm:$0xff]
  %v6095 = vld [vmem:[%s3 + $0x1a8] sm:$0xff]
  %v6096 = vld [vmem:[%s3 + $0x1b0] sm:$0xff]
  %v6097 = vld [vmem:[%s3 + $0x1b8] sm:$0xff]
  %v6098 = vld [vmem:[%s3 + $0x1c0] sm:$0xff]
  %v6099 = vld [vmem:[%s3 + $0x1c8] sm:$0xff]
  %v6100 = vld [vmem:[%s3 + $0x1d0] sm:$0xff]
  %v6101 = vld [vmem:[%s3 + $0x1d8] sm:$0xff]
  %v6102 = vld [vmem:[%s3 + $0x1e0] sm:$0xff]
  %v6103 = vld [vmem:[%s3 + $0x1e8] sm:$0xff]
  %v6104 = vld [vmem:[%s3 + $0x1f0] sm:$0xff]
  %v6105 = vld [vmem:[%s3 + $0x1f8] sm:$0xff]
  %v6114 = vunpack.c.l.b16 %v6082
  %v6115 = vunpack.c.l.b16 %v6083
  %v6116 = vunpack.c.l.b16 %v6084
  %v6117 = vunpack.c.l.b16 %v6085
  %v6118 = vunpack.c.l.b16 %v6086
  %v6119 = vunpack.c.l.b16 %v6087
  %v6120 = vunpack.c.l.b16 %v6088
  %v6121 = vunpack.c.l.b16 %v6089
  %v6122 = vrot.slane %v6115, 7
  %v6123 = vsel %vm1116, %v6122, %v6114
  %v6124 = vrot.slane %v6116, 6
  %v6125 = vsel %vm1119, %v6124, %v6123
  %v6126 = vrot.slane %v6117, 5
  %v6127 = vsel %vm1122, %v6126, %v6125
  %v6128 = vrot.slane %v6118, 4
  %v6129 = vsel %vm1125, %v6128, %v6127
  %v6130 = vrot.slane %v6119, 3
  %v6131 = vsel %vm1128, %v6130, %v6129
  %v6132 = vrot.slane %v6120, 2
  %v6133 = vsel %vm1131, %v6132, %v6131
  %v6134 = vrot.slane %v6121, 1
  %v6135 = vsel %vm1134, %v6134, %v6133
  %v6136 = vpack.c.b16 %v6135, %v6135
  %v6154 = vunpack.c.l.b16 %v6090
  %v6155 = vunpack.c.h.b16 %v6090
  %v6156 = vunpack.c.l.b16 %v6091
  %v6157 = vunpack.c.h.b16 %v6091
  %v6158 = vunpack.c.l.b16 %v6092
  %v6159 = vunpack.c.h.b16 %v6092
  %v6160 = vunpack.c.l.b16 %v6093
  %v6161 = vunpack.c.h.b16 %v6093
  %v6162 = vunpack.c.l.b16 %v6094
  %v6163 = vunpack.c.h.b16 %v6094
  %v6164 = vunpack.c.l.b16 %v6095
  %v6165 = vunpack.c.h.b16 %v6095
  %v6166 = vunpack.c.l.b16 %v6096
  %v6167 = vunpack.c.h.b16 %v6096
  %v6168 = vunpack.c.l.b16 %v6097
  %v6169 = vunpack.c.h.b16 %v6097
  %v6170 = vunpack.c.l.b16 %v6098
  %v6171 = vunpack.c.h.b16 %v6098
  %v6172 = vunpack.c.l.b16 %v6099
  %v6173 = vunpack.c.h.b16 %v6099
  %v6174 = vunpack.c.l.b16 %v6100
  %v6175 = vunpack.c.h.b16 %v6100
  %v6176 = vunpack.c.l.b16 %v6101
  %v6177 = vunpack.c.h.b16 %v6101
  %v6178 = vunpack.c.l.b16 %v6102
  %v6179 = vunpack.c.h.b16 %v6102
  %v6180 = vunpack.c.l.b16 %v6103
  %v6181 = vunpack.c.h.b16 %v6103
  %v6182 = vunpack.c.l.b16 %v6104
  %v6183 = vunpack.c.h.b16 %v6104
  %v6184 = vunpack.c.l.b16 %v6105
  %v6185 = vunpack.c.h.b16 %v6105
  %v6186 = vpack.c.b16 %v6156, %v6154
  %v6187 = vpack.c.b16 %v6157, %v6155
  %v6188 = vpack.c.b16 %v6160, %v6158
  %v6189 = vpack.c.b16 %v6161, %v6159
  %v6190 = vpack.c.b16 %v6164, %v6162
  %v6191 = vpack.c.b16 %v6165, %v6163
  %v6192 = vpack.c.b16 %v6168, %v6166
  %v6193 = vpack.c.b16 %v6169, %v6167
  %v6194 = vpack.c.b16 %v6172, %v6170
  %v6195 = vpack.c.b16 %v6173, %v6171
  %v6196 = vpack.c.b16 %v6176, %v6174
  %v6197 = vpack.c.b16 %v6177, %v6175
  %v6198 = vpack.c.b16 %v6180, %v6178
  %v6199 = vpack.c.b16 %v6181, %v6179
  %v6200 = vpack.c.b16 %v6184, %v6182
  %v6201 = vpack.c.b16 %v6185, %v6183
  %6218 = vmatprep.subr.bf16.mxu0 %v6187
  %6219 = vmatpush1.bf16.msra.mxu0 %v6186
  %6220 = vmatprep.subr.bf16.mxu0 %v6189
  %6221 = vmatpush1.bf16.msra.mxu0 %v6188
  %6222 = vmatprep.subr.bf16.mxu0 %v6191
  %6223 = vmatpush1.bf16.msra.mxu0 %v6190
  %6224 = vmatprep.subr.bf16.mxu0 %v6193
  %6225 = vmatpush1.bf16.msra.mxu0 %v6192
  %6226 = vmatprep.subr.bf16.mxu0 %v6195
  %6227 = vmatpush1.bf16.msra.mxu0 %v6194
  %6228 = vmatprep.subr.bf16.mxu0 %v6197
  %6229 = vmatpush1.bf16.msra.mxu0 %v6196
  %6230 = vmatprep.subr.bf16.mxu0 %v6199
  %6231 = vmatpush1.bf16.msra.mxu0 %v6198
  %6232 = vmatprep.subr.bf16.mxu0 %v6201
  %6233 = vmatpush1.bf16.msra.mxu0 %v6200
  %6234 = vmatprep.subr.bf16.mxu0 0
  %6235 = vmatpush1.bf16.msra.mxu0 0
  %6236 = vmatprep.subr.bf16.mxu0 0
  %6237 = vmatpush1.bf16.msra.mxu0 0
  %6238 = vmatprep.subr.bf16.mxu0 0
  %6239 = vmatpush1.bf16.msra.mxu0 0
  %6240 = vmatprep.subr.bf16.mxu0 0
  %6241 = vmatpush1.bf16.msra.mxu0 0
  %6242 = vmatprep.subr.bf16.mxu0 0
  %6243 = vmatpush1.bf16.msra.mxu0 0
  %6244 = vmatprep.subr.bf16.mxu0 0
  %6245 = vmatpush1.bf16.msra.mxu0 0
  %6246 = vmatprep.subr.bf16.mxu0 0
  %6247 = vmatpush1.bf16.msra.mxu0 0
  %6248 = vmatprep.subr.bf16.mxu0 0
  %6249 = vmatpush1.bf16.msra.mxu0 0
  %6250 = vmatprep.mubr.bf16.mxu0 0
  %6251 = vmatmul.mubr.bf16.gmra.mrb[0].mxu0 %v6136
  %v6252 = vpop.f32.mrb[0].mxu0
  %v6253 = vadd.f32 0.0, %v6252
  %v6254 = vpop.f32.mrb[0].mxu0
  %v6255 = vadd.f32 0.0, %v6254
  %v6256 = vpop.f32.mrb[0].mxu0
  %v6257 = vpop.f32.mrb[0].mxu0
  %6258 = vdwg.mxu0
  %v6259 = vadd.f32 %v6071, %v6253
  %v6260 = vadd.f32 %v6072, %v6255
  %s6261 = scalar_lea.vmem [#allocation3], 16
  %v6262 = vld [vmem:[%s6261 + $0x1] sm:$0x1]
  %v6263 = vld [vmem:[%s6261 + $0x3] sm:$0x1]
  %v6264 = vld [vmem:[%s6261 + $0x11] sm:$0x1]
  %v6265 = vld [vmem:[%s6261 + $0x13] sm:$0x1]
  %v6266 = vld [vmem:[%s6261 + $0x41] sm:$0x1]
  %v6267 = vld [vmem:[%s6261 + $0x43] sm:$0x1]
  %v6268 = vld [vmem:[%s6261 + $0x51] sm:$0x1]
  %v6269 = vld [vmem:[%s6261 + $0x53] sm:$0x1]
  %v6270 = vpack.c.bf16 %v6262, %v6262
  %v6271 = vpack.c.bf16 %v6263, %v6263
  %v6272 = vpack.c.bf16 %v6264, %v6264
  %v6273 = vpack.c.bf16 %v6265, %v6265
  %v6274 = vpack.c.bf16 %v6266, %v6266
  %v6275 = vpack.c.bf16 %v6267, %v6267
  %v6276 = vpack.c.bf16 %v6268, %v6268
  %v6277 = vpack.c.bf16 %v6269, %v6269
  %v6278 = vld [vmem:[%s3 + $0x200] sm:$0xff]
  %v6279 = vld [vmem:[%s3 + $0x208] sm:$0xff]
  %v6280 = vld [vmem:[%s3 + $0x210] sm:$0xff]
  %v6281 = vld [vmem:[%s3 + $0x218] sm:$0xff]
  %v6282 = vld [vmem:[%s3 + $0x220] sm:$0xff]
  %v6283 = vld [vmem:[%s3 + $0x228] sm:$0xff]
  %v6284 = vld [vmem:[%s3 + $0x230] sm:$0xff]
  %v6285 = vld [vmem:[%s3 + $0x238] sm:$0xff]
  %v6286 = vld [vmem:[%s3 + $0x240] sm:$0xff]
  %v6287 = vld [vmem:[%s3 + $0x248] sm:$0xff]
  %v6288 = vld [vmem:[%s3 + $0x250] sm:$0xff]
  %v6289 = vld [vmem:[%s3 + $0x258] sm:$0xff]
  %v6290 = vld [vmem:[%s3 + $0x260] sm:$0xff]
  %v6291 = vld [vmem:[%s3 + $0x268] sm:$0xff]
  %v6292 = vld [vmem:[%s3 + $0x270] sm:$0xff]
  %v6293 = vld [vmem:[%s3 + $0x278] sm:$0xff]
  %v6302 = vunpack.c.l.b16 %v6270
  %v6303 = vunpack.c.l.b16 %v6271
  %v6304 = vunpack.c.l.b16 %v6272
  %v6305 = vunpack.c.l.b16 %v6273
  %v6306 = vunpack.c.l.b16 %v6274
  %v6307 = vunpack.c.l.b16 %v6275
  %v6308 = vunpack.c.l.b16 %v6276
  %v6309 = vunpack.c.l.b16 %v6277
  %v6310 = vrot.slane %v6303, 7
  %v6311 = vsel %vm1116, %v6310, %v6302
  %v6312 = vrot.slane %v6304, 6
  %v6313 = vsel %vm1119, %v6312, %v6311
  %v6314 = vrot.slane %v6305, 5
  %v6315 = vsel %vm1122, %v6314, %v6313
  %v6316 = vrot.slane %v6306, 4
  %v6317 = vsel %vm1125, %v6316, %v6315
  %v6318 = vrot.slane %v6307, 3
  %v6319 = vsel %vm1128, %v6318, %v6317
  %v6320 = vrot.slane %v6308, 2
  %v6321 = vsel %vm1131, %v6320, %v6319
  %v6322 = vrot.slane %v6309, 1
  %v6323 = vsel %vm1134, %v6322, %v6321
  %v6324 = vpack.c.b16 %v6323, %v6323
  %v6342 = vunpack.c.l.b16 %v6278
  %v6343 = vunpack.c.h.b16 %v6278
  %v6344 = vunpack.c.l.b16 %v6279
  %v6345 = vunpack.c.h.b16 %v6279
  %v6346 = vunpack.c.l.b16 %v6280
  %v6347 = vunpack.c.h.b16 %v6280
  %v6348 = vunpack.c.l.b16 %v6281
  %v6349 = vunpack.c.h.b16 %v6281
  %v6350 = vunpack.c.l.b16 %v6282
  %v6351 = vunpack.c.h.b16 %v6282
  %v6352 = vunpack.c.l.b16 %v6283
  %v6353 = vunpack.c.h.b16 %v6283
  %v6354 = vunpack.c.l.b16 %v6284
  %v6355 = vunpack.c.h.b16 %v6284
  %v6356 = vunpack.c.l.b16 %v6285
  %v6357 = vunpack.c.h.b16 %v6285
  %v6358 = vunpack.c.l.b16 %v6286
  %v6359 = vunpack.c.h.b16 %v6286
  %v6360 = vunpack.c.l.b16 %v6287
  %v6361 = vunpack.c.h.b16 %v6287
  %v6362 = vunpack.c.l.b16 %v6288
  %v6363 = vunpack.c.h.b16 %v6288
  %v6364 = vunpack.c.l.b16 %v6289
  %v6365 = vunpack.c.h.b16 %v6289
  %v6366 = vunpack.c.l.b16 %v6290
  %v6367 = vunpack.c.h.b16 %v6290
  %v6368 = vunpack.c.l.b16 %v6291
  %v6369 = vunpack.c.h.b16 %v6291
  %v6370 = vunpack.c.l.b16 %v6292
  %v6371 = vunpack.c.h.b16 %v6292
  %v6372 = vunpack.c.l.b16 %v6293
  %v6373 = vunpack.c.h.b16 %v6293
  %v6374 = vpack.c.b16 %v6344, %v6342
  %v6375 = vpack.c.b16 %v6345, %v6343
  %v6376 = vpack.c.b16 %v6348, %v6346
  %v6377 = vpack.c.b16 %v6349, %v6347
  %v6378 = vpack.c.b16 %v6352, %v6350
  %v6379 = vpack.c.b16 %v6353, %v6351
  %v6380 = vpack.c.b16 %v6356, %v6354
  %v6381 = vpack.c.b16 %v6357, %v6355
  %v6382 = vpack.c.b16 %v6360, %v6358
  %v6383 = vpack.c.b16 %v6361, %v6359
  %v6384 = vpack.c.b16 %v6364, %v6362
  %v6385 = vpack.c.b16 %v6365, %v6363
  %v6386 = vpack.c.b16 %v6368, %v6366
  %v6387 = vpack.c.b16 %v6369, %v6367
  %v6388 = vpack.c.b16 %v6372, %v6370
  %v6389 = vpack.c.b16 %v6373, %v6371
  %6406 = vmatprep.subr.bf16.mxu0 %v6375
  %6407 = vmatpush1.bf16.msra.mxu0 %v6374
  %6408 = vmatprep.subr.bf16.mxu0 %v6377
  %6409 = vmatpush1.bf16.msra.mxu0 %v6376
  %6410 = vmatprep.subr.bf16.mxu0 %v6379
  %6411 = vmatpush1.bf16.msra.mxu0 %v6378
  %6412 = vmatprep.subr.bf16.mxu0 %v6381
  %6413 = vmatpush1.bf16.msra.mxu0 %v6380
  %6414 = vmatprep.subr.bf16.mxu0 %v6383
  %6415 = vmatpush1.bf16.msra.mxu0 %v6382
  %6416 = vmatprep.subr.bf16.mxu0 %v6385
  %6417 = vmatpush1.bf16.msra.mxu0 %v6384
  %6418 = vmatprep.subr.bf16.mxu0 %v6387
  %6419 = vmatpush1.bf16.msra.mxu0 %v6386
  %6420 = vmatprep.subr.bf16.mxu0 %v6389
  %6421 = vmatpush1.bf16.msra.mxu0 %v6388
  %6422 = vmatprep.subr.bf16.mxu0 0
  %6423 = vmatpush1.bf16.msra.mxu0 0
  %6424 = vmatprep.subr.bf16.mxu0 0
  %6425 = vmatpush1.bf16.msra.mxu0 0
  %6426 = vmatprep.subr.bf16.mxu0 0
  %6427 = vmatpush1.bf16.msra.mxu0 0
  %6428 = vmatprep.subr.bf16.mxu0 0
  %6429 = vmatpush1.bf16.msra.mxu0 0
  %6430 = vmatprep.subr.bf16.mxu0 0
  %6431 = vmatpush1.bf16.msra.mxu0 0
  %6432 = vmatprep.subr.bf16.mxu0 0
  %6433 = vmatpush1.bf16.msra.mxu0 0
  %6434 = vmatprep.subr.bf16.mxu0 0
  %6435 = vmatpush1.bf16.msra.mxu0 0
  %6436 = vmatprep.subr.bf16.mxu0 0
  %6437 = vmatpush1.bf16.msra.mxu0 0
  %6438 = vmatprep.mubr.bf16.mxu0 0
  %6439 = vmatmul.mubr.bf16.gmra.mrb[0].mxu0 %v6324
  %v6440 = vpop.f32.mrb[0].mxu0
  %v6441 = vadd.f32 0.0, %v6440
  %v6442 = vpop.f32.mrb[0].mxu0
  %v6443 = vadd.f32 0.0, %v6442
  %v6444 = vpop.f32.mrb[0].mxu0
  %v6445 = vpop.f32.mrb[0].mxu0
  %6446 = vdwg.mxu0
  %v6447 = vadd.f32 %v6259, %v6441
  %v6448 = vadd.f32 %v6260, %v6443
  %v6449 = vld [vmem:[%s5434] sm:$0x1]
  %v6450 = vld [vmem:[%s5434 + $0x2] sm:$0x1]
  %v6451 = vld [vmem:[%s5434 + $0x10] sm:$0x1]
  %v6452 = vld [vmem:[%s5434 + $0x12] sm:$0x1]
  %v6453 = vld [vmem:[%s5434 + $0x40] sm:$0x1]
  %v6454 = vld [vmem:[%s5434 + $0x42] sm:$0x1]
  %v6455 = vld [vmem:[%s5434 + $0x50] sm:$0x1]
  %v6456 = vld [vmem:[%s5434 + $0x52] sm:$0x1]
  %v6457 = vpack.c.bf16 %v6449, %v6449
  %v6458 = vpack.c.bf16 %v6450, %v6450
  %v6459 = vpack.c.bf16 %v6451, %v6451
  %v6460 = vpack.c.bf16 %v6452, %v6452
  %v6461 = vpack.c.bf16 %v6453, %v6453
  %v6462 = vpack.c.bf16 %v6454, %v6454
  %v6463 = vpack.c.bf16 %v6455, %v6455
  %v6464 = vpack.c.bf16 %v6456, %v6456
  %v6465 = vld [vmem:[%s3 + $0x280] sm:$0xff]
  %v6466 = vld [vmem:[%s3 + $0x288] sm:$0xff]
  %v6467 = vld [vmem:[%s3 + $0x290] sm:$0xff]
  %v6468 = vld [vmem:[%s3 + $0x298] sm:$0xff]
  %v6469 = vld [vmem:[%s3 + $0x2a0] sm:$0xff]
  %v6470 = vld [vmem:[%s3 + $0x2a8] sm:$0xff]
  %v6471 = vld [vmem:[%s3 + $0x2b0] sm:$0xff]
  %v6472 = vld [vmem:[%s3 + $0x2b8] sm:$0xff]
  %v6473 = vld [vmem:[%s3 + $0x2c0] sm:$0xff]
  %v6474 = vld [vmem:[%s3 + $0x2c8] sm:$0xff]
  %v6475 = vld [vmem:[%s3 + $0x2d0] sm:$0xff]
  %v6476 = vld [vmem:[%s3 + $0x2d8] sm:$0xff]
  %v6477 = vld [vmem:[%s3 + $0x2e0] sm:$0xff]
  %v6478 = vld [vmem:[%s3 + $0x2e8] sm:$0xff]
  %v6479 = vld [vmem:[%s3 + $0x2f0] sm:$0xff]
  %v6480 = vld [vmem:[%s3 + $0x2f8] sm:$0xff]
  %v6489 = vunpack.c.l.b16 %v6457
  %v6490 = vunpack.c.l.b16 %v6458
  %v6491 = vunpack.c.l.b16 %v6459
  %v6492 = vunpack.c.l.b16 %v6460
  %v6493 = vunpack.c.l.b16 %v6461
  %v6494 = vunpack.c.l.b16 %v6462
  %v6495 = vunpack.c.l.b16 %v6463
  %v6496 = vunpack.c.l.b16 %v6464
  %v6497 = vrot.slane %v6490, 7
  %v6498 = vsel %vm1116, %v6497, %v6489
  %v6499 = vrot.slane %v6491, 6
  %v6500 = vsel %vm1119, %v6499, %v6498
  %v6501 = vrot.slane %v6492, 5
  %v6502 = vsel %vm1122, %v6501, %v6500
  %v6503 = vrot.slane %v6493, 4
  %v6504 = vsel %vm1125, %v6503, %v6502
  %v6505 = vrot.slane %v6494, 3
  %v6506 = vsel %vm1128, %v6505, %v6504
  %v6507 = vrot.slane %v6495, 2
  %v6508 = vsel %vm1131, %v6507, %v6506
  %v6509 = vrot.slane %v6496, 1
  %v6510 = vsel %vm1134, %v6509, %v6508
  %v6511 = vpack.c.b16 %v6510, %v6510
  %v6529 = vunpack.c.l.b16 %v6465
  %v6530 = vunpack.c.h.b16 %v6465
  %v6531 = vunpack.c.l.b16 %v6466
  %v6532 = vunpack.c.h.b16 %v6466
  %v6533 = vunpack.c.l.b16 %v6467
  %v6534 = vunpack.c.h.b16 %v6467
  %v6535 = vunpack.c.l.b16 %v6468
  %v6536 = vunpack.c.h.b16 %v6468
  %v6537 = vunpack.c.l.b16 %v6469
  %v6538 = vunpack.c.h.b16 %v6469
  %v6539 = vunpack.c.l.b16 %v6470
  %v6540 = vunpack.c.h.b16 %v6470
  %v6541 = vunpack.c.l.b16 %v6471
  %v6542 = vunpack.c.h.b16 %v6471
  %v6543 = vunpack.c.l.b16 %v6472
  %v6544 = vunpack.c.h.b16 %v6472
  %v6545 = vunpack.c.l.b16 %v6473
  %v6546 = vunpack.c.h.b16 %v6473
  %v6547 = vunpack.c.l.b16 %v6474
  %v6548 = vunpack.c.h.b16 %v6474
  %v6549 = vunpack.c.l.b16 %v6475
  %v6550 = vunpack.c.h.b16 %v6475
  %v6551 = vunpack.c.l.b16 %v6476
  %v6552 = vunpack.c.h.b16 %v6476
  %v6553 = vunpack.c.l.b16 %v6477
  %v6554 = vunpack.c.h.b16 %v6477
  %v6555 = vunpack.c.l.b16 %v6478
  %v6556 = vunpack.c.h.b16 %v6478
  %v6557 = vunpack.c.l.b16 %v6479
  %v6558 = vunpack.c.h.b16 %v6479
  %v6559 = vunpack.c.l.b16 %v6480
  %v6560 = vunpack.c.h.b16 %v6480
  %v6561 = vpack.c.b16 %v6531, %v6529
  %v6562 = vpack.c.b16 %v6532, %v6530
  %v6563 = vpack.c.b16 %v6535, %v6533
  %v6564 = vpack.c.b16 %v6536, %v6534
  %v6565 = vpack.c.b16 %v6539, %v6537
  %v6566 = vpack.c.b16 %v6540, %v6538
  %v6567 = vpack.c.b16 %v6543, %v6541
  %v6568 = vpack.c.b16 %v6544, %v6542
  %v6569 = vpack.c.b16 %v6547, %v6545
  %v6570 = vpack.c.b16 %v6548, %v6546
  %v6571 = vpack.c.b16 %v6551, %v6549
  %v6572 = vpack.c.b16 %v6552, %v6550
  %v6573 = vpack.c.b16 %v6555, %v6553
  %v6574 = vpack.c.b16 %v6556, %v6554
  %v6575 = vpack.c.b16 %v6559, %v6557
  %v6576 = vpack.c.b16 %v6560, %v6558
  %6593 = vmatprep.subr.bf16.mxu0 %v6562
  %6594 = vmatpush1.bf16.msra.mxu0 %v6561
  %6595 = vmatprep.subr.bf16.mxu0 %v6564
  %6596 = vmatpush1.bf16.msra.mxu0 %v6563
  %6597 = vmatprep.subr.bf16.mxu0 %v6566
  %6598 = vmatpush1.bf16.msra.mxu0 %v6565
  %6599 = vmatprep.subr.bf16.mxu0 %v6568
  %6600 = vmatpush1.bf16.msra.mxu0 %v6567
  %6601 = vmatprep.subr.bf16.mxu0 %v6570
  %6602 = vmatpush1.bf16.msra.mxu0 %v6569
  %6603 = vmatprep.subr.bf16.mxu0 %v6572
  %6604 = vmatpush1.bf16.msra.mxu0 %v6571
  %6605 = vmatprep.subr.bf16.mxu0 %v6574
  %6606 = vmatpush1.bf16.msra.mxu0 %v6573
  %6607 = vmatprep.subr.bf16.mxu0 %v6576
  %6608 = vmatpush1.bf16.msra.mxu0 %v6575
  %6609 = vmatprep.subr.bf16.mxu0 0
  %6610 = vmatpush1.bf16.msra.mxu0 0
  %6611 = vmatprep.subr.bf16.mxu0 0
  %6612 = vmatpush1.bf16.msra.mxu0 0
  %6613 = vmatprep.subr.bf16.mxu0 0
  %6614 = vmatpush1.bf16.msra.mxu0 0
  %6615 = vmatprep.subr.bf16.mxu0 0
  %6616 = vmatpush1.bf16.msra.mxu0 0
  %6617 = vmatprep.subr.bf16.mxu0 0
  %6618 = vmatpush1.bf16.msra.mxu0 0
  %6619 = vmatprep.subr.bf16.mxu0 0
  %6620 = vmatpush1.bf16.msra.mxu0 0
  %6621 = vmatprep.subr.bf16.mxu0 0
  %6622 = vmatpush1.bf16.msra.mxu0 0
  %6623 = vmatprep.subr.bf16.mxu0 0
  %6624 = vmatpush1.bf16.msra.mxu0 0
  %6625 = vmatprep.mubr.bf16.mxu0 0
  %6626 = vmatmul.mubr.bf16.gmra.mrb[0].mxu0 %v6511
  %v6627 = vpop.f32.mrb[0].mxu0
  %v6628 = vadd.f32 0.0, %v6627
  %v6629 = vpop.f32.mrb[0].mxu0
  %v6630 = vadd.f32 0.0, %v6629
  %v6631 = vpop.f32.mrb[0].mxu0
  %v6632 = vpop.f32.mrb[0].mxu0
  %6633 = vdwg.mxu0
  %v6634 = vadd.f32 %v6447, %v6628
  %v6635 = vadd.f32 %v6448, %v6630
  %v6636 = vld [vmem:[%s5434 + $0x1] sm:$0x1]
  %v6637 = vld [vmem:[%s5434 + $0x3] sm:$0x1]
  %v6638 = vld [vmem:[%s5434 + $0x11] sm:$0x1]
  %v6639 = vld [vmem:[%s5434 + $0x13] sm:$0x1]
  %v6640 = vld [vmem:[%s5434 + $0x41] sm:$0x1]
  %v6641 = vld [vmem:[%s5434 + $0x43] sm:$0x1]
  %v6642 = vld [vmem:[%s5434 + $0x51] sm:$0x1]
  %v6643 = vld [vmem:[%s5434 + $0x53] sm:$0x1]
  %v6644 = vpack.c.bf16 %v6636, %v6636
  %v6645 = vpack.c.bf16 %v6637, %v6637
  %v6646 = vpack.c.bf16 %v6638, %v6638
  %v6647 = vpack.c.bf16 %v6639, %v6639
  %v6648 = vpack.c.bf16 %v6640, %v6640
  %v6649 = vpack.c.bf16 %v6641, %v6641
  %v6650 = vpack.c.bf16 %v6642, %v6642
  %v6651 = vpack.c.bf16 %v6643, %v6643
  %v6652 = vld [vmem:[%s3 + $0x300] sm:$0xff]
  %v6653 = vld [vmem:[%s3 + $0x308] sm:$0xff]
  %v6654 = vld [vmem:[%s3 + $0x310] sm:$0xff]
  %v6655 = vld [vmem:[%s3 + $0x318] sm:$0xff]
  %v6656 = vld [vmem:[%s3 + $0x320] sm:$0xff]
  %v6657 = vld [vmem:[%s3 + $0x328] sm:$0xff]
  %v6658 = vld [vmem:[%s3 + $0x330] sm:$0xff]
  %v6659 = vld [vmem:[%s3 + $0x338] sm:$0xff]
  %v6660 = vld [vmem:[%s3 + $0x340] sm:$0xff]
  %v6661 = vld [vmem:[%s3 + $0x348] sm:$0xff]
  %v6662 = vld [vmem:[%s3 + $0x350] sm:$0xff]
  %v6663 = vld [vmem:[%s3 + $0x358] sm:$0xff]
  %v6664 = vld [vmem:[%s3 + $0x360] sm:$0xff]
  %v6665 = vld [vmem:[%s3 + $0x368] sm:$0xff]
  %v6666 = vld [vmem:[%s3 + $0x370] sm:$0xff]
  %v6667 = vld [vmem:[%s3 + $0x378] sm:$0xff]
  %v6676 = vunpack.c.l.b16 %v6644
  %v6677 = vunpack.c.l.b16 %v6645
  %v6678 = vunpack.c.l.b16 %v6646
  %v6679 = vunpack.c.l.b16 %v6647
  %v6680 = vunpack.c.l.b16 %v6648
  %v6681 = vunpack.c.l.b16 %v6649
  %v6682 = vunpack.c.l.b16 %v6650
  %v6683 = vunpack.c.l.b16 %v6651
  %v6684 = vrot.slane %v6677, 7
  %v6685 = vsel %vm1116, %v6684, %v6676
  %v6686 = vrot.slane %v6678, 6
  %v6687 = vsel %vm1119, %v6686, %v6685
  %v6688 = vrot.slane %v6679, 5
  %v6689 = vsel %vm1122, %v6688, %v6687
  %v6690 = vrot.slane %v6680, 4
  %v6691 = vsel %vm1125, %v6690, %v6689
  %v6692 = vrot.slane %v6681, 3
  %v6693 = vsel %vm1128, %v6692, %v6691
  %v6694 = vrot.slane %v6682, 2
  %v6695 = vsel %vm1131, %v6694, %v6693
  %v6696 = vrot.slane %v6683, 1
  %v6697 = vsel %vm1134, %v6696, %v6695
  %v6698 = vpack.c.b16 %v6697, %v6697
  %v6716 = vunpack.c.l.b16 %v6652
  %v6717 = vunpack.c.h.b16 %v6652
  %v6718 = vunpack.c.l.b16 %v6653
  %v6719 = vunpack.c.h.b16 %v6653
  %v6720 = vunpack.c.l.b16 %v6654
  %v6721 = vunpack.c.h.b16 %v6654
  %v6722 = vunpack.c.l.b16 %v6655
  %v6723 = vunpack.c.h.b16 %v6655
  %v6724 = vunpack.c.l.b16 %v6656
  %v6725 = vunpack.c.h.b16 %v6656
  %v6726 = vunpack.c.l.b16 %v6657
  %v6727 = vunpack.c.h.b16 %v6657
  %v6728 = vunpack.c.l.b16 %v6658
  %v6729 = vunpack.c.h.b16 %v6658
  %v6730 = vunpack.c.l.b16 %v6659
  %v6731 = vunpack.c.h.b16 %v6659
  %v6732 = vunpack.c.l.b16 %v6660
  %v6733 = vunpack.c.h.b16 %v6660
  %v6734 = vunpack.c.l.b16 %v6661
  %v6735 = vunpack.c.h.b16 %v6661
  %v6736 = vunpack.c.l.b16 %v6662
  %v6737 = vunpack.c.h.b16 %v6662
  %v6738 = vunpack.c.l.b16 %v6663
  %v6739 = vunpack.c.h.b16 %v6663
  %v6740 = vunpack.c.l.b16 %v6664
  %v6741 = vunpack.c.h.b16 %v6664
  %v6742 = vunpack.c.l.b16 %v6665
  %v6743 = vunpack.c.h.b16 %v6665
  %v6744 = vunpack.c.l.b16 %v6666
  %v6745 = vunpack.c.h.b16 %v6666
  %v6746 = vunpack.c.l.b16 %v6667
  %v6747 = vunpack.c.h.b16 %v6667
  %v6748 = vpack.c.b16 %v6718, %v6716
  %v6749 = vpack.c.b16 %v6719, %v6717
  %v6750 = vpack.c.b16 %v6722, %v6720
  %v6751 = vpack.c.b16 %v6723, %v6721
  %v6752 = vpack.c.b16 %v6726, %v6724
  %v6753 = vpack.c.b16 %v6727, %v6725
  %v6754 = vpack.c.b16 %v6730, %v6728
  %v6755 = vpack.c.b16 %v6731, %v6729
  %v6756 = vpack.c.b16 %v6734, %v6732
  %v6757 = vpack.c.b16 %v6735, %v6733
  %v6758 = vpack.c.b16 %v6738, %v6736
  %v6759 = vpack.c.b16 %v6739, %v6737
  %v6760 = vpack.c.b16 %v6742, %v6740
  %v6761 = vpack.c.b16 %v6743, %v6741
  %v6762 = vpack.c.b16 %v6746, %v6744
  %v6763 = vpack.c.b16 %v6747, %v6745
  %6780 = vmatprep.subr.bf16.mxu0 %v6749
  %6781 = vmatpush1.bf16.msra.mxu0 %v6748
  %6782 = vmatprep.subr.bf16.mxu0 %v6751
  %6783 = vmatpush1.bf16.msra.mxu0 %v6750
  %6784 = vmatprep.subr.bf16.mxu0 %v6753
  %6785 = vmatpush1.bf16.msra.mxu0 %v6752
  %6786 = vmatprep.subr.bf16.mxu0 %v6755
  %6787 = vmatpush1.bf16.msra.mxu0 %v6754
  %6788 = vmatprep.subr.bf16.mxu0 %v6757
  %6789 = vmatpush1.bf16.msra.mxu0 %v6756
  %6790 = vmatprep.subr.bf16.mxu0 %v6759
  %6791 = vmatpush1.bf16.msra.mxu0 %v6758
  %6792 = vmatprep.subr.bf16.mxu0 %v6761
  %6793 = vmatpush1.bf16.msra.mxu0 %v6760
  %6794 = vmatprep.subr.bf16.mxu0 %v6763
  %6795 = vmatpush1.bf16.msra.mxu0 %v6762
  %6796 = vmatprep.subr.bf16.mxu0 0
  %6797 = vmatpush1.bf16.msra.mxu0 0
  %6798 = vmatprep.subr.bf16.mxu0 0
  %6799 = vmatpush1.bf16.msra.mxu0 0
  %6800 = vmatprep.subr.bf16.mxu0 0
  %6801 = vmatpush1.bf16.msra.mxu0 0
  %6802 = vmatprep.subr.bf16.mxu0 0
  %6803 = vmatpush1.bf16.msra.mxu0 0
  %6804 = vmatprep.subr.bf16.mxu0 0
  %6805 = vmatpush1.bf16.msra.mxu0 0
  %6806 = vmatprep.subr.bf16.mxu0 0
  %6807 = vmatpush1.bf16.msra.mxu0 0
  %6808 = vmatprep.subr.bf16.mxu0 0
  %6809 = vmatpush1.bf16.msra.mxu0 0
  %6810 = vmatprep.subr.bf16.mxu0 0
  %6811 = vmatpush1.bf16.msra.mxu0 0
  %6812 = vmatprep.mubr.bf16.mxu0 0
  %6813 = vmatmul.mubr.bf16.gmra.mrb[0].mxu0 %v6698
  %v6814 = vpop.f32.mrb[0].mxu0
  %v6815 = vadd.f32 0.0, %v6814
  %v6816 = vpop.f32.mrb[0].mxu0
  %v6817 = vadd.f32 0.0, %v6816
  %v6818 = vpop.f32.mrb[0].mxu0
  %v6819 = vpop.f32.mrb[0].mxu0
  %6820 = vdwg.mxu0
  %v6821 = vadd.f32 %v6634, %v6815
  %v6822 = vadd.f32 %v6635, %v6817
  %s6823 = scalar_lea.vmem [#allocation3], 20
  %v6824 = vld [vmem:[%s6823] sm:$0x1]
  %v6825 = vld [vmem:[%s6823 + $0x2] sm:$0x1]
  %v6826 = vld [vmem:[%s6823 + $0x10] sm:$0x1]
  %v6827 = vld [vmem:[%s6823 + $0x12] sm:$0x1]
  %v6828 = vld [vmem:[%s6823 + $0x40] sm:$0x1]
  %v6829 = vld [vmem:[%s6823 + $0x42] sm:$0x1]
  %v6830 = vld [vmem:[%s6823 + $0x50] sm:$0x1]
  %v6831 = vld [vmem:[%s6823 + $0x52] sm:$0x1]
  %v6832 = vpack.c.bf16 %v6824, %v6824
  %v6833 = vpack.c.bf16 %v6825, %v6825
  %v6834 = vpack.c.bf16 %v6826, %v6826
  %v6835 = vpack.c.bf16 %v6827, %v6827
  %v6836 = vpack.c.bf16 %v6828, %v6828
  %v6837 = vpack.c.bf16 %v6829, %v6829
  %v6838 = vpack.c.bf16 %v6830, %v6830
  %v6839 = vpack.c.bf16 %v6831, %v6831
  %v6840 = vld [vmem:[%s3 + $0x380] sm:$0xff]
  %v6841 = vld [vmem:[%s3 + $0x388] sm:$0xff]
  %v6842 = vld [vmem:[%s3 + $0x390] sm:$0xff]
  %v6843 = vld [vmem:[%s3 + $0x398] sm:$0xff]
  %v6844 = vld [vmem:[%s3 + $0x3a0] sm:$0xff]
  %v6845 = vld [vmem:[%s3 + $0x3a8] sm:$0xff]
  %v6846 = vld [vmem:[%s3 + $0x3b0] sm:$0xff]
  %v6847 = vld [vmem:[%s3 + $0x3b8] sm:$0xff]
  %v6848 = vld [vmem:[%s3 + $0x3c0] sm:$0xff]
  %v6849 = vld [vmem:[%s3 + $0x3c8] sm:$0xff]
  %v6850 = vld [vmem:[%s3 + $0x3d0] sm:$0xff]
  %v6851 = vld [vmem:[%s3 + $0x3d8] sm:$0xff]
  %v6852 = vld [vmem:[%s3 + $0x3e0] sm:$0xff]
  %v6853 = vld [vmem:[%s3 + $0x3e8] sm:$0xff]
  %v6854 = vld [vmem:[%s3 + $0x3f0] sm:$0xff]
  %v6855 = vld [vmem:[%s3 + $0x3f8] sm:$0xff]
  %v6864 = vunpack.c.l.b16 %v6832
  %v6865 = vunpack.c.l.b16 %v6833
  %v6866 = vunpack.c.l.b16 %v6834
  %v6867 = vunpack.c.l.b16 %v6835
  %v6868 = vunpack.c.l.b16 %v6836
  %v6869 = vunpack.c.l.b16 %v6837
  %v6870 = vunpack.c.l.b16 %v6838
  %v6871 = vunpack.c.l.b16 %v6839
  %v6872 = vrot.slane %v6865, 7
  %v6873 = vsel %vm1116, %v6872, %v6864
  %v6874 = vrot.slane %v6866, 6
  %v6875 = vsel %vm1119, %v6874, %v6873
  %v6876 = vrot.slane %v6867, 5
  %v6877 = vsel %vm1122, %v6876, %v6875
  %v6878 = vrot.slane %v6868, 4
  %v6879 = vsel %vm1125, %v6878, %v6877
  %v6880 = vrot.slane %v6869, 3
  %v6881 = vsel %vm1128, %v6880, %v6879
  %v6882 = vrot.slane %v6870, 2
  %v6883 = vsel %vm1131, %v6882, %v6881
  %v6884 = vrot.slane %v6871, 1
  %v6885 = vsel %vm1134, %v6884, %v6883
  %v6886 = vpack.c.b16 %v6885, %v6885
  %v6904 = vunpack.c.l.b16 %v6840
  %v6905 = vunpack.c.h.b16 %v6840
  %v6906 = vunpack.c.l.b16 %v6841
  %v6907 = vunpack.c.h.b16 %v6841
  %v6908 = vunpack.c.l.b16 %v6842
  %v6909 = vunpack.c.h.b16 %v6842
  %v6910 = vunpack.c.l.b16 %v6843
  %v6911 = vunpack.c.h.b16 %v6843
  %v6912 = vunpack.c.l.b16 %v6844
  %v6913 = vunpack.c.h.b16 %v6844
  %v6914 = vunpack.c.l.b16 %v6845
  %v6915 = vunpack.c.h.b16 %v6845
  %v6916 = vunpack.c.l.b16 %v6846
  %v6917 = vunpack.c.h.b16 %v6846
  %v6918 = vunpack.c.l.b16 %v6847
  %v6919 = vunpack.c.h.b16 %v6847
  %v6920 = vunpack.c.l.b16 %v6848
  %v6921 = vunpack.c.h.b16 %v6848
  %v6922 = vunpack.c.l.b16 %v6849
  %v6923 = vunpack.c.h.b16 %v6849
  %v6924 = vunpack.c.l.b16 %v6850
  %v6925 = vunpack.c.h.b16 %v6850
  %v6926 = vunpack.c.l.b16 %v6851
  %v6927 = vunpack.c.h.b16 %v6851
  %v6928 = vunpack.c.l.b16 %v6852
  %v6929 = vunpack.c.h.b16 %v6852
  %v6930 = vunpack.c.l.b16 %v6853
  %v6931 = vunpack.c.h.b16 %v6853
  %v6932 = vunpack.c.l.b16 %v6854
  %v6933 = vunpack.c.h.b16 %v6854
  %v6934 = vunpack.c.l.b16 %v6855
  %v6935 = vunpack.c.h.b16 %v6855
  %v6936 = vpack.c.b16 %v6906, %v6904
  %v6937 = vpack.c.b16 %v6907, %v6905
  %v6938 = vpack.c.b16 %v6910, %v6908
  %v6939 = vpack.c.b16 %v6911, %v6909
  %v6940 = vpack.c.b16 %v6914, %v6912
  %v6941 = vpack.c.b16 %v6915, %v6913
  %v6942 = vpack.c.b16 %v6918, %v6916
  %v6943 = vpack.c.b16 %v6919, %v6917
  %v6944 = vpack.c.b16 %v6922, %v6920
  %v6945 = vpack.c.b16 %v6923, %v6921
  %v6946 = vpack.c.b16 %v6926, %v6924
  %v6947 = vpack.c.b16 %v6927, %v6925
  %v6948 = vpack.c.b16 %v6930, %v6928
  %v6949 = vpack.c.b16 %v6931, %v6929
  %v6950 = vpack.c.b16 %v6934, %v6932
  %v6951 = vpack.c.b16 %v6935, %v6933
  %6968 = vmatprep.subr.bf16.mxu0 %v6937
  %6969 = vmatpush1.bf16.msra.mxu0 %v6936
  %6970 = vmatprep.subr.bf16.mxu0 %v6939
  %6971 = vmatpush1.bf16.msra.mxu0 %v6938
  %6972 = vmatprep.subr.bf16.mxu0 %v6941
  %6973 = vmatpush1.bf16.msra.mxu0 %v6940
  %6974 = vmatprep.subr.bf16.mxu0 %v6943
  %6975 = vmatpush1.bf16.msra.mxu0 %v6942
  %6976 = vmatprep.subr.bf16.mxu0 %v6945
  %6977 = vmatpush1.bf16.msra.mxu0 %v6944
  %6978 = vmatprep.subr.bf16.mxu0 %v6947
  %6979 = vmatpush1.bf16.msra.mxu0 %v6946
  %6980 = vmatprep.subr.bf16.mxu0 %v6949
  %6981 = vmatpush1.bf16.msra.mxu0 %v6948
  %6982 = vmatprep.subr.bf16.mxu0 %v6951
  %6983 = vmatpush1.bf16.msra.mxu0 %v6950
  %6984 = vmatprep.subr.bf16.mxu0 0
  %6985 = vmatpush1.bf16.msra.mxu0 0
  %6986 = vmatprep.subr.bf16.mxu0 0
  %6987 = vmatpush1.bf16.msra.mxu0 0
  %6988 = vmatprep.subr.bf16.mxu0 0
  %6989 = vmatpush1.bf16.msra.mxu0 0
  %6990 = vmatprep.subr.bf16.mxu0 0
  %6991 = vmatpush1.bf16.msra.mxu0 0
  %6992 = vmatprep.subr.bf16.mxu0 0
  %6993 = vmatpush1.bf16.msra.mxu0 0
  %6994 = vmatprep.subr.bf16.mxu0 0
  %6995 = vmatpush1.bf16.msra.mxu0 0
  %6996 = vmatprep.subr.bf16.mxu0 0
  %6997 = vmatpush1.bf16.msra.mxu0 0
  %6998 = vmatprep.subr.bf16.mxu0 0
  %6999 = vmatpush1.bf16.msra.mxu0 0
  %7000 = vmatprep.mubr.bf16.mxu0 0
  %7001 = vmatmul.mubr.bf16.gmra.mrb[0].mxu0 %v6886
  %v7002 = vpop.f32.mrb[0].mxu0
  %v7003 = vadd.f32 0.0, %v7002
  %v7004 = vpop.f32.mrb[0].mxu0
  %v7005 = vadd.f32 0.0, %v7004
  %v7006 = vpop.f32.mrb[0].mxu0
  %v7007 = vpop.f32.mrb[0].mxu0
  %7008 = vdwg.mxu0
  %v7009 = vadd.f32 %v6821, %v7003
  %v7010 = vadd.f32 %v6822, %v7005
  %s7011 = scalar_lea.vmem [#allocation3], 24
  %v7012 = vld [vmem:[%s7011 + $0x1] sm:$0x1]
  %v7013 = vld [vmem:[%s7011 + $0x3] sm:$0x1]
  %v7014 = vld [vmem:[%s7011 + $0x11] sm:$0x1]
  %v7015 = vld [vmem:[%s7011 + $0x13] sm:$0x1]
  %v7016 = vld [vmem:[%s7011 + $0x41] sm:$0x1]
  %v7017 = vld [vmem:[%s7011 + $0x43] sm:$0x1]
  %v7018 = vld [vmem:[%s7011 + $0x51] sm:$0x1]
  %v7019 = vld [vmem:[%s7011 + $0x53] sm:$0x1]
  %v7020 = vpack.c.bf16 %v7012, %v7012
  %v7021 = vpack.c.bf16 %v7013, %v7013
  %v7022 = vpack.c.bf16 %v7014, %v7014
  %v7023 = vpack.c.bf16 %v7015, %v7015
  %v7024 = vpack.c.bf16 %v7016, %v7016
  %v7025 = vpack.c.bf16 %v7017, %v7017
  %v7026 = vpack.c.bf16 %v7018, %v7018
  %v7027 = vpack.c.bf16 %v7019, %v7019
  %v7028 = vld [vmem:[%s3 + $0x400] sm:$0xff]
  %v7029 = vld [vmem:[%s3 + $0x408] sm:$0xff]
  %v7030 = vld [vmem:[%s3 + $0x410] sm:$0xff]
  %v7031 = vld [vmem:[%s3 + $0x418] sm:$0xff]
  %v7032 = vld [vmem:[%s3 + $0x420] sm:$0xff]
  %v7033 = vld [vmem:[%s3 + $0x428] sm:$0xff]
  %v7034 = vld [vmem:[%s3 + $0x430] sm:$0xff]
  %v7035 = vld [vmem:[%s3 + $0x438] sm:$0xff]
  %v7036 = vld [vmem:[%s3 + $0x440] sm:$0xff]
  %v7037 = vld [vmem:[%s3 + $0x448] sm:$0xff]
  %v7038 = vld [vmem:[%s3 + $0x450] sm:$0xff]
  %v7039 = vld [vmem:[%s3 + $0x458] sm:$0xff]
  %v7040 = vld [vmem:[%s3 + $0x460] sm:$0xff]
  %v7041 = vld [vmem:[%s3 + $0x468] sm:$0xff]
  %v7042 = vld [vmem:[%s3 + $0x470] sm:$0xff]
  %v7043 = vld [vmem:[%s3 + $0x478] sm:$0xff]
  %v7052 = vunpack.c.l.b16 %v7020
  %v7053 = vunpack.c.l.b16 %v7021
  %v7054 = vunpack.c.l.b16 %v7022
  %v7055 = vunpack.c.l.b16 %v7023
  %v7056 = vunpack.c.l.b16 %v7024
  %v7057 = vunpack.c.l.b16 %v7025
  %v7058 = vunpack.c.l.b16 %v7026
  %v7059 = vunpack.c.l.b16 %v7027
  %v7060 = vrot.slane %v7053, 7
  %v7061 = vsel %vm1116, %v7060, %v7052
  %v7062 = vrot.slane %v7054, 6
  %v7063 = vsel %vm1119, %v7062, %v7061
  %v7064 = vrot.slane %v7055, 5
  %v7065 = vsel %vm1122, %v7064, %v7063
  %v7066 = vrot.slane %v7056, 4
  %v7067 = vsel %vm1125, %v7066, %v7065
  %v7068 = vrot.slane %v7057, 3
  %v7069 = vsel %vm1128, %v7068, %v7067
  %v7070 = vrot.slane %v7058, 2
  %v7071 = vsel %vm1131, %v7070, %v7069
  %v7072 = vrot.slane %v7059, 1
  %v7073 = vsel %vm1134, %v7072, %v7071
  %v7074 = vpack.c.b16 %v7073, %v7073
  %v7092 = vunpack.c.l.b16 %v7028
  %v7093 = vunpack.c.h.b16 %v7028
  %v7094 = vunpack.c.l.b16 %v7029
  %v7095 = vunpack.c.h.b16 %v7029
  %v7096 = vunpack.c.l.b16 %v7030
  %v7097 = vunpack.c.h.b16 %v7030
  %v7098 = vunpack.c.l.b16 %v7031
  %v7099 = vunpack.c.h.b16 %v7031
  %v7100 = vunpack.c.l.b16 %v7032
  %v7101 = vunpack.c.h.b16 %v7032
  %v7102 = vunpack.c.l.b16 %v7033
  %v7103 = vunpack.c.h.b16 %v7033
  %v7104 = vunpack.c.l.b16 %v7034
  %v7105 = vunpack.c.h.b16 %v7034
  %v7106 = vunpack.c.l.b16 %v7035
  %v7107 = vunpack.c.h.b16 %v7035
  %v7108 = vunpack.c.l.b16 %v7036
  %v7109 = vunpack.c.h.b16 %v7036
  %v7110 = vunpack.c.l.b16 %v7037
  %v7111 = vunpack.c.h.b16 %v7037
  %v7112 = vunpack.c.l.b16 %v7038
  %v7113 = vunpack.c.h.b16 %v7038
  %v7114 = vunpack.c.l.b16 %v7039
  %v7115 = vunpack.c.h.b16 %v7039
  %v7116 = vunpack.c.l.b16 %v7040
  %v7117 = vunpack.c.h.b16 %v7040
  %v7118 = vunpack.c.l.b16 %v7041
  %v7119 = vunpack.c.h.b16 %v7041
  %v7120 = vunpack.c.l.b16 %v7042
  %v7121 = vunpack.c.h.b16 %v7042
  %v7122 = vunpack.c.l.b16 %v7043
  %v7123 = vunpack.c.h.b16 %v7043
  %v7124 = vpack.c.b16 %v7094, %v7092
  %v7125 = vpack.c.b16 %v7095, %v7093
  %v7126 = vpack.c.b16 %v7098, %v7096
  %v7127 = vpack.c.b16 %v7099, %v7097
  %v7128 = vpack.c.b16 %v7102, %v7100
  %v7129 = vpack.c.b16 %v7103, %v7101
  %v7130 = vpack.c.b16 %v7106, %v7104
  %v7131 = vpack.c.b16 %v7107, %v7105
  %v7132 = vpack.c.b16 %v7110, %v7108
  %v7133 = vpack.c.b16 %v7111, %v7109
  %v7134 = vpack.c.b16 %v7114, %v7112
  %v7135 = vpack.c.b16 %v7115, %v7113
  %v7136 = vpack.c.b16 %v7118, %v7116
  %v7137 = vpack.c.b16 %v7119, %v7117
  %v7138 = vpack.c.b16 %v7122, %v7120
  %v7139 = vpack.c.b16 %v7123, %v7121
  %7156 = vmatprep.subr.bf16.mxu0 %v7125
  %7157 = vmatpush1.bf16.msra.mxu0 %v7124
  %7158 = vmatprep.subr.bf16.mxu0 %v7127
  %7159 = vmatpush1.bf16.msra.mxu0 %v7126
  %7160 = vmatprep.subr.bf16.mxu0 %v7129
  %7161 = vmatpush1.bf16.msra.mxu0 %v7128
  %7162 = vmatprep.subr.bf16.mxu0 %v7131
  %7163 = vmatpush1.bf16.msra.mxu0 %v7130
  %7164 = vmatprep.subr.bf16.mxu0 %v7133
  %7165 = vmatpush1.bf16.msra.mxu0 %v7132
  %7166 = vmatprep.subr.bf16.mxu0 %v7135
  %7167 = vmatpush1.bf16.msra.mxu0 %v7134
  %7168 = vmatprep.subr.bf16.mxu0 %v7137
  %7169 = vmatpush1.bf16.msra.mxu0 %v7136
  %7170 = vmatprep.subr.bf16.mxu0 %v7139
  %7171 = vmatpush1.bf16.msra.mxu0 %v7138
  %7172 = vmatprep.subr.bf16.mxu0 0
  %7173 = vmatpush1.bf16.msra.mxu0 0
  %7174 = vmatprep.subr.bf16.mxu0 0
  %7175 = vmatpush1.bf16.msra.mxu0 0
  %7176 = vmatprep.subr.bf16.mxu0 0
  %7177 = vmatpush1.bf16.msra.mxu0 0
  %7178 = vmatprep.subr.bf16.mxu0 0
  %7179 = vmatpush1.bf16.msra.mxu0 0
  %7180 = vmatprep.subr.bf16.mxu0 0
  %7181 = vmatpush1.bf16.msra.mxu0 0
  %7182 = vmatprep.subr.bf16.mxu0 0
  %7183 = vmatpush1.bf16.msra.mxu0 0
  %7184 = vmatprep.subr.bf16.mxu0 0
  %7185 = vmatpush1.bf16.msra.mxu0 0
  %7186 = vmatprep.subr.bf16.mxu0 0
  %7187 = vmatpush1.bf16.msra.mxu0 0
  %7188 = vmatprep.mubr.bf16.mxu0 0
  %7189 = vmatmul.mubr.bf16.gmra.mrb[0].mxu0 %v7074
  %v7190 = vpop.f32.mrb[0].mxu0
  %v7191 = vadd.f32 0.0, %v7190
  %v7192 = vpop.f32.mrb[0].mxu0
  %v7193 = vadd.f32 0.0, %v7192
  %v7194 = vpop.f32.mrb[0].mxu0
  %v7195 = vpop.f32.mrb[0].mxu0
  %7196 = vdwg.mxu0
  %v7197 = vadd.f32 %v7009, %v7191
  %v7198 = vadd.f32 %v7010, %v7193
  %v7199 = vld [vmem:[%s5459] sm:$0x1]
  %v7200 = vld [vmem:[%s5459 + $0x2] sm:$0x1]
  %v7201 = vld [vmem:[%s5459 + $0x10] sm:$0x1]
  %v7202 = vld [vmem:[%s5459 + $0x12] sm:$0x1]
  %v7203 = vld [vmem:[%s5459 + $0x40] sm:$0x1]
  %v7204 = vld [vmem:[%s5459 + $0x42] sm:$0x1]
  %v7205 = vld [vmem:[%s5459 + $0x50] sm:$0x1]
  %v7206 = vld [vmem:[%s5459 + $0x52] sm:$0x1]
  %v7207 = vpack.c.bf16 %v7199, %v7199
  %v7208 = vpack.c.bf16 %v7200, %v7200
  %v7209 = vpack.c.bf16 %v7201, %v7201
  %v7210 = vpack.c.bf16 %v7202, %v7202
  %v7211 = vpack.c.bf16 %v7203, %v7203
  %v7212 = vpack.c.bf16 %v7204, %v7204
  %v7213 = vpack.c.bf16 %v7205, %v7205
  %v7214 = vpack.c.bf16 %v7206, %v7206
  %v7215 = vld [vmem:[%s3 + $0x480] sm:$0xff]
  %v7216 = vld [vmem:[%s3 + $0x488] sm:$0xff]
  %v7217 = vld [vmem:[%s3 + $0x490] sm:$0xff]
  %v7218 = vld [vmem:[%s3 + $0x498] sm:$0xff]
  %v7219 = vld [vmem:[%s3 + $0x4a0] sm:$0xff]
  %v7220 = vld [vmem:[%s3 + $0x4a8] sm:$0xff]
  %v7221 = vld [vmem:[%s3 + $0x4b0] sm:$0xff]
  %v7222 = vld [vmem:[%s3 + $0x4b8] sm:$0xff]
  %v7223 = vld [vmem:[%s3 + $0x4c0] sm:$0xff]
  %v7224 = vld [vmem:[%s3 + $0x4c8] sm:$0xff]
  %v7225 = vld [vmem:[%s3 + $0x4d0] sm:$0xff]
  %v7226 = vld [vmem:[%s3 + $0x4d8] sm:$0xff]
  %v7227 = vld [vmem:[%s3 + $0x4e0] sm:$0xff]
  %v7228 = vld [vmem:[%s3 + $0x4e8] sm:$0xff]
  %v7229 = vld [vmem:[%s3 + $0x4f0] sm:$0xff]
  %v7230 = vld [vmem:[%s3 + $0x4f8] sm:$0xff]
  %v7239 = vunpack.c.l.b16 %v7207
  %v7240 = vunpack.c.l.b16 %v7208
  %v7241 = vunpack.c.l.b16 %v7209
  %v7242 = vunpack.c.l.b16 %v7210
  %v7243 = vunpack.c.l.b16 %v7211
  %v7244 = vunpack.c.l.b16 %v7212
  %v7245 = vunpack.c.l.b16 %v7213
  %v7246 = vunpack.c.l.b16 %v7214
  %v7247 = vrot.slane %v7240, 7
  %v7248 = vsel %vm1116, %v7247, %v7239
  %v7249 = vrot.slane %v7241, 6
  %v7250 = vsel %vm1119, %v7249, %v7248
  %v7251 = vrot.slane %v7242, 5
  %v7252 = vsel %vm1122, %v7251, %v7250
  %v7253 = vrot.slane %v7243, 4
  %v7254 = vsel %vm1125, %v7253, %v7252
  %v7255 = vrot.slane %v7244, 3
  %v7256 = vsel %vm1128, %v7255, %v7254
  %v7257 = vrot.slane %v7245, 2
  %v7258 = vsel %vm1131, %v7257, %v7256
  %v7259 = vrot.slane %v7246, 1
  %v7260 = vsel %vm1134, %v7259, %v7258
  %v7261 = vpack.c.b16 %v7260, %v7260
  %v7279 = vunpack.c.l.b16 %v7215
  %v7280 = vunpack.c.h.b16 %v7215
  %v7281 = vunpack.c.l.b16 %v7216
  %v7282 = vunpack.c.h.b16 %v7216
  %v7283 = vunpack.c.l.b16 %v7217
  %v7284 = vunpack.c.h.b16 %v7217
  %v7285 = vunpack.c.l.b16 %v7218
  %v7286 = vunpack.c.h.b16 %v7218
  %v7287 = vunpack.c.l.b16 %v7219
  %v7288 = vunpack.c.h.b16 %v7219
  %v7289 = vunpack.c.l.b16 %v7220
  %v7290 = vunpack.c.h.b16 %v7220
  %v7291 = vunpack.c.l.b16 %v7221
  %v7292 = vunpack.c.h.b16 %v7221
  %v7293 = vunpack.c.l.b16 %v7222
  %v7294 = vunpack.c.h.b16 %v7222
  %v7295 = vunpack.c.l.b16 %v7223
  %v7296 = vunpack.c.h.b16 %v7223
  %v7297 = vunpack.c.l.b16 %v7224
  %v7298 = vunpack.c.h.b16 %v7224
  %v7299 = vunpack.c.l.b16 %v7225
  %v7300 = vunpack.c.h.b16 %v7225
  %v7301 = vunpack.c.l.b16 %v7226
  %v7302 = vunpack.c.h.b16 %v7226
  %v7303 = vunpack.c.l.b16 %v7227
  %v7304 = vunpack.c.h.b16 %v7227
  %v7305 = vunpack.c.l.b16 %v7228
  %v7306 = vunpack.c.h.b16 %v7228
  %v7307 = vunpack.c.l.b16 %v7229
  %v7308 = vunpack.c.h.b16 %v7229
  %v7309 = vunpack.c.l.b16 %v7230
  %v7310 = vunpack.c.h.b16 %v7230
  %v7311 = vpack.c.b16 %v7281, %v7279
  %v7312 = vpack.c.b16 %v7282, %v7280
  %v7313 = vpack.c.b16 %v7285, %v7283
  %v7314 = vpack.c.b16 %v7286, %v7284
  %v7315 = vpack.c.b16 %v7289, %v7287
  %v7316 = vpack.c.b16 %v7290, %v7288
  %v7317 = vpack.c.b16 %v7293, %v7291
  %v7318 = vpack.c.b16 %v7294, %v7292
  %v7319 = vpack.c.b16 %v7297, %v7295
  %v7320 = vpack.c.b16 %v7298, %v7296
  %v7321 = vpack.c.b16 %v7301, %v7299
  %v7322 = vpack.c.b16 %v7302, %v7300
  %v7323 = vpack.c.b16 %v7305, %v7303
  %v7324 = vpack.c.b16 %v7306, %v7304
  %v7325 = vpack.c.b16 %v7309, %v7307
  %v7326 = vpack.c.b16 %v7310, %v7308
  %7343 = vmatprep.subr.bf16.mxu0 %v7312
  %7344 = vmatpush1.bf16.msra.mxu0 %v7311
  %7345 = vmatprep.subr.bf16.mxu0 %v7314
  %7346 = vmatpush1.bf16.msra.mxu0 %v7313
  %7347 = vmatprep.subr.bf16.mxu0 %v7316
  %7348 = vmatpush1.bf16.msra.mxu0 %v7315
  %7349 = vmatprep.subr.bf16.mxu0 %v7318
  %7350 = vmatpush1.bf16.msra.mxu0 %v7317
  %7351 = vmatprep.subr.bf16.mxu0 %v7320
  %7352 = vmatpush1.bf16.msra.mxu0 %v7319
  %7353 = vmatprep.subr.bf16.mxu0 %v7322
  %7354 = vmatpush1.bf16.msra.mxu0 %v7321
  %7355 = vmatprep.subr.bf16.mxu0 %v7324
  %7356 = vmatpush1.bf16.msra.mxu0 %v7323
  %7357 = vmatprep.subr.bf16.mxu0 %v7326
  %7358 = vmatpush1.bf16.msra.mxu0 %v7325
  %7359 = vmatprep.subr.bf16.mxu0 0
  %7360 = vmatpush1.bf16.msra.mxu0 0
  %7361 = vmatprep.subr.bf16.mxu0 0
  %7362 = vmatpush1.bf16.msra.mxu0 0
  %7363 = vmatprep.subr.bf16.mxu0 0
  %7364 = vmatpush1.bf16.msra.mxu0 0
  %7365 = vmatprep.subr.bf16.mxu0 0
  %7366 = vmatpush1.bf16.msra.mxu0 0
  %7367 = vmatprep.subr.bf16.mxu0 0
  %7368 = vmatpush1.bf16.msra.mxu0 0
  %7369 = vmatprep.subr.bf16.mxu0 0
  %7370 = vmatpush1.bf16.msra.mxu0 0
  %7371 = vmatprep.subr.bf16.mxu0 0
  %7372 = vmatpush1.bf16.msra.mxu0 0
  %7373 = vmatprep.subr.bf16.mxu0 0
  %7374 = vmatpush1.bf16.msra.mxu0 0
  %7375 = vmatprep.mubr.bf16.mxu0 0
  %7376 = vmatmul.mubr.bf16.gmra.mrb[0].mxu0 %v7261
  %v7377 = vpop.f32.mrb[0].mxu0
  %v7378 = vadd.f32 0.0, %v7377
  %v7379 = vpop.f32.mrb[0].mxu0
  %v7380 = vadd.f32 0.0, %v7379
  %v7381 = vpop.f32.mrb[0].mxu0
  %v7382 = vpop.f32.mrb[0].mxu0
  %7383 = vdwg.mxu0
  %v7384 = vadd.f32 %v7197, %v7378
  %v7385 = vadd.f32 %v7198, %v7380
  %v7386 = vld [vmem:[%s5459 + $0x1] sm:$0x1]
  %v7387 = vld [vmem:[%s5459 + $0x3] sm:$0x1]
  %v7388 = vld [vmem:[%s5459 + $0x11] sm:$0x1]
  %v7389 = vld [vmem:[%s5459 + $0x13] sm:$0x1]
  %v7390 = vld [vmem:[%s5459 + $0x41] sm:$0x1]
  %v7391 = vld [vmem:[%s5459 + $0x43] sm:$0x1]
  %v7392 = vld [vmem:[%s5459 + $0x51] sm:$0x1]
  %v7393 = vld [vmem:[%s5459 + $0x53] sm:$0x1]
  %v7394 = vpack.c.bf16 %v7386, %v7386
  %v7395 = vpack.c.bf16 %v7387, %v7387
  %v7396 = vpack.c.bf16 %v7388, %v7388
  %v7397 = vpack.c.bf16 %v7389, %v7389
  %v7398 = vpack.c.bf16 %v7390, %v7390
  %v7399 = vpack.c.bf16 %v7391, %v7391
  %v7400 = vpack.c.bf16 %v7392, %v7392
  %v7401 = vpack.c.bf16 %v7393, %v7393
  %v7402 = vld [vmem:[%s3 + $0x500] sm:$0xff]
  %v7403 = vld [vmem:[%s3 + $0x508] sm:$0xff]
  %v7404 = vld [vmem:[%s3 + $0x510] sm:$0xff]
  %v7405 = vld [vmem:[%s3 + $0x518] sm:$0xff]
  %v7406 = vld [vmem:[%s3 + $0x520] sm:$0xff]
  %v7407 = vld [vmem:[%s3 + $0x528] sm:$0xff]
  %v7408 = vld [vmem:[%s3 + $0x530] sm:$0xff]
  %v7409 = vld [vmem:[%s3 + $0x538] sm:$0xff]
  %v7410 = vld [vmem:[%s3 + $0x540] sm:$0xff]
  %v7411 = vld [vmem:[%s3 + $0x548] sm:$0xff]
  %v7412 = vld [vmem:[%s3 + $0x550] sm:$0xff]
  %v7413 = vld [vmem:[%s3 + $0x558] sm:$0xff]
  %v7414 = vld [vmem:[%s3 + $0x560] sm:$0xff]
  %v7415 = vld [vmem:[%s3 + $0x568] sm:$0xff]
  %v7416 = vld [vmem:[%s3 + $0x570] sm:$0xff]
  %v7417 = vld [vmem:[%s3 + $0x578] sm:$0xff]
  %v7426 = vunpack.c.l.b16 %v7394
  %v7427 = vunpack.c.l.b16 %v7395
  %v7428 = vunpack.c.l.b16 %v7396
  %v7429 = vunpack.c.l.b16 %v7397
  %v7430 = vunpack.c.l.b16 %v7398
  %v7431 = vunpack.c.l.b16 %v7399
  %v7432 = vunpack.c.l.b16 %v7400
  %v7433 = vunpack.c.l.b16 %v7401
  %v7434 = vrot.slane %v7427, 7
  %v7435 = vsel %vm1116, %v7434, %v7426
  %v7436 = vrot.slane %v7428, 6
  %v7437 = vsel %vm1119, %v7436, %v7435
  %v7438 = vrot.slane %v7429, 5
  %v7439 = vsel %vm1122, %v7438, %v7437
  %v7440 = vrot.slane %v7430, 4
  %v7441 = vsel %vm1125, %v7440, %v7439
  %v7442 = vrot.slane %v7431, 3
  %v7443 = vsel %vm1128, %v7442, %v7441
  %v7444 = vrot.slane %v7432, 2
  %v7445 = vsel %vm1131, %v7444, %v7443
  %v7446 = vrot.slane %v7433, 1
  %v7447 = vsel %vm1134, %v7446, %v7445
  %v7448 = vpack.c.b16 %v7447, %v7447
  %v7466 = vunpack.c.l.b16 %v7402
  %v7467 = vunpack.c.h.b16 %v7402
  %v7468 = vunpack.c.l.b16 %v7403
  %v7469 = vunpack.c.h.b16 %v7403
  %v7470 = vunpack.c.l.b16 %v7404
  %v7471 = vunpack.c.h.b16 %v7404
  %v7472 = vunpack.c.l.b16 %v7405
  %v7473 = vunpack.c.h.b16 %v7405
  %v7474 = vunpack.c.l.b16 %v7406
  %v7475 = vunpack.c.h.b16 %v7406
  %v7476 = vunpack.c.l.b16 %v7407
  %v7477 = vunpack.c.h.b16 %v7407
  %v7478 = vunpack.c.l.b16 %v7408
  %v7479 = vunpack.c.h.b16 %v7408
  %v7480 = vunpack.c.l.b16 %v7409
  %v7481 = vunpack.c.h.b16 %v7409
  %v7482 = vunpack.c.l.b16 %v7410
  %v7483 = vunpack.c.h.b16 %v7410
  %v7484 = vunpack.c.l.b16 %v7411
  %v7485 = vunpack.c.h.b16 %v7411
  %v7486 = vunpack.c.l.b16 %v7412
  %v7487 = vunpack.c.h.b16 %v7412
  %v7488 = vunpack.c.l.b16 %v7413
  %v7489 = vunpack.c.h.b16 %v7413
  %v7490 = vunpack.c.l.b16 %v7414
  %v7491 = vunpack.c.h.b16 %v7414
  %v7492 = vunpack.c.l.b16 %v7415
  %v7493 = vunpack.c.h.b16 %v7415
  %v7494 = vunpack.c.l.b16 %v7416
  %v7495 = vunpack.c.h.b16 %v7416
  %v7496 = vunpack.c.l.b16 %v7417
  %v7497 = vunpack.c.h.b16 %v7417
  %v7498 = vpack.c.b16 %v7468, %v7466
  %v7499 = vpack.c.b16 %v7469, %v7467
  %v7500 = vpack.c.b16 %v7472, %v7470
  %v7501 = vpack.c.b16 %v7473, %v7471
  %v7502 = vpack.c.b16 %v7476, %v7474
  %v7503 = vpack.c.b16 %v7477, %v7475
  %v7504 = vpack.c.b16 %v7480, %v7478
  %v7505 = vpack.c.b16 %v7481, %v7479
  %v7506 = vpack.c.b16 %v7484, %v7482
  %v7507 = vpack.c.b16 %v7485, %v7483
  %v7508 = vpack.c.b16 %v7488, %v7486
  %v7509 = vpack.c.b16 %v7489, %v7487
  %v7510 = vpack.c.b16 %v7492, %v7490
  %v7511 = vpack.c.b16 %v7493, %v7491
  %v7512 = vpack.c.b16 %v7496, %v7494
  %v7513 = vpack.c.b16 %v7497, %v7495
  %7530 = vmatprep.subr.bf16.mxu0 %v7499
  %7531 = vmatpush1.bf16.msra.mxu0 %v7498
  %7532 = vmatprep.subr.bf16.mxu0 %v7501
  %7533 = vmatpush1.bf16.msra.mxu0 %v7500
  %7534 = vmatprep.subr.bf16.mxu0 %v7503
  %7535 = vmatpush1.bf16.msra.mxu0 %v7502
  %7536 = vmatprep.subr.bf16.mxu0 %v7505
  %7537 = vmatpush1.bf16.msra.mxu0 %v7504
  %7538 = vmatprep.subr.bf16.mxu0 %v7507
  %7539 = vmatpush1.bf16.msra.mxu0 %v7506
  %7540 = vmatprep.subr.bf16.mxu0 %v7509
  %7541 = vmatpush1.bf16.msra.mxu0 %v7508
  %7542 = vmatprep.subr.bf16.mxu0 %v7511
  %7543 = vmatpush1.bf16.msra.mxu0 %v7510
  %7544 = vmatprep.subr.bf16.mxu0 %v7513
  %7545 = vmatpush1.bf16.msra.mxu0 %v7512
  %7546 = vmatprep.subr.bf16.mxu0 0
  %7547 = vmatpush1.bf16.msra.mxu0 0
  %7548 = vmatprep.subr.bf16.mxu0 0
  %7549 = vmatpush1.bf16.msra.mxu0 0
  %7550 = vmatprep.subr.bf16.mxu0 0
  %7551 = vmatpush1.bf16.msra.mxu0 0
  %7552 = vmatprep.subr.bf16.mxu0 0
  %7553 = vmatpush1.bf16.msra.mxu0 0
  %7554 = vmatprep.subr.bf16.mxu0 0
  %7555 = vmatpush1.bf16.msra.mxu0 0
  %7556 = vmatprep.subr.bf16.mxu0 0
  %7557 = vmatpush1.bf16.msra.mxu0 0
  %7558 = vmatprep.subr.bf16.mxu0 0
  %7559 = vmatpush1.bf16.msra.mxu0 0
  %7560 = vmatprep.subr.bf16.mxu0 0
  %7561 = vmatpush1.bf16.msra.mxu0 0
  %7562 = vmatprep.mubr.bf16.mxu0 0
  %7563 = vmatmul.mubr.bf16.gmra.mrb[0].mxu0 %v7448
  %v7564 = vpop.f32.mrb[0].mxu0
  %v7565 = vadd.f32 0.0, %v7564
  %v7566 = vpop.f32.mrb[0].mxu0
  %v7567 = vadd.f32 0.0, %v7566
  %v7568 = vpop.f32.mrb[0].mxu0
  %v7569 = vpop.f32.mrb[0].mxu0
  %7570 = vdwg.mxu0
  %v7571 = vadd.f32 %v7384, %v7565
  %v7572 = vadd.f32 %v7385, %v7567
  %s7573 = scalar_lea.vmem [#allocation3], 28
  %v7574 = vld [vmem:[%s7573] sm:$0x1]
  %v7575 = vld [vmem:[%s7573 + $0x2] sm:$0x1]
  %v7576 = vld [vmem:[%s7573 + $0x10] sm:$0x1]
  %v7577 = vld [vmem:[%s7573 + $0x12] sm:$0x1]
  %v7578 = vld [vmem:[%s7573 + $0x40] sm:$0x1]
  %v7579 = vld [vmem:[%s7573 + $0x42] sm:$0x1]
  %v7580 = vld [vmem:[%s7573 + $0x50] sm:$0x1]
  %v7581 = vld [vmem:[%s7573 + $0x52] sm:$0x1]
  %v7582 = vpack.c.bf16 %v7574, %v7574
  %v7583 = vpack.c.bf16 %v7575, %v7575
  %v7584 = vpack.c.bf16 %v7576, %v7576
  %v7585 = vpack.c.bf16 %v7577, %v7577
  %v7586 = vpack.c.bf16 %v7578, %v7578
  %v7587 = vpack.c.bf16 %v7579, %v7579
  %v7588 = vpack.c.bf16 %v7580, %v7580
  %v7589 = vpack.c.bf16 %v7581, %v7581
  %v7590 = vld [vmem:[%s3 + $0x580] sm:$0xff]
  %v7591 = vld [vmem:[%s3 + $0x588] sm:$0xff]
  %v7592 = vld [vmem:[%s3 + $0x590] sm:$0xff]
  %v7593 = vld [vmem:[%s3 + $0x598] sm:$0xff]
  %v7594 = vld [vmem:[%s3 + $0x5a0] sm:$0xff]
  %v7595 = vld [vmem:[%s3 + $0x5a8] sm:$0xff]
  %v7596 = vld [vmem:[%s3 + $0x5b0] sm:$0xff]
  %v7597 = vld [vmem:[%s3 + $0x5b8] sm:$0xff]
  %v7598 = vld [vmem:[%s3 + $0x5c0] sm:$0xff]
  %v7599 = vld [vmem:[%s3 + $0x5c8] sm:$0xff]
  %v7600 = vld [vmem:[%s3 + $0x5d0] sm:$0xff]
  %v7601 = vld [vmem:[%s3 + $0x5d8] sm:$0xff]
  %v7602 = vld [vmem:[%s3 + $0x5e0] sm:$0xff]
  %v7603 = vld [vmem:[%s3 + $0x5e8] sm:$0xff]
  %v7604 = vld [vmem:[%s3 + $0x5f0] sm:$0xff]
  %v7605 = vld [vmem:[%s3 + $0x5f8] sm:$0xff]
  %v7614 = vunpack.c.l.b16 %v7582
  %v7615 = vunpack.c.l.b16 %v7583
  %v7616 = vunpack.c.l.b16 %v7584
  %v7617 = vunpack.c.l.b16 %v7585
  %v7618 = vunpack.c.l.b16 %v7586
  %v7619 = vunpack.c.l.b16 %v7587
  %v7620 = vunpack.c.l.b16 %v7588
  %v7621 = vunpack.c.l.b16 %v7589
  %v7622 = vrot.slane %v7615, 7
  %v7623 = vsel %vm1116, %v7622, %v7614
  %v7624 = vrot.slane %v7616, 6
  %v7625 = vsel %vm1119, %v7624, %v7623
  %v7626 = vrot.slane %v7617, 5
  %v7627 = vsel %vm1122, %v7626, %v7625
  %v7628 = vrot.slane %v7618, 4
  %v7629 = vsel %vm1125, %v7628, %v7627
  %v7630 = vrot.slane %v7619, 3
  %v7631 = vsel %vm1128, %v7630, %v7629
  %v7632 = vrot.slane %v7620, 2
  %v7633 = vsel %vm1131, %v7632, %v7631
  %v7634 = vrot.slane %v7621, 1
  %v7635 = vsel %vm1134, %v7634, %v7633
  %v7636 = vpack.c.b16 %v7635, %v7635
  %v7654 = vunpack.c.l.b16 %v7590
  %v7655 = vunpack.c.h.b16 %v7590
  %v7656 = vunpack.c.l.b16 %v7591
  %v7657 = vunpack.c.h.b16 %v7591
  %v7658 = vunpack.c.l.b16 %v7592
  %v7659 = vunpack.c.h.b16 %v7592
  %v7660 = vunpack.c.l.b16 %v7593
  %v7661 = vunpack.c.h.b16 %v7593
  %v7662 = vunpack.c.l.b16 %v7594
  %v7663 = vunpack.c.h.b16 %v7594
  %v7664 = vunpack.c.l.b16 %v7595
  %v7665 = vunpack.c.h.b16 %v7595
  %v7666 = vunpack.c.l.b16 %v7596
  %v7667 = vunpack.c.h.b16 %v7596
  %v7668 = vunpack.c.l.b16 %v7597
  %v7669 = vunpack.c.h.b16 %v7597
  %v7670 = vunpack.c.l.b16 %v7598
  %v7671 = vunpack.c.h.b16 %v7598
  %v7672 = vunpack.c.l.b16 %v7599
  %v7673 = vunpack.c.h.b16 %v7599
  %v7674 = vunpack.c.l.b16 %v7600
  %v7675 = vunpack.c.h.b16 %v7600
  %v7676 = vunpack.c.l.b16 %v7601
  %v7677 = vunpack.c.h.b16 %v7601
  %v7678 = vunpack.c.l.b16 %v7602
  %v7679 = vunpack.c.h.b16 %v7602
  %v7680 = vunpack.c.l.b16 %v7603
  %v7681 = vunpack.c.h.b16 %v7603
  %v7682 = vunpack.c.l.b16 %v7604
  %v7683 = vunpack.c.h.b16 %v7604
  %v7684 = vunpack.c.l.b16 %v7605
  %v7685 = vunpack.c.h.b16 %v7605
  %v7686 = vpack.c.b16 %v7656, %v7654
  %v7687 = vpack.c.b16 %v7657, %v7655
  %v7688 = vpack.c.b16 %v7660, %v7658
  %v7689 = vpack.c.b16 %v7661, %v7659
  %v7690 = vpack.c.b16 %v7664, %v7662
  %v7691 = vpack.c.b16 %v7665, %v7663
  %v7692 = vpack.c.b16 %v7668, %v7666
  %v7693 = vpack.c.b16 %v7669, %v7667
  %v7694 = vpack.c.b16 %v7672, %v7670
  %v7695 = vpack.c.b16 %v7673, %v7671
  %v7696 = vpack.c.b16 %v7676, %v7674
  %v7697 = vpack.c.b16 %v7677, %v7675
  %v7698 = vpack.c.b16 %v7680, %v7678
  %v7699 = vpack.c.b16 %v7681, %v7679
  %v7700 = vpack.c.b16 %v7684, %v7682
  %v7701 = vpack.c.b16 %v7685, %v7683
  %7718 = vmatprep.subr.bf16.mxu0 %v7687
  %7719 = vmatpush1.bf16.msra.mxu0 %v7686
  %7720 = vmatprep.subr.bf16.mxu0 %v7689
  %7721 = vmatpush1.bf16.msra.mxu0 %v7688
  %7722 = vmatprep.subr.bf16.mxu0 %v7691
  %7723 = vmatpush1.bf16.msra.mxu0 %v7690
  %7724 = vmatprep.subr.bf16.mxu0 %v7693
  %7725 = vmatpush1.bf16.msra.mxu0 %v7692
  %7726 = vmatprep.subr.bf16.mxu0 %v7695
  %7727 = vmatpush1.bf16.msra.mxu0 %v7694
  %7728 = vmatprep.subr.bf16.mxu0 %v7697
  %7729 = vmatpush1.bf16.msra.mxu0 %v7696
  %7730 = vmatprep.subr.bf16.mxu0 %v7699
  %7731 = vmatpush1.bf16.msra.mxu0 %v7698
  %7732 = vmatprep.subr.bf16.mxu0 %v7701
  %7733 = vmatpush1.bf16.msra.mxu0 %v7700
  %7734 = vmatprep.subr.bf16.mxu0 0
  %7735 = vmatpush1.bf16.msra.mxu0 0
  %7736 = vmatprep.subr.bf16.mxu0 0
  %7737 = vmatpush1.bf16.msra.mxu0 0
  %7738 = vmatprep.subr.bf16.mxu0 0
  %7739 = vmatpush1.bf16.msra.mxu0 0
  %7740 = vmatprep.subr.bf16.mxu0 0
  %7741 = vmatpush1.bf16.msra.mxu0 0
  %7742 = vmatprep.subr.bf16.mxu0 0
  %7743 = vmatpush1.bf16.msra.mxu0 0
  %7744 = vmatprep.subr.bf16.mxu0 0
  %7745 = vmatpush1.bf16.msra.mxu0 0
  %7746 = vmatprep.subr.bf16.mxu0 0
  %7747 = vmatpush1.bf16.msra.mxu0 0
  %7748 = vmatprep.subr.bf16.mxu0 0
  %7749 = vmatpush1.bf16.msra.mxu0 0
  %7750 = vmatprep.mubr.bf16.mxu0 0
  %7751 = vmatmul.mubr.bf16.gmra.mrb[0].mxu0 %v7636
  %v7752 = vpop.f32.mrb[0].mxu0
  %v7753 = vadd.f32 0.0, %v7752
  %v7754 = vpop.f32.mrb[0].mxu0
  %v7755 = vadd.f32 0.0, %v7754
  %v7756 = vpop.f32.mrb[0].mxu0
  %v7757 = vpop.f32.mrb[0].mxu0
  %7758 = vdwg.mxu0
  %v7759 = vadd.f32 %v7571, %v7753
  %v7760 = vadd.f32 %v7572, %v7755
  %s7761 = scalar_lea.vmem [#allocation3], 32
  %v7762 = vld [vmem:[%s7761 + $0x1] sm:$0x1]
  %v7763 = vld [vmem:[%s7761 + $0x3] sm:$0x1]
  %v7764 = vld [vmem:[%s7761 + $0x11] sm:$0x1]
  %v7765 = vld [vmem:[%s7761 + $0x13] sm:$0x1]
  %v7766 = vld [vmem:[%s7761 + $0x41] sm:$0x1]
  %v7767 = vld [vmem:[%s7761 + $0x43] sm:$0x1]
  %v7768 = vld [vmem:[%s7761 + $0x51] sm:$0x1]
  %v7769 = vld [vmem:[%s7761 + $0x53] sm:$0x1]
  %v7770 = vpack.c.bf16 %v7762, %v7762
  %v7771 = vpack.c.bf16 %v7763, %v7763
  %v7772 = vpack.c.bf16 %v7764, %v7764
  %v7773 = vpack.c.bf16 %v7765, %v7765
  %v7774 = vpack.c.bf16 %v7766, %v7766
  %v7775 = vpack.c.bf16 %v7767, %v7767
  %v7776 = vpack.c.bf16 %v7768, %v7768
  %v7777 = vpack.c.bf16 %v7769, %v7769
  %v7778 = vld [vmem:[%s3 + $0x600] sm:$0xff]
  %v7779 = vld [vmem:[%s3 + $0x608] sm:$0xff]
  %v7780 = vld [vmem:[%s3 + $0x610] sm:$0xff]
  %v7781 = vld [vmem:[%s3 + $0x618] sm:$0xff]
  %v7782 = vld [vmem:[%s3 + $0x620] sm:$0xff]
  %v7783 = vld [vmem:[%s3 + $0x628] sm:$0xff]
  %v7784 = vld [vmem:[%s3 + $0x630] sm:$0xff]
  %v7785 = vld [vmem:[%s3 + $0x638] sm:$0xff]
  %v7786 = vld [vmem:[%s3 + $0x640] sm:$0xff]
  %v7787 = vld [vmem:[%s3 + $0x648] sm:$0xff]
  %v7788 = vld [vmem:[%s3 + $0x650] sm:$0xff]
  %v7789 = vld [vmem:[%s3 + $0x658] sm:$0xff]
  %v7790 = vld [vmem:[%s3 + $0x660] sm:$0xff]
  %v7791 = vld [vmem:[%s3 + $0x668] sm:$0xff]
  %v7792 = vld [vmem:[%s3 + $0x670] sm:$0xff]
  %v7793 = vld [vmem:[%s3 + $0x678] sm:$0xff]
  %v7802 = vunpack.c.l.b16 %v7770
  %v7803 = vunpack.c.l.b16 %v7771
  %v7804 = vunpack.c.l.b16 %v7772
  %v7805 = vunpack.c.l.b16 %v7773
  %v7806 = vunpack.c.l.b16 %v7774
  %v7807 = vunpack.c.l.b16 %v7775
  %v7808 = vunpack.c.l.b16 %v7776
  %v7809 = vunpack.c.l.b16 %v7777
  %v7810 = vrot.slane %v7803, 7
  %v7811 = vsel %vm1116, %v7810, %v7802
  %v7812 = vrot.slane %v7804, 6
  %v7813 = vsel %vm1119, %v7812, %v7811
  %v7814 = vrot.slane %v7805, 5
  %v7815 = vsel %vm1122, %v7814, %v7813
  %v7816 = vrot.slane %v7806, 4
  %v7817 = vsel %vm1125, %v7816, %v7815
  %v7818 = vrot.slane %v7807, 3
  %v7819 = vsel %vm1128, %v7818, %v7817
  %v7820 = vrot.slane %v7808, 2
  %v7821 = vsel %vm1131, %v7820, %v7819
  %v7822 = vrot.slane %v7809, 1
  %v7823 = vsel %vm1134, %v7822, %v7821
  %v7824 = vpack.c.b16 %v7823, %v7823
  %v7842 = vunpack.c.l.b16 %v7778
  %v7843 = vunpack.c.h.b16 %v7778
  %v7844 = vunpack.c.l.b16 %v7779
  %v7845 = vunpack.c.h.b16 %v7779
  %v7846 = vunpack.c.l.b16 %v7780
  %v7847 = vunpack.c.h.b16 %v7780
  %v7848 = vunpack.c.l.b16 %v7781
  %v7849 = vunpack.c.h.b16 %v7781
  %v7850 = vunpack.c.l.b16 %v7782
  %v7851 = vunpack.c.h.b16 %v7782
  %v7852 = vunpack.c.l.b16 %v7783
  %v7853 = vunpack.c.h.b16 %v7783
  %v7854 = vunpack.c.l.b16 %v7784
  %v7855 = vunpack.c.h.b16 %v7784
  %v7856 = vunpack.c.l.b16 %v7785
  %v7857 = vunpack.c.h.b16 %v7785
  %v7858 = vunpack.c.l.b16 %v7786
  %v7859 = vunpack.c.h.b16 %v7786
  %v7860 = vunpack.c.l.b16 %v7787
  %v7861 = vunpack.c.h.b16 %v7787
  %v7862 = vunpack.c.l.b16 %v7788
  %v7863 = vunpack.c.h.b16 %v7788
  %v7864 = vunpack.c.l.b16 %v7789
  %v7865 = vunpack.c.h.b16 %v7789
  %v7866 = vunpack.c.l.b16 %v7790
  %v7867 = vunpack.c.h.b16 %v7790
  %v7868 = vunpack.c.l.b16 %v7791
  %v7869 = vunpack.c.h.b16 %v7791
  %v7870 = vunpack.c.l.b16 %v7792
  %v7871 = vunpack.c.h.b16 %v7792
  %v7872 = vunpack.c.l.b16 %v7793
  %v7873 = vunpack.c.h.b16 %v7793
  %v7874 = vpack.c.b16 %v7844, %v7842
  %v7875 = vpack.c.b16 %v7845, %v7843
  %v7876 = vpack.c.b16 %v7848, %v7846
  %v7877 = vpack.c.b16 %v7849, %v7847
  %v7878 = vpack.c.b16 %v7852, %v7850
  %v7879 = vpack.c.b16 %v7853, %v7851
  %v7880 = vpack.c.b16 %v7856, %v7854
  %v7881 = vpack.c.b16 %v7857, %v7855
  %v7882 = vpack.c.b16 %v7860, %v7858
  %v7883 = vpack.c.b16 %v7861, %v7859
  %v7884 = vpack.c.b16 %v7864, %v7862
  %v7885 = vpack.c.b16 %v7865, %v7863
  %v7886 = vpack.c.b16 %v7868, %v7866
  %v7887 = vpack.c.b16 %v7869, %v7867
  %v7888 = vpack.c.b16 %v7872, %v7870
  %v7889 = vpack.c.b16 %v7873, %v7871
  %7906 = vmatprep.subr.bf16.mxu0 %v7875
  %7907 = vmatpush1.bf16.msra.mxu0 %v7874
  %7908 = vmatprep.subr.bf16.mxu0 %v7877
  %7909 = vmatpush1.bf16.msra.mxu0 %v7876
  %7910 = vmatprep.subr.bf16.mxu0 %v7879
  %7911 = vmatpush1.bf16.msra.mxu0 %v7878
  %7912 = vmatprep.subr.bf16.mxu0 %v7881
  %7913 = vmatpush1.bf16.msra.mxu0 %v7880
  %7914 = vmatprep.subr.bf16.mxu0 %v7883
  %7915 = vmatpush1.bf16.msra.mxu0 %v7882
  %7916 = vmatprep.subr.bf16.mxu0 %v7885
  %7917 = vmatpush1.bf16.msra.mxu0 %v7884
  %7918 = vmatprep.subr.bf16.mxu0 %v7887
  %7919 = vmatpush1.bf16.msra.mxu0 %v7886
  %7920 = vmatprep.subr.bf16.mxu0 %v7889
  %7921 = vmatpush1.bf16.msra.mxu0 %v7888
  %7922 = vmatprep.subr.bf16.mxu0 0
  %7923 = vmatpush1.bf16.msra.mxu0 0
  %7924 = vmatprep.subr.bf16.mxu0 0
  %7925 = vmatpush1.bf16.msra.mxu0 0
  %7926 = vmatprep.subr.bf16.mxu0 0
  %7927 = vmatpush1.bf16.msra.mxu0 0
  %7928 = vmatprep.subr.bf16.mxu0 0
  %7929 = vmatpush1.bf16.msra.mxu0 0
  %7930 = vmatprep.subr.bf16.mxu0 0
  %7931 = vmatpush1.bf16.msra.mxu0 0
  %7932 = vmatprep.subr.bf16.mxu0 0
  %7933 = vmatpush1.bf16.msra.mxu0 0
  %7934 = vmatprep.subr.bf16.mxu0 0
  %7935 = vmatpush1.bf16.msra.mxu0 0
  %7936 = vmatprep.subr.bf16.mxu0 0
  %7937 = vmatpush1.bf16.msra.mxu0 0
  %7938 = vmatprep.mubr.bf16.mxu0 0
  %7939 = vmatmul.mubr.bf16.gmra.mrb[0].mxu0 %v7824
  %v7940 = vpop.f32.mrb[0].mxu0
  %v7941 = vadd.f32 0.0, %v7940
  %v7942 = vpop.f32.mrb[0].mxu0
  %v7943 = vadd.f32 0.0, %v7942
  %v7944 = vpop.f32.mrb[0].mxu0
  %v7945 = vpop.f32.mrb[0].mxu0
  %7946 = vdwg.mxu0
  %v7947 = vadd.f32 %v7759, %v7941
  %v7948 = vadd.f32 %v7760, %v7943
  %v7949 = vld [vmem:[%s5484] sm:$0x1]
  %v7950 = vld [vmem:[%s5484 + $0x2] sm:$0x1]
  %v7951 = vld [vmem:[%s5484 + $0x10] sm:$0x1]
  %v7952 = vld [vmem:[%s5484 + $0x12] sm:$0x1]
  %v7953 = vld [vmem:[%s5484 + $0x40] sm:$0x1]
  %v7954 = vld [vmem:[%s5484 + $0x42] sm:$0x1]
  %v7955 = vld [vmem:[%s5484 + $0x50] sm:$0x1]
  %v7956 = vld [vmem:[%s5484 + $0x52] sm:$0x1]
  %v7957 = vpack.c.bf16 %v7949, %v7949
  %v7958 = vpack.c.bf16 %v7950, %v7950
  %v7959 = vpack.c.bf16 %v7951, %v7951
  %v7960 = vpack.c.bf16 %v7952, %v7952
  %v7961 = vpack.c.bf16 %v7953, %v7953
  %v7962 = vpack.c.bf16 %v7954, %v7954
  %v7963 = vpack.c.bf16 %v7955, %v7955
  %v7964 = vpack.c.bf16 %v7956, %v7956
  %v7965 = vld [vmem:[%s3 + $0x680] sm:$0xff]
  %v7966 = vld [vmem:[%s3 + $0x688] sm:$0xff]
  %v7967 = vld [vmem:[%s3 + $0x690] sm:$0xff]
  %v7968 = vld [vmem:[%s3 + $0x698] sm:$0xff]
  %v7969 = vld [vmem:[%s3 + $0x6a0] sm:$0xff]
  %v7970 = vld [vmem:[%s3 + $0x6a8] sm:$0xff]
  %v7971 = vld [vmem:[%s3 + $0x6b0] sm:$0xff]
  %v7972 = vld [vmem:[%s3 + $0x6b8] sm:$0xff]
  %v7973 = vld [vmem:[%s3 + $0x6c0] sm:$0xff]
  %v7974 = vld [vmem:[%s3 + $0x6c8] sm:$0xff]
  %v7975 = vld [vmem:[%s3 + $0x6d0] sm:$0xff]
  %v7976 = vld [vmem:[%s3 + $0x6d8] sm:$0xff]
  %v7977 = vld [vmem:[%s3 + $0x6e0] sm:$0xff]
  %v7978 = vld [vmem:[%s3 + $0x6e8] sm:$0xff]
  %v7979 = vld [vmem:[%s3 + $0x6f0] sm:$0xff]
  %v7980 = vld [vmem:[%s3 + $0x6f8] sm:$0xff]
  %v7989 = vunpack.c.l.b16 %v7957
  %v7990 = vunpack.c.l.b16 %v7958
  %v7991 = vunpack.c.l.b16 %v7959
  %v7992 = vunpack.c.l.b16 %v7960
  %v7993 = vunpack.c.l.b16 %v7961
  %v7994 = vunpack.c.l.b16 %v7962
  %v7995 = vunpack.c.l.b16 %v7963
  %v7996 = vunpack.c.l.b16 %v7964
  %v7997 = vrot.slane %v7990, 7
  %v7998 = vsel %vm1116, %v7997, %v7989
  %v7999 = vrot.slane %v7991, 6
  %v8000 = vsel %vm1119, %v7999, %v7998
  %v8001 = vrot.slane %v7992, 5
  %v8002 = vsel %vm1122, %v8001, %v8000
  %v8003 = vrot.slane %v7993, 4
  %v8004 = vsel %vm1125, %v8003, %v8002
  %v8005 = vrot.slane %v7994, 3
  %v8006 = vsel %vm1128, %v8005, %v8004
  %v8007 = vrot.slane %v7995, 2
  %v8008 = vsel %vm1131, %v8007, %v8006
  %v8009 = vrot.slane %v7996, 1
  %v8010 = vsel %vm1134, %v8009, %v8008
  %v8011 = vpack.c.b16 %v8010, %v8010
  %v8029 = vunpack.c.l.b16 %v7965
  %v8030 = vunpack.c.h.b16 %v7965
  %v8031 = vunpack.c.l.b16 %v7966
  %v8032 = vunpack.c.h.b16 %v7966
  %v8033 = vunpack.c.l.b16 %v7967
  %v8034 = vunpack.c.h.b16 %v7967
  %v8035 = vunpack.c.l.b16 %v7968
  %v8036 = vunpack.c.h.b16 %v7968
  %v8037 = vunpack.c.l.b16 %v7969
  %v8038 = vunpack.c.h.b16 %v7969
  %v8039 = vunpack.c.l.b16 %v7970
  %v8040 = vunpack.c.h.b16 %v7970
  %v8041 = vunpack.c.l.b16 %v7971
  %v8042 = vunpack.c.h.b16 %v7971
  %v8043 = vunpack.c.l.b16 %v7972
  %v8044 = vunpack.c.h.b16 %v7972
  %v8045 = vunpack.c.l.b16 %v7973
  %v8046 = vunpack.c.h.b16 %v7973
  %v8047 = vunpack.c.l.b16 %v7974
  %v8048 = vunpack.c.h.b16 %v7974
  %v8049 = vunpack.c.l.b16 %v7975
  %v8050 = vunpack.c.h.b16 %v7975
  %v8051 = vunpack.c.l.b16 %v7976
  %v8052 = vunpack.c.h.b16 %v7976
  %v8053 = vunpack.c.l.b16 %v7977
  %v8054 = vunpack.c.h.b16 %v7977
  %v8055 = vunpack.c.l.b16 %v7978
  %v8056 = vunpack.c.h.b16 %v7978
  %v8057 = vunpack.c.l.b16 %v7979
  %v8058 = vunpack.c.h.b16 %v7979
  %v8059 = vunpack.c.l.b16 %v7980
  %v8060 = vunpack.c.h.b16 %v7980
  %v8061 = vpack.c.b16 %v8031, %v8029
  %v8062 = vpack.c.b16 %v8032, %v8030
  %v8063 = vpack.c.b16 %v8035, %v8033
  %v8064 = vpack.c.b16 %v8036, %v8034
  %v8065 = vpack.c.b16 %v8039, %v8037
  %v8066 = vpack.c.b16 %v8040, %v8038
  %v8067 = vpack.c.b16 %v8043, %v8041
  %v8068 = vpack.c.b16 %v8044, %v8042
  %v8069 = vpack.c.b16 %v8047, %v8045
  %v8070 = vpack.c.b16 %v8048, %v8046
  %v8071 = vpack.c.b16 %v8051, %v8049
  %v8072 = vpack.c.b16 %v8052, %v8050
  %v8073 = vpack.c.b16 %v8055, %v8053
  %v8074 = vpack.c.b16 %v8056, %v8054
  %v8075 = vpack.c.b16 %v8059, %v8057
  %v8076 = vpack.c.b16 %v8060, %v8058
  %8093 = vmatprep.subr.bf16.mxu0 %v8062
  %8094 = vmatpush1.bf16.msra.mxu0 %v8061
  %8095 = vmatprep.subr.bf16.mxu0 %v8064
  %8096 = vmatpush1.bf16.msra.mxu0 %v8063
  %8097 = vmatprep.subr.bf16.mxu0 %v8066
  %8098 = vmatpush1.bf16.msra.mxu0 %v8065
  %8099 = vmatprep.subr.bf16.mxu0 %v8068
  %8100 = vmatpush1.bf16.msra.mxu0 %v8067
  %8101 = vmatprep.subr.bf16.mxu0 %v8070
  %8102 = vmatpush1.bf16.msra.mxu0 %v8069
  %8103 = vmatprep.subr.bf16.mxu0 %v8072
  %8104 = vmatpush1.bf16.msra.mxu0 %v8071
  %8105 = vmatprep.subr.bf16.mxu0 %v8074
  %8106 = vmatpush1.bf16.msra.mxu0 %v8073
  %8107 = vmatprep.subr.bf16.mxu0 %v8076
  %8108 = vmatpush1.bf16.msra.mxu0 %v8075
  %8109 = vmatprep.subr.bf16.mxu0 0
  %8110 = vmatpush1.bf16.msra.mxu0 0
  %8111 = vmatprep.subr.bf16.mxu0 0
  %8112 = vmatpush1.bf16.msra.mxu0 0
  %8113 = vmatprep.subr.bf16.mxu0 0
  %8114 = vmatpush1.bf16.msra.mxu0 0
  %8115 = vmatprep.subr.bf16.mxu0 0
  %8116 = vmatpush1.bf16.msra.mxu0 0
  %8117 = vmatprep.subr.bf16.mxu0 0
  %8118 = vmatpush1.bf16.msra.mxu0 0
  %8119 = vmatprep.subr.bf16.mxu0 0
  %8120 = vmatpush1.bf16.msra.mxu0 0
  %8121 = vmatprep.subr.bf16.mxu0 0
  %8122 = vmatpush1.bf16.msra.mxu0 0
  %8123 = vmatprep.subr.bf16.mxu0 0
  %8124 = vmatpush1.bf16.msra.mxu0 0
  %8125 = vmatprep.mubr.bf16.mxu0 0
  %8126 = vmatmul.mubr.bf16.gmra.mrb[0].mxu0 %v8011
  %v8127 = vpop.f32.mrb[0].mxu0
  %v8128 = vadd.f32 0.0, %v8127
  %v8129 = vpop.f32.mrb[0].mxu0
  %v8130 = vadd.f32 0.0, %v8129
  %v8131 = vpop.f32.mrb[0].mxu0
  %v8132 = vpop.f32.mrb[0].mxu0
  %8133 = vdwg.mxu0
  %v8134 = vadd.f32 %v7947, %v8128
  %v8135 = vadd.f32 %v7948, %v8130
  %v8136 = vld [vmem:[%s5484 + $0x1] sm:$0x1]
  %v8137 = vld [vmem:[%s5484 + $0x3] sm:$0x1]
  %v8138 = vld [vmem:[%s5484 + $0x11] sm:$0x1]
  %v8139 = vld [vmem:[%s5484 + $0x13] sm:$0x1]
  %v8140 = vld [vmem:[%s5484 + $0x41] sm:$0x1]
  %v8141 = vld [vmem:[%s5484 + $0x43] sm:$0x1]
  %v8142 = vld [vmem:[%s5484 + $0x51] sm:$0x1]
  %v8143 = vld [vmem:[%s5484 + $0x53] sm:$0x1]
  %v8144 = vpack.c.bf16 %v8136, %v8136
  %v8145 = vpack.c.bf16 %v8137, %v8137
  %v8146 = vpack.c.bf16 %v8138, %v8138
  %v8147 = vpack.c.bf16 %v8139, %v8139
  %v8148 = vpack.c.bf16 %v8140, %v8140
  %v8149 = vpack.c.bf16 %v8141, %v8141
  %v8150 = vpack.c.bf16 %v8142, %v8142
  %v8151 = vpack.c.bf16 %v8143, %v8143
  %v8152 = vld [vmem:[%s3 + $0x700] sm:$0xff]
  %v8153 = vld [vmem:[%s3 + $0x708] sm:$0xff]
  %v8154 = vld [vmem:[%s3 + $0x710] sm:$0xff]
  %v8155 = vld [vmem:[%s3 + $0x718] sm:$0xff]
  %v8156 = vld [vmem:[%s3 + $0x720] sm:$0xff]
  %v8157 = vld [vmem:[%s3 + $0x728] sm:$0xff]
  %v8158 = vld [vmem:[%s3 + $0x730] sm:$0xff]
  %v8159 = vld [vmem:[%s3 + $0x738] sm:$0xff]
  %v8160 = vld [vmem:[%s3 + $0x740] sm:$0xff]
  %v8161 = vld [vmem:[%s3 + $0x748] sm:$0xff]
  %v8162 = vld [vmem:[%s3 + $0x750] sm:$0xff]
  %v8163 = vld [vmem:[%s3 + $0x758] sm:$0xff]
  %v8164 = vld [vmem:[%s3 + $0x760] sm:$0xff]
  %v8165 = vld [vmem:[%s3 + $0x768] sm:$0xff]
  %v8166 = vld [vmem:[%s3 + $0x770] sm:$0xff]
  %v8167 = vld [vmem:[%s3 + $0x778] sm:$0xff]
  %v8176 = vunpack.c.l.b16 %v8144
  %v8177 = vunpack.c.l.b16 %v8145
  %v8178 = vunpack.c.l.b16 %v8146
  %v8179 = vunpack.c.l.b16 %v8147
  %v8180 = vunpack.c.l.b16 %v8148
  %v8181 = vunpack.c.l.b16 %v8149
  %v8182 = vunpack.c.l.b16 %v8150
  %v8183 = vunpack.c.l.b16 %v8151
  %v8184 = vrot.slane %v8177, 7
  %v8185 = vsel %vm1116, %v8184, %v8176
  %v8186 = vrot.slane %v8178, 6
  %v8187 = vsel %vm1119, %v8186, %v8185
  %v8188 = vrot.slane %v8179, 5
  %v8189 = vsel %vm1122, %v8188, %v8187
  %v8190 = vrot.slane %v8180, 4
  %v8191 = vsel %vm1125, %v8190, %v8189
  %v8192 = vrot.slane %v8181, 3
  %v8193 = vsel %vm1128, %v8192, %v8191
  %v8194 = vrot.slane %v8182, 2
  %v8195 = vsel %vm1131, %v8194, %v8193
  %v8196 = vrot.slane %v8183, 1
  %v8197 = vsel %vm1134, %v8196, %v8195
  %v8198 = vpack.c.b16 %v8197, %v8197
  %v8216 = vunpack.c.l.b16 %v8152
  %v8217 = vunpack.c.h.b16 %v8152
  %v8218 = vunpack.c.l.b16 %v8153
  %v8219 = vunpack.c.h.b16 %v8153
  %v8220 = vunpack.c.l.b16 %v8154
  %v8221 = vunpack.c.h.b16 %v8154
  %v8222 = vunpack.c.l.b16 %v8155
  %v8223 = vunpack.c.h.b16 %v8155
  %v8224 = vunpack.c.l.b16 %v8156
  %v8225 = vunpack.c.h.b16 %v8156
  %v8226 = vunpack.c.l.b16 %v8157
  %v8227 = vunpack.c.h.b16 %v8157
  %v8228 = vunpack.c.l.b16 %v8158
  %v8229 = vunpack.c.h.b16 %v8158
  %v8230 = vunpack.c.l.b16 %v8159
  %v8231 = vunpack.c.h.b16 %v8159
  %v8232 = vunpack.c.l.b16 %v8160
  %v8233 = vunpack.c.h.b16 %v8160
  %v8234 = vunpack.c.l.b16 %v8161
  %v8235 = vunpack.c.h.b16 %v8161
  %v8236 = vunpack.c.l.b16 %v8162
  %v8237 = vunpack.c.h.b16 %v8162
  %v8238 = vunpack.c.l.b16 %v8163
  %v8239 = vunpack.c.h.b16 %v8163
  %v8240 = vunpack.c.l.b16 %v8164
  %v8241 = vunpack.c.h.b16 %v8164
  %v8242 = vunpack.c.l.b16 %v8165
  %v8243 = vunpack.c.h.b16 %v8165
  %v8244 = vunpack.c.l.b16 %v8166
  %v8245 = vunpack.c.h.b16 %v8166
  %v8246 = vunpack.c.l.b16 %v8167
  %v8247 = vunpack.c.h.b16 %v8167
  %v8248 = vpack.c.b16 %v8218, %v8216
  %v8249 = vpack.c.b16 %v8219, %v8217
  %v8250 = vpack.c.b16 %v8222, %v8220
  %v8251 = vpack.c.b16 %v8223, %v8221
  %v8252 = vpack.c.b16 %v8226, %v8224
  %v8253 = vpack.c.b16 %v8227, %v8225
  %v8254 = vpack.c.b16 %v8230, %v8228
  %v8255 = vpack.c.b16 %v8231, %v8229
  %v8256 = vpack.c.b16 %v8234, %v8232
  %v8257 = vpack.c.b16 %v8235, %v8233
  %v8258 = vpack.c.b16 %v8238, %v8236
  %v8259 = vpack.c.b16 %v8239, %v8237
  %v8260 = vpack.c.b16 %v8242, %v8240
  %v8261 = vpack.c.b16 %v8243, %v8241
  %v8262 = vpack.c.b16 %v8246, %v8244
  %v8263 = vpack.c.b16 %v8247, %v8245
  %8280 = vmatprep.subr.bf16.mxu0 %v8249
  %8281 = vmatpush1.bf16.msra.mxu0 %v8248
  %8282 = vmatprep.subr.bf16.mxu0 %v8251
  %8283 = vmatpush1.bf16.msra.mxu0 %v8250
  %8284 = vmatprep.subr.bf16.mxu0 %v8253
  %8285 = vmatpush1.bf16.msra.mxu0 %v8252
  %8286 = vmatprep.subr.bf16.mxu0 %v8255
  %8287 = vmatpush1.bf16.msra.mxu0 %v8254
  %8288 = vmatprep.subr.bf16.mxu0 %v8257
  %8289 = vmatpush1.bf16.msra.mxu0 %v8256
  %8290 = vmatprep.subr.bf16.mxu0 %v8259
  %8291 = vmatpush1.bf16.msra.mxu0 %v8258
  %8292 = vmatprep.subr.bf16.mxu0 %v8261
  %8293 = vmatpush1.bf16.msra.mxu0 %v8260
  %8294 = vmatprep.subr.bf16.mxu0 %v8263
  %8295 = vmatpush1.bf16.msra.mxu0 %v8262
  %8296 = vmatprep.subr.bf16.mxu0 0
  %8297 = vmatpush1.bf16.msra.mxu0 0
  %8298 = vmatprep.subr.bf16.mxu0 0
  %8299 = vmatpush1.bf16.msra.mxu0 0
  %8300 = vmatprep.subr.bf16.mxu0 0
  %8301 = vmatpush1.bf16.msra.mxu0 0
  %8302 = vmatprep.subr.bf16.mxu0 0
  %8303 = vmatpush1.bf16.msra.mxu0 0
  %8304 = vmatprep.subr.bf16.mxu0 0
  %8305 = vmatpush1.bf16.msra.mxu0 0
  %8306 = vmatprep.subr.bf16.mxu0 0
  %8307 = vmatpush1.bf16.msra.mxu0 0
  %8308 = vmatprep.subr.bf16.mxu0 0
  %8309 = vmatpush1.bf16.msra.mxu0 0
  %8310 = vmatprep.subr.bf16.mxu0 0
  %8311 = vmatpush1.bf16.msra.mxu0 0
  %8312 = vmatprep.mubr.bf16.mxu0 0
  %8313 = vmatmul.mubr.bf16.gmra.mrb[0].mxu0 %v8198
  %v8314 = vpop.f32.mrb[0].mxu0
  %v8315 = vadd.f32 0.0, %v8314
  %v8316 = vpop.f32.mrb[0].mxu0
  %v8317 = vadd.f32 0.0, %v8316
  %v8318 = vpop.f32.mrb[0].mxu0
  %v8319 = vpop.f32.mrb[0].mxu0
  %8320 = vdwg.mxu0
  %v8321 = vadd.f32 %v8134, %v8315
  %v8322 = vadd.f32 %v8135, %v8317
  %s8323 = scalar_lea.vmem [#allocation3], 36
  %v8324 = vld [vmem:[%s8323] sm:$0x1]
  %v8325 = vld [vmem:[%s8323 + $0x2] sm:$0x1]
  %v8326 = vld [vmem:[%s8323 + $0x10] sm:$0x1]
  %v8327 = vld [vmem:[%s8323 + $0x12] sm:$0x1]
  %v8328 = vld [vmem:[%s8323 + $0x40] sm:$0x1]
  %v8329 = vld [vmem:[%s8323 + $0x42] sm:$0x1]
  %v8330 = vld [vmem:[%s8323 + $0x50] sm:$0x1]
  %v8331 = vld [vmem:[%s8323 + $0x52] sm:$0x1]
  %v8332 = vpack.c.bf16 %v8324, %v8324
  %v8333 = vpack.c.bf16 %v8325, %v8325
  %v8334 = vpack.c.bf16 %v8326, %v8326
  %v8335 = vpack.c.bf16 %v8327, %v8327
  %v8336 = vpack.c.bf16 %v8328, %v8328
  %v8337 = vpack.c.bf16 %v8329, %v8329
  %v8338 = vpack.c.bf16 %v8330, %v8330
  %v8339 = vpack.c.bf16 %v8331, %v8331
  %v8340 = vld [vmem:[%s3 + $0x780] sm:$0xff]
  %v8341 = vld [vmem:[%s3 + $0x788] sm:$0xff]
  %v8342 = vld [vmem:[%s3 + $0x790] sm:$0xff]
  %v8343 = vld [vmem:[%s3 + $0x798] sm:$0xff]
  %v8344 = vld [vmem:[%s3 + $0x7a0] sm:$0xff]
  %v8345 = vld [vmem:[%s3 + $0x7a8] sm:$0xff]
  %v8346 = vld [vmem:[%s3 + $0x7b0] sm:$0xff]
  %v8347 = vld [vmem:[%s3 + $0x7b8] sm:$0xff]
  %v8348 = vld [vmem:[%s3 + $0x7c0] sm:$0xff]
  %v8349 = vld [vmem:[%s3 + $0x7c8] sm:$0xff]
  %v8350 = vld [vmem:[%s3 + $0x7d0] sm:$0xff]
  %v8351 = vld [vmem:[%s3 + $0x7d8] sm:$0xff]
  %v8352 = vld [vmem:[%s3 + $0x7e0] sm:$0xff]
  %v8353 = vld [vmem:[%s3 + $0x7e8] sm:$0xff]
  %v8354 = vld [vmem:[%s3 + $0x7f0] sm:$0xff]
  %v8355 = vld [vmem:[%s3 + $0x7f8] sm:$0xff]
  %v8364 = vunpack.c.l.b16 %v8332
  %v8365 = vunpack.c.l.b16 %v8333
  %v8366 = vunpack.c.l.b16 %v8334
  %v8367 = vunpack.c.l.b16 %v8335
  %v8368 = vunpack.c.l.b16 %v8336
  %v8369 = vunpack.c.l.b16 %v8337
  %v8370 = vunpack.c.l.b16 %v8338
  %v8371 = vunpack.c.l.b16 %v8339
  %v8372 = vrot.slane %v8365, 7
  %v8373 = vsel %vm1116, %v8372, %v8364
  %v8374 = vrot.slane %v8366, 6
  %v8375 = vsel %vm1119, %v8374, %v8373
  %v8376 = vrot.slane %v8367, 5
  %v8377 = vsel %vm1122, %v8376, %v8375
  %v8378 = vrot.slane %v8368, 4
  %v8379 = vsel %vm1125, %v8378, %v8377
  %v8380 = vrot.slane %v8369, 3
  %v8381 = vsel %vm1128, %v8380, %v8379
  %v8382 = vrot.slane %v8370, 2
  %v8383 = vsel %vm1131, %v8382, %v8381
  %v8384 = vrot.slane %v8371, 1
  %v8385 = vsel %vm1134, %v8384, %v8383
  %v8386 = vpack.c.b16 %v8385, %v8385
  %v8404 = vunpack.c.l.b16 %v8340
  %v8405 = vunpack.c.h.b16 %v8340
  %v8406 = vunpack.c.l.b16 %v8341
  %v8407 = vunpack.c.h.b16 %v8341
  %v8408 = vunpack.c.l.b16 %v8342
  %v8409 = vunpack.c.h.b16 %v8342
  %v8410 = vunpack.c.l.b16 %v8343
  %v8411 = vunpack.c.h.b16 %v8343
  %v8412 = vunpack.c.l.b16 %v8344
  %v8413 = vunpack.c.h.b16 %v8344
  %v8414 = vunpack.c.l.b16 %v8345
  %v8415 = vunpack.c.h.b16 %v8345
  %v8416 = vunpack.c.l.b16 %v8346
  %v8417 = vunpack.c.h.b16 %v8346
  %v8418 = vunpack.c.l.b16 %v8347
  %v8419 = vunpack.c.h.b16 %v8347
  %v8420 = vunpack.c.l.b16 %v8348
  %v8421 = vunpack.c.h.b16 %v8348
  %v8422 = vunpack.c.l.b16 %v8349
  %v8423 = vunpack.c.h.b16 %v8349
  %v8424 = vunpack.c.l.b16 %v8350
  %v8425 = vunpack.c.h.b16 %v8350
  %v8426 = vunpack.c.l.b16 %v8351
  %v8427 = vunpack.c.h.b16 %v8351
  %v8428 = vunpack.c.l.b16 %v8352
  %v8429 = vunpack.c.h.b16 %v8352
  %v8430 = vunpack.c.l.b16 %v8353
  %v8431 = vunpack.c.h.b16 %v8353
  %v8432 = vunpack.c.l.b16 %v8354
  %v8433 = vunpack.c.h.b16 %v8354
  %v8434 = vunpack.c.l.b16 %v8355
  %v8435 = vunpack.c.h.b16 %v8355
  %v8436 = vpack.c.b16 %v8406, %v8404
  %v8437 = vpack.c.b16 %v8407, %v8405
  %v8438 = vpack.c.b16 %v8410, %v8408
  %v8439 = vpack.c.b16 %v8411, %v8409
  %v8440 = vpack.c.b16 %v8414, %v8412
  %v8441 = vpack.c.b16 %v8415, %v8413
  %v8442 = vpack.c.b16 %v8418, %v8416
  %v8443 = vpack.c.b16 %v8419, %v8417
  %v8444 = vpack.c.b16 %v8422, %v8420
  %v8445 = vpack.c.b16 %v8423, %v8421
  %v8446 = vpack.c.b16 %v8426, %v8424
  %v8447 = vpack.c.b16 %v8427, %v8425
  %v8448 = vpack.c.b16 %v8430, %v8428
  %v8449 = vpack.c.b16 %v8431, %v8429
  %v8450 = vpack.c.b16 %v8434, %v8432
  %v8451 = vpack.c.b16 %v8435, %v8433
  %8468 = vmatprep.subr.bf16.mxu0 %v8437
  %8469 = vmatpush1.bf16.msra.mxu0 %v8436
  %8470 = vmatprep.subr.bf16.mxu0 %v8439
  %8471 = vmatpush1.bf16.msra.mxu0 %v8438
  %8472 = vmatprep.subr.bf16.mxu0 %v8441
  %8473 = vmatpush1.bf16.msra.mxu0 %v8440
  %8474 = vmatprep.subr.bf16.mxu0 %v8443
  %8475 = vmatpush1.bf16.msra.mxu0 %v8442
  %8476 = vmatprep.subr.bf16.mxu0 %v8445
  %8477 = vmatpush1.bf16.msra.mxu0 %v8444
  %8478 = vmatprep.subr.bf16.mxu0 %v8447
  %8479 = vmatpush1.bf16.msra.mxu0 %v8446
  %8480 = vmatprep.subr.bf16.mxu0 %v8449
  %8481 = vmatpush1.bf16.msra.mxu0 %v8448
  %8482 = vmatprep.subr.bf16.mxu0 %v8451
  %8483 = vmatpush1.bf16.msra.mxu0 %v8450
  %8484 = vmatprep.subr.bf16.mxu0 0
  %8485 = vmatpush1.bf16.msra.mxu0 0
  %8486 = vmatprep.subr.bf16.mxu0 0
  %8487 = vmatpush1.bf16.msra.mxu0 0
  %8488 = vmatprep.subr.bf16.mxu0 0
  %8489 = vmatpush1.bf16.msra.mxu0 0
  %8490 = vmatprep.subr.bf16.mxu0 0
  %8491 = vmatpush1.bf16.msra.mxu0 0
  %8492 = vmatprep.subr.bf16.mxu0 0
  %8493 = vmatpush1.bf16.msra.mxu0 0
  %8494 = vmatprep.subr.bf16.mxu0 0
  %8495 = vmatpush1.bf16.msra.mxu0 0
  %8496 = vmatprep.subr.bf16.mxu0 0
  %8497 = vmatpush1.bf16.msra.mxu0 0
  %8498 = vmatprep.subr.bf16.mxu0 0
  %8499 = vmatpush1.bf16.msra.mxu0 0
  %8500 = vmatprep.mubr.bf16.mxu0 0
  %8501 = vmatmul.mubr.bf16.gmra.mrb[0].mxu0 %v8386
  %v8502 = vpop.f32.mrb[0].mxu0
  %v8503 = vadd.f32 0.0, %v8502
  %v8504 = vpop.f32.mrb[0].mxu0
  %v8505 = vadd.f32 0.0, %v8504
  %v8506 = vpop.f32.mrb[0].mxu0
  %v8507 = vpop.f32.mrb[0].mxu0
  %8508 = vdwg.mxu0
  %v8509 = vadd.f32 %v8321, %v8503
  %v8510 = vadd.f32 %v8322, %v8505
  %v8511 = vld [vmem:[%s6] sm:$0x3]
  %v8512 = vld [vmem:[%s7] sm:$0x3]
  %v8513 = vrot.slane %v8509, 4
  %v8514 = vadd.f32 %v8509, %v8513
  %v8515 = vrot.slane %v8514, 2
  %v8516 = vadd.f32 %v8514, %v8515
  %v8517 = vrot.slane %v8516, 1
  %v8518 = vadd.f32 %v8516, %v8517
  %v8519 = vrot.slane %v8510, 4
  %v8520 = vadd.f32 %v8510, %v8519
  %v8521 = vrot.slane %v8520, 2
  %v8522 = vadd.f32 %v8520, %v8521
  %v8523 = vrot.slane %v8522, 1
  %v8524 = vadd.f32 %v8522, %v8523
  %v8525 = vmul.f32 %v8518, 0.125
  %v8526 = vmul.f32 %v8524, 0.125
  %v8527 = vmul.f32 %v8509, %v8509
  %v8528 = vmul.f32 %v8510, %v8510
  %v8529 = vrot.slane %v8527, 4
  %v8530 = vadd.f32 %v8527, %v8529
  %v8531 = vrot.slane %v8530, 2
  %v8532 = vadd.f32 %v8530, %v8531
  %v8533 = vrot.slane %v8532, 1
  %v8534 = vadd.f32 %v8532, %v8533
  %v8535 = vrot.slane %v8528, 4
  %v8536 = vadd.f32 %v8528, %v8535
  %v8537 = vrot.slane %v8536, 2
  %v8538 = vadd.f32 %v8536, %v8537
  %v8539 = vrot.slane %v8538, 1
  %v8540 = vadd.f32 %v8538, %v8539
  %v8541 = vmul.f32 %v8534, 0.125
  %v8542 = vmul.f32 %v8540, 0.125
  %v8543 = vmul.f32 %v8525, %v8525
  %v8544 = vmul.f32 %v8526, %v8526
  %v8545 = vsub.f32 %v8541, %v8543
  %v8546 = vsub.f32 %v8542, %v8544
  %v8547 = vadd.f32 %v8545, 1e-05
  %v8548 = vadd.f32 %v8546, 1e-05
  %v8549 = vrsqrt.pop %v8547
  %v8550 = vrsqrt.pop %v8548
  %v8553 = vcombine.low %v8549, %v8550
  %v8555 = vunpack.c.l.s4 1966171168
  %v8556 = vunpack.c.0.s8 %v8555
  %v8557 = vlaneseq
  %v8558 = vshrl.u32 %v8557, 7
  %v8559 = vsub.s32 %v8556, %v8558
  %v8560 = vrot.slane %v8553, %v8559
  %v8562 = vunpack.c.l.s4 1966171168
  %v8563 = vunpack.c.0.s8 %v8562
  %v8564 = vlaneseq
  %v8565 = vshrl.u32 %v8564, 7
  %v8566 = vsub.s32 %v8563, %v8565
  %v8567 = vrot.slane %v8560, %v8566
  %v8569 = vmul.f32 %v8511, %v8567
  %v8571 = vlaneseq
  %v8572 = vshrl.u32 %v8571, 7
  %v8573 = vsub.s32 0, %v8572
  %v8574 = vrot.slane %v8569, %v8573
  %v8575 = vlaneseq
  %v8576 = vshrl.u32 %v8575, 7
  %v8577 = vsub.s32 1, %v8576
  %v8578 = vrot.slane %v8569, %v8577
  %v8581 = vmul.f32 %v8525, %v8574
  %v8582 = vmul.f32 %v8526, %v8578
  %v8585 = vcombine.low %v8581, %v8582
  %v8587 = vunpack.c.l.s4 1966171168
  %v8588 = vunpack.c.0.s8 %v8587
  %v8589 = vlaneseq
  %v8590 = vshrl.u32 %v8589, 7
  %v8591 = vsub.s32 %v8588, %v8590
  %v8592 = vrot.slane %v8585, %v8591
  %v8594 = vunpack.c.l.s4 1966171168
  %v8595 = vunpack.c.0.s8 %v8594
  %v8596 = vlaneseq
  %v8597 = vshrl.u32 %v8596, 7
  %v8598 = vsub.s32 %v8595, %v8597
  %v8599 = vrot.slane %v8592, %v8598
  %v8601 = vsub.f32 %v8512, %v8599
  %v8602 = vmul.f32 %v8509, %v8574
  %v8603 = vmul.f32 %v8510, %v8578
  %v8605 = vlaneseq
  %v8606 = vshrl.u32 %v8605, 7
  %v8607 = vsub.s32 0, %v8606
  %v8608 = vrot.slane %v8601, %v8607
  %v8609 = vlaneseq
  %v8610 = vshrl.u32 %v8609, 7
  %v8611 = vsub.s32 1, %v8610
  %v8612 = vrot.slane %v8601, %v8611
  %v8615 = vadd.f32 %v8602, %v8608
  %v8616 = vadd.f32 %v8603, %v8612
  %v8617 = vmul.f32 %v8615, 0.1
  %v8618 = vmul.f32 %v8616, 0.1
  %v8619 = vmax.f32 %v8615, %v8617
  %v8620 = vmax.f32 %v8616, %v8618
  %8621 = vst [vmem:[%s8] sm:$0xff] %v8619
  %8622 = vst [vmem:[%s8 + $0x8] sm:$0xff] %v8620
  // Predicated region
  $region34: #{d_svhn_forward.1} parent=0 // pred_check
    _
  $region35: #{d_svhn_forward.1} parent=0 // pred_check_branch
    %8624 = sbr.rel (0) target = $region37
  $region36: #{d_svhn_forward.1} parent=0 // pred_region
    _
  $region37: #{d_svhn_forward.1} parent=0 // pred_fallthru
    _
  // Predicated region
  $region38: #{d_svhn_forward.1} parent=0 // pred_check
    _
  $region39: #{d_svhn_forward.1} parent=0 // pred_check_branch
    %8626 = sbr.rel (0) target = $region41
  $region40: #{d_svhn_forward.1} parent=0 // pred_region
    _
  $region41: #{d_svhn_forward.1} parent=0 // pred_fallthru
    _

</llo_original>
